<compile_context>
chip_gen: v5e
topology: v5e:2x2
jax: 0.10.0
libtpu: 0.0.40
codegen_flags: <defaults>
</compile_context>

<pallas_src>
import functools

import jax
import jax.numpy as jnp
from jax.experimental import pallas as pl
from jax.experimental.pallas import tpu as pltpu


def _round_up(x, m):
    return ((x + m - 1) // m) * m


# ----------------------------------------------------------------------------
# Pallas kernel 1: fused (x @ w + b) with optional ReLU (used by the conv path).
# x block: (TM, K) bf16, w: (K, 128) bf16 full, b: (1, 128) f32 full,
# out block: (TM, 128) -> lane-dense, unmasked stores.
# ----------------------------------------------------------------------------
def _matmul_bias_act_kernel(x_ref, w_ref, b_ref, o_ref, *, apply_relu):
    acc = jnp.dot(x_ref[...], w_ref[...], preferred_element_type=jnp.float32)
    acc = acc + b_ref[...]
    if apply_relu:
        acc = jnp.maximum(acc, 0.0)
    o_ref[...] = acc.astype(o_ref.dtype)


def matmul_bias_act(x, w, b, *, relu, out_dtype):
    """x: (M, K) bf16, w: (K, N) bf16 (N % 128 == 0), b: (1, N) f32 -> (M, N)."""
    M, K = x.shape
    K2, N = w.shape
    assert K == K2, (K, K2)
    assert N % 128 == 0, N

    # Tile over M only; pick a balanced tile <= ~1024 rows (16-row aligned for
    # bf16 sublane packing) so padding waste stays small.
    TM_CAP = 1024
    n_blocks = pl.cdiv(M, TM_CAP)
    TM = _round_up(pl.cdiv(M, n_blocks), 16)
    M_pad = TM * n_blocks
    if M_pad != M:
        x = jnp.pad(x, ((0, M_pad - M), (0, 0)))

    kernel = functools.partial(_matmul_bias_act_kernel, apply_relu=relu)
    out = pl.pallas_call(
        kernel,
        out_shape=jax.ShapeDtypeStruct((M_pad, N), out_dtype),
        grid=(n_blocks,),
        in_specs=[
            pl.BlockSpec((TM, K), lambda i: (i, 0)),
            pl.BlockSpec((K, N), lambda i: (0, 0)),
            pl.BlockSpec((1, N), lambda i: (0, 0)),
        ],
        out_specs=pl.BlockSpec((TM, N), lambda i: (i, 0)),
        compiler_params=pltpu.CompilerParams(
            dimension_semantics=("parallel",)
        ),
    )(x, w, b)
    return out[:M]


# ----------------------------------------------------------------------------
# Pallas kernel 2: the whole FC stack (fc1..fc5) fused in a single call.
# All weights bf16 / K,N padded to multiples of 128 (zero-padded -> exact);
# intermediates stay in registers/VMEM, only the final (B_pad, 128) f32 output
# is written back.
# ----------------------------------------------------------------------------
def _fc_stack_kernel(x_ref, w1, b1, w2, b2, w3, b3, w4, b4, w5, b5, o_ref):
    def layer(h, w_ref, b_ref, relu):
        acc = jnp.dot(h, w_ref[...], preferred_element_type=jnp.float32)
        acc = acc + b_ref[...]
        if relu:
            acc = jnp.maximum(acc, 0.0)
        return acc

    h = x_ref[...]
    h = layer(h, w1, b1, True).astype(jnp.bfloat16)
    h = layer(h, w2, b2, True).astype(jnp.bfloat16)
    h = layer(h, w3, b3, True).astype(jnp.bfloat16)
    h = layer(h, w4, b4, True).astype(jnp.bfloat16)
    o_ref[...] = layer(h, w5, b5, False)


def fused_fc_stack(x, fc_prep):
    (w1, b1), (w2, b2), (w3, b3), (w4, b4), (w5, b5) = fc_prep
    B_pad = x.shape[0]
    # No grid: every operand is a single full block resident in VMEM
    # (total ~3.4 MiB bf16 weights -> fits comfortably on v5e/v6e/v7x).
    return pl.pallas_call(
        _fc_stack_kernel,
        out_shape=jax.ShapeDtypeStruct((B_pad, 128), jnp.float32),
    )(x, w1, b1, w2, b2, w3, b3, w4, b4, w5, b5)


# ----------------------------------------------------------------------------
# Conv2d (valid padding, square kernel) + ReLU via NHWC im2col + Pallas GEMM.
# ----------------------------------------------------------------------------
def conv2d_relu_nhwc(x, wmat, bias, *, oc, ksize, stride):
    """x: (B, H, W, C) bf16, wmat: (ksize*ksize*C, 128) bf16, bias: (1,128) f32."""
    B, H, W, C = x.shape
    OH = (H - ksize) // stride + 1
    OW = (W - ksize) // stride + 1

    # im2col from NHWC: patch order = (kh, kw, c), channels already last so the
    # reshape below is a pure view-style flatten (no transpose).
    cols = []
    for i in range(ksize):
        for j in range(ksize):
            cols.append(
                x[:, i:i + stride * OH:stride, j:j + stride * OW:stride, :])
    p = jnp.concatenate(cols, axis=-1).reshape(B * OH * OW, ksize * ksize * C)

    out = matmul_bias_act(p, wmat, bias, relu=True, out_dtype=jnp.bfloat16)
    # Slice the zero-padded channels back off; stay NHWC for the next layer.
    return out[:, :oc].reshape(B, OH, OW, oc)


# ----------------------------------------------------------------------------
# Parameter init (PyTorch layout, PyTorch-default-like uniform) + one-time prep.
# ----------------------------------------------------------------------------
def _init_conv(key, oc, ic, k):
    k1, k2 = jax.random.split(key)
    bound = 1.0 / jnp.sqrt(ic * k * k)
    w = jax.random.uniform(k1, (oc, ic, k, k), jnp.float32, -bound, bound)
    b = jax.random.uniform(k2, (oc,), jnp.float32, -bound, bound)
    return w, b


def _init_linear(key, in_f, out_f):
    k1, k2 = jax.random.split(key)
    bound = 1.0 / jnp.sqrt(in_f)
    w = jax.random.uniform(k1, (out_f, in_f), jnp.float32, -bound, bound)
    b = jax.random.uniform(k2, (out_f,), jnp.float32, -bound, bound)
    return w, b


def init_pilotnet_params(key):
    keys = jax.random.split(key, 10)
    return {
        "conv1": _init_conv(keys[0], 24, 4, 5),
        "conv2": _init_conv(keys[1], 36, 24, 5),
        "conv3": _init_conv(keys[2], 48, 36, 5),
        "conv4": _init_conv(keys[3], 64, 48, 3),
        "conv5": _init_conv(keys[4], 64, 64, 3),
        "fc1": _init_linear(keys[5], 1152, 1164),
        "fc2": _init_linear(keys[6], 1164, 100),
        "fc3": _init_linear(keys[7], 100, 50),
        "fc4": _init_linear(keys[8], 50, 10),
        "fc5": _init_linear(keys[9], 10, 1),
    }


def prepare_params(params):
    """One-time weight prep: transpose/permute/pad/cast (hoisted out of forward)."""
    prep = {}

    # Conv weights: (OC, C, KH, KW) -> (KH*KW*C, OC) matching im2col patch order
    # (kh, kw, c); pad OC -> 128 (lane-dense kernel output), bias padded too.
    for name in ("conv1", "conv2", "conv3", "conv4", "conv5"):
        w, b = params[name]
        oc = w.shape[0]
        wmat = jnp.transpose(w, (2, 3, 1, 0)).reshape(-1, oc)
        wmat = jnp.pad(wmat, ((0, 0), (0, 128 - oc))).astype(jnp.bfloat16)
        bpad = jnp.pad(b, (0, 128 - oc)).reshape(1, 128).astype(jnp.float32)
        prep[name] = (wmat, bpad)

    # FC weights: (out, in) -> (in_pad, out_pad), zero-padded (exact) and bf16.
    def prep_fc(w, b, k_pad, n_pad, permute_nhwc=False):
        out_f, in_f = w.shape
        wk = w.T  # (in, out)
        if permute_nhwc:
            # PyTorch flattens conv5's NCHW output (C=64, H=1, W=18); our
            # activations are NHWC-flattened (H, W, C). Permute fc1's input
            # rows so the two flatten orders agree.
            wk = wk.reshape(64, 1, 18, out_f).transpose(1, 2, 0, 3)
            wk = wk.reshape(in_f, out_f)
        wk = jnp.pad(wk, ((0, k_pad - in_f), (0, n_pad - out_f)))
        bp = jnp.pad(b, (0, n_pad - out_f)).reshape(1, n_pad)
        return wk.astype(jnp.bfloat16), bp.astype(jnp.float32)

    prep["fc"] = (
        prep_fc(*params["fc1"], 1152, 1280, permute_nhwc=True),
        prep_fc(*params["fc2"], 1280, 128),
        prep_fc(*params["fc3"], 128, 128),
        prep_fc(*params["fc4"], 128, 128),
        prep_fc(*params["fc5"], 128, 128),
    )
    return prep


# ----------------------------------------------------------------------------
# Forward pass (mirrors PilotNet.forward semantics).
# ----------------------------------------------------------------------------
_CONV_CFG = (
    ("conv1", 24, 5, 2),
    ("conv2", 36, 5, 2),
    ("conv3", 48, 5, 2),
    ("conv4", 64, 3, 1),
    ("conv5", 64, 3, 1),
)


def pilotnet_forward(prep, x_nchw):
    # NCHW -> NHWC once, bf16 activations throughout the conv stack.
    x = jnp.transpose(x_nchw, (0, 2, 3, 1)).astype(jnp.bfloat16)
    for name, oc, ksize, stride in _CONV_CFG:
        wmat, bias = prep[name]
        x = conv2d_relu_nhwc(x, wmat, bias, oc=oc, ksize=ksize, stride=stride)

    B = x.shape[0]
    x = x.reshape(B, -1)  # NHWC flatten; fc1 weight rows were permuted to match.
    B_pad = _round_up(B, 8)
    if B_pad != B:
        x = jnp.pad(x, ((0, B_pad - B), (0, 0)))

    out = fused_fc_stack(x, prep["fc"])  # (B_pad, 128) f32, column 0 is fc5.
    return out[:B, :1]


if __name__ == "__main__":
    key = jax.random.PRNGKey(0)
    k_params, k_x = jax.random.split(key)

    params = init_pilotnet_params(k_params)
    prep = prepare_params(params)

    # fc1 expects 1152 = 64 * 1 * 18 features after conv5, which implies the
    # canonical PilotNet input resolution of 66 x 200 (4 channels here).
    x = jax.random.normal(k_x, (2, 4, 66, 200), jnp.float32)

    fwd = jax.jit(pilotnet_forward)
    out = jax.block_until_ready(fwd(prep, x))
    assert out.shape == (2, 1), out.shape
    assert bool(jnp.all(jnp.isfinite(out))), "non-finite output"
    print("KERNEL_OK")
</pallas_src>

<mosaic_0001>
module attributes {stable_mosaic.version = 11 : i64} {
  func.func @_matmul_bias_act_kernel(%arg0: i32, %arg1: memref<1024x100xbf16, #tpu.memory_space<vmem>>, %arg2: memref<100x128xbf16, #tpu.memory_space<vmem>>, %arg3: memref<1x128xf32, #tpu.memory_space<vmem>>, %arg4: memref<1024x128xbf16, #tpu.memory_space<vmem>>) attributes {dimension_semantics = [#tpu.dimension_semantics<parallel>], iteration_bounds = array<i64: 6>, scalar_prefetch = 0 : i64, scratch_operands = 0 : i64, tpu.core_type = #tpu.core_type<tc>, window_params = [{transform_indices = @transform_0, window_bounds = array<i64: 1024, 100>}, {pipeline_mode = #tpu.pipeline_mode<synchronous>, transform_indices = @transform_1, window_bounds = array<i64: 100, 128>}, {pipeline_mode = #tpu.pipeline_mode<synchronous>, transform_indices = @transform_2, window_bounds = array<i64: 1, 128>}, {transform_indices = @transform_3, window_bounds = array<i64: 1024, 128>}]} {
    %c0 = arith.constant 0 : index
    %c0_0 = arith.constant 0 : index
    %0 = vector.load %arg1[%c0, %c0_0] : memref<1024x100xbf16, #tpu.memory_space<vmem>>, vector<1024x100xbf16>
    %c0_1 = arith.constant 0 : index
    %c0_2 = arith.constant 0 : index
    %1 = vector.load %arg2[%c0_1, %c0_2] : memref<100x128xbf16, #tpu.memory_space<vmem>>, vector<100x128xbf16>
    %cst = arith.constant dense<0.000000e+00> : vector<1024x128xf32>
    %2 = tpu.matmul %0, %1, %cst {dimension_numbers = #tpu.dot_dimension_numbers<[1], [0], [0], [1], [0, 0, 1, 1], [], []>} : vector<1024x100xbf16>, vector<100x128xbf16>, vector<1024x128xf32> -> vector<1024x128xf32>
    %c0_3 = arith.constant 0 : index
    %c0_4 = arith.constant 0 : index
    %3 = vector.load %arg3[%c0_3, %c0_4] : memref<1x128xf32, #tpu.memory_space<vmem>>, vector<1x128xf32>
    %4 = vector.broadcast %3 : vector<1x128xf32> to vector<1024x128xf32>
    %5 = arith.addf %2, %4 : vector<1024x128xf32>
    %cst_5 = arith.constant 0.000000e+00 : f32
    %6 = vector.broadcast %cst_5 : f32 to vector<1024x128xf32>
    %7 = arith.maximumf %5, %6 : vector<1024x128xf32>
    %8 = arith.truncf %7 : vector<1024x128xf32> to vector<1024x128xbf16>
    %c0_6 = arith.constant 0 : index
    %c0_7 = arith.constant 0 : index
    %9 = vector.load %arg4[%c0_6, %c0_7] : memref<1024x128xbf16, #tpu.memory_space<vmem>>, vector<1024x128xbf16>
    tpu.vector_store %arg4[%c0_6, %c0_7], %8 {strides = array<i32>} : memref<1024x128xbf16, #tpu.memory_space<vmem>>, vector<1024x128xbf16>,
    return
  }
  func.func @transform_0(%arg0: i32) -> (i32, i32) {
    %c0_i32 = arith.constant 0 : i32
    %c0_i32_0 = arith.constant 0 : i32
    return %arg0, %c0_i32 : i32, i32
  }
  func.func @transform_1(%arg0: i32) -> (i32, i32) {
    %c0_i32 = arith.constant 0 : i32
    %c0_i32_0 = arith.constant 0 : i32
    %c0_i32_1 = arith.constant 0 : i32
    return %c0_i32, %c0_i32_0 : i32, i32
  }
  func.func @transform_2(%arg0: i32) -> (i32, i32) {
    %c0_i32 = arith.constant 0 : i32
    %c0_i32_0 = arith.constant 0 : i32
    %c0_i32_1 = arith.constant 0 : i32
    return %c0_i32, %c0_i32_0 : i32, i32
  }
  func.func @transform_3(%arg0: i32) -> (i32, i32) {
    %c0_i32 = arith.constant 0 : i32
    %c0_i32_0 = arith.constant 0 : i32
    return %arg0, %c0_i32 : i32, i32
  }
}

module attributes {stable_mosaic.version = 11 : i64} {
  func.func @_matmul_bias_act_kernel(%arg0: i32, %arg1: memref<672x600xbf16, #tpu.memory_space<vmem>>, %arg2: memref<600x128xbf16, #tpu.memory_space<vmem>>, %arg3: memref<1x128xf32, #tpu.memory_space<vmem>>, %arg4: memref<672x128xbf16, #tpu.memory_space<vmem>>) attributes {dimension_semantics = [#tpu.dimension_semantics<parallel>], iteration_bounds = array<i64: 2>, scalar_prefetch = 0 : i64, scratch_operands = 0 : i64, tpu.core_type = #tpu.core_type<tc>, window_params = [{transform_indices = @transform_0, window_bounds = array<i64: 672, 600>}, {pipeline_mode = #tpu.pipeline_mode<synchronous>, transform_indices = @transform_1, window_bounds = array<i64: 600, 128>}, {pipeline_mode = #tpu.pipeline_mode<synchronous>, transform_indices = @transform_2, window_bounds = array<i64: 1, 128>}, {transform_indices = @transform_3, window_bounds = array<i64: 672, 128>}]} {
    %c0 = arith.constant 0 : index
    %c0_0 = arith.constant 0 : index
    %0 = vector.load %arg1[%c0, %c0_0] : memref<672x600xbf16, #tpu.memory_space<vmem>>, vector<672x600xbf16>
    %c0_1 = arith.constant 0 : index
    %c0_2 = arith.constant 0 : index
    %1 = vector.load %arg2[%c0_1, %c0_2] : memref<600x128xbf16, #tpu.memory_space<vmem>>, vector<600x128xbf16>
    %cst = arith.constant dense<0.000000e+00> : vector<672x128xf32>
    %2 = tpu.matmul %0, %1, %cst {dimension_numbers = #tpu.dot_dimension_numbers<[1], [0], [0], [1], [0, 0, 1, 1], [], []>} : vector<672x600xbf16>, vector<600x128xbf16>, vector<672x128xf32> -> vector<672x128xf32>
    %c0_3 = arith.constant 0 : index
    %c0_4 = arith.constant 0 : index
    %3 = vector.load %arg3[%c0_3, %c0_4] : memref<1x128xf32, #tpu.memory_space<vmem>>, vector<1x128xf32>
    %4 = vector.broadcast %3 : vector<1x128xf32> to vector<672x128xf32>
    %5 = arith.addf %2, %4 : vector<672x128xf32>
    %cst_5 = arith.constant 0.000000e+00 : f32
    %6 = vector.broadcast %cst_5 : f32 to vector<672x128xf32>
    %7 = arith.maximumf %5, %6 : vector<672x128xf32>
    %8 = arith.truncf %7 : vector<672x128xf32> to vector<672x128xbf16>
    %c0_6 = arith.constant 0 : index
    %c0_7 = arith.constant 0 : index
    %9 = vector.load %arg4[%c0_6, %c0_7] : memref<672x128xbf16, #tpu.memory_space<vmem>>, vector<672x128xbf16>
    tpu.vector_store %arg4[%c0_6, %c0_7], %8 {strides = array<i32>} : memref<672x128xbf16, #tpu.memory_space<vmem>>, vector<672x128xbf16>,
    return
  }
  func.func @transform_0(%arg0: i32) -> (i32, i32) {
    %c0_i32 = arith.constant 0 : i32
    %c0_i32_0 = arith.constant 0 : i32
    return %arg0, %c0_i32 : i32, i32
  }
  func.func @transform_1(%arg0: i32) -> (i32, i32) {
    %c0_i32 = arith.constant 0 : i32
    %c0_i32_0 = arith.constant 0 : i32
    %c0_i32_1 = arith.constant 0 : i32
    return %c0_i32, %c0_i32_0 : i32, i32
  }
  func.func @transform_2(%arg0: i32) -> (i32, i32) {
    %c0_i32 = arith.constant 0 : i32
    %c0_i32_0 = arith.constant 0 : i32
    %c0_i32_1 = arith.constant 0 : i32
    return %c0_i32, %c0_i32_0 : i32, i32
  }
  func.func @transform_3(%arg0: i32) -> (i32, i32) {
    %c0_i32 = arith.constant 0 : i32
    %c0_i32_0 = arith.constant 0 : i32
    return %arg0, %c0_i32 : i32, i32
  }
}

module attributes {stable_mosaic.version = 11 : i64} {
  func.func @_matmul_bias_act_kernel(%arg0: i32, %arg1: memref<224x900xbf16, #tpu.memory_space<vmem>>, %arg2: memref<900x128xbf16, #tpu.memory_space<vmem>>, %arg3: memref<1x128xf32, #tpu.memory_space<vmem>>, %arg4: memref<224x128xbf16, #tpu.memory_space<vmem>>) attributes {dimension_semantics = [#tpu.dimension_semantics<parallel>], iteration_bounds = array<i64: 1>, scalar_prefetch = 0 : i64, scratch_operands = 0 : i64, tpu.core_type = #tpu.core_type<tc>, window_params = [{transform_indices = @transform_0, window_bounds = array<i64: 224, 900>}, {pipeline_mode = #tpu.pipeline_mode<synchronous>, transform_indices = @transform_1, window_bounds = array<i64: 900, 128>}, {pipeline_mode = #tpu.pipeline_mode<synchronous>, transform_indices = @transform_2, window_bounds = array<i64: 1, 128>}, {transform_indices = @transform_3, window_bounds = array<i64: 224, 128>}]} {
    %c0 = arith.constant 0 : index
    %c0_0 = arith.constant 0 : index
    %0 = vector.load %arg1[%c0, %c0_0] : memref<224x900xbf16, #tpu.memory_space<vmem>>, vector<224x900xbf16>
    %c0_1 = arith.constant 0 : index
    %c0_2 = arith.constant 0 : index
    %1 = vector.load %arg2[%c0_1, %c0_2] : memref<900x128xbf16, #tpu.memory_space<vmem>>, vector<900x128xbf16>
    %cst = arith.constant dense<0.000000e+00> : vector<224x128xf32>
    %2 = tpu.matmul %0, %1, %cst {dimension_numbers = #tpu.dot_dimension_numbers<[1], [0], [0], [1], [0, 0, 1, 1], [], []>} : vector<224x900xbf16>, vector<900x128xbf16>, vector<224x128xf32> -> vector<224x128xf32>
    %c0_3 = arith.constant 0 : index
    %c0_4 = arith.constant 0 : index
    %3 = vector.load %arg3[%c0_3, %c0_4] : memref<1x128xf32, #tpu.memory_space<vmem>>, vector<1x128xf32>
    %4 = vector.broadcast %3 : vector<1x128xf32> to vector<224x128xf32>
    %5 = arith.addf %2, %4 : vector<224x128xf32>
    %cst_5 = arith.constant 0.000000e+00 : f32
    %6 = vector.broadcast %cst_5 : f32 to vector<224x128xf32>
    %7 = arith.maximumf %5, %6 : vector<224x128xf32>
    %8 = arith.truncf %7 : vector<224x128xf32> to vector<224x128xbf16>
    %c0_6 = arith.constant 0 : index
    %c0_7 = arith.constant 0 : index
    %9 = vector.load %arg4[%c0_6, %c0_7] : memref<224x128xbf16, #tpu.memory_space<vmem>>, vector<224x128xbf16>
    tpu.vector_store %arg4[%c0_6, %c0_7], %8 {strides = array<i32>} : memref<224x128xbf16, #tpu.memory_space<vmem>>, vector<224x128xbf16>,
    return
  }
  func.func @transform_0(%arg0: i32) -> (i32, i32) {
    %c0_i32 = arith.constant 0 : i32
    %c0_i32_0 = arith.constant 0 : i32
    return %arg0, %c0_i32 : i32, i32
  }
  func.func @transform_1(%arg0: i32) -> (i32, i32) {
    %c0_i32 = arith.constant 0 : i32
    %c0_i32_0 = arith.constant 0 : i32
    %c0_i32_1 = arith.constant 0 : i32
    return %c0_i32, %c0_i32_0 : i32, i32
  }
  func.func @transform_2(%arg0: i32) -> (i32, i32) {
    %c0_i32 = arith.constant 0 : i32
    %c0_i32_0 = arith.constant 0 : i32
    %c0_i32_1 = arith.constant 0 : i32
    return %c0_i32, %c0_i32_0 : i32, i32
  }
  func.func @transform_3(%arg0: i32) -> (i32, i32) {
    %c0_i32 = arith.constant 0 : i32
    %c0_i32_0 = arith.constant 0 : i32
    return %arg0, %c0_i32 : i32, i32
  }
}

module attributes {stable_mosaic.version = 11 : i64} {
  func.func @_matmul_bias_act_kernel(%arg0: i32, %arg1: memref<128x432xbf16, #tpu.memory_space<vmem>>, %arg2: memref<432x128xbf16, #tpu.memory_space<vmem>>, %arg3: memref<1x128xf32, #tpu.memory_space<vmem>>, %arg4: memref<128x128xbf16, #tpu.memory_space<vmem>>) attributes {dimension_semantics = [#tpu.dimension_semantics<parallel>], iteration_bounds = array<i64: 1>, scalar_prefetch = 0 : i64, scratch_operands = 0 : i64, tpu.core_type = #tpu.core_type<tc>, window_params = [{transform_indices = @transform_0, window_bounds = array<i64: 128, 432>}, {pipeline_mode = #tpu.pipeline_mode<synchronous>, transform_indices = @transform_1, window_bounds = array<i64: 432, 128>}, {pipeline_mode = #tpu.pipeline_mode<synchronous>, transform_indices = @transform_2, window_bounds = array<i64: 1, 128>}, {transform_indices = @transform_3, window_bounds = array<i64: 128, 128>}]} {
    %c0 = arith.constant 0 : index
    %c0_0 = arith.constant 0 : index
    %0 = vector.load %arg1[%c0, %c0_0] : memref<128x432xbf16, #tpu.memory_space<vmem>>, vector<128x432xbf16>
    %c0_1 = arith.constant 0 : index
    %c0_2 = arith.constant 0 : index
    %1 = vector.load %arg2[%c0_1, %c0_2] : memref<432x128xbf16, #tpu.memory_space<vmem>>, vector<432x128xbf16>
    %cst = arith.constant dense<0.000000e+00> : vector<128x128xf32>
    %2 = tpu.matmul %0, %1, %cst {dimension_numbers = #tpu.dot_dimension_numbers<[1], [0], [0], [1], [0, 0, 1, 1], [], []>} : vector<128x432xbf16>, vector<432x128xbf16>, vector<128x128xf32> -> vector<128x128xf32>
    %c0_3 = arith.constant 0 : index
    %c0_4 = arith.constant 0 : index
    %3 = vector.load %arg3[%c0_3, %c0_4] : memref<1x128xf32, #tpu.memory_space<vmem>>, vector<1x128xf32>
    %4 = vector.broadcast %3 : vector<1x128xf32> to vector<128x128xf32>
    %5 = arith.addf %2, %4 : vector<128x128xf32>
    %cst_5 = arith.constant 0.000000e+00 : f32
    %6 = vector.broadcast %cst_5 : f32 to vector<128x128xf32>
    %7 = arith.maximumf %5, %6 : vector<128x128xf32>
    %8 = arith.truncf %7 : vector<128x128xf32> to vector<128x128xbf16>
    %c0_6 = arith.constant 0 : index
    %c0_7 = arith.constant 0 : index
    %9 = vector.load %arg4[%c0_6, %c0_7] : memref<128x128xbf16, #tpu.memory_space<vmem>>, vector<128x128xbf16>
    tpu.vector_store %arg4[%c0_6, %c0_7], %8 {strides = array<i32>} : memref<128x128xbf16, #tpu.memory_space<vmem>>, vector<128x128xbf16>,
    return
  }
  func.func @transform_0(%arg0: i32) -> (i32, i32) {
    %c0_i32 = arith.constant 0 : i32
    %c0_i32_0 = arith.constant 0 : i32
    return %arg0, %c0_i32 : i32, i32
  }
  func.func @transform_1(%arg0: i32) -> (i32, i32) {
    %c0_i32 = arith.constant 0 : i32
    %c0_i32_0 = arith.constant 0 : i32
    %c0_i32_1 = arith.constant 0 : i32
    return %c0_i32, %c0_i32_0 : i32, i32
  }
  func.func @transform_2(%arg0: i32) -> (i32, i32) {
    %c0_i32 = arith.constant 0 : i32
    %c0_i32_0 = arith.constant 0 : i32
    %c0_i32_1 = arith.constant 0 : i32
    return %c0_i32, %c0_i32_0 : i32, i32
  }
  func.func @transform_3(%arg0: i32) -> (i32, i32) {
    %c0_i32 = arith.constant 0 : i32
    %c0_i32_0 = arith.constant 0 : i32
    return %arg0, %c0_i32 : i32, i32
  }
}

module attributes {stable_mosaic.version = 11 : i64} {
  func.func @_matmul_bias_act_kernel(%arg0: i32, %arg1: memref<48x576xbf16, #tpu.memory_space<vmem>>, %arg2: memref<576x128xbf16, #tpu.memory_space<vmem>>, %arg3: memref<1x128xf32, #tpu.memory_space<vmem>>, %arg4: memref<48x128xbf16, #tpu.memory_space<vmem>>) attributes {dimension_semantics = [#tpu.dimension_semantics<parallel>], iteration_bounds = array<i64: 1>, scalar_prefetch = 0 : i64, scratch_operands = 0 : i64, tpu.core_type = #tpu.core_type<tc>, window_params = [{transform_indices = @transform_0, window_bounds = array<i64: 48, 576>}, {pipeline_mode = #tpu.pipeline_mode<synchronous>, transform_indices = @transform_1, window_bounds = array<i64: 576, 128>}, {pipeline_mode = #tpu.pipeline_mode<synchronous>, transform_indices = @transform_2, window_bounds = array<i64: 1, 128>}, {transform_indices = @transform_3, window_bounds = array<i64: 48, 128>}]} {
    %c0 = arith.constant 0 : index
    %c0_0 = arith.constant 0 : index
    %0 = vector.load %arg1[%c0, %c0_0] : memref<48x576xbf16, #tpu.memory_space<vmem>>, vector<48x576xbf16>
    %c0_1 = arith.constant 0 : index
    %c0_2 = arith.constant 0 : index
    %1 = vector.load %arg2[%c0_1, %c0_2] : memref<576x128xbf16, #tpu.memory_space<vmem>>, vector<576x128xbf16>
    %cst = arith.constant dense<0.000000e+00> : vector<48x128xf32>
    %2 = tpu.matmul %0, %1, %cst {dimension_numbers = #tpu.dot_dimension_numbers<[1], [0], [0], [1], [0, 0, 1, 1], [], []>} : vector<48x576xbf16>, vector<576x128xbf16>, vector<48x128xf32> -> vector<48x128xf32>
    %c0_3 = arith.constant 0 : index
    %c0_4 = arith.constant 0 : index
    %3 = vector.load %arg3[%c0_3, %c0_4] : memref<1x128xf32, #tpu.memory_space<vmem>>, vector<1x128xf32>
    %4 = vector.broadcast %3 : vector<1x128xf32> to vector<48x128xf32>
    %5 = arith.addf %2, %4 : vector<48x128xf32>
    %cst_5 = arith.constant 0.000000e+00 : f32
    %6 = vector.broadcast %cst_5 : f32 to vector<48x128xf32>
    %7 = arith.maximumf %5, %6 : vector<48x128xf32>
    %8 = arith.truncf %7 : vector<48x128xf32> to vector<48x128xbf16>
    %c0_6 = arith.constant 0 : index
    %c0_7 = arith.constant 0 : index
    %9 = vector.load %arg4[%c0_6, %c0_7] : memref<48x128xbf16, #tpu.memory_space<vmem>>, vector<48x128xbf16>
    tpu.vector_store %arg4[%c0_6, %c0_7], %8 {strides = array<i32>} : memref<48x128xbf16, #tpu.memory_space<vmem>>, vector<48x128xbf16>,
    return
  }
  func.func @transform_0(%arg0: i32) -> (i32, i32) {
    %c0_i32 = arith.constant 0 : i32
    %c0_i32_0 = arith.constant 0 : i32
    return %arg0, %c0_i32 : i32, i32
  }
  func.func @transform_1(%arg0: i32) -> (i32, i32) {
    %c0_i32 = arith.constant 0 : i32
    %c0_i32_0 = arith.constant 0 : i32
    %c0_i32_1 = arith.constant 0 : i32
    return %c0_i32, %c0_i32_0 : i32, i32
  }
  func.func @transform_2(%arg0: i32) -> (i32, i32) {
    %c0_i32 = arith.constant 0 : i32
    %c0_i32_0 = arith.constant 0 : i32
    %c0_i32_1 = arith.constant 0 : i32
    return %c0_i32, %c0_i32_0 : i32, i32
  }
  func.func @transform_3(%arg0: i32) -> (i32, i32) {
    %c0_i32 = arith.constant 0 : i32
    %c0_i32_0 = arith.constant 0 : i32
    return %arg0, %c0_i32 : i32, i32
  }
}

module attributes {stable_mosaic.version = 11 : i64} {
  func.func @_fc_stack_kernel(%arg0: memref<8x1152xbf16, #tpu.memory_space<vmem>>, %arg1: memref<1152x1280xbf16, #tpu.memory_space<vmem>>, %arg2: memref<1x1280xf32, #tpu.memory_space<vmem>>, %arg3: memref<1280x128xbf16, #tpu.memory_space<vmem>>, %arg4: memref<1x128xf32, #tpu.memory_space<vmem>>, %arg5: memref<128x128xbf16, #tpu.memory_space<vmem>>, %arg6: memref<1x128xf32, #tpu.memory_space<vmem>>, %arg7: memref<128x128xbf16, #tpu.memory_space<vmem>>, %arg8: memref<1x128xf32, #tpu.memory_space<vmem>>, %arg9: memref<128x128xbf16, #tpu.memory_space<vmem>>, %arg10: memref<1x128xf32, #tpu.memory_space<vmem>>, %arg11: memref<8x128xf32, #tpu.memory_space<vmem>>) attributes {dimension_semantics = [], scalar_prefetch = 0 : i64, scratch_operands = 0 : i64, tpu.core_type = #tpu.core_type<tc>} {
    %c0 = arith.constant 0 : index
    %c0_0 = arith.constant 0 : index
    %0 = vector.load %arg0[%c0, %c0_0] : memref<8x1152xbf16, #tpu.memory_space<vmem>>, vector<8x1152xbf16>
    %c0_1 = arith.constant 0 : index
    %c0_2 = arith.constant 0 : index
    %1 = vector.load %arg1[%c0_1, %c0_2] : memref<1152x1280xbf16, #tpu.memory_space<vmem>>, vector<1152x1280xbf16>
    %cst = arith.constant dense<0.000000e+00> : vector<8x1280xf32>
    %2 = tpu.matmul %0, %1, %cst {dimension_numbers = #tpu.dot_dimension_numbers<[1], [0], [0], [1], [0, 0, 1, 1], [], []>} : vector<8x1152xbf16>, vector<1152x1280xbf16>, vector<8x1280xf32> -> vector<8x1280xf32>
    %c0_3 = arith.constant 0 : index
    %c0_4 = arith.constant 0 : index
    %3 = vector.load %arg2[%c0_3, %c0_4] : memref<1x1280xf32, #tpu.memory_space<vmem>>, vector<1x1280xf32>
    %4 = vector.broadcast %3 : vector<1x1280xf32> to vector<8x1280xf32>
    %5 = arith.addf %2, %4 : vector<8x1280xf32>
    %cst_5 = arith.constant 0.000000e+00 : f32
    %6 = vector.broadcast %cst_5 : f32 to vector<8x1280xf32>
    %7 = arith.maximumf %5, %6 : vector<8x1280xf32>
    %8 = arith.truncf %7 : vector<8x1280xf32> to vector<8x1280xbf16>
    %c0_6 = arith.constant 0 : index
    %c0_7 = arith.constant 0 : index
    %9 = vector.load %arg3[%c0_6, %c0_7] : memref<1280x128xbf16, #tpu.memory_space<vmem>>, vector<1280x128xbf16>
    %cst_8 = arith.constant dense<0.000000e+00> : vector<8x128xf32>
    %10 = tpu.matmul %8, %9, %cst_8 {dimension_numbers = #tpu.dot_dimension_numbers<[1], [0], [0], [1], [0, 0, 1, 1], [], []>} : vector<8x1280xbf16>, vector<1280x128xbf16>, vector<8x128xf32> -> vector<8x128xf32>
    %c0_9 = arith.constant 0 : index
    %c0_10 = arith.constant 0 : index
    %11 = vector.load %arg4[%c0_9, %c0_10] : memref<1x128xf32, #tpu.memory_space<vmem>>, vector<1x128xf32>
    %12 = vector.broadcast %11 : vector<1x128xf32> to vector<8x128xf32>
    %13 = arith.addf %10, %12 : vector<8x128xf32>
    %cst_11 = arith.constant 0.000000e+00 : f32
    %14 = vector.broadcast %cst_11 : f32 to vector<8x128xf32>
    %15 = arith.maximumf %13, %14 : vector<8x128xf32>
    %16 = arith.truncf %15 : vector<8x128xf32> to vector<8x128xbf16>
    %c0_12 = arith.constant 0 : index
    %c0_13 = arith.constant 0 : index
    %17 = vector.load %arg5[%c0_12, %c0_13] : memref<128x128xbf16, #tpu.memory_space<vmem>>, vector<128x128xbf16>
    %cst_14 = arith.constant dense<0.000000e+00> : vector<8x128xf32>
    %18 = tpu.matmul %16, %17, %cst_14 {dimension_numbers = #tpu.dot_dimension_numbers<[1], [0], [0], [1], [0, 0, 1, 1], [], []>} : vector<8x128xbf16>, vector<128x128xbf16>, vector<8x128xf32> -> vector<8x128xf32>
    %c0_15 = arith.constant 0 : index
    %c0_16 = arith.constant 0 : index
    %19 = vector.load %arg6[%c0_15, %c0_16] : memref<1x128xf32, #tpu.memory_space<vmem>>, vector<1x128xf32>
    %20 = vector.broadcast %19 : vector<1x128xf32> to vector<8x128xf32>
    %21 = arith.addf %18, %20 : vector<8x128xf32>
    %cst_17 = arith.constant 0.000000e+00 : f32
    %22 = vector.broadcast %cst_17 : f32 to vector<8x128xf32>
    %23 = arith.maximumf %21, %22 : vector<8x128xf32>
    %24 = arith.truncf %23 : vector<8x128xf32> to vector<8x128xbf16>
    %c0_18 = arith.constant 0 : index
    %c0_19 = arith.constant 0 : index
    %25 = vector.load %arg7[%c0_18, %c0_19] : memref<128x128xbf16, #tpu.memory_space<vmem>>, vector<128x128xbf16>
    %cst_20 = arith.constant dense<0.000000e+00> : vector<8x128xf32>
    %26 = tpu.matmul %24, %25, %cst_20 {dimension_numbers = #tpu.dot_dimension_numbers<[1], [0], [0], [1], [0, 0, 1, 1], [], []>} : vector<8x128xbf16>, vector<128x128xbf16>, vector<8x128xf32> -> vector<8x128xf32>
    %c0_21 = arith.constant 0 : index
    %c0_22 = arith.constant 0 : index
    %27 = vector.load %arg8[%c0_21, %c0_22] : memref<1x128xf32, #tpu.memory_space<vmem>>, vector<1x128xf32>
    %28 = vector.broadcast %27 : vector<1x128xf32> to vector<8x128xf32>
    %29 = arith.addf %26, %28 : vector<8x128xf32>
    %cst_23 = arith.constant 0.000000e+00 : f32
    %30 = vector.broadcast %cst_23 : f32 to vector<8x128xf32>
    %31 = arith.maximumf %29, %30 : vector<8x128xf32>
    %32 = arith.truncf %31 : vector<8x128xf32> to vector<8x128xbf16>
    %c0_24 = arith.constant 0 : index
    %c0_25 = arith.constant 0 : index
    %33 = vector.load %arg9[%c0_24, %c0_25] : memref<128x128xbf16, #tpu.memory_space<vmem>>, vector<128x128xbf16>
    %cst_26 = arith.constant dense<0.000000e+00> : vector<8x128xf32>
    %34 = tpu.matmul %32, %33, %cst_26 {dimension_numbers = #tpu.dot_dimension_numbers<[1], [0], [0], [1], [0, 0, 1, 1], [], []>} : vector<8x128xbf16>, vector<128x128xbf16>, vector<8x128xf32> -> vector<8x128xf32>
    %c0_27 = arith.constant 0 : index
    %c0_28 = arith.constant 0 : index
    %35 = vector.load %arg10[%c0_27, %c0_28] : memref<1x128xf32, #tpu.memory_space<vmem>>, vector<1x128xf32>
    %36 = vector.broadcast %35 : vector<1x128xf32> to vector<8x128xf32>
    %37 = arith.addf %34, %36 : vector<8x128xf32>
    %c0_29 = arith.constant 0 : index
    %c0_30 = arith.constant 0 : index
    %38 = vector.load %arg11[%c0_29, %c0_30] : memref<8x128xf32, #tpu.memory_space<vmem>>, vector<8x128xf32>
    tpu.vector_store %arg11[%c0_29, %c0_30], %37 {strides = array<i32>} : memref<8x128xf32, #tpu.memory_space<vmem>>, vector<8x128xf32>,
    return
  }
}

</mosaic_0001>

<llo_original>
// kernel: pilotnet_forward.6
$region0: #{pilotnet_forward.6}
  #allocation0 [shape = 'u32[]', space=smem, size = 0x4, offset = 0x4, fixed_abs, tag = 'smem constant byte address 0x4 - core index']
  #allocation1 [shape = 'u32[72,128]{1,0:T(1,128)}', space=vmem, size = 0x9000, scoped, tag = 'internal scratch']
  %s0 = inlined_call_operand.vmem [shape: bf16[6144,100], index: 0, kind: input, shape index: {}]
  %s1 = inlined_call_operand.vmem [shape: bf16[100,128], index: 1, kind: input, shape index: {}]
  %s2 = inlined_call_operand.vmem [shape: f32[1,128], index: 2, kind: input, shape index: {}]
  %s3 = inlined_call_operand.vmem [shape: bf16[6144,128], index: 3, kind: output, shape index: {}]
  %s4 = sld [smem:[#allocation0]]
  $region45: #{pilotnet_forward.6} parent=0
    _
  %s6 = ssub.s32 1, %s4
  %s7 = scalar_select 0, %s6, %s4
  loop: start=0, step=1, limit=8
  $region2: #{pilotnet_forward.6} parent=0 // loop_pre_header
    _
  $region3: #{pilotnet_forward.6} parent=0 // loop_header
    %s9 = sphi 0, %s13
    %p10 = scmp.ge.s32.totalorder %s9, 8
    %s19 = sphi 0, %s21
    %s22 = sphi 0, %s19
    %s23 = sphi 0, %s22
    %s39 = sphi 0, %s23
    %s43 = sphi 0, %s43
    %s45 = sphi 0, %s43
    %s46 = sphi 0, %s45
    %s60 = sphi 0, %s46
    %s64 = sphi 0, %s64
    %s66 = sphi 0, %s64
    %s67 = sphi 0, %s66
    %s81 = sphi 0, %s67
    %s87 = sphi 0, %s89
    %s90 = sphi 0, %s87
    %s91 = sphi 0, %s90
    %s107 = sphi 0, %s91
  $region4: #{pilotnet_forward.6} parent=0 // loop_header_branch
    %12 = sbr.rel (%p10) target = $region8
  $region5: #{pilotnet_forward.6} parent=0 // loop_body
    %s14 = ssub.s32 %s9, 1
    %s15 = ssub.s32 %s9, 2
    %s16 = sadd.s32 %s9, 1
    %s17 = ssub.s32 %s9, %s16
    %p18 = scmp.eq.s32.totalorder %s17, 0
    %s20 = sadd.s32 %s19, 1
    %s21 = scalar_select %p18, %s19, %s20
    %p24 = pneg %p18
    %p25 = scmp.eq.s32.totalorder %s9, 5
    %p26 = por %p24, %p25
    %p27 = scmp.ne.s32.totalorder %s19, %s22
    %p28 = scmp.eq.s32.totalorder %s9, 0
    %p29 = por %p27, %p28
    %p30 = scmp.ne.s32.totalorder %s19, %s22
    %p31 = scmp.eq.s32.totalorder %s14, 5
    %p32 = por %p30, %p31
    %p33 = scmp.ne.s32.totalorder %s22, %s23
    %p34 = scmp.eq.s32.totalorder %s14, 0
    %p35 = por %p33, %p34
    %p36 = scmp.ne.s32.totalorder %s22, %s23
    %p37 = scmp.eq.s32.totalorder %s15, 5
    %p38 = por %p36, %p37
    %p40 = scmp.ne.s32.totalorder %s23, %s39
    %p41 = scmp.eq.s32.totalorder %s15, 0
    %p42 = por %p40, %p41
    %s44 = sadd.s32 %s43, 1
    %p47 = scmp.eq.s32.totalorder %s9, 5
    %p48 = scmp.ne.s32.totalorder %s43, %s45
    %p49 = scmp.eq.s32.totalorder %s9, 0
    %p50 = por %p48, %p49
    %p51 = scmp.ne.s32.totalorder %s43, %s45
    %p52 = scmp.eq.s32.totalorder %s14, 5
    %p53 = por %p51, %p52
    %p54 = scmp.ne.s32.totalorder %s45, %s46
    %p55 = scmp.eq.s32.totalorder %s14, 0
    %p56 = por %p54, %p55
    %p57 = scmp.ne.s32.totalorder %s45, %s46
    %p58 = scmp.eq.s32.totalorder %s15, 5
    %p59 = por %p57, %p58
    %p61 = scmp.ne.s32.totalorder %s46, %s60
    %p62 = scmp.eq.s32.totalorder %s15, 0
    %p63 = por %p61, %p62
    %s65 = sadd.s32 %s64, 1
    %p68 = scmp.eq.s32.totalorder %s9, 5
    %p69 = scmp.ne.s32.totalorder %s64, %s66
    %p70 = scmp.eq.s32.totalorder %s9, 0
    %p71 = por %p69, %p70
    %p72 = scmp.ne.s32.totalorder %s64, %s66
    %p73 = scmp.eq.s32.totalorder %s14, 5
    %p74 = por %p72, %p73
    %p75 = scmp.ne.s32.totalorder %s66, %s67
    %p76 = scmp.eq.s32.totalorder %s14, 0
    %p77 = por %p75, %p76
    %p78 = scmp.ne.s32.totalorder %s66, %s67
    %p79 = scmp.eq.s32.totalorder %s15, 5
    %p80 = por %p78, %p79
    %p82 = scmp.ne.s32.totalorder %s67, %s81
    %p83 = scmp.eq.s32.totalorder %s15, 0
    %p84 = por %p82, %p83
    %s85 = ssub.s32 %s9, %s16
    %p86 = scmp.eq.s32.totalorder %s85, 0
    %s88 = sadd.s32 %s87, 1
    %s89 = scalar_select %p86, %s87, %s88
    %p92 = pneg %p86
    %p93 = scmp.eq.s32.totalorder %s9, 5
    %p94 = por %p92, %p93
    %p95 = scmp.ne.s32.totalorder %s87, %s90
    %p96 = scmp.eq.s32.totalorder %s9, 0
    %p97 = por %p95, %p96
    %p98 = scmp.ne.s32.totalorder %s87, %s90
    %p99 = scmp.eq.s32.totalorder %s14, 5
    %p100 = por %p98, %p99
    %p101 = scmp.ne.s32.totalorder %s90, %s91
    %p102 = scmp.eq.s32.totalorder %s14, 0
    %p103 = por %p101, %p102
    %p104 = scmp.ne.s32.totalorder %s90, %s91
    %p105 = scmp.eq.s32.totalorder %s15, 5
    %p106 = por %p104, %p105
    %p108 = scmp.ne.s32.totalorder %s91, %s107
    %p109 = scmp.eq.s32.totalorder %s15, 0
    %p110 = por %p108, %p109
    %p111 = scmp.le.s32.totalorder 1, %s9
    %p112 = scmp.lt.s32.totalorder %s9, 7
    %p113 = pnand %p111, %p112
    %p114 = pneg %p113
    // Predicated region
    $region9: #{pilotnet_forward.6} parent=5 // pred_check
      _
    $region10: #{pilotnet_forward.6} parent=5 // pred_check_branch
      %116 = sbr.rel (%p113) target = $region12
    $region11: #{pilotnet_forward.6} parent=5 // pred_region
      %s117 = ssub.s32 %s9, 1
      // Predicated region
      $region13: #{pilotnet_forward.6} parent=11 // pred_check
        %p118 = pneg %p56
      $region14: #{pilotnet_forward.6} parent=11 // pred_check_branch
        %120 = sbr.rel (%p118) target = $region16
      $region15: #{pilotnet_forward.6} parent=11 // pred_region
        _
      $region16: #{pilotnet_forward.6} parent=11 // pred_fallthru
        _
      // Predicated region
      $region17: #{pilotnet_forward.6} parent=11 // pred_check
        %p121 = pneg %p77
      $region18: #{pilotnet_forward.6} parent=11 // pred_check_branch
        %123 = sbr.rel (%p121) target = $region20
      $region19: #{pilotnet_forward.6} parent=11 // pred_region
        _
      $region20: #{pilotnet_forward.6} parent=11 // pred_fallthru
        _
    $region12: #{pilotnet_forward.6} parent=5 // pred_fallthru
      _
    %p124 = scmp.lt.s32.totalorder %s9, 6
    // Predicated region
    $region21: #{pilotnet_forward.6} parent=5 // pred_check
      %p125 = pneg %p124
    $region22: #{pilotnet_forward.6} parent=5 // pred_check_branch
      %127 = sbr.rel (%p125) target = $region24
    $region23: #{pilotnet_forward.6} parent=5 // pred_region
      // Predicated region
      $region25: #{pilotnet_forward.6} parent=23 // pred_check
        %p128 = pneg %p29
      $region26: #{pilotnet_forward.6} parent=23 // pred_check_branch
        %130 = sbr.rel (%p128) target = $region28
      $region27: #{pilotnet_forward.6} parent=23 // pred_region
        %s131 = smul.u32 128, %s9
        %p132 = scmp.lt.s32.totalorder %s131, 767
        %s133 = scalar_select %p132, %s131, 767
        %s134 = smul.addr %s133, 4
        %s135 = scalar_lea.vmem %s0, %s134
        %s136 = smul.u32 128, %s9
      $region28: #{pilotnet_forward.6} parent=23 // pred_fallthru
        _
    $region24: #{pilotnet_forward.6} parent=5 // pred_fallthru
      _
    %p137 = scmp.le.s32.totalorder 1, %s9
    %p138 = scmp.lt.s32.totalorder %s9, 7
    %p139 = pnand %p137, %p138
    %p140 = pneg %p139
    // Predicated region
    $region29: #{pilotnet_forward.6} parent=5 // pred_check
      _
    $region30: #{pilotnet_forward.6} parent=5 // pred_check_branch
      %142 = sbr.rel (%p139) target = $region32
    $region31: #{pilotnet_forward.6} parent=5 // pred_region
      %s143 = ssub.s32 %s9, 1
      %s144 = smul.u32 128, %s14
      %p145 = scmp.lt.s32.totalorder %s144, 767
      %s146 = scalar_select %p145, %s144, 767
      %s147 = smul.addr %s146, 4
      %s148 = scalar_lea.vmem %s0, %s147
      %p149 = pneg %p35
      %p150 = pneg %p32
      %p151 = pneg %p56
      %p152 = pneg %p53
      %p153 = pneg %p77
      %p154 = pneg %p74
      %p155 = pneg %p103
      %p156 = pneg %p100
      %s157 = smul.u32 128, %s14
      %p158 = scmp.lt.s32.totalorder %s157, 767
      %s159 = scalar_select %p158, %s157, 767
      %s160 = smul.addr %s159, 4
      %s161 = scalar_lea.vmem %s3, %s160
      %s162 = smul.u32 128, %s14
      %p163 = scmp.lt.s32.totalorder %s162, 767
      %s164 = scalar_select %p163, %s162, 767
      %s165 = smul.addr %s164, 4
      %s166 = scalar_lea.vmem %s0, %s165
      %s167 = smul.u32 128, %s14
      %s168 = smul.u32 128, %s14
      %p169 = scmp.lt.s32.totalorder %s168, 767
      %s170 = scalar_select %p169, %s168, 767
      %s171 = smul.addr %s170, 4
      %s172 = scalar_lea.vmem %s3, %s171
      %s173 = smul.u32 128, %s14
      %v175 = vld [vmem:[%s166] sm:$0xf]
      %v176 = vld [vmem:[%s166 + $0x4] sm:$0xf]
      %v177 = vld [vmem:[%s166 + $0x8] sm:$0xf]
      %v178 = vld [vmem:[%s166 + $0xc] sm:$0xf]
      %v179 = vld [vmem:[%s166 + $0x10] sm:$0xf]
      %v180 = vld [vmem:[%s166 + $0x14] sm:$0xf]
      %v181 = vld [vmem:[%s166 + $0x18] sm:$0xf]
      %v182 = vld [vmem:[%s166 + $0x1c] sm:$0xf]
      %v183 = vld [vmem:[%s166 + $0x20] sm:$0xf]
      %v184 = vld [vmem:[%s166 + $0x24] sm:$0xf]
      %v185 = vld [vmem:[%s166 + $0x28] sm:$0xf]
      %v186 = vld [vmem:[%s166 + $0x2c] sm:$0xf]
      %v187 = vld [vmem:[%s166 + $0x30] sm:$0xf]
      %v188 = vld [vmem:[%s166 + $0x34] sm:$0xf]
      %v189 = vld [vmem:[%s166 + $0x38] sm:$0xf]
      %v190 = vld [vmem:[%s166 + $0x3c] sm:$0xf]
      %v191 = vld [vmem:[%s166 + $0x40] sm:$0xf]
      %v192 = vld [vmem:[%s166 + $0x44] sm:$0xf]
      %v193 = vld [vmem:[%s166 + $0x48] sm:$0xf]
      %v194 = vld [vmem:[%s166 + $0x4c] sm:$0xf]
      %v195 = vld [vmem:[%s166 + $0x50] sm:$0xf]
      %v196 = vld [vmem:[%s166 + $0x54] sm:$0xf]
      %v197 = vld [vmem:[%s166 + $0x58] sm:$0xf]
      %v198 = vld [vmem:[%s166 + $0x5c] sm:$0xf]
      %v199 = vld [vmem:[%s166 + $0x60] sm:$0xf]
      %v200 = vld [vmem:[%s166 + $0x64] sm:$0xf]
      %v201 = vld [vmem:[%s166 + $0x68] sm:$0xf]
      %v202 = vld [vmem:[%s166 + $0x6c] sm:$0xf]
      %v203 = vld [vmem:[%s166 + $0x70] sm:$0xf]
      %v204 = vld [vmem:[%s166 + $0x74] sm:$0xf]
      %v205 = vld [vmem:[%s166 + $0x78] sm:$0xf]
      %v206 = vld [vmem:[%s166 + $0x7c] sm:$0xf]
      %v207 = vld [vmem:[%s166 + $0x80] sm:$0xf]
      %v208 = vld [vmem:[%s166 + $0x84] sm:$0xf]
      %v209 = vld [vmem:[%s166 + $0x88] sm:$0xf]
      %v210 = vld [vmem:[%s166 + $0x8c] sm:$0xf]
      %v211 = vld [vmem:[%s166 + $0x90] sm:$0xf]
      %v212 = vld [vmem:[%s166 + $0x94] sm:$0xf]
      %v213 = vld [vmem:[%s166 + $0x98] sm:$0xf]
      %v214 = vld [vmem:[%s166 + $0x9c] sm:$0xf]
      %v215 = vld [vmem:[%s166 + $0xa0] sm:$0xf]
      %v216 = vld [vmem:[%s166 + $0xa4] sm:$0xf]
      %v217 = vld [vmem:[%s166 + $0xa8] sm:$0xf]
      %v218 = vld [vmem:[%s166 + $0xac] sm:$0xf]
      %v219 = vld [vmem:[%s166 + $0xb0] sm:$0xf]
      %v220 = vld [vmem:[%s166 + $0xb4] sm:$0xf]
      %v221 = vld [vmem:[%s166 + $0xb8] sm:$0xf]
      %v222 = vld [vmem:[%s166 + $0xbc] sm:$0xf]
      %v223 = vld [vmem:[%s166 + $0xc0] sm:$0xf]
      %v224 = vld [vmem:[%s166 + $0xc4] sm:$0xf]
      %v225 = vld [vmem:[%s166 + $0xc8] sm:$0xf]
      %v226 = vld [vmem:[%s166 + $0xcc] sm:$0xf]
      %v227 = vld [vmem:[%s166 + $0xd0] sm:$0xf]
      %v228 = vld [vmem:[%s166 + $0xd4] sm:$0xf]
      %v229 = vld [vmem:[%s166 + $0xd8] sm:$0xf]
      %v230 = vld [vmem:[%s166 + $0xdc] sm:$0xf]
      %v231 = vld [vmem:[%s166 + $0xe0] sm:$0xf]
      %v232 = vld [vmem:[%s166 + $0xe4] sm:$0xf]
      %v233 = vld [vmem:[%s166 + $0xe8] sm:$0xf]
      %v234 = vld [vmem:[%s166 + $0xec] sm:$0xf]
      %v235 = vld [vmem:[%s166 + $0xf0] sm:$0xf]
      %v236 = vld [vmem:[%s166 + $0xf4] sm:$0xf]
      %v237 = vld [vmem:[%s166 + $0xf8] sm:$0xf]
      %v238 = vld [vmem:[%s166 + $0xfc] sm:$0xf]
      %v239 = vld [vmem:[%s166 + $0x100] sm:$0xf]
      %v240 = vld [vmem:[%s166 + $0x104] sm:$0xf]
      %v241 = vld [vmem:[%s166 + $0x108] sm:$0xf]
      %v242 = vld [vmem:[%s166 + $0x10c] sm:$0xf]
      %v243 = vld [vmem:[%s166 + $0x110] sm:$0xf]
      %v244 = vld [vmem:[%s166 + $0x114] sm:$0xf]
      %v245 = vld [vmem:[%s166 + $0x118] sm:$0xf]
      %v246 = vld [vmem:[%s166 + $0x11c] sm:$0xf]
      %v247 = vld [vmem:[%s166 + $0x120] sm:$0xf]
      %v248 = vld [vmem:[%s166 + $0x124] sm:$0xf]
      %v249 = vld [vmem:[%s166 + $0x128] sm:$0xf]
      %v250 = vld [vmem:[%s166 + $0x12c] sm:$0xf]
      %v251 = vld [vmem:[%s166 + $0x130] sm:$0xf]
      %v252 = vld [vmem:[%s166 + $0x134] sm:$0xf]
      %v253 = vld [vmem:[%s166 + $0x138] sm:$0xf]
      %v254 = vld [vmem:[%s166 + $0x13c] sm:$0xf]
      %v255 = vld [vmem:[%s166 + $0x140] sm:$0xf]
      %v256 = vld [vmem:[%s166 + $0x144] sm:$0xf]
      %v257 = vld [vmem:[%s166 + $0x148] sm:$0xf]
      %v258 = vld [vmem:[%s166 + $0x14c] sm:$0xf]
      %v259 = vld [vmem:[%s166 + $0x150] sm:$0xf]
      %v260 = vld [vmem:[%s166 + $0x154] sm:$0xf]
      %v261 = vld [vmem:[%s166 + $0x158] sm:$0xf]
      %v262 = vld [vmem:[%s166 + $0x15c] sm:$0xf]
      %v263 = vld [vmem:[%s166 + $0x160] sm:$0xf]
      %v264 = vld [vmem:[%s166 + $0x164] sm:$0xf]
      %v265 = vld [vmem:[%s166 + $0x168] sm:$0xf]
      %v266 = vld [vmem:[%s166 + $0x16c] sm:$0xf]
      %v267 = vld [vmem:[%s166 + $0x170] sm:$0xf]
      %v268 = vld [vmem:[%s166 + $0x174] sm:$0xf]
      %v269 = vld [vmem:[%s166 + $0x178] sm:$0xf]
      %v270 = vld [vmem:[%s166 + $0x17c] sm:$0xf]
      %v271 = vld [vmem:[%s166 + $0x180] sm:$0xf]
      %v272 = vld [vmem:[%s166 + $0x184] sm:$0xf]
      %v273 = vld [vmem:[%s166 + $0x188] sm:$0xf]
      %v274 = vld [vmem:[%s166 + $0x18c] sm:$0xf]
      %v275 = vld [vmem:[%s166 + $0x190] sm:$0xf]
      %v276 = vld [vmem:[%s166 + $0x194] sm:$0xf]
      %v277 = vld [vmem:[%s166 + $0x198] sm:$0xf]
      %v278 = vld [vmem:[%s166 + $0x19c] sm:$0xf]
      %v279 = vld [vmem:[%s166 + $0x1a0] sm:$0xf]
      %v280 = vld [vmem:[%s166 + $0x1a4] sm:$0xf]
      %v281 = vld [vmem:[%s166 + $0x1a8] sm:$0xf]
      %v282 = vld [vmem:[%s166 + $0x1ac] sm:$0xf]
      %v283 = vld [vmem:[%s166 + $0x1b0] sm:$0xf]
      %v284 = vld [vmem:[%s166 + $0x1b4] sm:$0xf]
      %v285 = vld [vmem:[%s166 + $0x1b8] sm:$0xf]
      %v286 = vld [vmem:[%s166 + $0x1bc] sm:$0xf]
      %v287 = vld [vmem:[%s166 + $0x1c0] sm:$0xf]
      %v288 = vld [vmem:[%s166 + $0x1c4] sm:$0xf]
      %v289 = vld [vmem:[%s166 + $0x1c8] sm:$0xf]
      %v290 = vld [vmem:[%s166 + $0x1cc] sm:$0xf]
      %v291 = vld [vmem:[%s166 + $0x1d0] sm:$0xf]
      %v292 = vld [vmem:[%s166 + $0x1d4] sm:$0xf]
      %v293 = vld [vmem:[%s166 + $0x1d8] sm:$0xf]
      %v294 = vld [vmem:[%s166 + $0x1dc] sm:$0xf]
      %v295 = vld [vmem:[%s166 + $0x1e0] sm:$0xf]
      %v296 = vld [vmem:[%s166 + $0x1e4] sm:$0xf]
      %v297 = vld [vmem:[%s166 + $0x1e8] sm:$0xf]
      %v298 = vld [vmem:[%s166 + $0x1ec] sm:$0xf]
      %v299 = vld [vmem:[%s166 + $0x1f0] sm:$0xf]
      %v300 = vld [vmem:[%s166 + $0x1f4] sm:$0xf]
      %v301 = vld [vmem:[%s166 + $0x1f8] sm:$0xf]
      %v302 = vld [vmem:[%s166 + $0x1fc] sm:$0xf]
      %v303 = vld [vmem:[%s1] sm:$0xf]
      %v304 = vld [vmem:[%s1 + $0x4] sm:$0xf]
      %v305 = vld [vmem:[%s1 + $0x8] sm:$0xf]
      %v306 = vld [vmem:[%s1 + $0xc] sm:$0xf]
      %v307 = vld [vmem:[%s1 + $0x10] sm:$0xf]
      %v308 = vld [vmem:[%s1 + $0x14] sm:$0xf]
      %v309 = vld [vmem:[%s1 + $0x18] sm:$0xf]
      %v310 = vld [vmem:[%s1 + $0x1c] sm:$0xf]
      %v311 = vld [vmem:[%s1 + $0x20] sm:$0xf]
      %v312 = vld [vmem:[%s1 + $0x24] sm:$0xf]
      %v313 = vld [vmem:[%s1 + $0x28] sm:$0xf]
      %v314 = vld [vmem:[%s1 + $0x2c] sm:$0xf]
      %v315 = vld [vmem:[%s1 + $0x30] sm:$0x3]
      %v316 = vld [vmem:[%s2] sm:$0x1]
      %v318 = vperm.slane %v316, 0
      %v448 = vunpack.c.l.b16 %v175
      %v449 = vunpack.c.l.b16 %v176
      %v450 = vunpack.c.l.b16 %v177
      %v451 = vunpack.c.l.b16 %v178
      %v452 = vunpack.c.l.b16 %v179
      %v453 = vunpack.c.l.b16 %v180
      %v454 = vunpack.c.l.b16 %v181
      %v455 = vunpack.c.l.b16 %v182
      %v456 = vunpack.c.l.b16 %v183
      %v457 = vunpack.c.l.b16 %v184
      %v458 = vunpack.c.l.b16 %v185
      %v459 = vunpack.c.l.b16 %v186
      %v460 = vunpack.c.l.b16 %v187
      %v461 = vunpack.c.l.b16 %v188
      %v462 = vunpack.c.l.b16 %v189
      %v463 = vunpack.c.l.b16 %v190
      %v464 = vunpack.c.l.b16 %v191
      %v465 = vunpack.c.l.b16 %v192
      %v466 = vunpack.c.l.b16 %v193
      %v467 = vunpack.c.l.b16 %v194
      %v468 = vunpack.c.l.b16 %v195
      %v469 = vunpack.c.l.b16 %v196
      %v470 = vunpack.c.l.b16 %v197
      %v471 = vunpack.c.l.b16 %v198
      %v472 = vunpack.c.l.b16 %v199
      %v473 = vunpack.c.l.b16 %v200
      %v474 = vunpack.c.l.b16 %v201
      %v475 = vunpack.c.l.b16 %v202
      %v476 = vunpack.c.l.b16 %v203
      %v477 = vunpack.c.l.b16 %v204
      %v478 = vunpack.c.l.b16 %v205
      %v479 = vunpack.c.l.b16 %v206
      %v480 = vunpack.c.l.b16 %v207
      %v481 = vunpack.c.l.b16 %v208
      %v482 = vunpack.c.l.b16 %v209
      %v483 = vunpack.c.l.b16 %v210
      %v484 = vunpack.c.l.b16 %v211
      %v485 = vunpack.c.l.b16 %v212
      %v486 = vunpack.c.l.b16 %v213
      %v487 = vunpack.c.l.b16 %v214
      %v488 = vunpack.c.l.b16 %v215
      %v489 = vunpack.c.l.b16 %v216
      %v490 = vunpack.c.l.b16 %v217
      %v491 = vunpack.c.l.b16 %v218
      %v492 = vunpack.c.l.b16 %v219
      %v493 = vunpack.c.l.b16 %v220
      %v494 = vunpack.c.l.b16 %v221
      %v495 = vunpack.c.l.b16 %v222
      %v496 = vunpack.c.l.b16 %v223
      %v497 = vunpack.c.l.b16 %v224
      %v498 = vunpack.c.l.b16 %v225
      %v499 = vunpack.c.l.b16 %v226
      %v500 = vunpack.c.l.b16 %v227
      %v501 = vunpack.c.l.b16 %v228
      %v502 = vunpack.c.l.b16 %v229
      %v503 = vunpack.c.l.b16 %v230
      %v504 = vunpack.c.l.b16 %v231
      %v505 = vunpack.c.l.b16 %v232
      %v506 = vunpack.c.l.b16 %v233
      %v507 = vunpack.c.l.b16 %v234
      %v508 = vunpack.c.l.b16 %v235
      %v509 = vunpack.c.l.b16 %v236
      %v510 = vunpack.c.l.b16 %v237
      %v511 = vunpack.c.l.b16 %v238
      %v512 = vunpack.c.l.b16 %v239
      %v513 = vunpack.c.l.b16 %v240
      %v514 = vunpack.c.l.b16 %v241
      %v515 = vunpack.c.l.b16 %v242
      %v516 = vunpack.c.l.b16 %v243
      %v517 = vunpack.c.l.b16 %v244
      %v518 = vunpack.c.l.b16 %v245
      %v519 = vunpack.c.l.b16 %v246
      %v520 = vunpack.c.l.b16 %v247
      %v521 = vunpack.c.l.b16 %v248
      %v522 = vunpack.c.l.b16 %v249
      %v523 = vunpack.c.l.b16 %v250
      %v524 = vunpack.c.l.b16 %v251
      %v525 = vunpack.c.l.b16 %v252
      %v526 = vunpack.c.l.b16 %v253
      %v527 = vunpack.c.l.b16 %v254
      %v528 = vunpack.c.l.b16 %v255
      %v529 = vunpack.c.l.b16 %v256
      %v530 = vunpack.c.l.b16 %v257
      %v531 = vunpack.c.l.b16 %v258
      %v532 = vunpack.c.l.b16 %v259
      %v533 = vunpack.c.l.b16 %v260
      %v534 = vunpack.c.l.b16 %v261
      %v535 = vunpack.c.l.b16 %v262
      %v536 = vunpack.c.l.b16 %v263
      %v537 = vunpack.c.l.b16 %v264
      %v538 = vunpack.c.l.b16 %v265
      %v539 = vunpack.c.l.b16 %v266
      %v540 = vunpack.c.l.b16 %v267
      %v541 = vunpack.c.l.b16 %v268
      %v542 = vunpack.c.l.b16 %v269
      %v543 = vunpack.c.l.b16 %v270
      %v544 = vunpack.c.l.b16 %v271
      %v545 = vunpack.c.l.b16 %v272
      %v546 = vunpack.c.l.b16 %v273
      %v547 = vunpack.c.l.b16 %v274
      %v548 = vunpack.c.l.b16 %v275
      %v549 = vunpack.c.l.b16 %v276
      %v550 = vunpack.c.l.b16 %v277
      %v551 = vunpack.c.l.b16 %v278
      %v552 = vunpack.c.l.b16 %v279
      %v553 = vunpack.c.l.b16 %v280
      %v554 = vunpack.c.l.b16 %v281
      %v555 = vunpack.c.l.b16 %v282
      %v556 = vunpack.c.l.b16 %v283
      %v557 = vunpack.c.l.b16 %v284
      %v558 = vunpack.c.l.b16 %v285
      %v559 = vunpack.c.l.b16 %v286
      %v560 = vunpack.c.l.b16 %v287
      %v561 = vunpack.c.l.b16 %v288
      %v562 = vunpack.c.l.b16 %v289
      %v563 = vunpack.c.l.b16 %v290
      %v564 = vunpack.c.l.b16 %v291
      %v565 = vunpack.c.l.b16 %v292
      %v566 = vunpack.c.l.b16 %v293
      %v567 = vunpack.c.l.b16 %v294
      %v568 = vunpack.c.l.b16 %v295
      %v569 = vunpack.c.l.b16 %v296
      %v570 = vunpack.c.l.b16 %v297
      %v571 = vunpack.c.l.b16 %v298
      %v572 = vunpack.c.l.b16 %v299
      %v573 = vunpack.c.l.b16 %v300
      %v574 = vunpack.c.l.b16 %v301
      %v575 = vunpack.c.l.b16 %v302
      %v576 = vpack.c.b16 %v449, %v448
      %v577 = vpack.c.b16 %v451, %v450
      %v578 = vpack.c.b16 %v453, %v452
      %v579 = vpack.c.b16 %v455, %v454
      %v580 = vpack.c.b16 %v457, %v456
      %v581 = vpack.c.b16 %v459, %v458
      %v582 = vpack.c.b16 %v461, %v460
      %v583 = vpack.c.b16 %v463, %v462
      %v584 = vpack.c.b16 %v465, %v464
      %v585 = vpack.c.b16 %v467, %v466
      %v586 = vpack.c.b16 %v469, %v468
      %v587 = vpack.c.b16 %v471, %v470
      %v588 = vpack.c.b16 %v473, %v472
      %v589 = vpack.c.b16 %v475, %v474
      %v590 = vpack.c.b16 %v477, %v476
      %v591 = vpack.c.b16 %v479, %v478
      %v592 = vpack.c.b16 %v481, %v480
      %v593 = vpack.c.b16 %v483, %v482
      %v594 = vpack.c.b16 %v485, %v484
      %v595 = vpack.c.b16 %v487, %v486
      %v596 = vpack.c.b16 %v489, %v488
      %v597 = vpack.c.b16 %v491, %v490
      %v598 = vpack.c.b16 %v493, %v492
      %v599 = vpack.c.b16 %v495, %v494
      %v600 = vpack.c.b16 %v497, %v496
      %v601 = vpack.c.b16 %v499, %v498
      %v602 = vpack.c.b16 %v501, %v500
      %v603 = vpack.c.b16 %v503, %v502
      %v604 = vpack.c.b16 %v505, %v504
      %v605 = vpack.c.b16 %v507, %v506
      %v606 = vpack.c.b16 %v509, %v508
      %v607 = vpack.c.b16 %v511, %v510
      %v608 = vpack.c.b16 %v513, %v512
      %v609 = vpack.c.b16 %v515, %v514
      %v610 = vpack.c.b16 %v517, %v516
      %v611 = vpack.c.b16 %v519, %v518
      %v612 = vpack.c.b16 %v521, %v520
      %v613 = vpack.c.b16 %v523, %v522
      %v614 = vpack.c.b16 %v525, %v524
      %v615 = vpack.c.b16 %v527, %v526
      %v616 = vpack.c.b16 %v529, %v528
      %v617 = vpack.c.b16 %v531, %v530
      %v618 = vpack.c.b16 %v533, %v532
      %v619 = vpack.c.b16 %v535, %v534
      %v620 = vpack.c.b16 %v537, %v536
      %v621 = vpack.c.b16 %v539, %v538
      %v622 = vpack.c.b16 %v541, %v540
      %v623 = vpack.c.b16 %v543, %v542
      %v624 = vpack.c.b16 %v545, %v544
      %v625 = vpack.c.b16 %v547, %v546
      %v626 = vpack.c.b16 %v549, %v548
      %v627 = vpack.c.b16 %v551, %v550
      %v628 = vpack.c.b16 %v553, %v552
      %v629 = vpack.c.b16 %v555, %v554
      %v630 = vpack.c.b16 %v557, %v556
      %v631 = vpack.c.b16 %v559, %v558
      %v632 = vpack.c.b16 %v561, %v560
      %v633 = vpack.c.b16 %v563, %v562
      %v634 = vpack.c.b16 %v565, %v564
      %v635 = vpack.c.b16 %v567, %v566
      %v636 = vpack.c.b16 %v569, %v568
      %v637 = vpack.c.b16 %v571, %v570
      %v638 = vpack.c.b16 %v573, %v572
      %v639 = vpack.c.b16 %v575, %v574
      %v653 = vunpack.c.l.b16 %v303
      %v654 = vunpack.c.l.b16 %v304
      %v655 = vunpack.c.l.b16 %v305
      %v656 = vunpack.c.l.b16 %v306
      %v657 = vunpack.c.l.b16 %v307
      %v658 = vunpack.c.l.b16 %v308
      %v659 = vunpack.c.l.b16 %v309
      %v660 = vunpack.c.l.b16 %v310
      %v661 = vunpack.c.l.b16 %v311
      %v662 = vunpack.c.l.b16 %v312
      %v663 = vunpack.c.l.b16 %v313
      %v664 = vunpack.c.l.b16 %v314
      %v665 = vunpack.c.l.b16 %v315
      %v666 = vpack.c.b16 %v654, %v653
      %v667 = vpack.c.b16 %v656, %v655
      %v668 = vpack.c.b16 %v658, %v657
      %v669 = vpack.c.b16 %v660, %v659
      %v670 = vpack.c.b16 %v662, %v661
      %v671 = vpack.c.b16 %v664, %v663
      %v672 = vpack.c.b16 %v665, %v665
      %vm679 = vcmask 818176
      %v681 = vsel %vm679, %v576, 0
      %v684 = vsel %vm679, %v577, 0
      %v687 = vsel %vm679, %v578, 0
      %v690 = vsel %vm679, %v579, 0
      %v693 = vsel %vm679, %v580, 0
      %v696 = vsel %vm679, %v581, 0
      %v699 = vsel %vm679, %v582, 0
      %v702 = vsel %vm679, %v583, 0
      %v705 = vsel %vm679, %v584, 0
      %v708 = vsel %vm679, %v585, 0
      %v711 = vsel %vm679, %v586, 0
      %v714 = vsel %vm679, %v587, 0
      %v717 = vsel %vm679, %v588, 0
      %v720 = vsel %vm679, %v589, 0
      %v723 = vsel %vm679, %v590, 0
      %v726 = vsel %vm679, %v591, 0
      %v729 = vsel %vm679, %v592, 0
      %v732 = vsel %vm679, %v593, 0
      %v735 = vsel %vm679, %v594, 0
      %v738 = vsel %vm679, %v595, 0
      %v741 = vsel %vm679, %v596, 0
      %v744 = vsel %vm679, %v597, 0
      %v747 = vsel %vm679, %v598, 0
      %v750 = vsel %vm679, %v599, 0
      %v753 = vsel %vm679, %v600, 0
      %v756 = vsel %vm679, %v601, 0
      %v759 = vsel %vm679, %v602, 0
      %v762 = vsel %vm679, %v603, 0
      %v765 = vsel %vm679, %v604, 0
      %v768 = vsel %vm679, %v605, 0
      %v771 = vsel %vm679, %v606, 0
      %v774 = vsel %vm679, %v607, 0
      %v777 = vsel %vm679, %v608, 0
      %v780 = vsel %vm679, %v609, 0
      %v783 = vsel %vm679, %v610, 0
      %v786 = vsel %vm679, %v611, 0
      %v789 = vsel %vm679, %v612, 0
      %v792 = vsel %vm679, %v613, 0
      %v795 = vsel %vm679, %v614, 0
      %v798 = vsel %vm679, %v615, 0
      %v801 = vsel %vm679, %v616, 0
      %v804 = vsel %vm679, %v617, 0
      %v807 = vsel %vm679, %v618, 0
      %v810 = vsel %vm679, %v619, 0
      %v813 = vsel %vm679, %v620, 0
      %v816 = vsel %vm679, %v621, 0
      %v819 = vsel %vm679, %v622, 0
      %v822 = vsel %vm679, %v623, 0
      %v825 = vsel %vm679, %v624, 0
      %v828 = vsel %vm679, %v625, 0
      %v831 = vsel %vm679, %v626, 0
      %v834 = vsel %vm679, %v627, 0
      %v837 = vsel %vm679, %v628, 0
      %v840 = vsel %vm679, %v629, 0
      %v843 = vsel %vm679, %v630, 0
      %v846 = vsel %vm679, %v631, 0
      %v849 = vsel %vm679, %v632, 0
      %v852 = vsel %vm679, %v633, 0
      %v855 = vsel %vm679, %v634, 0
      %v858 = vsel %vm679, %v635, 0
      %v861 = vsel %vm679, %v636, 0
      %v864 = vsel %vm679, %v637, 0
      %v867 = vsel %vm679, %v638, 0
      %v870 = vsel %vm679, %v639, 0
      %vm872 = vcmask 1041408
      %v874 = vsel %vm872, %v672, 0
      %876 = vmatpush.bf16.msra.mxu0 0
      %877 = vmatpush.bf16.msra.mxu0 %v874
      %878 = vmatpush.bf16.msra.mxu0 %v671
      %879 = vmatpush.bf16.msra.mxu0 %v670
      %880 = vmatpush.bf16.msra.mxu0 %v669
      %881 = vmatpush.bf16.msra.mxu0 %v668
      %882 = vmatpush.bf16.msra.mxu0 %v667
      %883 = vmatpush.bf16.msra.mxu0 %v666
      %884 = vmatmul.bf16.gmra.mxu0 %v681
      %v885 = vpop.f32.mrf.mxu0
      %v886 = vadd.f32 %v318, %v885
      %v887 = vpop.f32.mrf.mxu0
      %v888 = vadd.f32 %v318, %v887
      %889 = vmatmul.bf16.gmra.mxu0 %v684
      %v890 = vpop.f32.mrf.mxu0
      %v891 = vadd.f32 %v318, %v890
      %v892 = vpop.f32.mrf.mxu0
      %v893 = vadd.f32 %v318, %v892
      %894 = vmatmul.bf16.gmra.mxu0 %v687
      %v895 = vpop.f32.mrf.mxu0
      %v896 = vadd.f32 %v318, %v895
      %v897 = vpop.f32.mrf.mxu0
      %v898 = vadd.f32 %v318, %v897
      %899 = vmatmul.bf16.gmra.mxu0 %v690
      %v900 = vpop.f32.mrf.mxu0
      %v901 = vadd.f32 %v318, %v900
      %v902 = vpop.f32.mrf.mxu0
      %v903 = vadd.f32 %v318, %v902
      %904 = vmatmul.bf16.gmra.mxu0 %v693
      %v905 = vpop.f32.mrf.mxu0
      %v906 = vadd.f32 %v318, %v905
      %v907 = vpop.f32.mrf.mxu0
      %v908 = vadd.f32 %v318, %v907
      %909 = vmatmul.bf16.gmra.mxu0 %v696
      %v910 = vpop.f32.mrf.mxu0
      %v911 = vadd.f32 %v318, %v910
      %v912 = vpop.f32.mrf.mxu0
      %v913 = vadd.f32 %v318, %v912
      %914 = vmatmul.bf16.gmra.mxu0 %v699
      %v915 = vpop.f32.mrf.mxu0
      %v916 = vadd.f32 %v318, %v915
      %v917 = vpop.f32.mrf.mxu0
      %v918 = vadd.f32 %v318, %v917
      %919 = vmatmul.bf16.gmra.mxu0 %v702
      %v920 = vpop.f32.mrf.mxu0
      %v921 = vadd.f32 %v318, %v920
      %v922 = vpop.f32.mrf.mxu0
      %v923 = vadd.f32 %v318, %v922
      %924 = vmatmul.bf16.gmra.mxu0 %v705
      %v925 = vpop.f32.mrf.mxu0
      %v926 = vadd.f32 %v318, %v925
      %v927 = vpop.f32.mrf.mxu0
      %v928 = vadd.f32 %v318, %v927
      %929 = vmatmul.bf16.gmra.mxu0 %v708
      %v930 = vpop.f32.mrf.mxu0
      %v931 = vadd.f32 %v318, %v930
      %v932 = vpop.f32.mrf.mxu0
      %v933 = vadd.f32 %v318, %v932
      %934 = vmatmul.bf16.gmra.mxu0 %v711
      %v935 = vpop.f32.mrf.mxu0
      %v936 = vadd.f32 %v318, %v935
      %v937 = vpop.f32.mrf.mxu0
      %v938 = vadd.f32 %v318, %v937
      %939 = vmatmul.bf16.gmra.mxu0 %v714
      %v940 = vpop.f32.mrf.mxu0
      %v941 = vadd.f32 %v318, %v940
      %v942 = vpop.f32.mrf.mxu0
      %v943 = vadd.f32 %v318, %v942
      %944 = vmatmul.bf16.gmra.mxu0 %v717
      %v945 = vpop.f32.mrf.mxu0
      %v946 = vadd.f32 %v318, %v945
      %v947 = vpop.f32.mrf.mxu0
      %v948 = vadd.f32 %v318, %v947
      %949 = vmatmul.bf16.gmra.mxu0 %v720
      %v950 = vpop.f32.mrf.mxu0
      %v951 = vadd.f32 %v318, %v950
      %v952 = vpop.f32.mrf.mxu0
      %v953 = vadd.f32 %v318, %v952
      %954 = vmatmul.bf16.gmra.mxu0 %v723
      %v955 = vpop.f32.mrf.mxu0
      %v956 = vadd.f32 %v318, %v955
      %v957 = vpop.f32.mrf.mxu0
      %v958 = vadd.f32 %v318, %v957
      %959 = vmatmul.bf16.gmra.mxu0 %v726
      %v960 = vpop.f32.mrf.mxu0
      %v961 = vadd.f32 %v318, %v960
      %v962 = vpop.f32.mrf.mxu0
      %v963 = vadd.f32 %v318, %v962
      %964 = vmatmul.bf16.gmra.mxu0 %v729
      %v965 = vpop.f32.mrf.mxu0
      %v966 = vadd.f32 %v318, %v965
      %v967 = vpop.f32.mrf.mxu0
      %v968 = vadd.f32 %v318, %v967
      %969 = vmatmul.bf16.gmra.mxu0 %v732
      %v970 = vpop.f32.mrf.mxu0
      %v971 = vadd.f32 %v318, %v970
      %v972 = vpop.f32.mrf.mxu0
      %v973 = vadd.f32 %v318, %v972
      %974 = vmatmul.bf16.gmra.mxu0 %v735
      %v975 = vpop.f32.mrf.mxu0
      %v976 = vadd.f32 %v318, %v975
      %v977 = vpop.f32.mrf.mxu0
      %v978 = vadd.f32 %v318, %v977
      %979 = vmatmul.bf16.gmra.mxu0 %v738
      %v980 = vpop.f32.mrf.mxu0
      %v981 = vadd.f32 %v318, %v980
      %v982 = vpop.f32.mrf.mxu0
      %v983 = vadd.f32 %v318, %v982
      %984 = vmatmul.bf16.gmra.mxu0 %v741
      %v985 = vpop.f32.mrf.mxu0
      %v986 = vadd.f32 %v318, %v985
      %v987 = vpop.f32.mrf.mxu0
      %v988 = vadd.f32 %v318, %v987
      %989 = vmatmul.bf16.gmra.mxu0 %v744
      %v990 = vpop.f32.mrf.mxu0
      %v991 = vadd.f32 %v318, %v990
      %v992 = vpop.f32.mrf.mxu0
      %v993 = vadd.f32 %v318, %v992
      %994 = vmatmul.bf16.gmra.mxu0 %v747
      %v995 = vpop.f32.mrf.mxu0
      %v996 = vadd.f32 %v318, %v995
      %v997 = vpop.f32.mrf.mxu0
      %v998 = vadd.f32 %v318, %v997
      %999 = vmatmul.bf16.gmra.mxu0 %v750
      %v1000 = vpop.f32.mrf.mxu0
      %v1001 = vadd.f32 %v318, %v1000
      %v1002 = vpop.f32.mrf.mxu0
      %v1003 = vadd.f32 %v318, %v1002
      %1004 = vmatmul.bf16.gmra.mxu0 %v753
      %v1005 = vpop.f32.mrf.mxu0
      %v1006 = vadd.f32 %v318, %v1005
      %v1007 = vpop.f32.mrf.mxu0
      %v1008 = vadd.f32 %v318, %v1007
      %1009 = vmatmul.bf16.gmra.mxu0 %v756
      %v1010 = vpop.f32.mrf.mxu0
      %v1011 = vadd.f32 %v318, %v1010
      %v1012 = vpop.f32.mrf.mxu0
      %v1013 = vadd.f32 %v318, %v1012
      %1014 = vmatmul.bf16.gmra.mxu0 %v759
      %v1015 = vpop.f32.mrf.mxu0
      %v1016 = vadd.f32 %v318, %v1015
      %v1017 = vpop.f32.mrf.mxu0
      %v1018 = vadd.f32 %v318, %v1017
      %1019 = vmatmul.bf16.gmra.mxu0 %v762
      %v1020 = vpop.f32.mrf.mxu0
      %v1021 = vadd.f32 %v318, %v1020
      %v1022 = vpop.f32.mrf.mxu0
      %v1023 = vadd.f32 %v318, %v1022
      %1024 = vmatmul.bf16.gmra.mxu0 %v765
      %v1025 = vpop.f32.mrf.mxu0
      %v1026 = vadd.f32 %v318, %v1025
      %v1027 = vpop.f32.mrf.mxu0
      %v1028 = vadd.f32 %v318, %v1027
      %1029 = vmatmul.bf16.gmra.mxu0 %v768
      %v1030 = vpop.f32.mrf.mxu0
      %v1031 = vadd.f32 %v318, %v1030
      %v1032 = vpop.f32.mrf.mxu0
      %v1033 = vadd.f32 %v318, %v1032
      %1034 = vmatmul.bf16.gmra.mxu0 %v771
      %v1035 = vpop.f32.mrf.mxu0
      %v1036 = vadd.f32 %v318, %v1035
      %v1037 = vpop.f32.mrf.mxu0
      %v1038 = vadd.f32 %v318, %v1037
      %1039 = vmatmul.bf16.gmra.mxu0 %v774
      %v1040 = vpop.f32.mrf.mxu0
      %v1041 = vadd.f32 %v318, %v1040
      %v1042 = vpop.f32.mrf.mxu0
      %v1043 = vadd.f32 %v318, %v1042
      %1044 = vmatmul.bf16.gmra.mxu0 %v777
      %v1045 = vpop.f32.mrf.mxu0
      %v1046 = vadd.f32 %v318, %v1045
      %v1047 = vpop.f32.mrf.mxu0
      %v1048 = vadd.f32 %v318, %v1047
      %1049 = vmatmul.bf16.gmra.mxu0 %v780
      %v1050 = vpop.f32.mrf.mxu0
      %v1051 = vadd.f32 %v318, %v1050
      %v1052 = vpop.f32.mrf.mxu0
      %v1053 = vadd.f32 %v318, %v1052
      %1054 = vmatmul.bf16.gmra.mxu0 %v783
      %v1055 = vpop.f32.mrf.mxu0
      %v1056 = vadd.f32 %v318, %v1055
      %v1057 = vpop.f32.mrf.mxu0
      %v1058 = vadd.f32 %v318, %v1057
      %1059 = vmatmul.bf16.gmra.mxu0 %v786
      %v1060 = vpop.f32.mrf.mxu0
      %v1061 = vadd.f32 %v318, %v1060
      %v1062 = vpop.f32.mrf.mxu0
      %v1063 = vadd.f32 %v318, %v1062
      %1064 = vmatmul.bf16.gmra.mxu0 %v789
      %v1065 = vpop.f32.mrf.mxu0
      %v1066 = vadd.f32 %v318, %v1065
      %v1067 = vpop.f32.mrf.mxu0
      %v1068 = vadd.f32 %v318, %v1067
      %1069 = vmatmul.bf16.gmra.mxu0 %v792
      %v1070 = vpop.f32.mrf.mxu0
      %v1071 = vadd.f32 %v318, %v1070
      %v1072 = vpop.f32.mrf.mxu0
      %v1073 = vadd.f32 %v318, %v1072
      %1074 = vmatmul.bf16.gmra.mxu0 %v795
      %v1075 = vpop.f32.mrf.mxu0
      %v1076 = vadd.f32 %v318, %v1075
      %v1077 = vpop.f32.mrf.mxu0
      %v1078 = vadd.f32 %v318, %v1077
      %1079 = vmatmul.bf16.gmra.mxu0 %v798
      %v1080 = vpop.f32.mrf.mxu0
      %v1081 = vadd.f32 %v318, %v1080
      %v1082 = vpop.f32.mrf.mxu0
      %v1083 = vadd.f32 %v318, %v1082
      %1084 = vmatmul.bf16.gmra.mxu0 %v801
      %v1085 = vpop.f32.mrf.mxu0
      %v1086 = vadd.f32 %v318, %v1085
      %v1087 = vpop.f32.mrf.mxu0
      %v1088 = vadd.f32 %v318, %v1087
      %1089 = vmatmul.bf16.gmra.mxu0 %v804
      %v1090 = vpop.f32.mrf.mxu0
      %v1091 = vadd.f32 %v318, %v1090
      %v1092 = vpop.f32.mrf.mxu0
      %v1093 = vadd.f32 %v318, %v1092
      %1094 = vmatmul.bf16.gmra.mxu0 %v807
      %v1095 = vpop.f32.mrf.mxu0
      %v1096 = vadd.f32 %v318, %v1095
      %v1097 = vpop.f32.mrf.mxu0
      %v1098 = vadd.f32 %v318, %v1097
      %1099 = vmatmul.bf16.gmra.mxu0 %v810
      %v1100 = vpop.f32.mrf.mxu0
      %v1101 = vadd.f32 %v318, %v1100
      %v1102 = vpop.f32.mrf.mxu0
      %v1103 = vadd.f32 %v318, %v1102
      %1104 = vmatmul.bf16.gmra.mxu0 %v813
      %v1105 = vpop.f32.mrf.mxu0
      %v1106 = vadd.f32 %v318, %v1105
      %v1107 = vpop.f32.mrf.mxu0
      %v1108 = vadd.f32 %v318, %v1107
      %1109 = vmatmul.bf16.gmra.mxu0 %v816
      %v1110 = vpop.f32.mrf.mxu0
      %v1111 = vadd.f32 %v318, %v1110
      %v1112 = vpop.f32.mrf.mxu0
      %v1113 = vadd.f32 %v318, %v1112
      %1114 = vmatmul.bf16.gmra.mxu0 %v819
      %v1115 = vpop.f32.mrf.mxu0
      %v1116 = vadd.f32 %v318, %v1115
      %v1117 = vpop.f32.mrf.mxu0
      %v1118 = vadd.f32 %v318, %v1117
      %1119 = vmatmul.bf16.gmra.mxu0 %v822
      %v1120 = vpop.f32.mrf.mxu0
      %v1121 = vadd.f32 %v318, %v1120
      %v1122 = vpop.f32.mrf.mxu0
      %v1123 = vadd.f32 %v318, %v1122
      %1124 = vmatmul.bf16.gmra.mxu0 %v825
      %v1125 = vpop.f32.mrf.mxu0
      %v1126 = vadd.f32 %v318, %v1125
      %v1127 = vpop.f32.mrf.mxu0
      %v1128 = vadd.f32 %v318, %v1127
      %1129 = vmatmul.bf16.gmra.mxu0 %v828
      %v1130 = vpop.f32.mrf.mxu0
      %v1131 = vadd.f32 %v318, %v1130
      %v1132 = vpop.f32.mrf.mxu0
      %v1133 = vadd.f32 %v318, %v1132
      %1134 = vmatmul.bf16.gmra.mxu0 %v831
      %v1135 = vpop.f32.mrf.mxu0
      %v1136 = vadd.f32 %v318, %v1135
      %v1137 = vpop.f32.mrf.mxu0
      %v1138 = vadd.f32 %v318, %v1137
      %1139 = vmatmul.bf16.gmra.mxu0 %v834
      %v1140 = vpop.f32.mrf.mxu0
      %v1141 = vadd.f32 %v318, %v1140
      %v1142 = vpop.f32.mrf.mxu0
      %v1143 = vadd.f32 %v318, %v1142
      %1144 = vmatmul.bf16.gmra.mxu0 %v837
      %v1145 = vpop.f32.mrf.mxu0
      %v1146 = vadd.f32 %v318, %v1145
      %v1147 = vpop.f32.mrf.mxu0
      %v1148 = vadd.f32 %v318, %v1147
      %1149 = vmatmul.bf16.gmra.mxu0 %v840
      %v1150 = vpop.f32.mrf.mxu0
      %v1151 = vadd.f32 %v318, %v1150
      %v1152 = vpop.f32.mrf.mxu0
      %v1153 = vadd.f32 %v318, %v1152
      %1154 = vmatmul.bf16.gmra.mxu0 %v843
      %v1155 = vpop.f32.mrf.mxu0
      %v1156 = vadd.f32 %v318, %v1155
      %v1157 = vpop.f32.mrf.mxu0
      %v1158 = vadd.f32 %v318, %v1157
      %1159 = vmatmul.bf16.gmra.mxu0 %v846
      %v1160 = vpop.f32.mrf.mxu0
      %v1161 = vadd.f32 %v318, %v1160
      %v1162 = vpop.f32.mrf.mxu0
      %v1163 = vadd.f32 %v318, %v1162
      %1164 = vmatmul.bf16.gmra.mxu0 %v849
      %v1165 = vpop.f32.mrf.mxu0
      %v1166 = vadd.f32 %v318, %v1165
      %v1167 = vpop.f32.mrf.mxu0
      %v1168 = vadd.f32 %v318, %v1167
      %1169 = vmatmul.bf16.gmra.mxu0 %v852
      %v1170 = vpop.f32.mrf.mxu0
      %v1171 = vadd.f32 %v318, %v1170
      %v1172 = vpop.f32.mrf.mxu0
      %v1173 = vadd.f32 %v318, %v1172
      %1174 = vmatmul.bf16.gmra.mxu0 %v855
      %v1175 = vpop.f32.mrf.mxu0
      %v1176 = vadd.f32 %v318, %v1175
      %v1177 = vpop.f32.mrf.mxu0
      %v1178 = vadd.f32 %v318, %v1177
      %1179 = vmatmul.bf16.gmra.mxu0 %v858
      %v1180 = vpop.f32.mrf.mxu0
      %v1181 = vadd.f32 %v318, %v1180
      %v1182 = vpop.f32.mrf.mxu0
      %v1183 = vadd.f32 %v318, %v1182
      %1184 = vmatmul.bf16.gmra.mxu0 %v861
      %v1185 = vpop.f32.mrf.mxu0
      %v1186 = vadd.f32 %v318, %v1185
      %v1187 = vpop.f32.mrf.mxu0
      %v1188 = vadd.f32 %v318, %v1187
      %1189 = vmatmul.bf16.gmra.mxu0 %v864
      %v1190 = vpop.f32.mrf.mxu0
      %v1191 = vadd.f32 %v318, %v1190
      %v1192 = vpop.f32.mrf.mxu0
      %v1193 = vadd.f32 %v318, %v1192
      %1194 = vmatmul.bf16.gmra.mxu0 %v867
      %v1195 = vpop.f32.mrf.mxu0
      %v1196 = vadd.f32 %v318, %v1195
      %v1197 = vpop.f32.mrf.mxu0
      %v1198 = vadd.f32 %v318, %v1197
      %1199 = vmatmul.bf16.gmra.mxu0 %v870
      %v1200 = vpop.f32.mrf.mxu0
      %v1201 = vadd.f32 %v318, %v1200
      %v1202 = vpop.f32.mrf.mxu0
      %v1203 = vadd.f32 %v318, %v1202
      %1204 = vdwg.mxu0
      %v1205 = vmax.f32 %v886, 0.0
      %v1206 = vmax.f32 %v888, 0.0
      %v1207 = vmax.f32 %v891, 0.0
      %v1208 = vmax.f32 %v893, 0.0
      %v1209 = vmax.f32 %v896, 0.0
      %v1210 = vmax.f32 %v898, 0.0
      %v1211 = vmax.f32 %v901, 0.0
      %v1212 = vmax.f32 %v903, 0.0
      %v1213 = vmax.f32 %v906, 0.0
      %v1214 = vmax.f32 %v908, 0.0
      %v1215 = vmax.f32 %v911, 0.0
      %v1216 = vmax.f32 %v913, 0.0
      %v1217 = vmax.f32 %v916, 0.0
      %v1218 = vmax.f32 %v918, 0.0
      %v1219 = vmax.f32 %v921, 0.0
      %v1220 = vmax.f32 %v923, 0.0
      %v1221 = vmax.f32 %v926, 0.0
      %v1222 = vmax.f32 %v928, 0.0
      %v1223 = vmax.f32 %v931, 0.0
      %v1224 = vmax.f32 %v933, 0.0
      %v1225 = vmax.f32 %v936, 0.0
      %v1226 = vmax.f32 %v938, 0.0
      %v1227 = vmax.f32 %v941, 0.0
      %v1228 = vmax.f32 %v943, 0.0
      %v1229 = vmax.f32 %v946, 0.0
      %v1230 = vmax.f32 %v948, 0.0
      %v1231 = vmax.f32 %v951, 0.0
      %v1232 = vmax.f32 %v953, 0.0
      %v1233 = vmax.f32 %v956, 0.0
      %v1234 = vmax.f32 %v958, 0.0
      %v1235 = vmax.f32 %v961, 0.0
      %v1236 = vmax.f32 %v963, 0.0
      %v1237 = vmax.f32 %v966, 0.0
      %v1238 = vmax.f32 %v968, 0.0
      %v1239 = vmax.f32 %v971, 0.0
      %v1240 = vmax.f32 %v973, 0.0
      %v1241 = vmax.f32 %v976, 0.0
      %v1242 = vmax.f32 %v978, 0.0
      %v1243 = vmax.f32 %v981, 0.0
      %v1244 = vmax.f32 %v983, 0.0
      %v1245 = vmax.f32 %v986, 0.0
      %v1246 = vmax.f32 %v988, 0.0
      %v1247 = vmax.f32 %v991, 0.0
      %v1248 = vmax.f32 %v993, 0.0
      %v1249 = vmax.f32 %v996, 0.0
      %v1250 = vmax.f32 %v998, 0.0
      %v1251 = vmax.f32 %v1001, 0.0
      %v1252 = vmax.f32 %v1003, 0.0
      %v1253 = vmax.f32 %v1006, 0.0
      %v1254 = vmax.f32 %v1008, 0.0
      %v1255 = vmax.f32 %v1011, 0.0
      %v1256 = vmax.f32 %v1013, 0.0
      %v1257 = vmax.f32 %v1016, 0.0
      %v1258 = vmax.f32 %v1018, 0.0
      %v1259 = vmax.f32 %v1021, 0.0
      %v1260 = vmax.f32 %v1023, 0.0
      %v1261 = vmax.f32 %v1026, 0.0
      %v1262 = vmax.f32 %v1028, 0.0
      %v1263 = vmax.f32 %v1031, 0.0
      %v1264 = vmax.f32 %v1033, 0.0
      %v1265 = vmax.f32 %v1036, 0.0
      %v1266 = vmax.f32 %v1038, 0.0
      %v1267 = vmax.f32 %v1041, 0.0
      %v1268 = vmax.f32 %v1043, 0.0
      %v1269 = vmax.f32 %v1046, 0.0
      %v1270 = vmax.f32 %v1048, 0.0
      %v1271 = vmax.f32 %v1051, 0.0
      %v1272 = vmax.f32 %v1053, 0.0
      %v1273 = vmax.f32 %v1056, 0.0
      %v1274 = vmax.f32 %v1058, 0.0
      %v1275 = vmax.f32 %v1061, 0.0
      %v1276 = vmax.f32 %v1063, 0.0
      %v1277 = vmax.f32 %v1066, 0.0
      %v1278 = vmax.f32 %v1068, 0.0
      %v1279 = vmax.f32 %v1071, 0.0
      %v1280 = vmax.f32 %v1073, 0.0
      %v1281 = vmax.f32 %v1076, 0.0
      %v1282 = vmax.f32 %v1078, 0.0
      %v1283 = vmax.f32 %v1081, 0.0
      %v1284 = vmax.f32 %v1083, 0.0
      %v1285 = vmax.f32 %v1086, 0.0
      %v1286 = vmax.f32 %v1088, 0.0
      %v1287 = vmax.f32 %v1091, 0.0
      %v1288 = vmax.f32 %v1093, 0.0
      %v1289 = vmax.f32 %v1096, 0.0
      %v1290 = vmax.f32 %v1098, 0.0
      %v1291 = vmax.f32 %v1101, 0.0
      %v1292 = vmax.f32 %v1103, 0.0
      %v1293 = vmax.f32 %v1106, 0.0
      %v1294 = vmax.f32 %v1108, 0.0
      %v1295 = vmax.f32 %v1111, 0.0
      %v1296 = vmax.f32 %v1113, 0.0
      %v1297 = vmax.f32 %v1116, 0.0
      %v1298 = vmax.f32 %v1118, 0.0
      %v1299 = vmax.f32 %v1121, 0.0
      %v1300 = vmax.f32 %v1123, 0.0
      %v1301 = vmax.f32 %v1126, 0.0
      %v1302 = vmax.f32 %v1128, 0.0
      %v1303 = vmax.f32 %v1131, 0.0
      %v1304 = vmax.f32 %v1133, 0.0
      %v1305 = vmax.f32 %v1136, 0.0
      %v1306 = vmax.f32 %v1138, 0.0
      %v1307 = vmax.f32 %v1141, 0.0
      %v1308 = vmax.f32 %v1143, 0.0
      %v1309 = vmax.f32 %v1146, 0.0
      %v1310 = vmax.f32 %v1148, 0.0
      %v1311 = vmax.f32 %v1151, 0.0
      %v1312 = vmax.f32 %v1153, 0.0
      %v1313 = vmax.f32 %v1156, 0.0
      %v1314 = vmax.f32 %v1158, 0.0
      %v1315 = vmax.f32 %v1161, 0.0
      %v1316 = vmax.f32 %v1163, 0.0
      %v1317 = vmax.f32 %v1166, 0.0
      %v1318 = vmax.f32 %v1168, 0.0
      %v1319 = vmax.f32 %v1171, 0.0
      %v1320 = vmax.f32 %v1173, 0.0
      %v1321 = vmax.f32 %v1176, 0.0
      %v1322 = vmax.f32 %v1178, 0.0
      %v1323 = vmax.f32 %v1181, 0.0
      %v1324 = vmax.f32 %v1183, 0.0
      %v1325 = vmax.f32 %v1186, 0.0
      %v1326 = vmax.f32 %v1188, 0.0
      %v1327 = vmax.f32 %v1191, 0.0
      %v1328 = vmax.f32 %v1193, 0.0
      %v1329 = vmax.f32 %v1196, 0.0
      %v1330 = vmax.f32 %v1198, 0.0
      %v1331 = vmax.f32 %v1201, 0.0
      %v1332 = vmax.f32 %v1203, 0.0
      %v1333 = vpack.c.bf16 %v1205, %v1205
      %v1334 = vpack.c.bf16 %v1206, %v1206
      %v1335 = vpack.c.bf16 %v1207, %v1207
      %v1336 = vpack.c.bf16 %v1208, %v1208
      %v1337 = vpack.c.bf16 %v1209, %v1209
      %v1338 = vpack.c.bf16 %v1210, %v1210
      %v1339 = vpack.c.bf16 %v1211, %v1211
      %v1340 = vpack.c.bf16 %v1212, %v1212
      %v1341 = vpack.c.bf16 %v1213, %v1213
      %v1342 = vpack.c.bf16 %v1214, %v1214
      %v1343 = vpack.c.bf16 %v1215, %v1215
      %v1344 = vpack.c.bf16 %v1216, %v1216
      %v1345 = vpack.c.bf16 %v1217, %v1217
      %v1346 = vpack.c.bf16 %v1218, %v1218
      %v1347 = vpack.c.bf16 %v1219, %v1219
      %v1348 = vpack.c.bf16 %v1220, %v1220
      %v1349 = vpack.c.bf16 %v1221, %v1221
      %v1350 = vpack.c.bf16 %v1222, %v1222
      %v1351 = vpack.c.bf16 %v1223, %v1223
      %v1352 = vpack.c.bf16 %v1224, %v1224
      %v1353 = vpack.c.bf16 %v1225, %v1225
      %v1354 = vpack.c.bf16 %v1226, %v1226
      %v1355 = vpack.c.bf16 %v1227, %v1227
      %v1356 = vpack.c.bf16 %v1228, %v1228
      %v1357 = vpack.c.bf16 %v1229, %v1229
      %v1358 = vpack.c.bf16 %v1230, %v1230
      %v1359 = vpack.c.bf16 %v1231, %v1231
      %v1360 = vpack.c.bf16 %v1232, %v1232
      %v1361 = vpack.c.bf16 %v1233, %v1233
      %v1362 = vpack.c.bf16 %v1234, %v1234
      %v1363 = vpack.c.bf16 %v1235, %v1235
      %v1364 = vpack.c.bf16 %v1236, %v1236
      %v1365 = vpack.c.bf16 %v1237, %v1237
      %v1366 = vpack.c.bf16 %v1238, %v1238
      %v1367 = vpack.c.bf16 %v1239, %v1239
      %v1368 = vpack.c.bf16 %v1240, %v1240
      %v1369 = vpack.c.bf16 %v1241, %v1241
      %v1370 = vpack.c.bf16 %v1242, %v1242
      %v1371 = vpack.c.bf16 %v1243, %v1243
      %v1372 = vpack.c.bf16 %v1244, %v1244
      %v1373 = vpack.c.bf16 %v1245, %v1245
      %v1374 = vpack.c.bf16 %v1246, %v1246
      %v1375 = vpack.c.bf16 %v1247, %v1247
      %v1376 = vpack.c.bf16 %v1248, %v1248
      %v1377 = vpack.c.bf16 %v1249, %v1249
      %v1378 = vpack.c.bf16 %v1250, %v1250
      %v1379 = vpack.c.bf16 %v1251, %v1251
      %v1380 = vpack.c.bf16 %v1252, %v1252
      %v1381 = vpack.c.bf16 %v1253, %v1253
      %v1382 = vpack.c.bf16 %v1254, %v1254
      %v1383 = vpack.c.bf16 %v1255, %v1255
      %v1384 = vpack.c.bf16 %v1256, %v1256
      %v1385 = vpack.c.bf16 %v1257, %v1257
      %v1386 = vpack.c.bf16 %v1258, %v1258
      %v1387 = vpack.c.bf16 %v1259, %v1259
      %v1388 = vpack.c.bf16 %v1260, %v1260
      %v1389 = vpack.c.bf16 %v1261, %v1261
      %v1390 = vpack.c.bf16 %v1262, %v1262
      %v1391 = vpack.c.bf16 %v1263, %v1263
      %v1392 = vpack.c.bf16 %v1264, %v1264
      %v1393 = vpack.c.bf16 %v1265, %v1265
      %v1394 = vpack.c.bf16 %v1266, %v1266
      %v1395 = vpack.c.bf16 %v1267, %v1267
      %v1396 = vpack.c.bf16 %v1268, %v1268
      %v1397 = vpack.c.bf16 %v1269, %v1269
      %v1398 = vpack.c.bf16 %v1270, %v1270
      %v1399 = vpack.c.bf16 %v1271, %v1271
      %v1400 = vpack.c.bf16 %v1272, %v1272
      %v1401 = vpack.c.bf16 %v1273, %v1273
      %v1402 = vpack.c.bf16 %v1274, %v1274
      %v1403 = vpack.c.bf16 %v1275, %v1275
      %v1404 = vpack.c.bf16 %v1276, %v1276
      %v1405 = vpack.c.bf16 %v1277, %v1277
      %v1406 = vpack.c.bf16 %v1278, %v1278
      %v1407 = vpack.c.bf16 %v1279, %v1279
      %v1408 = vpack.c.bf16 %v1280, %v1280
      %v1409 = vpack.c.bf16 %v1281, %v1281
      %v1410 = vpack.c.bf16 %v1282, %v1282
      %v1411 = vpack.c.bf16 %v1283, %v1283
      %v1412 = vpack.c.bf16 %v1284, %v1284
      %v1413 = vpack.c.bf16 %v1285, %v1285
      %v1414 = vpack.c.bf16 %v1286, %v1286
      %v1415 = vpack.c.bf16 %v1287, %v1287
      %v1416 = vpack.c.bf16 %v1288, %v1288
      %v1417 = vpack.c.bf16 %v1289, %v1289
      %v1418 = vpack.c.bf16 %v1290, %v1290
      %v1419 = vpack.c.bf16 %v1291, %v1291
      %v1420 = vpack.c.bf16 %v1292, %v1292
      %v1421 = vpack.c.bf16 %v1293, %v1293
      %v1422 = vpack.c.bf16 %v1294, %v1294
      %v1423 = vpack.c.bf16 %v1295, %v1295
      %v1424 = vpack.c.bf16 %v1296, %v1296
      %v1425 = vpack.c.bf16 %v1297, %v1297
      %v1426 = vpack.c.bf16 %v1298, %v1298
      %v1427 = vpack.c.bf16 %v1299, %v1299
      %v1428 = vpack.c.bf16 %v1300, %v1300
      %v1429 = vpack.c.bf16 %v1301, %v1301
      %v1430 = vpack.c.bf16 %v1302, %v1302
      %v1431 = vpack.c.bf16 %v1303, %v1303
      %v1432 = vpack.c.bf16 %v1304, %v1304
      %v1433 = vpack.c.bf16 %v1305, %v1305
      %v1434 = vpack.c.bf16 %v1306, %v1306
      %v1435 = vpack.c.bf16 %v1307, %v1307
      %v1436 = vpack.c.bf16 %v1308, %v1308
      %v1437 = vpack.c.bf16 %v1309, %v1309
      %v1438 = vpack.c.bf16 %v1310, %v1310
      %v1439 = vpack.c.bf16 %v1311, %v1311
      %v1440 = vpack.c.bf16 %v1312, %v1312
      %v1441 = vpack.c.bf16 %v1313, %v1313
      %v1442 = vpack.c.bf16 %v1314, %v1314
      %v1443 = vpack.c.bf16 %v1315, %v1315
      %v1444 = vpack.c.bf16 %v1316, %v1316
      %v1445 = vpack.c.bf16 %v1317, %v1317
      %v1446 = vpack.c.bf16 %v1318, %v1318
      %v1447 = vpack.c.bf16 %v1319, %v1319
      %v1448 = vpack.c.bf16 %v1320, %v1320
      %v1449 = vpack.c.bf16 %v1321, %v1321
      %v1450 = vpack.c.bf16 %v1322, %v1322
      %v1451 = vpack.c.bf16 %v1323, %v1323
      %v1452 = vpack.c.bf16 %v1324, %v1324
      %v1453 = vpack.c.bf16 %v1325, %v1325
      %v1454 = vpack.c.bf16 %v1326, %v1326
      %v1455 = vpack.c.bf16 %v1327, %v1327
      %v1456 = vpack.c.bf16 %v1328, %v1328
      %v1457 = vpack.c.bf16 %v1329, %v1329
      %v1458 = vpack.c.bf16 %v1330, %v1330
      %v1459 = vpack.c.bf16 %v1331, %v1331
      %v1460 = vpack.c.bf16 %v1332, %v1332
      %1461 = vst [vmem:[%s172] sm:$0xf] %v1333
      %1462 = vst [vmem:[%s172 + $0x4] sm:$0xf] %v1334
      %1463 = vst [vmem:[%s172 + $0x8] sm:$0xf] %v1335
      %1464 = vst [vmem:[%s172 + $0xc] sm:$0xf] %v1336
      %1465 = vst [vmem:[%s172 + $0x10] sm:$0xf] %v1337
      %1466 = vst [vmem:[%s172 + $0x14] sm:$0xf] %v1338
      %1467 = vst [vmem:[%s172 + $0x18] sm:$0xf] %v1339
      %1468 = vst [vmem:[%s172 + $0x1c] sm:$0xf] %v1340
      %1469 = vst [vmem:[%s172 + $0x20] sm:$0xf] %v1341
      %1470 = vst [vmem:[%s172 + $0x24] sm:$0xf] %v1342
      %1471 = vst [vmem:[%s172 + $0x28] sm:$0xf] %v1343
      %1472 = vst [vmem:[%s172 + $0x2c] sm:$0xf] %v1344
      %1473 = vst [vmem:[%s172 + $0x30] sm:$0xf] %v1345
      %1474 = vst [vmem:[%s172 + $0x34] sm:$0xf] %v1346
      %1475 = vst [vmem:[%s172 + $0x38] sm:$0xf] %v1347
      %1476 = vst [vmem:[%s172 + $0x3c] sm:$0xf] %v1348
      %1477 = vst [vmem:[%s172 + $0x40] sm:$0xf] %v1349
      %1478 = vst [vmem:[%s172 + $0x44] sm:$0xf] %v1350
      %1479 = vst [vmem:[%s172 + $0x48] sm:$0xf] %v1351
      %1480 = vst [vmem:[%s172 + $0x4c] sm:$0xf] %v1352
      %1481 = vst [vmem:[%s172 + $0x50] sm:$0xf] %v1353
      %1482 = vst [vmem:[%s172 + $0x54] sm:$0xf] %v1354
      %1483 = vst [vmem:[%s172 + $0x58] sm:$0xf] %v1355
      %1484 = vst [vmem:[%s172 + $0x5c] sm:$0xf] %v1356
      %1485 = vst [vmem:[%s172 + $0x60] sm:$0xf] %v1357
      %1486 = vst [vmem:[%s172 + $0x64] sm:$0xf] %v1358
      %1487 = vst [vmem:[%s172 + $0x68] sm:$0xf] %v1359
      %1488 = vst [vmem:[%s172 + $0x6c] sm:$0xf] %v1360
      %1489 = vst [vmem:[%s172 + $0x70] sm:$0xf] %v1361
      %1490 = vst [vmem:[%s172 + $0x74] sm:$0xf] %v1362
      %1491 = vst [vmem:[%s172 + $0x78] sm:$0xf] %v1363
      %1492 = vst [vmem:[%s172 + $0x7c] sm:$0xf] %v1364
      %1493 = vst [vmem:[%s172 + $0x80] sm:$0xf] %v1365
      %1494 = vst [vmem:[%s172 + $0x84] sm:$0xf] %v1366
      %1495 = vst [vmem:[%s172 + $0x88] sm:$0xf] %v1367
      %1496 = vst [vmem:[%s172 + $0x8c] sm:$0xf] %v1368
      %1497 = vst [vmem:[%s172 + $0x90] sm:$0xf] %v1369
      %1498 = vst [vmem:[%s172 + $0x94] sm:$0xf] %v1370
      %1499 = vst [vmem:[%s172 + $0x98] sm:$0xf] %v1371
      %1500 = vst [vmem:[%s172 + $0x9c] sm:$0xf] %v1372
      %1501 = vst [vmem:[%s172 + $0xa0] sm:$0xf] %v1373
      %1502 = vst [vmem:[%s172 + $0xa4] sm:$0xf] %v1374
      %1503 = vst [vmem:[%s172 + $0xa8] sm:$0xf] %v1375
      %1504 = vst [vmem:[%s172 + $0xac] sm:$0xf] %v1376
      %1505 = vst [vmem:[%s172 + $0xb0] sm:$0xf] %v1377
      %1506 = vst [vmem:[%s172 + $0xb4] sm:$0xf] %v1378
      %1507 = vst [vmem:[%s172 + $0xb8] sm:$0xf] %v1379
      %1508 = vst [vmem:[%s172 + $0xbc] sm:$0xf] %v1380
      %1509 = vst [vmem:[%s172 + $0xc0] sm:$0xf] %v1381
      %1510 = vst [vmem:[%s172 + $0xc4] sm:$0xf] %v1382
      %1511 = vst [vmem:[%s172 + $0xc8] sm:$0xf] %v1383
      %1512 = vst [vmem:[%s172 + $0xcc] sm:$0xf] %v1384
      %1513 = vst [vmem:[%s172 + $0xd0] sm:$0xf] %v1385
      %1514 = vst [vmem:[%s172 + $0xd4] sm:$0xf] %v1386
      %1515 = vst [vmem:[%s172 + $0xd8] sm:$0xf] %v1387
      %1516 = vst [vmem:[%s172 + $0xdc] sm:$0xf] %v1388
      %1517 = vst [vmem:[%s172 + $0xe0] sm:$0xf] %v1389
      %1518 = vst [vmem:[%s172 + $0xe4] sm:$0xf] %v1390
      %1519 = vst [vmem:[%s172 + $0xe8] sm:$0xf] %v1391
      %1520 = vst [vmem:[%s172 + $0xec] sm:$0xf] %v1392
      %1521 = vst [vmem:[%s172 + $0xf0] sm:$0xf] %v1393
      %1522 = vst [vmem:[%s172 + $0xf4] sm:$0xf] %v1394
      %1523 = vst [vmem:[%s172 + $0xf8] sm:$0xf] %v1395
      %1524 = vst [vmem:[%s172 + $0xfc] sm:$0xf] %v1396
      %1525 = vst [vmem:[%s172 + $0x100] sm:$0xf] %v1397
      %1526 = vst [vmem:[%s172 + $0x104] sm:$0xf] %v1398
      %1527 = vst [vmem:[%s172 + $0x108] sm:$0xf] %v1399
      %1528 = vst [vmem:[%s172 + $0x10c] sm:$0xf] %v1400
      %1529 = vst [vmem:[%s172 + $0x110] sm:$0xf] %v1401
      %1530 = vst [vmem:[%s172 + $0x114] sm:$0xf] %v1402
      %1531 = vst [vmem:[%s172 + $0x118] sm:$0xf] %v1403
      %1532 = vst [vmem:[%s172 + $0x11c] sm:$0xf] %v1404
      %1533 = vst [vmem:[%s172 + $0x120] sm:$0xf] %v1405
      %1534 = vst [vmem:[%s172 + $0x124] sm:$0xf] %v1406
      %1535 = vst [vmem:[%s172 + $0x128] sm:$0xf] %v1407
      %1536 = vst [vmem:[%s172 + $0x12c] sm:$0xf] %v1408
      %1537 = vst [vmem:[%s172 + $0x130] sm:$0xf] %v1409
      %1538 = vst [vmem:[%s172 + $0x134] sm:$0xf] %v1410
      %1539 = vst [vmem:[%s172 + $0x138] sm:$0xf] %v1411
      %1540 = vst [vmem:[%s172 + $0x13c] sm:$0xf] %v1412
      %1541 = vst [vmem:[%s172 + $0x140] sm:$0xf] %v1413
      %1542 = vst [vmem:[%s172 + $0x144] sm:$0xf] %v1414
      %1543 = vst [vmem:[%s172 + $0x148] sm:$0xf] %v1415
      %1544 = vst [vmem:[%s172 + $0x14c] sm:$0xf] %v1416
      %1545 = vst [vmem:[%s172 + $0x150] sm:$0xf] %v1417
      %1546 = vst [vmem:[%s172 + $0x154] sm:$0xf] %v1418
      %1547 = vst [vmem:[%s172 + $0x158] sm:$0xf] %v1419
      %1548 = vst [vmem:[%s172 + $0x15c] sm:$0xf] %v1420
      %1549 = vst [vmem:[%s172 + $0x160] sm:$0xf] %v1421
      %1550 = vst [vmem:[%s172 + $0x164] sm:$0xf] %v1422
      %1551 = vst [vmem:[%s172 + $0x168] sm:$0xf] %v1423
      %1552 = vst [vmem:[%s172 + $0x16c] sm:$0xf] %v1424
      %1553 = vst [vmem:[%s172 + $0x170] sm:$0xf] %v1425
      %1554 = vst [vmem:[%s172 + $0x174] sm:$0xf] %v1426
      %1555 = vst [vmem:[%s172 + $0x178] sm:$0xf] %v1427
      %1556 = vst [vmem:[%s172 + $0x17c] sm:$0xf] %v1428
      %1557 = vst [vmem:[%s172 + $0x180] sm:$0xf] %v1429
      %1558 = vst [vmem:[%s172 + $0x184] sm:$0xf] %v1430
      %1559 = vst [vmem:[%s172 + $0x188] sm:$0xf] %v1431
      %1560 = vst [vmem:[%s172 + $0x18c] sm:$0xf] %v1432
      %1561 = vst [vmem:[%s172 + $0x190] sm:$0xf] %v1433
      %1562 = vst [vmem:[%s172 + $0x194] sm:$0xf] %v1434
      %1563 = vst [vmem:[%s172 + $0x198] sm:$0xf] %v1435
      %1564 = vst [vmem:[%s172 + $0x19c] sm:$0xf] %v1436
      %1565 = vst [vmem:[%s172 + $0x1a0] sm:$0xf] %v1437
      %1566 = vst [vmem:[%s172 + $0x1a4] sm:$0xf] %v1438
      %1567 = vst [vmem:[%s172 + $0x1a8] sm:$0xf] %v1439
      %1568 = vst [vmem:[%s172 + $0x1ac] sm:$0xf] %v1440
      %1569 = vst [vmem:[%s172 + $0x1b0] sm:$0xf] %v1441
      %1570 = vst [vmem:[%s172 + $0x1b4] sm:$0xf] %v1442
      %1571 = vst [vmem:[%s172 + $0x1b8] sm:$0xf] %v1443
      %1572 = vst [vmem:[%s172 + $0x1bc] sm:$0xf] %v1444
      %1573 = vst [vmem:[%s172 + $0x1c0] sm:$0xf] %v1445
      %1574 = vst [vmem:[%s172 + $0x1c4] sm:$0xf] %v1446
      %1575 = vst [vmem:[%s172 + $0x1c8] sm:$0xf] %v1447
      %1576 = vst [vmem:[%s172 + $0x1cc] sm:$0xf] %v1448
      %1577 = vst [vmem:[%s172 + $0x1d0] sm:$0xf] %v1449
      %1578 = vst [vmem:[%s172 + $0x1d4] sm:$0xf] %v1450
      %1579 = vst [vmem:[%s172 + $0x1d8] sm:$0xf] %v1451
      %1580 = vst [vmem:[%s172 + $0x1dc] sm:$0xf] %v1452
      %1581 = vst [vmem:[%s172 + $0x1e0] sm:$0xf] %v1453
      %1582 = vst [vmem:[%s172 + $0x1e4] sm:$0xf] %v1454
      %1583 = vst [vmem:[%s172 + $0x1e8] sm:$0xf] %v1455
      %1584 = vst [vmem:[%s172 + $0x1ec] sm:$0xf] %v1456
      %1585 = vst [vmem:[%s172 + $0x1f0] sm:$0xf] %v1457
      %1586 = vst [vmem:[%s172 + $0x1f4] sm:$0xf] %v1458
      %1587 = vst [vmem:[%s172 + $0x1f8] sm:$0xf] %v1459
      %1588 = vst [vmem:[%s172 + $0x1fc] sm:$0xf] %v1460
      %s1589 = smul.u32 128, %s14
      %p1590 = scmp.lt.s32.totalorder %s1589, 767
      %s1591 = scalar_select %p1590, %s1589, 767
      %s1592 = smul.addr %s1591, 4
      %s1593 = scalar_lea.vmem %s3, %s1592
      // Predicated region
      $region33: #{pilotnet_forward.6} parent=31 // pred_check
        %p1594 = pneg %p100
      $region34: #{pilotnet_forward.6} parent=31 // pred_check_branch
        %1596 = sbr.rel (%p1594) target = $region36
      $region35: #{pilotnet_forward.6} parent=31 // pred_region
        %s1597 = smul.u32 128, %s14
      $region36: #{pilotnet_forward.6} parent=31 // pred_fallthru
        _
    $region32: #{pilotnet_forward.6} parent=5 // pred_fallthru
      _
    %p1598 = scmp.le.s32.totalorder 2, %s9
    // Predicated region
    $region37: #{pilotnet_forward.6} parent=5 // pred_check
      %p1599 = pneg %p1598
    $region38: #{pilotnet_forward.6} parent=5 // pred_check_branch
      %1601 = sbr.rel (%p1599) target = $region40
    $region39: #{pilotnet_forward.6} parent=5 // pred_region
      %s1602 = ssub.s32 %s9, 2
      // Predicated region
      $region41: #{pilotnet_forward.6} parent=39 // pred_check
        %p1603 = pneg %p106
      $region42: #{pilotnet_forward.6} parent=39 // pred_check_branch
        %1605 = sbr.rel (%p1603) target = $region44
      $region43: #{pilotnet_forward.6} parent=39 // pred_region
        %s1606 = smul.u32 128, %s15
        %p1607 = scmp.lt.s32.totalorder %s1606, 767
        %s1608 = scalar_select %p1607, %s1606, 767
        %s1609 = smul.addr %s1608, 4
        %s1610 = scalar_lea.vmem %s3, %s1609
      $region44: #{pilotnet_forward.6} parent=39 // pred_fallthru
        _
    $region40: #{pilotnet_forward.6} parent=5 // pred_fallthru
      _
  $region6: #{pilotnet_forward.6} parent=0 // loop_footer
    %s13 = sadd.s32 1, %s9
  $region7: #{pilotnet_forward.6} parent=0 // loop_footer_branch
    %8 = sbr.rel target = $region3
  $region8: #{pilotnet_forward.6} parent=0 // loop_exit
    _

// kernel: pilotnet_forward.7
$region0: #{pilotnet_forward.7}
  #allocation0 [shape = 'u32[]', space=smem, size = 0x4, offset = 0x4, fixed_abs, tag = 'smem constant byte address 0x4 - core index']
  #allocation1 [shape = 'u32[72,128]{1,0:T(1,128)}', space=vmem, size = 0x9000, scoped, tag = 'internal scratch']
  %s0 = inlined_call_operand.vmem [shape: bf16[1344,600], index: 0, kind: input, shape index: {}]
  %s1 = inlined_call_operand.vmem [shape: bf16[600,128], index: 1, kind: input, shape index: {}]
  %s2 = inlined_call_operand.vmem [shape: f32[1,128], index: 2, kind: input, shape index: {}]
  %s3 = inlined_call_operand.vmem [shape: bf16[1344,128], index: 3, kind: output, shape index: {}]
  %s4 = sld [smem:[#allocation0]]
  $region45: #{pilotnet_forward.7} parent=0
    _
  %s6 = ssub.s32 1, %s4
  %s7 = scalar_select 0, %s6, %s4
  loop: start=0, step=1, limit=4
  $region2: #{pilotnet_forward.7} parent=0 // loop_pre_header
    _
  $region3: #{pilotnet_forward.7} parent=0 // loop_header
    %s9 = sphi 0, %s13
    %p10 = scmp.ge.s32.totalorder %s9, 4
    %s19 = sphi 0, %s21
    %s22 = sphi 0, %s19
    %s23 = sphi 0, %s22
    %s39 = sphi 0, %s23
    %s43 = sphi 0, %s43
    %s45 = sphi 0, %s43
    %s46 = sphi 0, %s45
    %s60 = sphi 0, %s46
    %s64 = sphi 0, %s64
    %s66 = sphi 0, %s64
    %s67 = sphi 0, %s66
    %s81 = sphi 0, %s67
    %s87 = sphi 0, %s89
    %s90 = sphi 0, %s87
    %s91 = sphi 0, %s90
    %s107 = sphi 0, %s91
  $region4: #{pilotnet_forward.7} parent=0 // loop_header_branch
    %12 = sbr.rel (%p10) target = $region8
  $region5: #{pilotnet_forward.7} parent=0 // loop_body
    %s14 = ssub.s32 %s9, 1
    %s15 = ssub.s32 %s9, 2
    %s16 = sadd.s32 %s9, 1
    %s17 = ssub.s32 %s9, %s16
    %p18 = scmp.eq.s32.totalorder %s17, 0
    %s20 = sadd.s32 %s19, 1
    %s21 = scalar_select %p18, %s19, %s20
    %p24 = pneg %p18
    %p25 = scmp.eq.s32.totalorder %s9, 1
    %p26 = por %p24, %p25
    %p27 = scmp.ne.s32.totalorder %s19, %s22
    %p28 = scmp.eq.s32.totalorder %s9, 0
    %p29 = por %p27, %p28
    %p30 = scmp.ne.s32.totalorder %s19, %s22
    %p31 = scmp.eq.s32.totalorder %s14, 1
    %p32 = por %p30, %p31
    %p33 = scmp.ne.s32.totalorder %s22, %s23
    %p34 = scmp.eq.s32.totalorder %s14, 0
    %p35 = por %p33, %p34
    %p36 = scmp.ne.s32.totalorder %s22, %s23
    %p37 = scmp.eq.s32.totalorder %s15, 1
    %p38 = por %p36, %p37
    %p40 = scmp.ne.s32.totalorder %s23, %s39
    %p41 = scmp.eq.s32.totalorder %s15, 0
    %p42 = por %p40, %p41
    %s44 = sadd.s32 %s43, 1
    %p47 = scmp.eq.s32.totalorder %s9, 1
    %p48 = scmp.ne.s32.totalorder %s43, %s45
    %p49 = scmp.eq.s32.totalorder %s9, 0
    %p50 = por %p48, %p49
    %p51 = scmp.ne.s32.totalorder %s43, %s45
    %p52 = scmp.eq.s32.totalorder %s14, 1
    %p53 = por %p51, %p52
    %p54 = scmp.ne.s32.totalorder %s45, %s46
    %p55 = scmp.eq.s32.totalorder %s14, 0
    %p56 = por %p54, %p55
    %p57 = scmp.ne.s32.totalorder %s45, %s46
    %p58 = scmp.eq.s32.totalorder %s15, 1
    %p59 = por %p57, %p58
    %p61 = scmp.ne.s32.totalorder %s46, %s60
    %p62 = scmp.eq.s32.totalorder %s15, 0
    %p63 = por %p61, %p62
    %s65 = sadd.s32 %s64, 1
    %p68 = scmp.eq.s32.totalorder %s9, 1
    %p69 = scmp.ne.s32.totalorder %s64, %s66
    %p70 = scmp.eq.s32.totalorder %s9, 0
    %p71 = por %p69, %p70
    %p72 = scmp.ne.s32.totalorder %s64, %s66
    %p73 = scmp.eq.s32.totalorder %s14, 1
    %p74 = por %p72, %p73
    %p75 = scmp.ne.s32.totalorder %s66, %s67
    %p76 = scmp.eq.s32.totalorder %s14, 0
    %p77 = por %p75, %p76
    %p78 = scmp.ne.s32.totalorder %s66, %s67
    %p79 = scmp.eq.s32.totalorder %s15, 1
    %p80 = por %p78, %p79
    %p82 = scmp.ne.s32.totalorder %s67, %s81
    %p83 = scmp.eq.s32.totalorder %s15, 0
    %p84 = por %p82, %p83
    %s85 = ssub.s32 %s9, %s16
    %p86 = scmp.eq.s32.totalorder %s85, 0
    %s88 = sadd.s32 %s87, 1
    %s89 = scalar_select %p86, %s87, %s88
    %p92 = pneg %p86
    %p93 = scmp.eq.s32.totalorder %s9, 1
    %p94 = por %p92, %p93
    %p95 = scmp.ne.s32.totalorder %s87, %s90
    %p96 = scmp.eq.s32.totalorder %s9, 0
    %p97 = por %p95, %p96
    %p98 = scmp.ne.s32.totalorder %s87, %s90
    %p99 = scmp.eq.s32.totalorder %s14, 1
    %p100 = por %p98, %p99
    %p101 = scmp.ne.s32.totalorder %s90, %s91
    %p102 = scmp.eq.s32.totalorder %s14, 0
    %p103 = por %p101, %p102
    %p104 = scmp.ne.s32.totalorder %s90, %s91
    %p105 = scmp.eq.s32.totalorder %s15, 1
    %p106 = por %p104, %p105
    %p108 = scmp.ne.s32.totalorder %s91, %s107
    %p109 = scmp.eq.s32.totalorder %s15, 0
    %p110 = por %p108, %p109
    %p111 = scmp.le.s32.totalorder 1, %s9
    %p112 = scmp.lt.s32.totalorder %s9, 3
    %p113 = pnand %p111, %p112
    %p114 = pneg %p113
    // Predicated region
    $region9: #{pilotnet_forward.7} parent=5 // pred_check
      _
    $region10: #{pilotnet_forward.7} parent=5 // pred_check_branch
      %116 = sbr.rel (%p113) target = $region12
    $region11: #{pilotnet_forward.7} parent=5 // pred_region
      %s117 = ssub.s32 %s9, 1
      // Predicated region
      $region13: #{pilotnet_forward.7} parent=11 // pred_check
        %p118 = pneg %p56
      $region14: #{pilotnet_forward.7} parent=11 // pred_check_branch
        %120 = sbr.rel (%p118) target = $region16
      $region15: #{pilotnet_forward.7} parent=11 // pred_region
        _
      $region16: #{pilotnet_forward.7} parent=11 // pred_fallthru
        _
      // Predicated region
      $region17: #{pilotnet_forward.7} parent=11 // pred_check
        %p121 = pneg %p77
      $region18: #{pilotnet_forward.7} parent=11 // pred_check_branch
        %123 = sbr.rel (%p121) target = $region20
      $region19: #{pilotnet_forward.7} parent=11 // pred_region
        _
      $region20: #{pilotnet_forward.7} parent=11 // pred_fallthru
        _
    $region12: #{pilotnet_forward.7} parent=5 // pred_fallthru
      _
    %p124 = scmp.lt.s32.totalorder %s9, 2
    // Predicated region
    $region21: #{pilotnet_forward.7} parent=5 // pred_check
      %p125 = pneg %p124
    $region22: #{pilotnet_forward.7} parent=5 // pred_check_branch
      %127 = sbr.rel (%p125) target = $region24
    $region23: #{pilotnet_forward.7} parent=5 // pred_region
      // Predicated region
      $region25: #{pilotnet_forward.7} parent=23 // pred_check
        %p128 = pneg %p29
      $region26: #{pilotnet_forward.7} parent=23 // pred_check_branch
        %130 = sbr.rel (%p128) target = $region28
      $region27: #{pilotnet_forward.7} parent=23 // pred_region
        %s131 = smul.u32 84, %s9
        %p132 = scmp.lt.s32.totalorder %s131, 167
        %s133 = scalar_select %p132, %s131, 167
        %s134 = smul.addr %s133, 5
        %s135 = smul.addr %s134, 4
        %s136 = scalar_lea.vmem %s0, %s135
        %s137 = smul.u32 84, %s9
      $region28: #{pilotnet_forward.7} parent=23 // pred_fallthru
        _
    $region24: #{pilotnet_forward.7} parent=5 // pred_fallthru
      _
    %p138 = scmp.le.s32.totalorder 1, %s9
    %p139 = scmp.lt.s32.totalorder %s9, 3
    %p140 = pnand %p138, %p139
    %p141 = pneg %p140
    // Predicated region
    $region29: #{pilotnet_forward.7} parent=5 // pred_check
      _
    $region30: #{pilotnet_forward.7} parent=5 // pred_check_branch
      %143 = sbr.rel (%p140) target = $region32
    $region31: #{pilotnet_forward.7} parent=5 // pred_region
      %s144 = ssub.s32 %s9, 1
      %s145 = smul.u32 84, %s14
      %p146 = scmp.lt.s32.totalorder %s145, 167
      %s147 = scalar_select %p146, %s145, 167
      %s148 = smul.addr %s147, 5
      %s149 = smul.addr %s148, 4
      %s150 = scalar_lea.vmem %s0, %s149
      %p151 = pneg %p35
      %p152 = pneg %p32
      %p153 = pneg %p56
      %p154 = pneg %p53
      %p155 = pneg %p77
      %p156 = pneg %p74
      %p157 = pneg %p103
      %p158 = pneg %p100
      %s159 = smul.u32 84, %s14
      %p160 = scmp.lt.s32.totalorder %s159, 167
      %s161 = scalar_select %p160, %s159, 167
      %s162 = smul.addr %s161, 4
      %s163 = scalar_lea.vmem %s3, %s162
      %s164 = smul.u32 84, %s14
      %p165 = scmp.lt.s32.totalorder %s164, 167
      %s166 = scalar_select %p165, %s164, 167
      %s167 = smul.addr %s166, 5
      %s168 = smul.addr %s167, 4
      %s169 = scalar_lea.vmem %s0, %s168
      %s170 = smul.u32 84, %s14
      %s171 = smul.u32 84, %s14
      %p172 = scmp.lt.s32.totalorder %s171, 167
      %s173 = scalar_select %p172, %s171, 167
      %s174 = smul.addr %s173, 4
      %s175 = scalar_lea.vmem %s3, %s174
      %s176 = smul.u32 84, %s14
      %v178 = vld [vmem:[%s169] sm:$0xff]
      %v179 = vld [vmem:[%s169 + $0x8] sm:$0xff]
      %v180 = vld [vmem:[%s169 + $0x10] sm:$0xf]
      %v181 = vld [vmem:[%s169 + $0x14] sm:$0xff]
      %v182 = vld [vmem:[%s169 + $0x1c] sm:$0xff]
      %v183 = vld [vmem:[%s169 + $0x24] sm:$0xf]
      %v184 = vld [vmem:[%s169 + $0x28] sm:$0xff]
      %v185 = vld [vmem:[%s169 + $0x30] sm:$0xff]
      %v186 = vld [vmem:[%s169 + $0x38] sm:$0xf]
      %v187 = vld [vmem:[%s169 + $0x3c] sm:$0xff]
      %v188 = vld [vmem:[%s169 + $0x44] sm:$0xff]
      %v189 = vld [vmem:[%s169 + $0x4c] sm:$0xf]
      %v190 = vld [vmem:[%s169 + $0x50] sm:$0xff]
      %v191 = vld [vmem:[%s169 + $0x58] sm:$0xff]
      %v192 = vld [vmem:[%s169 + $0x60] sm:$0xf]
      %v193 = vld [vmem:[%s169 + $0x64] sm:$0xff]
      %v194 = vld [vmem:[%s169 + $0x6c] sm:$0xff]
      %v195 = vld [vmem:[%s169 + $0x74] sm:$0xf]
      %v196 = vld [vmem:[%s169 + $0x78] sm:$0xff]
      %v197 = vld [vmem:[%s169 + $0x80] sm:$0xff]
      %v198 = vld [vmem:[%s169 + $0x88] sm:$0xf]
      %v199 = vld [vmem:[%s169 + $0x8c] sm:$0xff]
      %v200 = vld [vmem:[%s169 + $0x94] sm:$0xff]
      %v201 = vld [vmem:[%s169 + $0x9c] sm:$0xf]
      %v202 = vld [vmem:[%s169 + $0xa0] sm:$0xff]
      %v203 = vld [vmem:[%s169 + $0xa8] sm:$0xff]
      %v204 = vld [vmem:[%s169 + $0xb0] sm:$0xf]
      %v205 = vld [vmem:[%s169 + $0xb4] sm:$0xff]
      %v206 = vld [vmem:[%s169 + $0xbc] sm:$0xff]
      %v207 = vld [vmem:[%s169 + $0xc4] sm:$0xf]
      %v208 = vld [vmem:[%s169 + $0xc8] sm:$0xff]
      %v209 = vld [vmem:[%s169 + $0xd0] sm:$0xff]
      %v210 = vld [vmem:[%s169 + $0xd8] sm:$0xf]
      %v211 = vld [vmem:[%s169 + $0xdc] sm:$0xff]
      %v212 = vld [vmem:[%s169 + $0xe4] sm:$0xff]
      %v213 = vld [vmem:[%s169 + $0xec] sm:$0xf]
      %v214 = vld [vmem:[%s169 + $0xf0] sm:$0xff]
      %v215 = vld [vmem:[%s169 + $0xf8] sm:$0xff]
      %v216 = vld [vmem:[%s169 + $0x100] sm:$0xf]
      %v217 = vld [vmem:[%s169 + $0x104] sm:$0xff]
      %v218 = vld [vmem:[%s169 + $0x10c] sm:$0xff]
      %v219 = vld [vmem:[%s169 + $0x114] sm:$0xf]
      %v220 = vld [vmem:[%s169 + $0x118] sm:$0xff]
      %v221 = vld [vmem:[%s169 + $0x120] sm:$0xff]
      %v222 = vld [vmem:[%s169 + $0x128] sm:$0xf]
      %v223 = vld [vmem:[%s169 + $0x12c] sm:$0xff]
      %v224 = vld [vmem:[%s169 + $0x134] sm:$0xff]
      %v225 = vld [vmem:[%s169 + $0x13c] sm:$0xf]
      %v226 = vld [vmem:[%s169 + $0x140] sm:$0xff]
      %v227 = vld [vmem:[%s169 + $0x148] sm:$0xff]
      %v228 = vld [vmem:[%s169 + $0x150] sm:$0xf]
      %v229 = vld [vmem:[%s169 + $0x154] sm:$0xff]
      %v230 = vld [vmem:[%s169 + $0x15c] sm:$0xff]
      %v231 = vld [vmem:[%s169 + $0x164] sm:$0xf]
      %v232 = vld [vmem:[%s169 + $0x168] sm:$0xff]
      %v233 = vld [vmem:[%s169 + $0x170] sm:$0xff]
      %v234 = vld [vmem:[%s169 + $0x178] sm:$0xf]
      %v235 = vld [vmem:[%s169 + $0x17c] sm:$0xff]
      %v236 = vld [vmem:[%s169 + $0x184] sm:$0xff]
      %v237 = vld [vmem:[%s169 + $0x18c] sm:$0xf]
      %v238 = vld [vmem:[%s169 + $0x190] sm:$0xff]
      %v239 = vld [vmem:[%s169 + $0x198] sm:$0xff]
      %v240 = vld [vmem:[%s169 + $0x1a0] sm:$0xf]
      %v241 = vld [vmem:[%s169 + $0x1a4] sm:$0xff]
      %v242 = vld [vmem:[%s169 + $0x1ac] sm:$0xff]
      %v243 = vld [vmem:[%s169 + $0x1b4] sm:$0xf]
      %v244 = vld [vmem:[%s169 + $0x1b8] sm:$0xff]
      %v245 = vld [vmem:[%s169 + $0x1c0] sm:$0xff]
      %v246 = vld [vmem:[%s169 + $0x1c8] sm:$0xf]
      %v247 = vld [vmem:[%s169 + $0x1cc] sm:$0xff]
      %v248 = vld [vmem:[%s169 + $0x1d4] sm:$0xff]
      %v249 = vld [vmem:[%s169 + $0x1dc] sm:$0xf]
      %v250 = vld [vmem:[%s169 + $0x1e0] sm:$0xff]
      %v251 = vld [vmem:[%s169 + $0x1e8] sm:$0xff]
      %v252 = vld [vmem:[%s169 + $0x1f0] sm:$0xf]
      %v253 = vld [vmem:[%s169 + $0x1f4] sm:$0xff]
      %v254 = vld [vmem:[%s169 + $0x1fc] sm:$0xff]
      %v255 = vld [vmem:[%s169 + $0x204] sm:$0xf]
      %v256 = vld [vmem:[%s169 + $0x208] sm:$0xff]
      %v257 = vld [vmem:[%s169 + $0x210] sm:$0xff]
      %v258 = vld [vmem:[%s169 + $0x218] sm:$0xf]
      %v259 = vld [vmem:[%s169 + $0x21c] sm:$0xff]
      %v260 = vld [vmem:[%s169 + $0x224] sm:$0xff]
      %v261 = vld [vmem:[%s169 + $0x22c] sm:$0xf]
      %v262 = vld [vmem:[%s169 + $0x230] sm:$0xff]
      %v263 = vld [vmem:[%s169 + $0x238] sm:$0xff]
      %v264 = vld [vmem:[%s169 + $0x240] sm:$0xf]
      %v265 = vld [vmem:[%s169 + $0x244] sm:$0xff]
      %v266 = vld [vmem:[%s169 + $0x24c] sm:$0xff]
      %v267 = vld [vmem:[%s169 + $0x254] sm:$0xf]
      %v268 = vld [vmem:[%s169 + $0x258] sm:$0xff]
      %v269 = vld [vmem:[%s169 + $0x260] sm:$0xff]
      %v270 = vld [vmem:[%s169 + $0x268] sm:$0xf]
      %v271 = vld [vmem:[%s169 + $0x26c] sm:$0xff]
      %v272 = vld [vmem:[%s169 + $0x274] sm:$0xff]
      %v273 = vld [vmem:[%s169 + $0x27c] sm:$0xf]
      %v274 = vld [vmem:[%s169 + $0x280] sm:$0xff]
      %v275 = vld [vmem:[%s169 + $0x288] sm:$0xff]
      %v276 = vld [vmem:[%s169 + $0x290] sm:$0xf]
      %v277 = vld [vmem:[%s169 + $0x294] sm:$0xff]
      %v278 = vld [vmem:[%s169 + $0x29c] sm:$0xff]
      %v279 = vld [vmem:[%s169 + $0x2a4] sm:$0xf]
      %v280 = vld [vmem:[%s169 + $0x2a8] sm:$0xff]
      %v281 = vld [vmem:[%s169 + $0x2b0] sm:$0xff]
      %v282 = vld [vmem:[%s169 + $0x2b8] sm:$0xf]
      %v283 = vld [vmem:[%s169 + $0x2bc] sm:$0xff]
      %v284 = vld [vmem:[%s169 + $0x2c4] sm:$0xff]
      %v285 = vld [vmem:[%s169 + $0x2cc] sm:$0xf]
      %v286 = vld [vmem:[%s169 + $0x2d0] sm:$0xff]
      %v287 = vld [vmem:[%s169 + $0x2d8] sm:$0xff]
      %v288 = vld [vmem:[%s169 + $0x2e0] sm:$0xf]
      %v289 = vld [vmem:[%s169 + $0x2e4] sm:$0xff]
      %v290 = vld [vmem:[%s169 + $0x2ec] sm:$0xff]
      %v291 = vld [vmem:[%s169 + $0x2f4] sm:$0xf]
      %v292 = vld [vmem:[%s169 + $0x2f8] sm:$0xff]
      %v293 = vld [vmem:[%s169 + $0x300] sm:$0xff]
      %v294 = vld [vmem:[%s169 + $0x308] sm:$0xf]
      %v295 = vld [vmem:[%s169 + $0x30c] sm:$0xff]
      %v296 = vld [vmem:[%s169 + $0x314] sm:$0xff]
      %v297 = vld [vmem:[%s169 + $0x31c] sm:$0xf]
      %v298 = vld [vmem:[%s169 + $0x320] sm:$0xff]
      %v299 = vld [vmem:[%s169 + $0x328] sm:$0xff]
      %v300 = vld [vmem:[%s169 + $0x330] sm:$0xf]
      %v301 = vld [vmem:[%s169 + $0x334] sm:$0xff]
      %v302 = vld [vmem:[%s169 + $0x33c] sm:$0xff]
      %v303 = vld [vmem:[%s169 + $0x344] sm:$0xf]
      %v304 = vld [vmem:[%s169 + $0x348] sm:$0xff]
      %v305 = vld [vmem:[%s169 + $0x350] sm:$0xff]
      %v306 = vld [vmem:[%s169 + $0x358] sm:$0xf]
      %v307 = vld [vmem:[%s169 + $0x35c] sm:$0xff]
      %v308 = vld [vmem:[%s169 + $0x364] sm:$0xff]
      %v309 = vld [vmem:[%s169 + $0x36c] sm:$0xf]
      %v310 = vld [vmem:[%s169 + $0x370] sm:$0xff]
      %v311 = vld [vmem:[%s169 + $0x378] sm:$0xff]
      %v312 = vld [vmem:[%s169 + $0x380] sm:$0xf]
      %v313 = vld [vmem:[%s169 + $0x384] sm:$0xff]
      %v314 = vld [vmem:[%s169 + $0x38c] sm:$0xff]
      %v315 = vld [vmem:[%s169 + $0x394] sm:$0xf]
      %v316 = vld [vmem:[%s169 + $0x398] sm:$0xff]
      %v317 = vld [vmem:[%s169 + $0x3a0] sm:$0xff]
      %v318 = vld [vmem:[%s169 + $0x3a8] sm:$0xf]
      %v319 = vld [vmem:[%s169 + $0x3ac] sm:$0xff]
      %v320 = vld [vmem:[%s169 + $0x3b4] sm:$0xff]
      %v321 = vld [vmem:[%s169 + $0x3bc] sm:$0xf]
      %v322 = vld [vmem:[%s169 + $0x3c0] sm:$0xff]
      %v323 = vld [vmem:[%s169 + $0x3c8] sm:$0xff]
      %v324 = vld [vmem:[%s169 + $0x3d0] sm:$0xf]
      %v325 = vld [vmem:[%s169 + $0x3d4] sm:$0xff]
      %v326 = vld [vmem:[%s169 + $0x3dc] sm:$0xff]
      %v327 = vld [vmem:[%s169 + $0x3e4] sm:$0xf]
      %v328 = vld [vmem:[%s169 + $0x3e8] sm:$0xff]
      %v329 = vld [vmem:[%s169 + $0x3f0] sm:$0xff]
      %v330 = vld [vmem:[%s169 + $0x3f8] sm:$0xf]
      %v331 = vld [vmem:[%s169 + $0x3fc] sm:$0xff]
      %v332 = vld [vmem:[%s169 + $0x404] sm:$0xff]
      %v333 = vld [vmem:[%s169 + $0x40c] sm:$0xf]
      %v334 = vld [vmem:[%s169 + $0x410] sm:$0xff]
      %v335 = vld [vmem:[%s169 + $0x418] sm:$0xff]
      %v336 = vld [vmem:[%s169 + $0x420] sm:$0xf]
      %v337 = vld [vmem:[%s169 + $0x424] sm:$0xff]
      %v338 = vld [vmem:[%s169 + $0x42c] sm:$0xff]
      %v339 = vld [vmem:[%s169 + $0x434] sm:$0xf]
      %v340 = vld [vmem:[%s169 + $0x438] sm:$0xff]
      %v341 = vld [vmem:[%s169 + $0x440] sm:$0xff]
      %v342 = vld [vmem:[%s169 + $0x448] sm:$0xf]
      %v343 = vld [vmem:[%s169 + $0x44c] sm:$0xff]
      %v344 = vld [vmem:[%s169 + $0x454] sm:$0xff]
      %v345 = vld [vmem:[%s169 + $0x45c] sm:$0xf]
      %v346 = vld [vmem:[%s169 + $0x460] sm:$0xff]
      %v347 = vld [vmem:[%s169 + $0x468] sm:$0xff]
      %v348 = vld [vmem:[%s169 + $0x470] sm:$0xf]
      %v349 = vld [vmem:[%s169 + $0x474] sm:$0xff]
      %v350 = vld [vmem:[%s169 + $0x47c] sm:$0xff]
      %v351 = vld [vmem:[%s169 + $0x484] sm:$0xf]
      %v352 = vld [vmem:[%s169 + $0x488] sm:$0xff]
      %v353 = vld [vmem:[%s169 + $0x490] sm:$0xff]
      %v354 = vld [vmem:[%s169 + $0x498] sm:$0xf]
      %v355 = vld [vmem:[%s169 + $0x49c] sm:$0xff]
      %v356 = vld [vmem:[%s169 + $0x4a4] sm:$0xff]
      %v357 = vld [vmem:[%s169 + $0x4ac] sm:$0xf]
      %v358 = vld [vmem:[%s169 + $0x4b0] sm:$0xff]
      %v359 = vld [vmem:[%s169 + $0x4b8] sm:$0xff]
      %v360 = vld [vmem:[%s169 + $0x4c0] sm:$0xf]
      %v361 = vld [vmem:[%s169 + $0x4c4] sm:$0xff]
      %v362 = vld [vmem:[%s169 + $0x4cc] sm:$0xff]
      %v363 = vld [vmem:[%s169 + $0x4d4] sm:$0xf]
      %v364 = vld [vmem:[%s169 + $0x4d8] sm:$0xff]
      %v365 = vld [vmem:[%s169 + $0x4e0] sm:$0xff]
      %v366 = vld [vmem:[%s169 + $0x4e8] sm:$0xf]
      %v367 = vld [vmem:[%s169 + $0x4ec] sm:$0xff]
      %v368 = vld [vmem:[%s169 + $0x4f4] sm:$0xff]
      %v369 = vld [vmem:[%s169 + $0x4fc] sm:$0xf]
      %v370 = vld [vmem:[%s169 + $0x500] sm:$0xff]
      %v371 = vld [vmem:[%s169 + $0x508] sm:$0xff]
      %v372 = vld [vmem:[%s169 + $0x510] sm:$0xf]
      %v373 = vld [vmem:[%s169 + $0x514] sm:$0xff]
      %v374 = vld [vmem:[%s169 + $0x51c] sm:$0xff]
      %v375 = vld [vmem:[%s169 + $0x524] sm:$0xf]
      %v376 = vld [vmem:[%s169 + $0x528] sm:$0xff]
      %v377 = vld [vmem:[%s169 + $0x530] sm:$0xff]
      %v378 = vld [vmem:[%s169 + $0x538] sm:$0xf]
      %v379 = vld [vmem:[%s169 + $0x53c] sm:$0xff]
      %v380 = vld [vmem:[%s169 + $0x544] sm:$0xff]
      %v381 = vld [vmem:[%s169 + $0x54c] sm:$0xf]
      %v382 = vld [vmem:[%s169 + $0x550] sm:$0xff]
      %v383 = vld [vmem:[%s169 + $0x558] sm:$0xff]
      %v384 = vld [vmem:[%s169 + $0x560] sm:$0xf]
      %v385 = vld [vmem:[%s169 + $0x564] sm:$0xff]
      %v386 = vld [vmem:[%s169 + $0x56c] sm:$0xff]
      %v387 = vld [vmem:[%s169 + $0x574] sm:$0xf]
      %v388 = vld [vmem:[%s169 + $0x578] sm:$0xff]
      %v389 = vld [vmem:[%s169 + $0x580] sm:$0xff]
      %v390 = vld [vmem:[%s169 + $0x588] sm:$0xf]
      %v391 = vld [vmem:[%s169 + $0x58c] sm:$0xff]
      %v392 = vld [vmem:[%s169 + $0x594] sm:$0xff]
      %v393 = vld [vmem:[%s169 + $0x59c] sm:$0xf]
      %v394 = vld [vmem:[%s169 + $0x5a0] sm:$0xff]
      %v395 = vld [vmem:[%s169 + $0x5a8] sm:$0xff]
      %v396 = vld [vmem:[%s169 + $0x5b0] sm:$0xf]
      %v397 = vld [vmem:[%s169 + $0x5b4] sm:$0xff]
      %v398 = vld [vmem:[%s169 + $0x5bc] sm:$0xff]
      %v399 = vld [vmem:[%s169 + $0x5c4] sm:$0xf]
      %v400 = vld [vmem:[%s169 + $0x5c8] sm:$0xff]
      %v401 = vld [vmem:[%s169 + $0x5d0] sm:$0xff]
      %v402 = vld [vmem:[%s169 + $0x5d8] sm:$0xf]
      %v403 = vld [vmem:[%s169 + $0x5dc] sm:$0xff]
      %v404 = vld [vmem:[%s169 + $0x5e4] sm:$0xff]
      %v405 = vld [vmem:[%s169 + $0x5ec] sm:$0xf]
      %v406 = vld [vmem:[%s169 + $0x5f0] sm:$0xff]
      %v407 = vld [vmem:[%s169 + $0x5f8] sm:$0xff]
      %v408 = vld [vmem:[%s169 + $0x600] sm:$0xf]
      %v409 = vld [vmem:[%s169 + $0x604] sm:$0xff]
      %v410 = vld [vmem:[%s169 + $0x60c] sm:$0xff]
      %v411 = vld [vmem:[%s169 + $0x614] sm:$0xf]
      %v412 = vld [vmem:[%s169 + $0x618] sm:$0xff]
      %v413 = vld [vmem:[%s169 + $0x620] sm:$0xff]
      %v414 = vld [vmem:[%s169 + $0x628] sm:$0xf]
      %v415 = vld [vmem:[%s169 + $0x62c] sm:$0xff]
      %v416 = vld [vmem:[%s169 + $0x634] sm:$0xff]
      %v417 = vld [vmem:[%s169 + $0x63c] sm:$0xf]
      %v418 = vld [vmem:[%s169 + $0x640] sm:$0xff]
      %v419 = vld [vmem:[%s169 + $0x648] sm:$0xff]
      %v420 = vld [vmem:[%s169 + $0x650] sm:$0xf]
      %v421 = vld [vmem:[%s169 + $0x654] sm:$0xff]
      %v422 = vld [vmem:[%s169 + $0x65c] sm:$0xff]
      %v423 = vld [vmem:[%s169 + $0x664] sm:$0xf]
      %v424 = vld [vmem:[%s169 + $0x668] sm:$0xff]
      %v425 = vld [vmem:[%s169 + $0x670] sm:$0xff]
      %v426 = vld [vmem:[%s169 + $0x678] sm:$0xf]
      %v427 = vld [vmem:[%s169 + $0x67c] sm:$0xff]
      %v428 = vld [vmem:[%s169 + $0x684] sm:$0xff]
      %v429 = vld [vmem:[%s169 + $0x68c] sm:$0xf]
      %v430 = vld [vmem:[%s1] sm:$0xf]
      %v431 = vld [vmem:[%s1 + $0x4] sm:$0xf]
      %v432 = vld [vmem:[%s1 + $0x8] sm:$0xf]
      %v433 = vld [vmem:[%s1 + $0xc] sm:$0xf]
      %v434 = vld [vmem:[%s1 + $0x10] sm:$0xf]
      %v435 = vld [vmem:[%s1 + $0x14] sm:$0xf]
      %v436 = vld [vmem:[%s1 + $0x18] sm:$0xf]
      %v437 = vld [vmem:[%s1 + $0x1c] sm:$0xf]
      %v438 = vld [vmem:[%s1 + $0x20] sm:$0xf]
      %v439 = vld [vmem:[%s1 + $0x24] sm:$0xf]
      %v440 = vld [vmem:[%s1 + $0x28] sm:$0xf]
      %v441 = vld [vmem:[%s1 + $0x2c] sm:$0xf]
      %v442 = vld [vmem:[%s1 + $0x30] sm:$0xf]
      %v443 = vld [vmem:[%s1 + $0x34] sm:$0xf]
      %v444 = vld [vmem:[%s1 + $0x38] sm:$0xf]
      %v445 = vld [vmem:[%s1 + $0x3c] sm:$0xf]
      %v446 = vld [vmem:[%s1 + $0x40] sm:$0xf]
      %v447 = vld [vmem:[%s1 + $0x44] sm:$0xf]
      %v448 = vld [vmem:[%s1 + $0x48] sm:$0xf]
      %v449 = vld [vmem:[%s1 + $0x4c] sm:$0xf]
      %v450 = vld [vmem:[%s1 + $0x50] sm:$0xf]
      %v451 = vld [vmem:[%s1 + $0x54] sm:$0xf]
      %v452 = vld [vmem:[%s1 + $0x58] sm:$0xf]
      %v453 = vld [vmem:[%s1 + $0x5c] sm:$0xf]
      %v454 = vld [vmem:[%s1 + $0x60] sm:$0xf]
      %v455 = vld [vmem:[%s1 + $0x64] sm:$0xf]
      %v456 = vld [vmem:[%s1 + $0x68] sm:$0xf]
      %v457 = vld [vmem:[%s1 + $0x6c] sm:$0xf]
      %v458 = vld [vmem:[%s1 + $0x70] sm:$0xf]
      %v459 = vld [vmem:[%s1 + $0x74] sm:$0xf]
      %v460 = vld [vmem:[%s1 + $0x78] sm:$0xf]
      %v461 = vld [vmem:[%s1 + $0x7c] sm:$0xf]
      %v462 = vld [vmem:[%s1 + $0x80] sm:$0xf]
      %v463 = vld [vmem:[%s1 + $0x84] sm:$0xf]
      %v464 = vld [vmem:[%s1 + $0x88] sm:$0xf]
      %v465 = vld [vmem:[%s1 + $0x8c] sm:$0xf]
      %v466 = vld [vmem:[%s1 + $0x90] sm:$0xf]
      %v467 = vld [vmem:[%s1 + $0x94] sm:$0xf]
      %v468 = vld [vmem:[%s1 + $0x98] sm:$0xf]
      %v469 = vld [vmem:[%s1 + $0x9c] sm:$0xf]
      %v470 = vld [vmem:[%s1 + $0xa0] sm:$0xf]
      %v471 = vld [vmem:[%s1 + $0xa4] sm:$0xf]
      %v472 = vld [vmem:[%s1 + $0xa8] sm:$0xf]
      %v473 = vld [vmem:[%s1 + $0xac] sm:$0xf]
      %v474 = vld [vmem:[%s1 + $0xb0] sm:$0xf]
      %v475 = vld [vmem:[%s1 + $0xb4] sm:$0xf]
      %v476 = vld [vmem:[%s1 + $0xb8] sm:$0xf]
      %v477 = vld [vmem:[%s1 + $0xbc] sm:$0xf]
      %v478 = vld [vmem:[%s1 + $0xc0] sm:$0xf]
      %v479 = vld [vmem:[%s1 + $0xc4] sm:$0xf]
      %v480 = vld [vmem:[%s1 + $0xc8] sm:$0xf]
      %v481 = vld [vmem:[%s1 + $0xcc] sm:$0xf]
      %v482 = vld [vmem:[%s1 + $0xd0] sm:$0xf]
      %v483 = vld [vmem:[%s1 + $0xd4] sm:$0xf]
      %v484 = vld [vmem:[%s1 + $0xd8] sm:$0xf]
      %v485 = vld [vmem:[%s1 + $0xdc] sm:$0xf]
      %v486 = vld [vmem:[%s1 + $0xe0] sm:$0xf]
      %v487 = vld [vmem:[%s1 + $0xe4] sm:$0xf]
      %v488 = vld [vmem:[%s1 + $0xe8] sm:$0xf]
      %v489 = vld [vmem:[%s1 + $0xec] sm:$0xf]
      %v490 = vld [vmem:[%s1 + $0xf0] sm:$0xf]
      %v491 = vld [vmem:[%s1 + $0xf4] sm:$0xf]
      %v492 = vld [vmem:[%s1 + $0xf8] sm:$0xf]
      %v493 = vld [vmem:[%s1 + $0xfc] sm:$0xf]
      %v494 = vld [vmem:[%s1 + $0x100] sm:$0xf]
      %v495 = vld [vmem:[%s1 + $0x104] sm:$0xf]
      %v496 = vld [vmem:[%s1 + $0x108] sm:$0xf]
      %v497 = vld [vmem:[%s1 + $0x10c] sm:$0xf]
      %v498 = vld [vmem:[%s1 + $0x110] sm:$0xf]
      %v499 = vld [vmem:[%s1 + $0x114] sm:$0xf]
      %v500 = vld [vmem:[%s1 + $0x118] sm:$0xf]
      %v501 = vld [vmem:[%s1 + $0x11c] sm:$0xf]
      %v502 = vld [vmem:[%s1 + $0x120] sm:$0xf]
      %v503 = vld [vmem:[%s1 + $0x124] sm:$0xf]
      %v504 = vld [vmem:[%s1 + $0x128] sm:$0xf]
      %v505 = vld [vmem:[%s2] sm:$0x1]
      %v507 = vperm.slane %v505, 0
      %v761 = vunpack.c.l.b16 %v178
      %v762 = vunpack.c.h.b16 %v178
      %v763 = vunpack.c.l.b16 %v179
      %v764 = vunpack.c.h.b16 %v179
      %v765 = vunpack.c.l.b16 %v180
      %v766 = vunpack.c.l.b16 %v181
      %v767 = vunpack.c.h.b16 %v181
      %v768 = vunpack.c.l.b16 %v182
      %v769 = vunpack.c.h.b16 %v182
      %v770 = vunpack.c.l.b16 %v183
      %v771 = vunpack.c.l.b16 %v184
      %v772 = vunpack.c.h.b16 %v184
      %v773 = vunpack.c.l.b16 %v185
      %v774 = vunpack.c.h.b16 %v185
      %v775 = vunpack.c.l.b16 %v186
      %v776 = vunpack.c.l.b16 %v187
      %v777 = vunpack.c.h.b16 %v187
      %v778 = vunpack.c.l.b16 %v188
      %v779 = vunpack.c.h.b16 %v188
      %v780 = vunpack.c.l.b16 %v189
      %v781 = vunpack.c.l.b16 %v190
      %v782 = vunpack.c.h.b16 %v190
      %v783 = vunpack.c.l.b16 %v191
      %v784 = vunpack.c.h.b16 %v191
      %v785 = vunpack.c.l.b16 %v192
      %v786 = vunpack.c.l.b16 %v193
      %v787 = vunpack.c.h.b16 %v193
      %v788 = vunpack.c.l.b16 %v194
      %v789 = vunpack.c.h.b16 %v194
      %v790 = vunpack.c.l.b16 %v195
      %v791 = vunpack.c.l.b16 %v196
      %v792 = vunpack.c.h.b16 %v196
      %v793 = vunpack.c.l.b16 %v197
      %v794 = vunpack.c.h.b16 %v197
      %v795 = vunpack.c.l.b16 %v198
      %v796 = vunpack.c.l.b16 %v199
      %v797 = vunpack.c.h.b16 %v199
      %v798 = vunpack.c.l.b16 %v200
      %v799 = vunpack.c.h.b16 %v200
      %v800 = vunpack.c.l.b16 %v201
      %v801 = vunpack.c.l.b16 %v202
      %v802 = vunpack.c.h.b16 %v202
      %v803 = vunpack.c.l.b16 %v203
      %v804 = vunpack.c.h.b16 %v203
      %v805 = vunpack.c.l.b16 %v204
      %v806 = vunpack.c.l.b16 %v205
      %v807 = vunpack.c.h.b16 %v205
      %v808 = vunpack.c.l.b16 %v206
      %v809 = vunpack.c.h.b16 %v206
      %v810 = vunpack.c.l.b16 %v207
      %v811 = vunpack.c.l.b16 %v208
      %v812 = vunpack.c.h.b16 %v208
      %v813 = vunpack.c.l.b16 %v209
      %v814 = vunpack.c.h.b16 %v209
      %v815 = vunpack.c.l.b16 %v210
      %v816 = vunpack.c.l.b16 %v211
      %v817 = vunpack.c.h.b16 %v211
      %v818 = vunpack.c.l.b16 %v212
      %v819 = vunpack.c.h.b16 %v212
      %v820 = vunpack.c.l.b16 %v213
      %v821 = vunpack.c.l.b16 %v214
      %v822 = vunpack.c.h.b16 %v214
      %v823 = vunpack.c.l.b16 %v215
      %v824 = vunpack.c.h.b16 %v215
      %v825 = vunpack.c.l.b16 %v216
      %v826 = vunpack.c.l.b16 %v217
      %v827 = vunpack.c.h.b16 %v217
      %v828 = vunpack.c.l.b16 %v218
      %v829 = vunpack.c.h.b16 %v218
      %v830 = vunpack.c.l.b16 %v219
      %v831 = vunpack.c.l.b16 %v220
      %v832 = vunpack.c.h.b16 %v220
      %v833 = vunpack.c.l.b16 %v221
      %v834 = vunpack.c.h.b16 %v221
      %v835 = vunpack.c.l.b16 %v222
      %v836 = vunpack.c.l.b16 %v223
      %v837 = vunpack.c.h.b16 %v223
      %v838 = vunpack.c.l.b16 %v224
      %v839 = vunpack.c.h.b16 %v224
      %v840 = vunpack.c.l.b16 %v225
      %v841 = vunpack.c.l.b16 %v226
      %v842 = vunpack.c.h.b16 %v226
      %v843 = vunpack.c.l.b16 %v227
      %v844 = vunpack.c.h.b16 %v227
      %v845 = vunpack.c.l.b16 %v228
      %v846 = vunpack.c.l.b16 %v229
      %v847 = vunpack.c.h.b16 %v229
      %v848 = vunpack.c.l.b16 %v230
      %v849 = vunpack.c.h.b16 %v230
      %v850 = vunpack.c.l.b16 %v231
      %v851 = vunpack.c.l.b16 %v232
      %v852 = vunpack.c.h.b16 %v232
      %v853 = vunpack.c.l.b16 %v233
      %v854 = vunpack.c.h.b16 %v233
      %v855 = vunpack.c.l.b16 %v234
      %v856 = vunpack.c.l.b16 %v235
      %v857 = vunpack.c.h.b16 %v235
      %v858 = vunpack.c.l.b16 %v236
      %v859 = vunpack.c.h.b16 %v236
      %v860 = vunpack.c.l.b16 %v237
      %v861 = vunpack.c.l.b16 %v238
      %v862 = vunpack.c.h.b16 %v238
      %v863 = vunpack.c.l.b16 %v239
      %v864 = vunpack.c.h.b16 %v239
      %v865 = vunpack.c.l.b16 %v240
      %v866 = vunpack.c.l.b16 %v241
      %v867 = vunpack.c.h.b16 %v241
      %v868 = vunpack.c.l.b16 %v242
      %v869 = vunpack.c.h.b16 %v242
      %v870 = vunpack.c.l.b16 %v243
      %v871 = vunpack.c.l.b16 %v244
      %v872 = vunpack.c.h.b16 %v244
      %v873 = vunpack.c.l.b16 %v245
      %v874 = vunpack.c.h.b16 %v245
      %v875 = vunpack.c.l.b16 %v246
      %v876 = vunpack.c.l.b16 %v247
      %v877 = vunpack.c.h.b16 %v247
      %v878 = vunpack.c.l.b16 %v248
      %v879 = vunpack.c.h.b16 %v248
      %v880 = vunpack.c.l.b16 %v249
      %v881 = vunpack.c.l.b16 %v250
      %v882 = vunpack.c.h.b16 %v250
      %v883 = vunpack.c.l.b16 %v251
      %v884 = vunpack.c.h.b16 %v251
      %v885 = vunpack.c.l.b16 %v252
      %v886 = vunpack.c.l.b16 %v253
      %v887 = vunpack.c.h.b16 %v253
      %v888 = vunpack.c.l.b16 %v254
      %v889 = vunpack.c.h.b16 %v254
      %v890 = vunpack.c.l.b16 %v255
      %v891 = vunpack.c.l.b16 %v256
      %v892 = vunpack.c.h.b16 %v256
      %v893 = vunpack.c.l.b16 %v257
      %v894 = vunpack.c.h.b16 %v257
      %v895 = vunpack.c.l.b16 %v258
      %v896 = vunpack.c.l.b16 %v259
      %v897 = vunpack.c.h.b16 %v259
      %v898 = vunpack.c.l.b16 %v260
      %v899 = vunpack.c.h.b16 %v260
      %v900 = vunpack.c.l.b16 %v261
      %v901 = vunpack.c.l.b16 %v262
      %v902 = vunpack.c.h.b16 %v262
      %v903 = vunpack.c.l.b16 %v263
      %v904 = vunpack.c.h.b16 %v263
      %v905 = vunpack.c.l.b16 %v264
      %v906 = vunpack.c.l.b16 %v265
      %v907 = vunpack.c.h.b16 %v265
      %v908 = vunpack.c.l.b16 %v266
      %v909 = vunpack.c.h.b16 %v266
      %v910 = vunpack.c.l.b16 %v267
      %v911 = vunpack.c.l.b16 %v268
      %v912 = vunpack.c.h.b16 %v268
      %v913 = vunpack.c.l.b16 %v269
      %v914 = vunpack.c.h.b16 %v269
      %v915 = vunpack.c.l.b16 %v270
      %v916 = vunpack.c.l.b16 %v271
      %v917 = vunpack.c.h.b16 %v271
      %v918 = vunpack.c.l.b16 %v272
      %v919 = vunpack.c.h.b16 %v272
      %v920 = vunpack.c.l.b16 %v273
      %v921 = vunpack.c.l.b16 %v274
      %v922 = vunpack.c.h.b16 %v274
      %v923 = vunpack.c.l.b16 %v275
      %v924 = vunpack.c.h.b16 %v275
      %v925 = vunpack.c.l.b16 %v276
      %v926 = vunpack.c.l.b16 %v277
      %v927 = vunpack.c.h.b16 %v277
      %v928 = vunpack.c.l.b16 %v278
      %v929 = vunpack.c.h.b16 %v278
      %v930 = vunpack.c.l.b16 %v279
      %v931 = vunpack.c.l.b16 %v280
      %v932 = vunpack.c.h.b16 %v280
      %v933 = vunpack.c.l.b16 %v281
      %v934 = vunpack.c.h.b16 %v281
      %v935 = vunpack.c.l.b16 %v282
      %v936 = vunpack.c.l.b16 %v283
      %v937 = vunpack.c.h.b16 %v283
      %v938 = vunpack.c.l.b16 %v284
      %v939 = vunpack.c.h.b16 %v284
      %v940 = vunpack.c.l.b16 %v285
      %v941 = vunpack.c.l.b16 %v286
      %v942 = vunpack.c.h.b16 %v286
      %v943 = vunpack.c.l.b16 %v287
      %v944 = vunpack.c.h.b16 %v287
      %v945 = vunpack.c.l.b16 %v288
      %v946 = vunpack.c.l.b16 %v289
      %v947 = vunpack.c.h.b16 %v289
      %v948 = vunpack.c.l.b16 %v290
      %v949 = vunpack.c.h.b16 %v290
      %v950 = vunpack.c.l.b16 %v291
      %v951 = vunpack.c.l.b16 %v292
      %v952 = vunpack.c.h.b16 %v292
      %v953 = vunpack.c.l.b16 %v293
      %v954 = vunpack.c.h.b16 %v293
      %v955 = vunpack.c.l.b16 %v294
      %v956 = vunpack.c.l.b16 %v295
      %v957 = vunpack.c.h.b16 %v295
      %v958 = vunpack.c.l.b16 %v296
      %v959 = vunpack.c.h.b16 %v296
      %v960 = vunpack.c.l.b16 %v297
      %v961 = vunpack.c.l.b16 %v298
      %v962 = vunpack.c.h.b16 %v298
      %v963 = vunpack.c.l.b16 %v299
      %v964 = vunpack.c.h.b16 %v299
      %v965 = vunpack.c.l.b16 %v300
      %v966 = vunpack.c.l.b16 %v301
      %v967 = vunpack.c.h.b16 %v301
      %v968 = vunpack.c.l.b16 %v302
      %v969 = vunpack.c.h.b16 %v302
      %v970 = vunpack.c.l.b16 %v303
      %v971 = vunpack.c.l.b16 %v304
      %v972 = vunpack.c.h.b16 %v304
      %v973 = vunpack.c.l.b16 %v305
      %v974 = vunpack.c.h.b16 %v305
      %v975 = vunpack.c.l.b16 %v306
      %v976 = vunpack.c.l.b16 %v307
      %v977 = vunpack.c.h.b16 %v307
      %v978 = vunpack.c.l.b16 %v308
      %v979 = vunpack.c.h.b16 %v308
      %v980 = vunpack.c.l.b16 %v309
      %v981 = vunpack.c.l.b16 %v310
      %v982 = vunpack.c.h.b16 %v310
      %v983 = vunpack.c.l.b16 %v311
      %v984 = vunpack.c.h.b16 %v311
      %v985 = vunpack.c.l.b16 %v312
      %v986 = vunpack.c.l.b16 %v313
      %v987 = vunpack.c.h.b16 %v313
      %v988 = vunpack.c.l.b16 %v314
      %v989 = vunpack.c.h.b16 %v314
      %v990 = vunpack.c.l.b16 %v315
      %v991 = vunpack.c.l.b16 %v316
      %v992 = vunpack.c.h.b16 %v316
      %v993 = vunpack.c.l.b16 %v317
      %v994 = vunpack.c.h.b16 %v317
      %v995 = vunpack.c.l.b16 %v318
      %v996 = vunpack.c.l.b16 %v319
      %v997 = vunpack.c.h.b16 %v319
      %v998 = vunpack.c.l.b16 %v320
      %v999 = vunpack.c.h.b16 %v320
      %v1000 = vunpack.c.l.b16 %v321
      %v1001 = vunpack.c.l.b16 %v322
      %v1002 = vunpack.c.h.b16 %v322
      %v1003 = vunpack.c.l.b16 %v323
      %v1004 = vunpack.c.h.b16 %v323
      %v1005 = vunpack.c.l.b16 %v324
      %v1006 = vunpack.c.l.b16 %v325
      %v1007 = vunpack.c.h.b16 %v325
      %v1008 = vunpack.c.l.b16 %v326
      %v1009 = vunpack.c.h.b16 %v326
      %v1010 = vunpack.c.l.b16 %v327
      %v1011 = vunpack.c.l.b16 %v328
      %v1012 = vunpack.c.h.b16 %v328
      %v1013 = vunpack.c.l.b16 %v329
      %v1014 = vunpack.c.h.b16 %v329
      %v1015 = vunpack.c.l.b16 %v330
      %v1016 = vunpack.c.l.b16 %v331
      %v1017 = vunpack.c.h.b16 %v331
      %v1018 = vunpack.c.l.b16 %v332
      %v1019 = vunpack.c.h.b16 %v332
      %v1020 = vunpack.c.l.b16 %v333
      %v1021 = vunpack.c.l.b16 %v334
      %v1022 = vunpack.c.h.b16 %v334
      %v1023 = vunpack.c.l.b16 %v335
      %v1024 = vunpack.c.h.b16 %v335
      %v1025 = vunpack.c.l.b16 %v336
      %v1026 = vunpack.c.l.b16 %v337
      %v1027 = vunpack.c.h.b16 %v337
      %v1028 = vunpack.c.l.b16 %v338
      %v1029 = vunpack.c.h.b16 %v338
      %v1030 = vunpack.c.l.b16 %v339
      %v1031 = vunpack.c.l.b16 %v340
      %v1032 = vunpack.c.h.b16 %v340
      %v1033 = vunpack.c.l.b16 %v341
      %v1034 = vunpack.c.h.b16 %v341
      %v1035 = vunpack.c.l.b16 %v342
      %v1036 = vunpack.c.l.b16 %v343
      %v1037 = vunpack.c.h.b16 %v343
      %v1038 = vunpack.c.l.b16 %v344
      %v1039 = vunpack.c.h.b16 %v344
      %v1040 = vunpack.c.l.b16 %v345
      %v1041 = vunpack.c.l.b16 %v346
      %v1042 = vunpack.c.h.b16 %v346
      %v1043 = vunpack.c.l.b16 %v347
      %v1044 = vunpack.c.h.b16 %v347
      %v1045 = vunpack.c.l.b16 %v348
      %v1046 = vunpack.c.l.b16 %v349
      %v1047 = vunpack.c.h.b16 %v349
      %v1048 = vunpack.c.l.b16 %v350
      %v1049 = vunpack.c.h.b16 %v350
      %v1050 = vunpack.c.l.b16 %v351
      %v1051 = vunpack.c.l.b16 %v352
      %v1052 = vunpack.c.h.b16 %v352
      %v1053 = vunpack.c.l.b16 %v353
      %v1054 = vunpack.c.h.b16 %v353
      %v1055 = vunpack.c.l.b16 %v354
      %v1056 = vunpack.c.l.b16 %v355
      %v1057 = vunpack.c.h.b16 %v355
      %v1058 = vunpack.c.l.b16 %v356
      %v1059 = vunpack.c.h.b16 %v356
      %v1060 = vunpack.c.l.b16 %v357
      %v1061 = vunpack.c.l.b16 %v358
      %v1062 = vunpack.c.h.b16 %v358
      %v1063 = vunpack.c.l.b16 %v359
      %v1064 = vunpack.c.h.b16 %v359
      %v1065 = vunpack.c.l.b16 %v360
      %v1066 = vunpack.c.l.b16 %v361
      %v1067 = vunpack.c.h.b16 %v361
      %v1068 = vunpack.c.l.b16 %v362
      %v1069 = vunpack.c.h.b16 %v362
      %v1070 = vunpack.c.l.b16 %v363
      %v1071 = vunpack.c.l.b16 %v364
      %v1072 = vunpack.c.h.b16 %v364
      %v1073 = vunpack.c.l.b16 %v365
      %v1074 = vunpack.c.h.b16 %v365
      %v1075 = vunpack.c.l.b16 %v366
      %v1076 = vunpack.c.l.b16 %v367
      %v1077 = vunpack.c.h.b16 %v367
      %v1078 = vunpack.c.l.b16 %v368
      %v1079 = vunpack.c.h.b16 %v368
      %v1080 = vunpack.c.l.b16 %v369
      %v1081 = vunpack.c.l.b16 %v370
      %v1082 = vunpack.c.h.b16 %v370
      %v1083 = vunpack.c.l.b16 %v371
      %v1084 = vunpack.c.h.b16 %v371
      %v1085 = vunpack.c.l.b16 %v372
      %v1086 = vunpack.c.l.b16 %v373
      %v1087 = vunpack.c.h.b16 %v373
      %v1088 = vunpack.c.l.b16 %v374
      %v1089 = vunpack.c.h.b16 %v374
      %v1090 = vunpack.c.l.b16 %v375
      %v1091 = vunpack.c.l.b16 %v376
      %v1092 = vunpack.c.h.b16 %v376
      %v1093 = vunpack.c.l.b16 %v377
      %v1094 = vunpack.c.h.b16 %v377
      %v1095 = vunpack.c.l.b16 %v378
      %v1096 = vunpack.c.l.b16 %v379
      %v1097 = vunpack.c.h.b16 %v379
      %v1098 = vunpack.c.l.b16 %v380
      %v1099 = vunpack.c.h.b16 %v380
      %v1100 = vunpack.c.l.b16 %v381
      %v1101 = vunpack.c.l.b16 %v382
      %v1102 = vunpack.c.h.b16 %v382
      %v1103 = vunpack.c.l.b16 %v383
      %v1104 = vunpack.c.h.b16 %v383
      %v1105 = vunpack.c.l.b16 %v384
      %v1106 = vunpack.c.l.b16 %v385
      %v1107 = vunpack.c.h.b16 %v385
      %v1108 = vunpack.c.l.b16 %v386
      %v1109 = vunpack.c.h.b16 %v386
      %v1110 = vunpack.c.l.b16 %v387
      %v1111 = vunpack.c.l.b16 %v388
      %v1112 = vunpack.c.h.b16 %v388
      %v1113 = vunpack.c.l.b16 %v389
      %v1114 = vunpack.c.h.b16 %v389
      %v1115 = vunpack.c.l.b16 %v390
      %v1116 = vunpack.c.l.b16 %v391
      %v1117 = vunpack.c.h.b16 %v391
      %v1118 = vunpack.c.l.b16 %v392
      %v1119 = vunpack.c.h.b16 %v392
      %v1120 = vunpack.c.l.b16 %v393
      %v1121 = vunpack.c.l.b16 %v394
      %v1122 = vunpack.c.h.b16 %v394
      %v1123 = vunpack.c.l.b16 %v395
      %v1124 = vunpack.c.h.b16 %v395
      %v1125 = vunpack.c.l.b16 %v396
      %v1126 = vunpack.c.l.b16 %v397
      %v1127 = vunpack.c.h.b16 %v397
      %v1128 = vunpack.c.l.b16 %v398
      %v1129 = vunpack.c.h.b16 %v398
      %v1130 = vunpack.c.l.b16 %v399
      %v1131 = vunpack.c.l.b16 %v400
      %v1132 = vunpack.c.h.b16 %v400
      %v1133 = vunpack.c.l.b16 %v401
      %v1134 = vunpack.c.h.b16 %v401
      %v1135 = vunpack.c.l.b16 %v402
      %v1136 = vunpack.c.l.b16 %v403
      %v1137 = vunpack.c.h.b16 %v403
      %v1138 = vunpack.c.l.b16 %v404
      %v1139 = vunpack.c.h.b16 %v404
      %v1140 = vunpack.c.l.b16 %v405
      %v1141 = vunpack.c.l.b16 %v406
      %v1142 = vunpack.c.h.b16 %v406
      %v1143 = vunpack.c.l.b16 %v407
      %v1144 = vunpack.c.h.b16 %v407
      %v1145 = vunpack.c.l.b16 %v408
      %v1146 = vunpack.c.l.b16 %v409
      %v1147 = vunpack.c.h.b16 %v409
      %v1148 = vunpack.c.l.b16 %v410
      %v1149 = vunpack.c.h.b16 %v410
      %v1150 = vunpack.c.l.b16 %v411
      %v1151 = vunpack.c.l.b16 %v412
      %v1152 = vunpack.c.h.b16 %v412
      %v1153 = vunpack.c.l.b16 %v413
      %v1154 = vunpack.c.h.b16 %v413
      %v1155 = vunpack.c.l.b16 %v414
      %v1156 = vunpack.c.l.b16 %v415
      %v1157 = vunpack.c.h.b16 %v415
      %v1158 = vunpack.c.l.b16 %v416
      %v1159 = vunpack.c.h.b16 %v416
      %v1160 = vunpack.c.l.b16 %v417
      %v1161 = vunpack.c.l.b16 %v418
      %v1162 = vunpack.c.h.b16 %v418
      %v1163 = vunpack.c.l.b16 %v419
      %v1164 = vunpack.c.h.b16 %v419
      %v1165 = vunpack.c.l.b16 %v420
      %v1166 = vunpack.c.l.b16 %v421
      %v1167 = vunpack.c.h.b16 %v421
      %v1168 = vunpack.c.l.b16 %v422
      %v1169 = vunpack.c.h.b16 %v422
      %v1170 = vunpack.c.l.b16 %v423
      %v1171 = vunpack.c.l.b16 %v424
      %v1172 = vunpack.c.h.b16 %v424
      %v1173 = vunpack.c.l.b16 %v425
      %v1174 = vunpack.c.h.b16 %v425
      %v1175 = vunpack.c.l.b16 %v426
      %v1176 = vunpack.c.l.b16 %v427
      %v1177 = vunpack.c.h.b16 %v427
      %v1178 = vunpack.c.l.b16 %v428
      %v1179 = vunpack.c.h.b16 %v428
      %v1180 = vunpack.c.l.b16 %v429
      %v1181 = vpack.c.b16 %v766, %v761
      %v1182 = vpack.c.b16 %v767, %v762
      %v1183 = vpack.c.b16 %v768, %v763
      %v1184 = vpack.c.b16 %v769, %v764
      %v1185 = vpack.c.b16 %v770, %v765
      %v1186 = vpack.c.b16 %v776, %v771
      %v1187 = vpack.c.b16 %v777, %v772
      %v1188 = vpack.c.b16 %v778, %v773
      %v1189 = vpack.c.b16 %v779, %v774
      %v1190 = vpack.c.b16 %v780, %v775
      %v1191 = vpack.c.b16 %v786, %v781
      %v1192 = vpack.c.b16 %v787, %v782
      %v1193 = vpack.c.b16 %v788, %v783
      %v1194 = vpack.c.b16 %v789, %v784
      %v1195 = vpack.c.b16 %v790, %v785
      %v1196 = vpack.c.b16 %v796, %v791
      %v1197 = vpack.c.b16 %v797, %v792
      %v1198 = vpack.c.b16 %v798, %v793
      %v1199 = vpack.c.b16 %v799, %v794
      %v1200 = vpack.c.b16 %v800, %v795
      %v1201 = vpack.c.b16 %v806, %v801
      %v1202 = vpack.c.b16 %v807, %v802
      %v1203 = vpack.c.b16 %v808, %v803
      %v1204 = vpack.c.b16 %v809, %v804
      %v1205 = vpack.c.b16 %v810, %v805
      %v1206 = vpack.c.b16 %v816, %v811
      %v1207 = vpack.c.b16 %v817, %v812
      %v1208 = vpack.c.b16 %v818, %v813
      %v1209 = vpack.c.b16 %v819, %v814
      %v1210 = vpack.c.b16 %v820, %v815
      %v1211 = vpack.c.b16 %v826, %v821
      %v1212 = vpack.c.b16 %v827, %v822
      %v1213 = vpack.c.b16 %v828, %v823
      %v1214 = vpack.c.b16 %v829, %v824
      %v1215 = vpack.c.b16 %v830, %v825
      %v1216 = vpack.c.b16 %v836, %v831
      %v1217 = vpack.c.b16 %v837, %v832
      %v1218 = vpack.c.b16 %v838, %v833
      %v1219 = vpack.c.b16 %v839, %v834
      %v1220 = vpack.c.b16 %v840, %v835
      %v1221 = vpack.c.b16 %v846, %v841
      %v1222 = vpack.c.b16 %v847, %v842
      %v1223 = vpack.c.b16 %v848, %v843
      %v1224 = vpack.c.b16 %v849, %v844
      %v1225 = vpack.c.b16 %v850, %v845
      %v1226 = vpack.c.b16 %v856, %v851
      %v1227 = vpack.c.b16 %v857, %v852
      %v1228 = vpack.c.b16 %v858, %v853
      %v1229 = vpack.c.b16 %v859, %v854
      %v1230 = vpack.c.b16 %v860, %v855
      %v1231 = vpack.c.b16 %v866, %v861
      %v1232 = vpack.c.b16 %v867, %v862
      %v1233 = vpack.c.b16 %v868, %v863
      %v1234 = vpack.c.b16 %v869, %v864
      %v1235 = vpack.c.b16 %v870, %v865
      %v1236 = vpack.c.b16 %v876, %v871
      %v1237 = vpack.c.b16 %v877, %v872
      %v1238 = vpack.c.b16 %v878, %v873
      %v1239 = vpack.c.b16 %v879, %v874
      %v1240 = vpack.c.b16 %v880, %v875
      %v1241 = vpack.c.b16 %v886, %v881
      %v1242 = vpack.c.b16 %v887, %v882
      %v1243 = vpack.c.b16 %v888, %v883
      %v1244 = vpack.c.b16 %v889, %v884
      %v1245 = vpack.c.b16 %v890, %v885
      %v1246 = vpack.c.b16 %v896, %v891
      %v1247 = vpack.c.b16 %v897, %v892
      %v1248 = vpack.c.b16 %v898, %v893
      %v1249 = vpack.c.b16 %v899, %v894
      %v1250 = vpack.c.b16 %v900, %v895
      %v1251 = vpack.c.b16 %v906, %v901
      %v1252 = vpack.c.b16 %v907, %v902
      %v1253 = vpack.c.b16 %v908, %v903
      %v1254 = vpack.c.b16 %v909, %v904
      %v1255 = vpack.c.b16 %v910, %v905
      %v1256 = vpack.c.b16 %v916, %v911
      %v1257 = vpack.c.b16 %v917, %v912
      %v1258 = vpack.c.b16 %v918, %v913
      %v1259 = vpack.c.b16 %v919, %v914
      %v1260 = vpack.c.b16 %v920, %v915
      %v1261 = vpack.c.b16 %v926, %v921
      %v1262 = vpack.c.b16 %v927, %v922
      %v1263 = vpack.c.b16 %v928, %v923
      %v1264 = vpack.c.b16 %v929, %v924
      %v1265 = vpack.c.b16 %v930, %v925
      %v1266 = vpack.c.b16 %v936, %v931
      %v1267 = vpack.c.b16 %v937, %v932
      %v1268 = vpack.c.b16 %v938, %v933
      %v1269 = vpack.c.b16 %v939, %v934
      %v1270 = vpack.c.b16 %v940, %v935
      %v1271 = vpack.c.b16 %v946, %v941
      %v1272 = vpack.c.b16 %v947, %v942
      %v1273 = vpack.c.b16 %v948, %v943
      %v1274 = vpack.c.b16 %v949, %v944
      %v1275 = vpack.c.b16 %v950, %v945
      %v1276 = vpack.c.b16 %v956, %v951
      %v1277 = vpack.c.b16 %v957, %v952
      %v1278 = vpack.c.b16 %v958, %v953
      %v1279 = vpack.c.b16 %v959, %v954
      %v1280 = vpack.c.b16 %v960, %v955
      %v1281 = vpack.c.b16 %v966, %v961
      %v1282 = vpack.c.b16 %v967, %v962
      %v1283 = vpack.c.b16 %v968, %v963
      %v1284 = vpack.c.b16 %v969, %v964
      %v1285 = vpack.c.b16 %v970, %v965
      %v1286 = vpack.c.b16 %v976, %v971
      %v1287 = vpack.c.b16 %v977, %v972
      %v1288 = vpack.c.b16 %v978, %v973
      %v1289 = vpack.c.b16 %v979, %v974
      %v1290 = vpack.c.b16 %v980, %v975
      %v1291 = vpack.c.b16 %v986, %v981
      %v1292 = vpack.c.b16 %v987, %v982
      %v1293 = vpack.c.b16 %v988, %v983
      %v1294 = vpack.c.b16 %v989, %v984
      %v1295 = vpack.c.b16 %v990, %v985
      %v1296 = vpack.c.b16 %v996, %v991
      %v1297 = vpack.c.b16 %v997, %v992
      %v1298 = vpack.c.b16 %v998, %v993
      %v1299 = vpack.c.b16 %v999, %v994
      %v1300 = vpack.c.b16 %v1000, %v995
      %v1301 = vpack.c.b16 %v1006, %v1001
      %v1302 = vpack.c.b16 %v1007, %v1002
      %v1303 = vpack.c.b16 %v1008, %v1003
      %v1304 = vpack.c.b16 %v1009, %v1004
      %v1305 = vpack.c.b16 %v1010, %v1005
      %v1306 = vpack.c.b16 %v1016, %v1011
      %v1307 = vpack.c.b16 %v1017, %v1012
      %v1308 = vpack.c.b16 %v1018, %v1013
      %v1309 = vpack.c.b16 %v1019, %v1014
      %v1310 = vpack.c.b16 %v1020, %v1015
      %v1311 = vpack.c.b16 %v1026, %v1021
      %v1312 = vpack.c.b16 %v1027, %v1022
      %v1313 = vpack.c.b16 %v1028, %v1023
      %v1314 = vpack.c.b16 %v1029, %v1024
      %v1315 = vpack.c.b16 %v1030, %v1025
      %v1316 = vpack.c.b16 %v1036, %v1031
      %v1317 = vpack.c.b16 %v1037, %v1032
      %v1318 = vpack.c.b16 %v1038, %v1033
      %v1319 = vpack.c.b16 %v1039, %v1034
      %v1320 = vpack.c.b16 %v1040, %v1035
      %v1321 = vpack.c.b16 %v1046, %v1041
      %v1322 = vpack.c.b16 %v1047, %v1042
      %v1323 = vpack.c.b16 %v1048, %v1043
      %v1324 = vpack.c.b16 %v1049, %v1044
      %v1325 = vpack.c.b16 %v1050, %v1045
      %v1326 = vpack.c.b16 %v1056, %v1051
      %v1327 = vpack.c.b16 %v1057, %v1052
      %v1328 = vpack.c.b16 %v1058, %v1053
      %v1329 = vpack.c.b16 %v1059, %v1054
      %v1330 = vpack.c.b16 %v1060, %v1055
      %v1331 = vpack.c.b16 %v1066, %v1061
      %v1332 = vpack.c.b16 %v1067, %v1062
      %v1333 = vpack.c.b16 %v1068, %v1063
      %v1334 = vpack.c.b16 %v1069, %v1064
      %v1335 = vpack.c.b16 %v1070, %v1065
      %v1336 = vpack.c.b16 %v1076, %v1071
      %v1337 = vpack.c.b16 %v1077, %v1072
      %v1338 = vpack.c.b16 %v1078, %v1073
      %v1339 = vpack.c.b16 %v1079, %v1074
      %v1340 = vpack.c.b16 %v1080, %v1075
      %v1341 = vpack.c.b16 %v1086, %v1081
      %v1342 = vpack.c.b16 %v1087, %v1082
      %v1343 = vpack.c.b16 %v1088, %v1083
      %v1344 = vpack.c.b16 %v1089, %v1084
      %v1345 = vpack.c.b16 %v1090, %v1085
      %v1346 = vpack.c.b16 %v1096, %v1091
      %v1347 = vpack.c.b16 %v1097, %v1092
      %v1348 = vpack.c.b16 %v1098, %v1093
      %v1349 = vpack.c.b16 %v1099, %v1094
      %v1350 = vpack.c.b16 %v1100, %v1095
      %v1351 = vpack.c.b16 %v1106, %v1101
      %v1352 = vpack.c.b16 %v1107, %v1102
      %v1353 = vpack.c.b16 %v1108, %v1103
      %v1354 = vpack.c.b16 %v1109, %v1104
      %v1355 = vpack.c.b16 %v1110, %v1105
      %v1356 = vpack.c.b16 %v1116, %v1111
      %v1357 = vpack.c.b16 %v1117, %v1112
      %v1358 = vpack.c.b16 %v1118, %v1113
      %v1359 = vpack.c.b16 %v1119, %v1114
      %v1360 = vpack.c.b16 %v1120, %v1115
      %v1361 = vpack.c.b16 %v1126, %v1121
      %v1362 = vpack.c.b16 %v1127, %v1122
      %v1363 = vpack.c.b16 %v1128, %v1123
      %v1364 = vpack.c.b16 %v1129, %v1124
      %v1365 = vpack.c.b16 %v1130, %v1125
      %v1366 = vpack.c.b16 %v1136, %v1131
      %v1367 = vpack.c.b16 %v1137, %v1132
      %v1368 = vpack.c.b16 %v1138, %v1133
      %v1369 = vpack.c.b16 %v1139, %v1134
      %v1370 = vpack.c.b16 %v1140, %v1135
      %v1371 = vpack.c.b16 %v1146, %v1141
      %v1372 = vpack.c.b16 %v1147, %v1142
      %v1373 = vpack.c.b16 %v1148, %v1143
      %v1374 = vpack.c.b16 %v1149, %v1144
      %v1375 = vpack.c.b16 %v1150, %v1145
      %v1376 = vpack.c.b16 %v1156, %v1151
      %v1377 = vpack.c.b16 %v1157, %v1152
      %v1378 = vpack.c.b16 %v1158, %v1153
      %v1379 = vpack.c.b16 %v1159, %v1154
      %v1380 = vpack.c.b16 %v1160, %v1155
      %v1381 = vpack.c.b16 %v1166, %v1161
      %v1382 = vpack.c.b16 %v1167, %v1162
      %v1383 = vpack.c.b16 %v1168, %v1163
      %v1384 = vpack.c.b16 %v1169, %v1164
      %v1385 = vpack.c.b16 %v1170, %v1165
      %v1386 = vpack.c.b16 %v1176, %v1171
      %v1387 = vpack.c.b16 %v1177, %v1172
      %v1388 = vpack.c.b16 %v1178, %v1173
      %v1389 = vpack.c.b16 %v1179, %v1174
      %v1390 = vpack.c.b16 %v1180, %v1175
      %v1634 = vunpack.c.l.b16 %v430
      %v1635 = vunpack.c.l.b16 %v431
      %v1636 = vunpack.c.l.b16 %v432
      %v1637 = vunpack.c.l.b16 %v433
      %v1638 = vunpack.c.l.b16 %v434
      %v1639 = vunpack.c.l.b16 %v435
      %v1640 = vunpack.c.l.b16 %v436
      %v1641 = vunpack.c.l.b16 %v437
      %v1642 = vunpack.c.l.b16 %v438
      %v1643 = vunpack.c.l.b16 %v439
      %v1644 = vunpack.c.l.b16 %v440
      %v1645 = vunpack.c.l.b16 %v441
      %v1646 = vunpack.c.l.b16 %v442
      %v1647 = vunpack.c.l.b16 %v443
      %v1648 = vunpack.c.l.b16 %v444
      %v1649 = vunpack.c.l.b16 %v445
      %v1650 = vunpack.c.l.b16 %v446
      %v1651 = vunpack.c.l.b16 %v447
      %v1652 = vunpack.c.l.b16 %v448
      %v1653 = vunpack.c.l.b16 %v449
      %v1654 = vunpack.c.l.b16 %v450
      %v1655 = vunpack.c.l.b16 %v451
      %v1656 = vunpack.c.l.b16 %v452
      %v1657 = vunpack.c.l.b16 %v453
      %v1658 = vunpack.c.l.b16 %v454
      %v1659 = vunpack.c.l.b16 %v455
      %v1660 = vunpack.c.l.b16 %v456
      %v1661 = vunpack.c.l.b16 %v457
      %v1662 = vunpack.c.l.b16 %v458
      %v1663 = vunpack.c.l.b16 %v459
      %v1664 = vunpack.c.l.b16 %v460
      %v1665 = vunpack.c.l.b16 %v461
      %v1666 = vunpack.c.l.b16 %v462
      %v1667 = vunpack.c.l.b16 %v463
      %v1668 = vunpack.c.l.b16 %v464
      %v1669 = vunpack.c.l.b16 %v465
      %v1670 = vunpack.c.l.b16 %v466
      %v1671 = vunpack.c.l.b16 %v467
      %v1672 = vunpack.c.l.b16 %v468
      %v1673 = vunpack.c.l.b16 %v469
      %v1674 = vunpack.c.l.b16 %v470
      %v1675 = vunpack.c.l.b16 %v471
      %v1676 = vunpack.c.l.b16 %v472
      %v1677 = vunpack.c.l.b16 %v473
      %v1678 = vunpack.c.l.b16 %v474
      %v1679 = vunpack.c.l.b16 %v475
      %v1680 = vunpack.c.l.b16 %v476
      %v1681 = vunpack.c.l.b16 %v477
      %v1682 = vunpack.c.l.b16 %v478
      %v1683 = vunpack.c.l.b16 %v479
      %v1684 = vunpack.c.l.b16 %v480
      %v1685 = vunpack.c.l.b16 %v481
      %v1686 = vunpack.c.l.b16 %v482
      %v1687 = vunpack.c.l.b16 %v483
      %v1688 = vunpack.c.l.b16 %v484
      %v1689 = vunpack.c.l.b16 %v485
      %v1690 = vunpack.c.l.b16 %v486
      %v1691 = vunpack.c.l.b16 %v487
      %v1692 = vunpack.c.l.b16 %v488
      %v1693 = vunpack.c.l.b16 %v489
      %v1694 = vunpack.c.l.b16 %v490
      %v1695 = vunpack.c.l.b16 %v491
      %v1696 = vunpack.c.l.b16 %v492
      %v1697 = vunpack.c.l.b16 %v493
      %v1698 = vunpack.c.l.b16 %v494
      %v1699 = vunpack.c.l.b16 %v495
      %v1700 = vunpack.c.l.b16 %v496
      %v1701 = vunpack.c.l.b16 %v497
      %v1702 = vunpack.c.l.b16 %v498
      %v1703 = vunpack.c.l.b16 %v499
      %v1704 = vunpack.c.l.b16 %v500
      %v1705 = vunpack.c.l.b16 %v501
      %v1706 = vunpack.c.l.b16 %v502
      %v1707 = vunpack.c.l.b16 %v503
      %v1708 = vunpack.c.l.b16 %v504
      %v1709 = vpack.c.b16 %v1635, %v1634
      %v1710 = vpack.c.b16 %v1637, %v1636
      %v1711 = vpack.c.b16 %v1639, %v1638
      %v1712 = vpack.c.b16 %v1641, %v1640
      %v1713 = vpack.c.b16 %v1643, %v1642
      %v1714 = vpack.c.b16 %v1645, %v1644
      %v1715 = vpack.c.b16 %v1647, %v1646
      %v1716 = vpack.c.b16 %v1649, %v1648
      %v1717 = vpack.c.b16 %v1651, %v1650
      %v1718 = vpack.c.b16 %v1653, %v1652
      %v1719 = vpack.c.b16 %v1655, %v1654
      %v1720 = vpack.c.b16 %v1657, %v1656
      %v1721 = vpack.c.b16 %v1659, %v1658
      %v1722 = vpack.c.b16 %v1661, %v1660
      %v1723 = vpack.c.b16 %v1663, %v1662
      %v1724 = vpack.c.b16 %v1665, %v1664
      %v1725 = vpack.c.b16 %v1667, %v1666
      %v1726 = vpack.c.b16 %v1669, %v1668
      %v1727 = vpack.c.b16 %v1671, %v1670
      %v1728 = vpack.c.b16 %v1673, %v1672
      %v1729 = vpack.c.b16 %v1675, %v1674
      %v1730 = vpack.c.b16 %v1677, %v1676
      %v1731 = vpack.c.b16 %v1679, %v1678
      %v1732 = vpack.c.b16 %v1681, %v1680
      %v1733 = vpack.c.b16 %v1683, %v1682
      %v1734 = vpack.c.b16 %v1685, %v1684
      %v1735 = vpack.c.b16 %v1687, %v1686
      %v1736 = vpack.c.b16 %v1689, %v1688
      %v1737 = vpack.c.b16 %v1691, %v1690
      %v1738 = vpack.c.b16 %v1693, %v1692
      %v1739 = vpack.c.b16 %v1695, %v1694
      %v1740 = vpack.c.b16 %v1697, %v1696
      %v1741 = vpack.c.b16 %v1699, %v1698
      %v1742 = vpack.c.b16 %v1701, %v1700
      %v1743 = vpack.c.b16 %v1703, %v1702
      %v1744 = vpack.c.b16 %v1705, %v1704
      %v1745 = vpack.c.b16 %v1707, %v1706
      %v1746 = vpack.c.b16 %v1708, %v1708
      %vm1784 = vcmask 719872
      %v1786 = vsel %vm1784, %v1185, 0
      %v1789 = vsel %vm1784, %v1190, 0
      %v1792 = vsel %vm1784, %v1195, 0
      %v1795 = vsel %vm1784, %v1200, 0
      %v1798 = vsel %vm1784, %v1205, 0
      %v1801 = vsel %vm1784, %v1210, 0
      %v1804 = vsel %vm1784, %v1215, 0
      %v1807 = vsel %vm1784, %v1220, 0
      %v1810 = vsel %vm1784, %v1225, 0
      %v1813 = vsel %vm1784, %v1230, 0
      %v1816 = vsel %vm1784, %v1235, 0
      %v1819 = vsel %vm1784, %v1240, 0
      %v1822 = vsel %vm1784, %v1245, 0
      %v1825 = vsel %vm1784, %v1250, 0
      %v1828 = vsel %vm1784, %v1255, 0
      %v1831 = vsel %vm1784, %v1260, 0
      %v1834 = vsel %vm1784, %v1265, 0
      %v1837 = vsel %vm1784, %v1270, 0
      %v1840 = vsel %vm1784, %v1275, 0
      %v1843 = vsel %vm1784, %v1280, 0
      %v1846 = vsel %vm1784, %v1285, 0
      %v1849 = vsel %vm1784, %v1290, 0
      %v1852 = vsel %vm1784, %v1295, 0
      %v1855 = vsel %vm1784, %v1300, 0
      %v1858 = vsel %vm1784, %v1305, 0
      %v1861 = vsel %vm1784, %v1310, 0
      %v1864 = vsel %vm1784, %v1315, 0
      %v1867 = vsel %vm1784, %v1320, 0
      %v1870 = vsel %vm1784, %v1325, 0
      %v1873 = vsel %vm1784, %v1330, 0
      %v1876 = vsel %vm1784, %v1335, 0
      %v1879 = vsel %vm1784, %v1340, 0
      %v1882 = vsel %vm1784, %v1345, 0
      %v1885 = vsel %vm1784, %v1350, 0
      %v1888 = vsel %vm1784, %v1355, 0
      %v1891 = vsel %vm1784, %v1360, 0
      %v1894 = vsel %vm1784, %v1365, 0
      %v1897 = vsel %vm1784, %v1370, 0
      %v1900 = vsel %vm1784, %v1375, 0
      %v1903 = vsel %vm1784, %v1380, 0
      %v1906 = vsel %vm1784, %v1385, 0
      %v1909 = vsel %vm1784, %v1390, 0
      %vm1911 = vcmask 1043456
      %v1913 = vsel %vm1911, %v1746, 0
      %1915 = vmatpush.bf16.msra.mxu0 %v1716
      %1916 = vmatpush.bf16.msra.mxu0 %v1715
      %1917 = vmatpush.bf16.msra.mxu0 %v1714
      %1918 = vmatpush.bf16.msra.mxu0 %v1713
      %1919 = vmatpush.bf16.msra.mxu0 %v1712
      %1920 = vmatpush.bf16.msra.mxu0 %v1711
      %1921 = vmatpush.bf16.msra.mxu0 %v1710
      %1922 = vmatpush.bf16.msra.mxu0 %v1709
      %1923 = vmatmul.bf16.gmra.mxu0 %v1181
      %v1924 = vpop.f32.mrf.mxu0
      %v1925 = vadd.f32 %v507, %v1924
      %v1926 = vpop.f32.mrf.mxu0
      %v1927 = vadd.f32 %v507, %v1926
      %1928 = vmatmul.bf16.gmra.mxu0 %v1186
      %v1929 = vpop.f32.mrf.mxu0
      %v1930 = vadd.f32 %v507, %v1929
      %v1931 = vpop.f32.mrf.mxu0
      %v1932 = vadd.f32 %v507, %v1931
      %1933 = vmatmul.bf16.gmra.mxu0 %v1191
      %v1934 = vpop.f32.mrf.mxu0
      %v1935 = vadd.f32 %v507, %v1934
      %v1936 = vpop.f32.mrf.mxu0
      %v1937 = vadd.f32 %v507, %v1936
      %1938 = vmatmul.bf16.gmra.mxu0 %v1196
      %v1939 = vpop.f32.mrf.mxu0
      %v1940 = vadd.f32 %v507, %v1939
      %v1941 = vpop.f32.mrf.mxu0
      %v1942 = vadd.f32 %v507, %v1941
      %1943 = vmatmul.bf16.gmra.mxu0 %v1201
      %v1944 = vpop.f32.mrf.mxu0
      %v1945 = vadd.f32 %v507, %v1944
      %v1946 = vpop.f32.mrf.mxu0
      %v1947 = vadd.f32 %v507, %v1946
      %1948 = vmatmul.bf16.gmra.mxu0 %v1206
      %v1949 = vpop.f32.mrf.mxu0
      %v1950 = vadd.f32 %v507, %v1949
      %v1951 = vpop.f32.mrf.mxu0
      %v1952 = vadd.f32 %v507, %v1951
      %1953 = vmatmul.bf16.gmra.mxu0 %v1211
      %v1954 = vpop.f32.mrf.mxu0
      %v1955 = vadd.f32 %v507, %v1954
      %v1956 = vpop.f32.mrf.mxu0
      %v1957 = vadd.f32 %v507, %v1956
      %1958 = vmatmul.bf16.gmra.mxu0 %v1216
      %v1959 = vpop.f32.mrf.mxu0
      %v1960 = vadd.f32 %v507, %v1959
      %v1961 = vpop.f32.mrf.mxu0
      %v1962 = vadd.f32 %v507, %v1961
      %1963 = vmatmul.bf16.gmra.mxu0 %v1221
      %v1964 = vpop.f32.mrf.mxu0
      %v1965 = vadd.f32 %v507, %v1964
      %v1966 = vpop.f32.mrf.mxu0
      %v1967 = vadd.f32 %v507, %v1966
      %1968 = vmatmul.bf16.gmra.mxu0 %v1226
      %v1969 = vpop.f32.mrf.mxu0
      %v1970 = vadd.f32 %v507, %v1969
      %v1971 = vpop.f32.mrf.mxu0
      %v1972 = vadd.f32 %v507, %v1971
      %1973 = vmatmul.bf16.gmra.mxu0 %v1231
      %v1974 = vpop.f32.mrf.mxu0
      %v1975 = vadd.f32 %v507, %v1974
      %v1976 = vpop.f32.mrf.mxu0
      %v1977 = vadd.f32 %v507, %v1976
      %1978 = vmatmul.bf16.gmra.mxu0 %v1236
      %v1979 = vpop.f32.mrf.mxu0
      %v1980 = vadd.f32 %v507, %v1979
      %v1981 = vpop.f32.mrf.mxu0
      %v1982 = vadd.f32 %v507, %v1981
      %1983 = vmatmul.bf16.gmra.mxu0 %v1241
      %v1984 = vpop.f32.mrf.mxu0
      %v1985 = vadd.f32 %v507, %v1984
      %v1986 = vpop.f32.mrf.mxu0
      %v1987 = vadd.f32 %v507, %v1986
      %1988 = vmatmul.bf16.gmra.mxu0 %v1246
      %v1989 = vpop.f32.mrf.mxu0
      %v1990 = vadd.f32 %v507, %v1989
      %v1991 = vpop.f32.mrf.mxu0
      %v1992 = vadd.f32 %v507, %v1991
      %1993 = vmatmul.bf16.gmra.mxu0 %v1251
      %v1994 = vpop.f32.mrf.mxu0
      %v1995 = vadd.f32 %v507, %v1994
      %v1996 = vpop.f32.mrf.mxu0
      %v1997 = vadd.f32 %v507, %v1996
      %1998 = vmatmul.bf16.gmra.mxu0 %v1256
      %v1999 = vpop.f32.mrf.mxu0
      %v2000 = vadd.f32 %v507, %v1999
      %v2001 = vpop.f32.mrf.mxu0
      %v2002 = vadd.f32 %v507, %v2001
      %2003 = vmatmul.bf16.gmra.mxu0 %v1261
      %v2004 = vpop.f32.mrf.mxu0
      %v2005 = vadd.f32 %v507, %v2004
      %v2006 = vpop.f32.mrf.mxu0
      %v2007 = vadd.f32 %v507, %v2006
      %2008 = vmatmul.bf16.gmra.mxu0 %v1266
      %v2009 = vpop.f32.mrf.mxu0
      %v2010 = vadd.f32 %v507, %v2009
      %v2011 = vpop.f32.mrf.mxu0
      %v2012 = vadd.f32 %v507, %v2011
      %2013 = vmatmul.bf16.gmra.mxu0 %v1271
      %v2014 = vpop.f32.mrf.mxu0
      %v2015 = vadd.f32 %v507, %v2014
      %v2016 = vpop.f32.mrf.mxu0
      %v2017 = vadd.f32 %v507, %v2016
      %2018 = vmatmul.bf16.gmra.mxu0 %v1276
      %v2019 = vpop.f32.mrf.mxu0
      %v2020 = vadd.f32 %v507, %v2019
      %v2021 = vpop.f32.mrf.mxu0
      %v2022 = vadd.f32 %v507, %v2021
      %2023 = vmatmul.bf16.gmra.mxu0 %v1281
      %v2024 = vpop.f32.mrf.mxu0
      %v2025 = vadd.f32 %v507, %v2024
      %v2026 = vpop.f32.mrf.mxu0
      %v2027 = vadd.f32 %v507, %v2026
      %2028 = vmatmul.bf16.gmra.mxu0 %v1286
      %v2029 = vpop.f32.mrf.mxu0
      %v2030 = vadd.f32 %v507, %v2029
      %v2031 = vpop.f32.mrf.mxu0
      %v2032 = vadd.f32 %v507, %v2031
      %2033 = vmatmul.bf16.gmra.mxu0 %v1291
      %v2034 = vpop.f32.mrf.mxu0
      %v2035 = vadd.f32 %v507, %v2034
      %v2036 = vpop.f32.mrf.mxu0
      %v2037 = vadd.f32 %v507, %v2036
      %2038 = vmatmul.bf16.gmra.mxu0 %v1296
      %v2039 = vpop.f32.mrf.mxu0
      %v2040 = vadd.f32 %v507, %v2039
      %v2041 = vpop.f32.mrf.mxu0
      %v2042 = vadd.f32 %v507, %v2041
      %2043 = vmatmul.bf16.gmra.mxu0 %v1301
      %v2044 = vpop.f32.mrf.mxu0
      %v2045 = vadd.f32 %v507, %v2044
      %v2046 = vpop.f32.mrf.mxu0
      %v2047 = vadd.f32 %v507, %v2046
      %2048 = vmatmul.bf16.gmra.mxu0 %v1306
      %v2049 = vpop.f32.mrf.mxu0
      %v2050 = vadd.f32 %v507, %v2049
      %v2051 = vpop.f32.mrf.mxu0
      %v2052 = vadd.f32 %v507, %v2051
      %2053 = vmatmul.bf16.gmra.mxu0 %v1311
      %v2054 = vpop.f32.mrf.mxu0
      %v2055 = vadd.f32 %v507, %v2054
      %v2056 = vpop.f32.mrf.mxu0
      %v2057 = vadd.f32 %v507, %v2056
      %2058 = vmatmul.bf16.gmra.mxu0 %v1316
      %v2059 = vpop.f32.mrf.mxu0
      %v2060 = vadd.f32 %v507, %v2059
      %v2061 = vpop.f32.mrf.mxu0
      %v2062 = vadd.f32 %v507, %v2061
      %2063 = vmatmul.bf16.gmra.mxu0 %v1321
      %v2064 = vpop.f32.mrf.mxu0
      %v2065 = vadd.f32 %v507, %v2064
      %v2066 = vpop.f32.mrf.mxu0
      %v2067 = vadd.f32 %v507, %v2066
      %2068 = vmatmul.bf16.gmra.mxu0 %v1326
      %v2069 = vpop.f32.mrf.mxu0
      %v2070 = vadd.f32 %v507, %v2069
      %v2071 = vpop.f32.mrf.mxu0
      %v2072 = vadd.f32 %v507, %v2071
      %2073 = vmatmul.bf16.gmra.mxu0 %v1331
      %v2074 = vpop.f32.mrf.mxu0
      %v2075 = vadd.f32 %v507, %v2074
      %v2076 = vpop.f32.mrf.mxu0
      %v2077 = vadd.f32 %v507, %v2076
      %2078 = vmatmul.bf16.gmra.mxu0 %v1336
      %v2079 = vpop.f32.mrf.mxu0
      %v2080 = vadd.f32 %v507, %v2079
      %v2081 = vpop.f32.mrf.mxu0
      %v2082 = vadd.f32 %v507, %v2081
      %2083 = vmatmul.bf16.gmra.mxu0 %v1341
      %v2084 = vpop.f32.mrf.mxu0
      %v2085 = vadd.f32 %v507, %v2084
      %v2086 = vpop.f32.mrf.mxu0
      %v2087 = vadd.f32 %v507, %v2086
      %2088 = vmatmul.bf16.gmra.mxu0 %v1346
      %v2089 = vpop.f32.mrf.mxu0
      %v2090 = vadd.f32 %v507, %v2089
      %v2091 = vpop.f32.mrf.mxu0
      %v2092 = vadd.f32 %v507, %v2091
      %2093 = vmatmul.bf16.gmra.mxu0 %v1351
      %v2094 = vpop.f32.mrf.mxu0
      %v2095 = vadd.f32 %v507, %v2094
      %v2096 = vpop.f32.mrf.mxu0
      %v2097 = vadd.f32 %v507, %v2096
      %2098 = vmatmul.bf16.gmra.mxu0 %v1356
      %v2099 = vpop.f32.mrf.mxu0
      %v2100 = vadd.f32 %v507, %v2099
      %v2101 = vpop.f32.mrf.mxu0
      %v2102 = vadd.f32 %v507, %v2101
      %2103 = vmatmul.bf16.gmra.mxu0 %v1361
      %v2104 = vpop.f32.mrf.mxu0
      %v2105 = vadd.f32 %v507, %v2104
      %v2106 = vpop.f32.mrf.mxu0
      %v2107 = vadd.f32 %v507, %v2106
      %2108 = vmatmul.bf16.gmra.mxu0 %v1366
      %v2109 = vpop.f32.mrf.mxu0
      %v2110 = vadd.f32 %v507, %v2109
      %v2111 = vpop.f32.mrf.mxu0
      %v2112 = vadd.f32 %v507, %v2111
      %2113 = vmatmul.bf16.gmra.mxu0 %v1371
      %v2114 = vpop.f32.mrf.mxu0
      %v2115 = vadd.f32 %v507, %v2114
      %v2116 = vpop.f32.mrf.mxu0
      %v2117 = vadd.f32 %v507, %v2116
      %2118 = vmatmul.bf16.gmra.mxu0 %v1376
      %v2119 = vpop.f32.mrf.mxu0
      %v2120 = vadd.f32 %v507, %v2119
      %v2121 = vpop.f32.mrf.mxu0
      %v2122 = vadd.f32 %v507, %v2121
      %2123 = vmatmul.bf16.gmra.mxu0 %v1381
      %v2124 = vpop.f32.mrf.mxu0
      %v2125 = vadd.f32 %v507, %v2124
      %v2126 = vpop.f32.mrf.mxu0
      %v2127 = vadd.f32 %v507, %v2126
      %2128 = vmatmul.bf16.gmra.mxu0 %v1386
      %v2129 = vpop.f32.mrf.mxu0
      %v2130 = vadd.f32 %v507, %v2129
      %v2131 = vpop.f32.mrf.mxu0
      %v2132 = vadd.f32 %v507, %v2131
      %2133 = vdwg.mxu0
      %2134 = vmatpush.bf16.msra.mxu0 %v1724
      %2135 = vmatpush.bf16.msra.mxu0 %v1723
      %2136 = vmatpush.bf16.msra.mxu0 %v1722
      %2137 = vmatpush.bf16.msra.mxu0 %v1721
      %2138 = vmatpush.bf16.msra.mxu0 %v1720
      %2139 = vmatpush.bf16.msra.mxu0 %v1719
      %2140 = vmatpush.bf16.msra.mxu0 %v1718
      %2141 = vmatpush.bf16.msra.mxu0 %v1717
      %2142 = vmatmul.bf16.gmra.mxu0 %v1182
      %v2143 = vpop.f32.mrf.mxu0
      %v2144 = vadd.f32 %v1925, %v2143
      %v2145 = vpop.f32.mrf.mxu0
      %v2146 = vadd.f32 %v1927, %v2145
      %2147 = vmatmul.bf16.gmra.mxu0 %v1187
      %v2148 = vpop.f32.mrf.mxu0
      %v2149 = vadd.f32 %v1930, %v2148
      %v2150 = vpop.f32.mrf.mxu0
      %v2151 = vadd.f32 %v1932, %v2150
      %2152 = vmatmul.bf16.gmra.mxu0 %v1192
      %v2153 = vpop.f32.mrf.mxu0
      %v2154 = vadd.f32 %v1935, %v2153
      %v2155 = vpop.f32.mrf.mxu0
      %v2156 = vadd.f32 %v1937, %v2155
      %2157 = vmatmul.bf16.gmra.mxu0 %v1197
      %v2158 = vpop.f32.mrf.mxu0
      %v2159 = vadd.f32 %v1940, %v2158
      %v2160 = vpop.f32.mrf.mxu0
      %v2161 = vadd.f32 %v1942, %v2160
      %2162 = vmatmul.bf16.gmra.mxu0 %v1202
      %v2163 = vpop.f32.mrf.mxu0
      %v2164 = vadd.f32 %v1945, %v2163
      %v2165 = vpop.f32.mrf.mxu0
      %v2166 = vadd.f32 %v1947, %v2165
      %2167 = vmatmul.bf16.gmra.mxu0 %v1207
      %v2168 = vpop.f32.mrf.mxu0
      %v2169 = vadd.f32 %v1950, %v2168
      %v2170 = vpop.f32.mrf.mxu0
      %v2171 = vadd.f32 %v1952, %v2170
      %2172 = vmatmul.bf16.gmra.mxu0 %v1212
      %v2173 = vpop.f32.mrf.mxu0
      %v2174 = vadd.f32 %v1955, %v2173
      %v2175 = vpop.f32.mrf.mxu0
      %v2176 = vadd.f32 %v1957, %v2175
      %2177 = vmatmul.bf16.gmra.mxu0 %v1217
      %v2178 = vpop.f32.mrf.mxu0
      %v2179 = vadd.f32 %v1960, %v2178
      %v2180 = vpop.f32.mrf.mxu0
      %v2181 = vadd.f32 %v1962, %v2180
      %2182 = vmatmul.bf16.gmra.mxu0 %v1222
      %v2183 = vpop.f32.mrf.mxu0
      %v2184 = vadd.f32 %v1965, %v2183
      %v2185 = vpop.f32.mrf.mxu0
      %v2186 = vadd.f32 %v1967, %v2185
      %2187 = vmatmul.bf16.gmra.mxu0 %v1227
      %v2188 = vpop.f32.mrf.mxu0
      %v2189 = vadd.f32 %v1970, %v2188
      %v2190 = vpop.f32.mrf.mxu0
      %v2191 = vadd.f32 %v1972, %v2190
      %2192 = vmatmul.bf16.gmra.mxu0 %v1232
      %v2193 = vpop.f32.mrf.mxu0
      %v2194 = vadd.f32 %v1975, %v2193
      %v2195 = vpop.f32.mrf.mxu0
      %v2196 = vadd.f32 %v1977, %v2195
      %2197 = vmatmul.bf16.gmra.mxu0 %v1237
      %v2198 = vpop.f32.mrf.mxu0
      %v2199 = vadd.f32 %v1980, %v2198
      %v2200 = vpop.f32.mrf.mxu0
      %v2201 = vadd.f32 %v1982, %v2200
      %2202 = vmatmul.bf16.gmra.mxu0 %v1242
      %v2203 = vpop.f32.mrf.mxu0
      %v2204 = vadd.f32 %v1985, %v2203
      %v2205 = vpop.f32.mrf.mxu0
      %v2206 = vadd.f32 %v1987, %v2205
      %2207 = vmatmul.bf16.gmra.mxu0 %v1247
      %v2208 = vpop.f32.mrf.mxu0
      %v2209 = vadd.f32 %v1990, %v2208
      %v2210 = vpop.f32.mrf.mxu0
      %v2211 = vadd.f32 %v1992, %v2210
      %2212 = vmatmul.bf16.gmra.mxu0 %v1252
      %v2213 = vpop.f32.mrf.mxu0
      %v2214 = vadd.f32 %v1995, %v2213
      %v2215 = vpop.f32.mrf.mxu0
      %v2216 = vadd.f32 %v1997, %v2215
      %2217 = vmatmul.bf16.gmra.mxu0 %v1257
      %v2218 = vpop.f32.mrf.mxu0
      %v2219 = vadd.f32 %v2000, %v2218
      %v2220 = vpop.f32.mrf.mxu0
      %v2221 = vadd.f32 %v2002, %v2220
      %2222 = vmatmul.bf16.gmra.mxu0 %v1262
      %v2223 = vpop.f32.mrf.mxu0
      %v2224 = vadd.f32 %v2005, %v2223
      %v2225 = vpop.f32.mrf.mxu0
      %v2226 = vadd.f32 %v2007, %v2225
      %2227 = vmatmul.bf16.gmra.mxu0 %v1267
      %v2228 = vpop.f32.mrf.mxu0
      %v2229 = vadd.f32 %v2010, %v2228
      %v2230 = vpop.f32.mrf.mxu0
      %v2231 = vadd.f32 %v2012, %v2230
      %2232 = vmatmul.bf16.gmra.mxu0 %v1272
      %v2233 = vpop.f32.mrf.mxu0
      %v2234 = vadd.f32 %v2015, %v2233
      %v2235 = vpop.f32.mrf.mxu0
      %v2236 = vadd.f32 %v2017, %v2235
      %2237 = vmatmul.bf16.gmra.mxu0 %v1277
      %v2238 = vpop.f32.mrf.mxu0
      %v2239 = vadd.f32 %v2020, %v2238
      %v2240 = vpop.f32.mrf.mxu0
      %v2241 = vadd.f32 %v2022, %v2240
      %2242 = vmatmul.bf16.gmra.mxu0 %v1282
      %v2243 = vpop.f32.mrf.mxu0
      %v2244 = vadd.f32 %v2025, %v2243
      %v2245 = vpop.f32.mrf.mxu0
      %v2246 = vadd.f32 %v2027, %v2245
      %2247 = vmatmul.bf16.gmra.mxu0 %v1287
      %v2248 = vpop.f32.mrf.mxu0
      %v2249 = vadd.f32 %v2030, %v2248
      %v2250 = vpop.f32.mrf.mxu0
      %v2251 = vadd.f32 %v2032, %v2250
      %2252 = vmatmul.bf16.gmra.mxu0 %v1292
      %v2253 = vpop.f32.mrf.mxu0
      %v2254 = vadd.f32 %v2035, %v2253
      %v2255 = vpop.f32.mrf.mxu0
      %v2256 = vadd.f32 %v2037, %v2255
      %2257 = vmatmul.bf16.gmra.mxu0 %v1297
      %v2258 = vpop.f32.mrf.mxu0
      %v2259 = vadd.f32 %v2040, %v2258
      %v2260 = vpop.f32.mrf.mxu0
      %v2261 = vadd.f32 %v2042, %v2260
      %2262 = vmatmul.bf16.gmra.mxu0 %v1302
      %v2263 = vpop.f32.mrf.mxu0
      %v2264 = vadd.f32 %v2045, %v2263
      %v2265 = vpop.f32.mrf.mxu0
      %v2266 = vadd.f32 %v2047, %v2265
      %2267 = vmatmul.bf16.gmra.mxu0 %v1307
      %v2268 = vpop.f32.mrf.mxu0
      %v2269 = vadd.f32 %v2050, %v2268
      %v2270 = vpop.f32.mrf.mxu0
      %v2271 = vadd.f32 %v2052, %v2270
      %2272 = vmatmul.bf16.gmra.mxu0 %v1312
      %v2273 = vpop.f32.mrf.mxu0
      %v2274 = vadd.f32 %v2055, %v2273
      %v2275 = vpop.f32.mrf.mxu0
      %v2276 = vadd.f32 %v2057, %v2275
      %2277 = vmatmul.bf16.gmra.mxu0 %v1317
      %v2278 = vpop.f32.mrf.mxu0
      %v2279 = vadd.f32 %v2060, %v2278
      %v2280 = vpop.f32.mrf.mxu0
      %v2281 = vadd.f32 %v2062, %v2280
      %2282 = vmatmul.bf16.gmra.mxu0 %v1322
      %v2283 = vpop.f32.mrf.mxu0
      %v2284 = vadd.f32 %v2065, %v2283
      %v2285 = vpop.f32.mrf.mxu0
      %v2286 = vadd.f32 %v2067, %v2285
      %2287 = vmatmul.bf16.gmra.mxu0 %v1327
      %v2288 = vpop.f32.mrf.mxu0
      %v2289 = vadd.f32 %v2070, %v2288
      %v2290 = vpop.f32.mrf.mxu0
      %v2291 = vadd.f32 %v2072, %v2290
      %2292 = vmatmul.bf16.gmra.mxu0 %v1332
      %v2293 = vpop.f32.mrf.mxu0
      %v2294 = vadd.f32 %v2075, %v2293
      %v2295 = vpop.f32.mrf.mxu0
      %v2296 = vadd.f32 %v2077, %v2295
      %2297 = vmatmul.bf16.gmra.mxu0 %v1337
      %v2298 = vpop.f32.mrf.mxu0
      %v2299 = vadd.f32 %v2080, %v2298
      %v2300 = vpop.f32.mrf.mxu0
      %v2301 = vadd.f32 %v2082, %v2300
      %2302 = vmatmul.bf16.gmra.mxu0 %v1342
      %v2303 = vpop.f32.mrf.mxu0
      %v2304 = vadd.f32 %v2085, %v2303
      %v2305 = vpop.f32.mrf.mxu0
      %v2306 = vadd.f32 %v2087, %v2305
      %2307 = vmatmul.bf16.gmra.mxu0 %v1347
      %v2308 = vpop.f32.mrf.mxu0
      %v2309 = vadd.f32 %v2090, %v2308
      %v2310 = vpop.f32.mrf.mxu0
      %v2311 = vadd.f32 %v2092, %v2310
      %2312 = vmatmul.bf16.gmra.mxu0 %v1352
      %v2313 = vpop.f32.mrf.mxu0
      %v2314 = vadd.f32 %v2095, %v2313
      %v2315 = vpop.f32.mrf.mxu0
      %v2316 = vadd.f32 %v2097, %v2315
      %2317 = vmatmul.bf16.gmra.mxu0 %v1357
      %v2318 = vpop.f32.mrf.mxu0
      %v2319 = vadd.f32 %v2100, %v2318
      %v2320 = vpop.f32.mrf.mxu0
      %v2321 = vadd.f32 %v2102, %v2320
      %2322 = vmatmul.bf16.gmra.mxu0 %v1362
      %v2323 = vpop.f32.mrf.mxu0
      %v2324 = vadd.f32 %v2105, %v2323
      %v2325 = vpop.f32.mrf.mxu0
      %v2326 = vadd.f32 %v2107, %v2325
      %2327 = vmatmul.bf16.gmra.mxu0 %v1367
      %v2328 = vpop.f32.mrf.mxu0
      %v2329 = vadd.f32 %v2110, %v2328
      %v2330 = vpop.f32.mrf.mxu0
      %v2331 = vadd.f32 %v2112, %v2330
      %2332 = vmatmul.bf16.gmra.mxu0 %v1372
      %v2333 = vpop.f32.mrf.mxu0
      %v2334 = vadd.f32 %v2115, %v2333
      %v2335 = vpop.f32.mrf.mxu0
      %v2336 = vadd.f32 %v2117, %v2335
      %2337 = vmatmul.bf16.gmra.mxu0 %v1377
      %v2338 = vpop.f32.mrf.mxu0
      %v2339 = vadd.f32 %v2120, %v2338
      %v2340 = vpop.f32.mrf.mxu0
      %v2341 = vadd.f32 %v2122, %v2340
      %2342 = vmatmul.bf16.gmra.mxu0 %v1382
      %v2343 = vpop.f32.mrf.mxu0
      %v2344 = vadd.f32 %v2125, %v2343
      %v2345 = vpop.f32.mrf.mxu0
      %v2346 = vadd.f32 %v2127, %v2345
      %2347 = vmatmul.bf16.gmra.mxu0 %v1387
      %v2348 = vpop.f32.mrf.mxu0
      %v2349 = vadd.f32 %v2130, %v2348
      %v2350 = vpop.f32.mrf.mxu0
      %v2351 = vadd.f32 %v2132, %v2350
      %2352 = vdwg.mxu0
      %2353 = vmatpush.bf16.msra.mxu0 %v1732
      %2354 = vmatpush.bf16.msra.mxu0 %v1731
      %2355 = vmatpush.bf16.msra.mxu0 %v1730
      %2356 = vmatpush.bf16.msra.mxu0 %v1729
      %2357 = vmatpush.bf16.msra.mxu0 %v1728
      %2358 = vmatpush.bf16.msra.mxu0 %v1727
      %2359 = vmatpush.bf16.msra.mxu0 %v1726
      %2360 = vmatpush.bf16.msra.mxu0 %v1725
      %2361 = vmatmul.bf16.gmra.mxu0 %v1183
      %v2362 = vpop.f32.mrf.mxu0
      %v2363 = vadd.f32 %v2144, %v2362
      %v2364 = vpop.f32.mrf.mxu0
      %v2365 = vadd.f32 %v2146, %v2364
      %2366 = vmatmul.bf16.gmra.mxu0 %v1188
      %v2367 = vpop.f32.mrf.mxu0
      %v2368 = vadd.f32 %v2149, %v2367
      %v2369 = vpop.f32.mrf.mxu0
      %v2370 = vadd.f32 %v2151, %v2369
      %2371 = vmatmul.bf16.gmra.mxu0 %v1193
      %v2372 = vpop.f32.mrf.mxu0
      %v2373 = vadd.f32 %v2154, %v2372
      %v2374 = vpop.f32.mrf.mxu0
      %v2375 = vadd.f32 %v2156, %v2374
      %2376 = vmatmul.bf16.gmra.mxu0 %v1198
      %v2377 = vpop.f32.mrf.mxu0
      %v2378 = vadd.f32 %v2159, %v2377
      %v2379 = vpop.f32.mrf.mxu0
      %v2380 = vadd.f32 %v2161, %v2379
      %2381 = vmatmul.bf16.gmra.mxu0 %v1203
      %v2382 = vpop.f32.mrf.mxu0
      %v2383 = vadd.f32 %v2164, %v2382
      %v2384 = vpop.f32.mrf.mxu0
      %v2385 = vadd.f32 %v2166, %v2384
      %2386 = vmatmul.bf16.gmra.mxu0 %v1208
      %v2387 = vpop.f32.mrf.mxu0
      %v2388 = vadd.f32 %v2169, %v2387
      %v2389 = vpop.f32.mrf.mxu0
      %v2390 = vadd.f32 %v2171, %v2389
      %2391 = vmatmul.bf16.gmra.mxu0 %v1213
      %v2392 = vpop.f32.mrf.mxu0
      %v2393 = vadd.f32 %v2174, %v2392
      %v2394 = vpop.f32.mrf.mxu0
      %v2395 = vadd.f32 %v2176, %v2394
      %2396 = vmatmul.bf16.gmra.mxu0 %v1218
      %v2397 = vpop.f32.mrf.mxu0
      %v2398 = vadd.f32 %v2179, %v2397
      %v2399 = vpop.f32.mrf.mxu0
      %v2400 = vadd.f32 %v2181, %v2399
      %2401 = vmatmul.bf16.gmra.mxu0 %v1223
      %v2402 = vpop.f32.mrf.mxu0
      %v2403 = vadd.f32 %v2184, %v2402
      %v2404 = vpop.f32.mrf.mxu0
      %v2405 = vadd.f32 %v2186, %v2404
      %2406 = vmatmul.bf16.gmra.mxu0 %v1228
      %v2407 = vpop.f32.mrf.mxu0
      %v2408 = vadd.f32 %v2189, %v2407
      %v2409 = vpop.f32.mrf.mxu0
      %v2410 = vadd.f32 %v2191, %v2409
      %2411 = vmatmul.bf16.gmra.mxu0 %v1233
      %v2412 = vpop.f32.mrf.mxu0
      %v2413 = vadd.f32 %v2194, %v2412
      %v2414 = vpop.f32.mrf.mxu0
      %v2415 = vadd.f32 %v2196, %v2414
      %2416 = vmatmul.bf16.gmra.mxu0 %v1238
      %v2417 = vpop.f32.mrf.mxu0
      %v2418 = vadd.f32 %v2199, %v2417
      %v2419 = vpop.f32.mrf.mxu0
      %v2420 = vadd.f32 %v2201, %v2419
      %2421 = vmatmul.bf16.gmra.mxu0 %v1243
      %v2422 = vpop.f32.mrf.mxu0
      %v2423 = vadd.f32 %v2204, %v2422
      %v2424 = vpop.f32.mrf.mxu0
      %v2425 = vadd.f32 %v2206, %v2424
      %2426 = vmatmul.bf16.gmra.mxu0 %v1248
      %v2427 = vpop.f32.mrf.mxu0
      %v2428 = vadd.f32 %v2209, %v2427
      %v2429 = vpop.f32.mrf.mxu0
      %v2430 = vadd.f32 %v2211, %v2429
      %2431 = vmatmul.bf16.gmra.mxu0 %v1253
      %v2432 = vpop.f32.mrf.mxu0
      %v2433 = vadd.f32 %v2214, %v2432
      %v2434 = vpop.f32.mrf.mxu0
      %v2435 = vadd.f32 %v2216, %v2434
      %2436 = vmatmul.bf16.gmra.mxu0 %v1258
      %v2437 = vpop.f32.mrf.mxu0
      %v2438 = vadd.f32 %v2219, %v2437
      %v2439 = vpop.f32.mrf.mxu0
      %v2440 = vadd.f32 %v2221, %v2439
      %2441 = vmatmul.bf16.gmra.mxu0 %v1263
      %v2442 = vpop.f32.mrf.mxu0
      %v2443 = vadd.f32 %v2224, %v2442
      %v2444 = vpop.f32.mrf.mxu0
      %v2445 = vadd.f32 %v2226, %v2444
      %2446 = vmatmul.bf16.gmra.mxu0 %v1268
      %v2447 = vpop.f32.mrf.mxu0
      %v2448 = vadd.f32 %v2229, %v2447
      %v2449 = vpop.f32.mrf.mxu0
      %v2450 = vadd.f32 %v2231, %v2449
      %2451 = vmatmul.bf16.gmra.mxu0 %v1273
      %v2452 = vpop.f32.mrf.mxu0
      %v2453 = vadd.f32 %v2234, %v2452
      %v2454 = vpop.f32.mrf.mxu0
      %v2455 = vadd.f32 %v2236, %v2454
      %2456 = vmatmul.bf16.gmra.mxu0 %v1278
      %v2457 = vpop.f32.mrf.mxu0
      %v2458 = vadd.f32 %v2239, %v2457
      %v2459 = vpop.f32.mrf.mxu0
      %v2460 = vadd.f32 %v2241, %v2459
      %2461 = vmatmul.bf16.gmra.mxu0 %v1283
      %v2462 = vpop.f32.mrf.mxu0
      %v2463 = vadd.f32 %v2244, %v2462
      %v2464 = vpop.f32.mrf.mxu0
      %v2465 = vadd.f32 %v2246, %v2464
      %2466 = vmatmul.bf16.gmra.mxu0 %v1288
      %v2467 = vpop.f32.mrf.mxu0
      %v2468 = vadd.f32 %v2249, %v2467
      %v2469 = vpop.f32.mrf.mxu0
      %v2470 = vadd.f32 %v2251, %v2469
      %2471 = vmatmul.bf16.gmra.mxu0 %v1293
      %v2472 = vpop.f32.mrf.mxu0
      %v2473 = vadd.f32 %v2254, %v2472
      %v2474 = vpop.f32.mrf.mxu0
      %v2475 = vadd.f32 %v2256, %v2474
      %2476 = vmatmul.bf16.gmra.mxu0 %v1298
      %v2477 = vpop.f32.mrf.mxu0
      %v2478 = vadd.f32 %v2259, %v2477
      %v2479 = vpop.f32.mrf.mxu0
      %v2480 = vadd.f32 %v2261, %v2479
      %2481 = vmatmul.bf16.gmra.mxu0 %v1303
      %v2482 = vpop.f32.mrf.mxu0
      %v2483 = vadd.f32 %v2264, %v2482
      %v2484 = vpop.f32.mrf.mxu0
      %v2485 = vadd.f32 %v2266, %v2484
      %2486 = vmatmul.bf16.gmra.mxu0 %v1308
      %v2487 = vpop.f32.mrf.mxu0
      %v2488 = vadd.f32 %v2269, %v2487
      %v2489 = vpop.f32.mrf.mxu0
      %v2490 = vadd.f32 %v2271, %v2489
      %2491 = vmatmul.bf16.gmra.mxu0 %v1313
      %v2492 = vpop.f32.mrf.mxu0
      %v2493 = vadd.f32 %v2274, %v2492
      %v2494 = vpop.f32.mrf.mxu0
      %v2495 = vadd.f32 %v2276, %v2494
      %2496 = vmatmul.bf16.gmra.mxu0 %v1318
      %v2497 = vpop.f32.mrf.mxu0
      %v2498 = vadd.f32 %v2279, %v2497
      %v2499 = vpop.f32.mrf.mxu0
      %v2500 = vadd.f32 %v2281, %v2499
      %2501 = vmatmul.bf16.gmra.mxu0 %v1323
      %v2502 = vpop.f32.mrf.mxu0
      %v2503 = vadd.f32 %v2284, %v2502
      %v2504 = vpop.f32.mrf.mxu0
      %v2505 = vadd.f32 %v2286, %v2504
      %2506 = vmatmul.bf16.gmra.mxu0 %v1328
      %v2507 = vpop.f32.mrf.mxu0
      %v2508 = vadd.f32 %v2289, %v2507
      %v2509 = vpop.f32.mrf.mxu0
      %v2510 = vadd.f32 %v2291, %v2509
      %2511 = vmatmul.bf16.gmra.mxu0 %v1333
      %v2512 = vpop.f32.mrf.mxu0
      %v2513 = vadd.f32 %v2294, %v2512
      %v2514 = vpop.f32.mrf.mxu0
      %v2515 = vadd.f32 %v2296, %v2514
      %2516 = vmatmul.bf16.gmra.mxu0 %v1338
      %v2517 = vpop.f32.mrf.mxu0
      %v2518 = vadd.f32 %v2299, %v2517
      %v2519 = vpop.f32.mrf.mxu0
      %v2520 = vadd.f32 %v2301, %v2519
      %2521 = vmatmul.bf16.gmra.mxu0 %v1343
      %v2522 = vpop.f32.mrf.mxu0
      %v2523 = vadd.f32 %v2304, %v2522
      %v2524 = vpop.f32.mrf.mxu0
      %v2525 = vadd.f32 %v2306, %v2524
      %2526 = vmatmul.bf16.gmra.mxu0 %v1348
      %v2527 = vpop.f32.mrf.mxu0
      %v2528 = vadd.f32 %v2309, %v2527
      %v2529 = vpop.f32.mrf.mxu0
      %v2530 = vadd.f32 %v2311, %v2529
      %2531 = vmatmul.bf16.gmra.mxu0 %v1353
      %v2532 = vpop.f32.mrf.mxu0
      %v2533 = vadd.f32 %v2314, %v2532
      %v2534 = vpop.f32.mrf.mxu0
      %v2535 = vadd.f32 %v2316, %v2534
      %2536 = vmatmul.bf16.gmra.mxu0 %v1358
      %v2537 = vpop.f32.mrf.mxu0
      %v2538 = vadd.f32 %v2319, %v2537
      %v2539 = vpop.f32.mrf.mxu0
      %v2540 = vadd.f32 %v2321, %v2539
      %2541 = vmatmul.bf16.gmra.mxu0 %v1363
      %v2542 = vpop.f32.mrf.mxu0
      %v2543 = vadd.f32 %v2324, %v2542
      %v2544 = vpop.f32.mrf.mxu0
      %v2545 = vadd.f32 %v2326, %v2544
      %2546 = vmatmul.bf16.gmra.mxu0 %v1368
      %v2547 = vpop.f32.mrf.mxu0
      %v2548 = vadd.f32 %v2329, %v2547
      %v2549 = vpop.f32.mrf.mxu0
      %v2550 = vadd.f32 %v2331, %v2549
      %2551 = vmatmul.bf16.gmra.mxu0 %v1373
      %v2552 = vpop.f32.mrf.mxu0
      %v2553 = vadd.f32 %v2334, %v2552
      %v2554 = vpop.f32.mrf.mxu0
      %v2555 = vadd.f32 %v2336, %v2554
      %2556 = vmatmul.bf16.gmra.mxu0 %v1378
      %v2557 = vpop.f32.mrf.mxu0
      %v2558 = vadd.f32 %v2339, %v2557
      %v2559 = vpop.f32.mrf.mxu0
      %v2560 = vadd.f32 %v2341, %v2559
      %2561 = vmatmul.bf16.gmra.mxu0 %v1383
      %v2562 = vpop.f32.mrf.mxu0
      %v2563 = vadd.f32 %v2344, %v2562
      %v2564 = vpop.f32.mrf.mxu0
      %v2565 = vadd.f32 %v2346, %v2564
      %2566 = vmatmul.bf16.gmra.mxu0 %v1388
      %v2567 = vpop.f32.mrf.mxu0
      %v2568 = vadd.f32 %v2349, %v2567
      %v2569 = vpop.f32.mrf.mxu0
      %v2570 = vadd.f32 %v2351, %v2569
      %2571 = vdwg.mxu0
      %2572 = vmatpush.bf16.msra.mxu0 %v1740
      %2573 = vmatpush.bf16.msra.mxu0 %v1739
      %2574 = vmatpush.bf16.msra.mxu0 %v1738
      %2575 = vmatpush.bf16.msra.mxu0 %v1737
      %2576 = vmatpush.bf16.msra.mxu0 %v1736
      %2577 = vmatpush.bf16.msra.mxu0 %v1735
      %2578 = vmatpush.bf16.msra.mxu0 %v1734
      %2579 = vmatpush.bf16.msra.mxu0 %v1733
      %2580 = vmatmul.bf16.gmra.mxu0 %v1184
      %v2581 = vpop.f32.mrf.mxu0
      %v2582 = vadd.f32 %v2363, %v2581
      %v2583 = vpop.f32.mrf.mxu0
      %v2584 = vadd.f32 %v2365, %v2583
      %2585 = vmatmul.bf16.gmra.mxu0 %v1189
      %v2586 = vpop.f32.mrf.mxu0
      %v2587 = vadd.f32 %v2368, %v2586
      %v2588 = vpop.f32.mrf.mxu0
      %v2589 = vadd.f32 %v2370, %v2588
      %2590 = vmatmul.bf16.gmra.mxu0 %v1194
      %v2591 = vpop.f32.mrf.mxu0
      %v2592 = vadd.f32 %v2373, %v2591
      %v2593 = vpop.f32.mrf.mxu0
      %v2594 = vadd.f32 %v2375, %v2593
      %2595 = vmatmul.bf16.gmra.mxu0 %v1199
      %v2596 = vpop.f32.mrf.mxu0
      %v2597 = vadd.f32 %v2378, %v2596
      %v2598 = vpop.f32.mrf.mxu0
      %v2599 = vadd.f32 %v2380, %v2598
      %2600 = vmatmul.bf16.gmra.mxu0 %v1204
      %v2601 = vpop.f32.mrf.mxu0
      %v2602 = vadd.f32 %v2383, %v2601
      %v2603 = vpop.f32.mrf.mxu0
      %v2604 = vadd.f32 %v2385, %v2603
      %2605 = vmatmul.bf16.gmra.mxu0 %v1209
      %v2606 = vpop.f32.mrf.mxu0
      %v2607 = vadd.f32 %v2388, %v2606
      %v2608 = vpop.f32.mrf.mxu0
      %v2609 = vadd.f32 %v2390, %v2608
      %2610 = vmatmul.bf16.gmra.mxu0 %v1214
      %v2611 = vpop.f32.mrf.mxu0
      %v2612 = vadd.f32 %v2393, %v2611
      %v2613 = vpop.f32.mrf.mxu0
      %v2614 = vadd.f32 %v2395, %v2613
      %2615 = vmatmul.bf16.gmra.mxu0 %v1219
      %v2616 = vpop.f32.mrf.mxu0
      %v2617 = vadd.f32 %v2398, %v2616
      %v2618 = vpop.f32.mrf.mxu0
      %v2619 = vadd.f32 %v2400, %v2618
      %2620 = vmatmul.bf16.gmra.mxu0 %v1224
      %v2621 = vpop.f32.mrf.mxu0
      %v2622 = vadd.f32 %v2403, %v2621
      %v2623 = vpop.f32.mrf.mxu0
      %v2624 = vadd.f32 %v2405, %v2623
      %2625 = vmatmul.bf16.gmra.mxu0 %v1229
      %v2626 = vpop.f32.mrf.mxu0
      %v2627 = vadd.f32 %v2408, %v2626
      %v2628 = vpop.f32.mrf.mxu0
      %v2629 = vadd.f32 %v2410, %v2628
      %2630 = vmatmul.bf16.gmra.mxu0 %v1234
      %v2631 = vpop.f32.mrf.mxu0
      %v2632 = vadd.f32 %v2413, %v2631
      %v2633 = vpop.f32.mrf.mxu0
      %v2634 = vadd.f32 %v2415, %v2633
      %2635 = vmatmul.bf16.gmra.mxu0 %v1239
      %v2636 = vpop.f32.mrf.mxu0
      %v2637 = vadd.f32 %v2418, %v2636
      %v2638 = vpop.f32.mrf.mxu0
      %v2639 = vadd.f32 %v2420, %v2638
      %2640 = vmatmul.bf16.gmra.mxu0 %v1244
      %v2641 = vpop.f32.mrf.mxu0
      %v2642 = vadd.f32 %v2423, %v2641
      %v2643 = vpop.f32.mrf.mxu0
      %v2644 = vadd.f32 %v2425, %v2643
      %2645 = vmatmul.bf16.gmra.mxu0 %v1249
      %v2646 = vpop.f32.mrf.mxu0
      %v2647 = vadd.f32 %v2428, %v2646
      %v2648 = vpop.f32.mrf.mxu0
      %v2649 = vadd.f32 %v2430, %v2648
      %2650 = vmatmul.bf16.gmra.mxu0 %v1254
      %v2651 = vpop.f32.mrf.mxu0
      %v2652 = vadd.f32 %v2433, %v2651
      %v2653 = vpop.f32.mrf.mxu0
      %v2654 = vadd.f32 %v2435, %v2653
      %2655 = vmatmul.bf16.gmra.mxu0 %v1259
      %v2656 = vpop.f32.mrf.mxu0
      %v2657 = vadd.f32 %v2438, %v2656
      %v2658 = vpop.f32.mrf.mxu0
      %v2659 = vadd.f32 %v2440, %v2658
      %2660 = vmatmul.bf16.gmra.mxu0 %v1264
      %v2661 = vpop.f32.mrf.mxu0
      %v2662 = vadd.f32 %v2443, %v2661
      %v2663 = vpop.f32.mrf.mxu0
      %v2664 = vadd.f32 %v2445, %v2663
      %2665 = vmatmul.bf16.gmra.mxu0 %v1269
      %v2666 = vpop.f32.mrf.mxu0
      %v2667 = vadd.f32 %v2448, %v2666
      %v2668 = vpop.f32.mrf.mxu0
      %v2669 = vadd.f32 %v2450, %v2668
      %2670 = vmatmul.bf16.gmra.mxu0 %v1274
      %v2671 = vpop.f32.mrf.mxu0
      %v2672 = vadd.f32 %v2453, %v2671
      %v2673 = vpop.f32.mrf.mxu0
      %v2674 = vadd.f32 %v2455, %v2673
      %2675 = vmatmul.bf16.gmra.mxu0 %v1279
      %v2676 = vpop.f32.mrf.mxu0
      %v2677 = vadd.f32 %v2458, %v2676
      %v2678 = vpop.f32.mrf.mxu0
      %v2679 = vadd.f32 %v2460, %v2678
      %2680 = vmatmul.bf16.gmra.mxu0 %v1284
      %v2681 = vpop.f32.mrf.mxu0
      %v2682 = vadd.f32 %v2463, %v2681
      %v2683 = vpop.f32.mrf.mxu0
      %v2684 = vadd.f32 %v2465, %v2683
      %2685 = vmatmul.bf16.gmra.mxu0 %v1289
      %v2686 = vpop.f32.mrf.mxu0
      %v2687 = vadd.f32 %v2468, %v2686
      %v2688 = vpop.f32.mrf.mxu0
      %v2689 = vadd.f32 %v2470, %v2688
      %2690 = vmatmul.bf16.gmra.mxu0 %v1294
      %v2691 = vpop.f32.mrf.mxu0
      %v2692 = vadd.f32 %v2473, %v2691
      %v2693 = vpop.f32.mrf.mxu0
      %v2694 = vadd.f32 %v2475, %v2693
      %2695 = vmatmul.bf16.gmra.mxu0 %v1299
      %v2696 = vpop.f32.mrf.mxu0
      %v2697 = vadd.f32 %v2478, %v2696
      %v2698 = vpop.f32.mrf.mxu0
      %v2699 = vadd.f32 %v2480, %v2698
      %2700 = vmatmul.bf16.gmra.mxu0 %v1304
      %v2701 = vpop.f32.mrf.mxu0
      %v2702 = vadd.f32 %v2483, %v2701
      %v2703 = vpop.f32.mrf.mxu0
      %v2704 = vadd.f32 %v2485, %v2703
      %2705 = vmatmul.bf16.gmra.mxu0 %v1309
      %v2706 = vpop.f32.mrf.mxu0
      %v2707 = vadd.f32 %v2488, %v2706
      %v2708 = vpop.f32.mrf.mxu0
      %v2709 = vadd.f32 %v2490, %v2708
      %2710 = vmatmul.bf16.gmra.mxu0 %v1314
      %v2711 = vpop.f32.mrf.mxu0
      %v2712 = vadd.f32 %v2493, %v2711
      %v2713 = vpop.f32.mrf.mxu0
      %v2714 = vadd.f32 %v2495, %v2713
      %2715 = vmatmul.bf16.gmra.mxu0 %v1319
      %v2716 = vpop.f32.mrf.mxu0
      %v2717 = vadd.f32 %v2498, %v2716
      %v2718 = vpop.f32.mrf.mxu0
      %v2719 = vadd.f32 %v2500, %v2718
      %2720 = vmatmul.bf16.gmra.mxu0 %v1324
      %v2721 = vpop.f32.mrf.mxu0
      %v2722 = vadd.f32 %v2503, %v2721
      %v2723 = vpop.f32.mrf.mxu0
      %v2724 = vadd.f32 %v2505, %v2723
      %2725 = vmatmul.bf16.gmra.mxu0 %v1329
      %v2726 = vpop.f32.mrf.mxu0
      %v2727 = vadd.f32 %v2508, %v2726
      %v2728 = vpop.f32.mrf.mxu0
      %v2729 = vadd.f32 %v2510, %v2728
      %2730 = vmatmul.bf16.gmra.mxu0 %v1334
      %v2731 = vpop.f32.mrf.mxu0
      %v2732 = vadd.f32 %v2513, %v2731
      %v2733 = vpop.f32.mrf.mxu0
      %v2734 = vadd.f32 %v2515, %v2733
      %2735 = vmatmul.bf16.gmra.mxu0 %v1339
      %v2736 = vpop.f32.mrf.mxu0
      %v2737 = vadd.f32 %v2518, %v2736
      %v2738 = vpop.f32.mrf.mxu0
      %v2739 = vadd.f32 %v2520, %v2738
      %2740 = vmatmul.bf16.gmra.mxu0 %v1344
      %v2741 = vpop.f32.mrf.mxu0
      %v2742 = vadd.f32 %v2523, %v2741
      %v2743 = vpop.f32.mrf.mxu0
      %v2744 = vadd.f32 %v2525, %v2743
      %2745 = vmatmul.bf16.gmra.mxu0 %v1349
      %v2746 = vpop.f32.mrf.mxu0
      %v2747 = vadd.f32 %v2528, %v2746
      %v2748 = vpop.f32.mrf.mxu0
      %v2749 = vadd.f32 %v2530, %v2748
      %2750 = vmatmul.bf16.gmra.mxu0 %v1354
      %v2751 = vpop.f32.mrf.mxu0
      %v2752 = vadd.f32 %v2533, %v2751
      %v2753 = vpop.f32.mrf.mxu0
      %v2754 = vadd.f32 %v2535, %v2753
      %2755 = vmatmul.bf16.gmra.mxu0 %v1359
      %v2756 = vpop.f32.mrf.mxu0
      %v2757 = vadd.f32 %v2538, %v2756
      %v2758 = vpop.f32.mrf.mxu0
      %v2759 = vadd.f32 %v2540, %v2758
      %2760 = vmatmul.bf16.gmra.mxu0 %v1364
      %v2761 = vpop.f32.mrf.mxu0
      %v2762 = vadd.f32 %v2543, %v2761
      %v2763 = vpop.f32.mrf.mxu0
      %v2764 = vadd.f32 %v2545, %v2763
      %2765 = vmatmul.bf16.gmra.mxu0 %v1369
      %v2766 = vpop.f32.mrf.mxu0
      %v2767 = vadd.f32 %v2548, %v2766
      %v2768 = vpop.f32.mrf.mxu0
      %v2769 = vadd.f32 %v2550, %v2768
      %2770 = vmatmul.bf16.gmra.mxu0 %v1374
      %v2771 = vpop.f32.mrf.mxu0
      %v2772 = vadd.f32 %v2553, %v2771
      %v2773 = vpop.f32.mrf.mxu0
      %v2774 = vadd.f32 %v2555, %v2773
      %2775 = vmatmul.bf16.gmra.mxu0 %v1379
      %v2776 = vpop.f32.mrf.mxu0
      %v2777 = vadd.f32 %v2558, %v2776
      %v2778 = vpop.f32.mrf.mxu0
      %v2779 = vadd.f32 %v2560, %v2778
      %2780 = vmatmul.bf16.gmra.mxu0 %v1384
      %v2781 = vpop.f32.mrf.mxu0
      %v2782 = vadd.f32 %v2563, %v2781
      %v2783 = vpop.f32.mrf.mxu0
      %v2784 = vadd.f32 %v2565, %v2783
      %2785 = vmatmul.bf16.gmra.mxu0 %v1389
      %v2786 = vpop.f32.mrf.mxu0
      %v2787 = vadd.f32 %v2568, %v2786
      %v2788 = vpop.f32.mrf.mxu0
      %v2789 = vadd.f32 %v2570, %v2788
      %2790 = vdwg.mxu0
      %2791 = vmatpush.bf16.msra.mxu0 0
      %2792 = vmatpush.bf16.msra.mxu0 0
      %2793 = vmatpush.bf16.msra.mxu0 %v1913
      %2794 = vmatpush.bf16.msra.mxu0 %v1745
      %2795 = vmatpush.bf16.msra.mxu0 %v1744
      %2796 = vmatpush.bf16.msra.mxu0 %v1743
      %2797 = vmatpush.bf16.msra.mxu0 %v1742
      %2798 = vmatpush.bf16.msra.mxu0 %v1741
      %2799 = vmatmul.bf16.gmra.mxu0 %v1786
      %v2800 = vpop.f32.mrf.mxu0
      %v2801 = vadd.f32 %v2582, %v2800
      %v2802 = vpop.f32.mrf.mxu0
      %v2803 = vadd.f32 %v2584, %v2802
      %2804 = vmatmul.bf16.gmra.mxu0 %v1789
      %v2805 = vpop.f32.mrf.mxu0
      %v2806 = vadd.f32 %v2587, %v2805
      %v2807 = vpop.f32.mrf.mxu0
      %v2808 = vadd.f32 %v2589, %v2807
      %2809 = vmatmul.bf16.gmra.mxu0 %v1792
      %v2810 = vpop.f32.mrf.mxu0
      %v2811 = vadd.f32 %v2592, %v2810
      %v2812 = vpop.f32.mrf.mxu0
      %v2813 = vadd.f32 %v2594, %v2812
      %2814 = vmatmul.bf16.gmra.mxu0 %v1795
      %v2815 = vpop.f32.mrf.mxu0
      %v2816 = vadd.f32 %v2597, %v2815
      %v2817 = vpop.f32.mrf.mxu0
      %v2818 = vadd.f32 %v2599, %v2817
      %2819 = vmatmul.bf16.gmra.mxu0 %v1798
      %v2820 = vpop.f32.mrf.mxu0
      %v2821 = vadd.f32 %v2602, %v2820
      %v2822 = vpop.f32.mrf.mxu0
      %v2823 = vadd.f32 %v2604, %v2822
      %2824 = vmatmul.bf16.gmra.mxu0 %v1801
      %v2825 = vpop.f32.mrf.mxu0
      %v2826 = vadd.f32 %v2607, %v2825
      %v2827 = vpop.f32.mrf.mxu0
      %v2828 = vadd.f32 %v2609, %v2827
      %2829 = vmatmul.bf16.gmra.mxu0 %v1804
      %v2830 = vpop.f32.mrf.mxu0
      %v2831 = vadd.f32 %v2612, %v2830
      %v2832 = vpop.f32.mrf.mxu0
      %v2833 = vadd.f32 %v2614, %v2832
      %2834 = vmatmul.bf16.gmra.mxu0 %v1807
      %v2835 = vpop.f32.mrf.mxu0
      %v2836 = vadd.f32 %v2617, %v2835
      %v2837 = vpop.f32.mrf.mxu0
      %v2838 = vadd.f32 %v2619, %v2837
      %2839 = vmatmul.bf16.gmra.mxu0 %v1810
      %v2840 = vpop.f32.mrf.mxu0
      %v2841 = vadd.f32 %v2622, %v2840
      %v2842 = vpop.f32.mrf.mxu0
      %v2843 = vadd.f32 %v2624, %v2842
      %2844 = vmatmul.bf16.gmra.mxu0 %v1813
      %v2845 = vpop.f32.mrf.mxu0
      %v2846 = vadd.f32 %v2627, %v2845
      %v2847 = vpop.f32.mrf.mxu0
      %v2848 = vadd.f32 %v2629, %v2847
      %2849 = vmatmul.bf16.gmra.mxu0 %v1816
      %v2850 = vpop.f32.mrf.mxu0
      %v2851 = vadd.f32 %v2632, %v2850
      %v2852 = vpop.f32.mrf.mxu0
      %v2853 = vadd.f32 %v2634, %v2852
      %2854 = vmatmul.bf16.gmra.mxu0 %v1819
      %v2855 = vpop.f32.mrf.mxu0
      %v2856 = vadd.f32 %v2637, %v2855
      %v2857 = vpop.f32.mrf.mxu0
      %v2858 = vadd.f32 %v2639, %v2857
      %2859 = vmatmul.bf16.gmra.mxu0 %v1822
      %v2860 = vpop.f32.mrf.mxu0
      %v2861 = vadd.f32 %v2642, %v2860
      %v2862 = vpop.f32.mrf.mxu0
      %v2863 = vadd.f32 %v2644, %v2862
      %2864 = vmatmul.bf16.gmra.mxu0 %v1825
      %v2865 = vpop.f32.mrf.mxu0
      %v2866 = vadd.f32 %v2647, %v2865
      %v2867 = vpop.f32.mrf.mxu0
      %v2868 = vadd.f32 %v2649, %v2867
      %2869 = vmatmul.bf16.gmra.mxu0 %v1828
      %v2870 = vpop.f32.mrf.mxu0
      %v2871 = vadd.f32 %v2652, %v2870
      %v2872 = vpop.f32.mrf.mxu0
      %v2873 = vadd.f32 %v2654, %v2872
      %2874 = vmatmul.bf16.gmra.mxu0 %v1831
      %v2875 = vpop.f32.mrf.mxu0
      %v2876 = vadd.f32 %v2657, %v2875
      %v2877 = vpop.f32.mrf.mxu0
      %v2878 = vadd.f32 %v2659, %v2877
      %2879 = vmatmul.bf16.gmra.mxu0 %v1834
      %v2880 = vpop.f32.mrf.mxu0
      %v2881 = vadd.f32 %v2662, %v2880
      %v2882 = vpop.f32.mrf.mxu0
      %v2883 = vadd.f32 %v2664, %v2882
      %2884 = vmatmul.bf16.gmra.mxu0 %v1837
      %v2885 = vpop.f32.mrf.mxu0
      %v2886 = vadd.f32 %v2667, %v2885
      %v2887 = vpop.f32.mrf.mxu0
      %v2888 = vadd.f32 %v2669, %v2887
      %2889 = vmatmul.bf16.gmra.mxu0 %v1840
      %v2890 = vpop.f32.mrf.mxu0
      %v2891 = vadd.f32 %v2672, %v2890
      %v2892 = vpop.f32.mrf.mxu0
      %v2893 = vadd.f32 %v2674, %v2892
      %2894 = vmatmul.bf16.gmra.mxu0 %v1843
      %v2895 = vpop.f32.mrf.mxu0
      %v2896 = vadd.f32 %v2677, %v2895
      %v2897 = vpop.f32.mrf.mxu0
      %v2898 = vadd.f32 %v2679, %v2897
      %2899 = vmatmul.bf16.gmra.mxu0 %v1846
      %v2900 = vpop.f32.mrf.mxu0
      %v2901 = vadd.f32 %v2682, %v2900
      %v2902 = vpop.f32.mrf.mxu0
      %v2903 = vadd.f32 %v2684, %v2902
      %2904 = vmatmul.bf16.gmra.mxu0 %v1849
      %v2905 = vpop.f32.mrf.mxu0
      %v2906 = vadd.f32 %v2687, %v2905
      %v2907 = vpop.f32.mrf.mxu0
      %v2908 = vadd.f32 %v2689, %v2907
      %2909 = vmatmul.bf16.gmra.mxu0 %v1852
      %v2910 = vpop.f32.mrf.mxu0
      %v2911 = vadd.f32 %v2692, %v2910
      %v2912 = vpop.f32.mrf.mxu0
      %v2913 = vadd.f32 %v2694, %v2912
      %2914 = vmatmul.bf16.gmra.mxu0 %v1855
      %v2915 = vpop.f32.mrf.mxu0
      %v2916 = vadd.f32 %v2697, %v2915
      %v2917 = vpop.f32.mrf.mxu0
      %v2918 = vadd.f32 %v2699, %v2917
      %2919 = vmatmul.bf16.gmra.mxu0 %v1858
      %v2920 = vpop.f32.mrf.mxu0
      %v2921 = vadd.f32 %v2702, %v2920
      %v2922 = vpop.f32.mrf.mxu0
      %v2923 = vadd.f32 %v2704, %v2922
      %2924 = vmatmul.bf16.gmra.mxu0 %v1861
      %v2925 = vpop.f32.mrf.mxu0
      %v2926 = vadd.f32 %v2707, %v2925
      %v2927 = vpop.f32.mrf.mxu0
      %v2928 = vadd.f32 %v2709, %v2927
      %2929 = vmatmul.bf16.gmra.mxu0 %v1864
      %v2930 = vpop.f32.mrf.mxu0
      %v2931 = vadd.f32 %v2712, %v2930
      %v2932 = vpop.f32.mrf.mxu0
      %v2933 = vadd.f32 %v2714, %v2932
      %2934 = vmatmul.bf16.gmra.mxu0 %v1867
      %v2935 = vpop.f32.mrf.mxu0
      %v2936 = vadd.f32 %v2717, %v2935
      %v2937 = vpop.f32.mrf.mxu0
      %v2938 = vadd.f32 %v2719, %v2937
      %2939 = vmatmul.bf16.gmra.mxu0 %v1870
      %v2940 = vpop.f32.mrf.mxu0
      %v2941 = vadd.f32 %v2722, %v2940
      %v2942 = vpop.f32.mrf.mxu0
      %v2943 = vadd.f32 %v2724, %v2942
      %2944 = vmatmul.bf16.gmra.mxu0 %v1873
      %v2945 = vpop.f32.mrf.mxu0
      %v2946 = vadd.f32 %v2727, %v2945
      %v2947 = vpop.f32.mrf.mxu0
      %v2948 = vadd.f32 %v2729, %v2947
      %2949 = vmatmul.bf16.gmra.mxu0 %v1876
      %v2950 = vpop.f32.mrf.mxu0
      %v2951 = vadd.f32 %v2732, %v2950
      %v2952 = vpop.f32.mrf.mxu0
      %v2953 = vadd.f32 %v2734, %v2952
      %2954 = vmatmul.bf16.gmra.mxu0 %v1879
      %v2955 = vpop.f32.mrf.mxu0
      %v2956 = vadd.f32 %v2737, %v2955
      %v2957 = vpop.f32.mrf.mxu0
      %v2958 = vadd.f32 %v2739, %v2957
      %2959 = vmatmul.bf16.gmra.mxu0 %v1882
      %v2960 = vpop.f32.mrf.mxu0
      %v2961 = vadd.f32 %v2742, %v2960
      %v2962 = vpop.f32.mrf.mxu0
      %v2963 = vadd.f32 %v2744, %v2962
      %2964 = vmatmul.bf16.gmra.mxu0 %v1885
      %v2965 = vpop.f32.mrf.mxu0
      %v2966 = vadd.f32 %v2747, %v2965
      %v2967 = vpop.f32.mrf.mxu0
      %v2968 = vadd.f32 %v2749, %v2967
      %2969 = vmatmul.bf16.gmra.mxu0 %v1888
      %v2970 = vpop.f32.mrf.mxu0
      %v2971 = vadd.f32 %v2752, %v2970
      %v2972 = vpop.f32.mrf.mxu0
      %v2973 = vadd.f32 %v2754, %v2972
      %2974 = vmatmul.bf16.gmra.mxu0 %v1891
      %v2975 = vpop.f32.mrf.mxu0
      %v2976 = vadd.f32 %v2757, %v2975
      %v2977 = vpop.f32.mrf.mxu0
      %v2978 = vadd.f32 %v2759, %v2977
      %2979 = vmatmul.bf16.gmra.mxu0 %v1894
      %v2980 = vpop.f32.mrf.mxu0
      %v2981 = vadd.f32 %v2762, %v2980
      %v2982 = vpop.f32.mrf.mxu0
      %v2983 = vadd.f32 %v2764, %v2982
      %2984 = vmatmul.bf16.gmra.mxu0 %v1897
      %v2985 = vpop.f32.mrf.mxu0
      %v2986 = vadd.f32 %v2767, %v2985
      %v2987 = vpop.f32.mrf.mxu0
      %v2988 = vadd.f32 %v2769, %v2987
      %2989 = vmatmul.bf16.gmra.mxu0 %v1900
      %v2990 = vpop.f32.mrf.mxu0
      %v2991 = vadd.f32 %v2772, %v2990
      %v2992 = vpop.f32.mrf.mxu0
      %v2993 = vadd.f32 %v2774, %v2992
      %2994 = vmatmul.bf16.gmra.mxu0 %v1903
      %v2995 = vpop.f32.mrf.mxu0
      %v2996 = vadd.f32 %v2777, %v2995
      %v2997 = vpop.f32.mrf.mxu0
      %v2998 = vadd.f32 %v2779, %v2997
      %2999 = vmatmul.bf16.gmra.mxu0 %v1906
      %v3000 = vpop.f32.mrf.mxu0
      %v3001 = vadd.f32 %v2782, %v3000
      %v3002 = vpop.f32.mrf.mxu0
      %v3003 = vadd.f32 %v2784, %v3002
      %3004 = vmatmul.bf16.gmra.mxu0 %v1909
      %v3005 = vpop.f32.mrf.mxu0
      %v3006 = vadd.f32 %v2787, %v3005
      %v3007 = vpop.f32.mrf.mxu0
      %v3008 = vadd.f32 %v2789, %v3007
      %3009 = vdwg.mxu0
      %v3010 = vmax.f32 %v2801, 0.0
      %v3011 = vmax.f32 %v2803, 0.0
      %v3012 = vmax.f32 %v2806, 0.0
      %v3013 = vmax.f32 %v2808, 0.0
      %v3014 = vmax.f32 %v2811, 0.0
      %v3015 = vmax.f32 %v2813, 0.0
      %v3016 = vmax.f32 %v2816, 0.0
      %v3017 = vmax.f32 %v2818, 0.0
      %v3018 = vmax.f32 %v2821, 0.0
      %v3019 = vmax.f32 %v2823, 0.0
      %v3020 = vmax.f32 %v2826, 0.0
      %v3021 = vmax.f32 %v2828, 0.0
      %v3022 = vmax.f32 %v2831, 0.0
      %v3023 = vmax.f32 %v2833, 0.0
      %v3024 = vmax.f32 %v2836, 0.0
      %v3025 = vmax.f32 %v2838, 0.0
      %v3026 = vmax.f32 %v2841, 0.0
      %v3027 = vmax.f32 %v2843, 0.0
      %v3028 = vmax.f32 %v2846, 0.0
      %v3029 = vmax.f32 %v2848, 0.0
      %v3030 = vmax.f32 %v2851, 0.0
      %v3031 = vmax.f32 %v2853, 0.0
      %v3032 = vmax.f32 %v2856, 0.0
      %v3033 = vmax.f32 %v2858, 0.0
      %v3034 = vmax.f32 %v2861, 0.0
      %v3035 = vmax.f32 %v2863, 0.0
      %v3036 = vmax.f32 %v2866, 0.0
      %v3037 = vmax.f32 %v2868, 0.0
      %v3038 = vmax.f32 %v2871, 0.0
      %v3039 = vmax.f32 %v2873, 0.0
      %v3040 = vmax.f32 %v2876, 0.0
      %v3041 = vmax.f32 %v2878, 0.0
      %v3042 = vmax.f32 %v2881, 0.0
      %v3043 = vmax.f32 %v2883, 0.0
      %v3044 = vmax.f32 %v2886, 0.0
      %v3045 = vmax.f32 %v2888, 0.0
      %v3046 = vmax.f32 %v2891, 0.0
      %v3047 = vmax.f32 %v2893, 0.0
      %v3048 = vmax.f32 %v2896, 0.0
      %v3049 = vmax.f32 %v2898, 0.0
      %v3050 = vmax.f32 %v2901, 0.0
      %v3051 = vmax.f32 %v2903, 0.0
      %v3052 = vmax.f32 %v2906, 0.0
      %v3053 = vmax.f32 %v2908, 0.0
      %v3054 = vmax.f32 %v2911, 0.0
      %v3055 = vmax.f32 %v2913, 0.0
      %v3056 = vmax.f32 %v2916, 0.0
      %v3057 = vmax.f32 %v2918, 0.0
      %v3058 = vmax.f32 %v2921, 0.0
      %v3059 = vmax.f32 %v2923, 0.0
      %v3060 = vmax.f32 %v2926, 0.0
      %v3061 = vmax.f32 %v2928, 0.0
      %v3062 = vmax.f32 %v2931, 0.0
      %v3063 = vmax.f32 %v2933, 0.0
      %v3064 = vmax.f32 %v2936, 0.0
      %v3065 = vmax.f32 %v2938, 0.0
      %v3066 = vmax.f32 %v2941, 0.0
      %v3067 = vmax.f32 %v2943, 0.0
      %v3068 = vmax.f32 %v2946, 0.0
      %v3069 = vmax.f32 %v2948, 0.0
      %v3070 = vmax.f32 %v2951, 0.0
      %v3071 = vmax.f32 %v2953, 0.0
      %v3072 = vmax.f32 %v2956, 0.0
      %v3073 = vmax.f32 %v2958, 0.0
      %v3074 = vmax.f32 %v2961, 0.0
      %v3075 = vmax.f32 %v2963, 0.0
      %v3076 = vmax.f32 %v2966, 0.0
      %v3077 = vmax.f32 %v2968, 0.0
      %v3078 = vmax.f32 %v2971, 0.0
      %v3079 = vmax.f32 %v2973, 0.0
      %v3080 = vmax.f32 %v2976, 0.0
      %v3081 = vmax.f32 %v2978, 0.0
      %v3082 = vmax.f32 %v2981, 0.0
      %v3083 = vmax.f32 %v2983, 0.0
      %v3084 = vmax.f32 %v2986, 0.0
      %v3085 = vmax.f32 %v2988, 0.0
      %v3086 = vmax.f32 %v2991, 0.0
      %v3087 = vmax.f32 %v2993, 0.0
      %v3088 = vmax.f32 %v2996, 0.0
      %v3089 = vmax.f32 %v2998, 0.0
      %v3090 = vmax.f32 %v3001, 0.0
      %v3091 = vmax.f32 %v3003, 0.0
      %v3092 = vmax.f32 %v3006, 0.0
      %v3093 = vmax.f32 %v3008, 0.0
      %v3094 = vpack.c.bf16 %v3010, %v3010
      %v3095 = vpack.c.bf16 %v3011, %v3011
      %v3096 = vpack.c.bf16 %v3012, %v3012
      %v3097 = vpack.c.bf16 %v3013, %v3013
      %v3098 = vpack.c.bf16 %v3014, %v3014
      %v3099 = vpack.c.bf16 %v3015, %v3015
      %v3100 = vpack.c.bf16 %v3016, %v3016
      %v3101 = vpack.c.bf16 %v3017, %v3017
      %v3102 = vpack.c.bf16 %v3018, %v3018
      %v3103 = vpack.c.bf16 %v3019, %v3019
      %v3104 = vpack.c.bf16 %v3020, %v3020
      %v3105 = vpack.c.bf16 %v3021, %v3021
      %v3106 = vpack.c.bf16 %v3022, %v3022
      %v3107 = vpack.c.bf16 %v3023, %v3023
      %v3108 = vpack.c.bf16 %v3024, %v3024
      %v3109 = vpack.c.bf16 %v3025, %v3025
      %v3110 = vpack.c.bf16 %v3026, %v3026
      %v3111 = vpack.c.bf16 %v3027, %v3027
      %v3112 = vpack.c.bf16 %v3028, %v3028
      %v3113 = vpack.c.bf16 %v3029, %v3029
      %v3114 = vpack.c.bf16 %v3030, %v3030
      %v3115 = vpack.c.bf16 %v3031, %v3031
      %v3116 = vpack.c.bf16 %v3032, %v3032
      %v3117 = vpack.c.bf16 %v3033, %v3033
      %v3118 = vpack.c.bf16 %v3034, %v3034
      %v3119 = vpack.c.bf16 %v3035, %v3035
      %v3120 = vpack.c.bf16 %v3036, %v3036
      %v3121 = vpack.c.bf16 %v3037, %v3037
      %v3122 = vpack.c.bf16 %v3038, %v3038
      %v3123 = vpack.c.bf16 %v3039, %v3039
      %v3124 = vpack.c.bf16 %v3040, %v3040
      %v3125 = vpack.c.bf16 %v3041, %v3041
      %v3126 = vpack.c.bf16 %v3042, %v3042
      %v3127 = vpack.c.bf16 %v3043, %v3043
      %v3128 = vpack.c.bf16 %v3044, %v3044
      %v3129 = vpack.c.bf16 %v3045, %v3045
      %v3130 = vpack.c.bf16 %v3046, %v3046
      %v3131 = vpack.c.bf16 %v3047, %v3047
      %v3132 = vpack.c.bf16 %v3048, %v3048
      %v3133 = vpack.c.bf16 %v3049, %v3049
      %v3134 = vpack.c.bf16 %v3050, %v3050
      %v3135 = vpack.c.bf16 %v3051, %v3051
      %v3136 = vpack.c.bf16 %v3052, %v3052
      %v3137 = vpack.c.bf16 %v3053, %v3053
      %v3138 = vpack.c.bf16 %v3054, %v3054
      %v3139 = vpack.c.bf16 %v3055, %v3055
      %v3140 = vpack.c.bf16 %v3056, %v3056
      %v3141 = vpack.c.bf16 %v3057, %v3057
      %v3142 = vpack.c.bf16 %v3058, %v3058
      %v3143 = vpack.c.bf16 %v3059, %v3059
      %v3144 = vpack.c.bf16 %v3060, %v3060
      %v3145 = vpack.c.bf16 %v3061, %v3061
      %v3146 = vpack.c.bf16 %v3062, %v3062
      %v3147 = vpack.c.bf16 %v3063, %v3063
      %v3148 = vpack.c.bf16 %v3064, %v3064
      %v3149 = vpack.c.bf16 %v3065, %v3065
      %v3150 = vpack.c.bf16 %v3066, %v3066
      %v3151 = vpack.c.bf16 %v3067, %v3067
      %v3152 = vpack.c.bf16 %v3068, %v3068
      %v3153 = vpack.c.bf16 %v3069, %v3069
      %v3154 = vpack.c.bf16 %v3070, %v3070
      %v3155 = vpack.c.bf16 %v3071, %v3071
      %v3156 = vpack.c.bf16 %v3072, %v3072
      %v3157 = vpack.c.bf16 %v3073, %v3073
      %v3158 = vpack.c.bf16 %v3074, %v3074
      %v3159 = vpack.c.bf16 %v3075, %v3075
      %v3160 = vpack.c.bf16 %v3076, %v3076
      %v3161 = vpack.c.bf16 %v3077, %v3077
      %v3162 = vpack.c.bf16 %v3078, %v3078
      %v3163 = vpack.c.bf16 %v3079, %v3079
      %v3164 = vpack.c.bf16 %v3080, %v3080
      %v3165 = vpack.c.bf16 %v3081, %v3081
      %v3166 = vpack.c.bf16 %v3082, %v3082
      %v3167 = vpack.c.bf16 %v3083, %v3083
      %v3168 = vpack.c.bf16 %v3084, %v3084
      %v3169 = vpack.c.bf16 %v3085, %v3085
      %v3170 = vpack.c.bf16 %v3086, %v3086
      %v3171 = vpack.c.bf16 %v3087, %v3087
      %v3172 = vpack.c.bf16 %v3088, %v3088
      %v3173 = vpack.c.bf16 %v3089, %v3089
      %v3174 = vpack.c.bf16 %v3090, %v3090
      %v3175 = vpack.c.bf16 %v3091, %v3091
      %v3176 = vpack.c.bf16 %v3092, %v3092
      %v3177 = vpack.c.bf16 %v3093, %v3093
      %3178 = vst [vmem:[%s175] sm:$0xf] %v3094
      %3179 = vst [vmem:[%s175 + $0x4] sm:$0xf] %v3095
      %3180 = vst [vmem:[%s175 + $0x8] sm:$0xf] %v3096
      %3181 = vst [vmem:[%s175 + $0xc] sm:$0xf] %v3097
      %3182 = vst [vmem:[%s175 + $0x10] sm:$0xf] %v3098
      %3183 = vst [vmem:[%s175 + $0x14] sm:$0xf] %v3099
      %3184 = vst [vmem:[%s175 + $0x18] sm:$0xf] %v3100
      %3185 = vst [vmem:[%s175 + $0x1c] sm:$0xf] %v3101
      %3186 = vst [vmem:[%s175 + $0x20] sm:$0xf] %v3102
      %3187 = vst [vmem:[%s175 + $0x24] sm:$0xf] %v3103
      %3188 = vst [vmem:[%s175 + $0x28] sm:$0xf] %v3104
      %3189 = vst [vmem:[%s175 + $0x2c] sm:$0xf] %v3105
      %3190 = vst [vmem:[%s175 + $0x30] sm:$0xf] %v3106
      %3191 = vst [vmem:[%s175 + $0x34] sm:$0xf] %v3107
      %3192 = vst [vmem:[%s175 + $0x38] sm:$0xf] %v3108
      %3193 = vst [vmem:[%s175 + $0x3c] sm:$0xf] %v3109
      %3194 = vst [vmem:[%s175 + $0x40] sm:$0xf] %v3110
      %3195 = vst [vmem:[%s175 + $0x44] sm:$0xf] %v3111
      %3196 = vst [vmem:[%s175 + $0x48] sm:$0xf] %v3112
      %3197 = vst [vmem:[%s175 + $0x4c] sm:$0xf] %v3113
      %3198 = vst [vmem:[%s175 + $0x50] sm:$0xf] %v3114
      %3199 = vst [vmem:[%s175 + $0x54] sm:$0xf] %v3115
      %3200 = vst [vmem:[%s175 + $0x58] sm:$0xf] %v3116
      %3201 = vst [vmem:[%s175 + $0x5c] sm:$0xf] %v3117
      %3202 = vst [vmem:[%s175 + $0x60] sm:$0xf] %v3118
      %3203 = vst [vmem:[%s175 + $0x64] sm:$0xf] %v3119
      %3204 = vst [vmem:[%s175 + $0x68] sm:$0xf] %v3120
      %3205 = vst [vmem:[%s175 + $0x6c] sm:$0xf] %v3121
      %3206 = vst [vmem:[%s175 + $0x70] sm:$0xf] %v3122
      %3207 = vst [vmem:[%s175 + $0x74] sm:$0xf] %v3123
      %3208 = vst [vmem:[%s175 + $0x78] sm:$0xf] %v3124
      %3209 = vst [vmem:[%s175 + $0x7c] sm:$0xf] %v3125
      %3210 = vst [vmem:[%s175 + $0x80] sm:$0xf] %v3126
      %3211 = vst [vmem:[%s175 + $0x84] sm:$0xf] %v3127
      %3212 = vst [vmem:[%s175 + $0x88] sm:$0xf] %v3128
      %3213 = vst [vmem:[%s175 + $0x8c] sm:$0xf] %v3129
      %3214 = vst [vmem:[%s175 + $0x90] sm:$0xf] %v3130
      %3215 = vst [vmem:[%s175 + $0x94] sm:$0xf] %v3131
      %3216 = vst [vmem:[%s175 + $0x98] sm:$0xf] %v3132
      %3217 = vst [vmem:[%s175 + $0x9c] sm:$0xf] %v3133
      %3218 = vst [vmem:[%s175 + $0xa0] sm:$0xf] %v3134
      %3219 = vst [vmem:[%s175 + $0xa4] sm:$0xf] %v3135
      %3220 = vst [vmem:[%s175 + $0xa8] sm:$0xf] %v3136
      %3221 = vst [vmem:[%s175 + $0xac] sm:$0xf] %v3137
      %3222 = vst [vmem:[%s175 + $0xb0] sm:$0xf] %v3138
      %3223 = vst [vmem:[%s175 + $0xb4] sm:$0xf] %v3139
      %3224 = vst [vmem:[%s175 + $0xb8] sm:$0xf] %v3140
      %3225 = vst [vmem:[%s175 + $0xbc] sm:$0xf] %v3141
      %3226 = vst [vmem:[%s175 + $0xc0] sm:$0xf] %v3142
      %3227 = vst [vmem:[%s175 + $0xc4] sm:$0xf] %v3143
      %3228 = vst [vmem:[%s175 + $0xc8] sm:$0xf] %v3144
      %3229 = vst [vmem:[%s175 + $0xcc] sm:$0xf] %v3145
      %3230 = vst [vmem:[%s175 + $0xd0] sm:$0xf] %v3146
      %3231 = vst [vmem:[%s175 + $0xd4] sm:$0xf] %v3147
      %3232 = vst [vmem:[%s175 + $0xd8] sm:$0xf] %v3148
      %3233 = vst [vmem:[%s175 + $0xdc] sm:$0xf] %v3149
      %3234 = vst [vmem:[%s175 + $0xe0] sm:$0xf] %v3150
      %3235 = vst [vmem:[%s175 + $0xe4] sm:$0xf] %v3151
      %3236 = vst [vmem:[%s175 + $0xe8] sm:$0xf] %v3152
      %3237 = vst [vmem:[%s175 + $0xec] sm:$0xf] %v3153
      %3238 = vst [vmem:[%s175 + $0xf0] sm:$0xf] %v3154
      %3239 = vst [vmem:[%s175 + $0xf4] sm:$0xf] %v3155
      %3240 = vst [vmem:[%s175 + $0xf8] sm:$0xf] %v3156
      %3241 = vst [vmem:[%s175 + $0xfc] sm:$0xf] %v3157
      %3242 = vst [vmem:[%s175 + $0x100] sm:$0xf] %v3158
      %3243 = vst [vmem:[%s175 + $0x104] sm:$0xf] %v3159
      %3244 = vst [vmem:[%s175 + $0x108] sm:$0xf] %v3160
      %3245 = vst [vmem:[%s175 + $0x10c] sm:$0xf] %v3161
      %3246 = vst [vmem:[%s175 + $0x110] sm:$0xf] %v3162
      %3247 = vst [vmem:[%s175 + $0x114] sm:$0xf] %v3163
      %3248 = vst [vmem:[%s175 + $0x118] sm:$0xf] %v3164
      %3249 = vst [vmem:[%s175 + $0x11c] sm:$0xf] %v3165
      %3250 = vst [vmem:[%s175 + $0x120] sm:$0xf] %v3166
      %3251 = vst [vmem:[%s175 + $0x124] sm:$0xf] %v3167
      %3252 = vst [vmem:[%s175 + $0x128] sm:$0xf] %v3168
      %3253 = vst [vmem:[%s175 + $0x12c] sm:$0xf] %v3169
      %3254 = vst [vmem:[%s175 + $0x130] sm:$0xf] %v3170
      %3255 = vst [vmem:[%s175 + $0x134] sm:$0xf] %v3171
      %3256 = vst [vmem:[%s175 + $0x138] sm:$0xf] %v3172
      %3257 = vst [vmem:[%s175 + $0x13c] sm:$0xf] %v3173
      %3258 = vst [vmem:[%s175 + $0x140] sm:$0xf] %v3174
      %3259 = vst [vmem:[%s175 + $0x144] sm:$0xf] %v3175
      %3260 = vst [vmem:[%s175 + $0x148] sm:$0xf] %v3176
      %3261 = vst [vmem:[%s175 + $0x14c] sm:$0xf] %v3177
      %s3262 = smul.u32 84, %s14
      %p3263 = scmp.lt.s32.totalorder %s3262, 167
      %s3264 = scalar_select %p3263, %s3262, 167
      %s3265 = smul.addr %s3264, 4
      %s3266 = scalar_lea.vmem %s3, %s3265
      // Predicated region
      $region33: #{pilotnet_forward.7} parent=31 // pred_check
        %p3267 = pneg %p100
      $region34: #{pilotnet_forward.7} parent=31 // pred_check_branch
        %3269 = sbr.rel (%p3267) target = $region36
      $region35: #{pilotnet_forward.7} parent=31 // pred_region
        %s3270 = smul.u32 84, %s14
      $region36: #{pilotnet_forward.7} parent=31 // pred_fallthru
        _
    $region32: #{pilotnet_forward.7} parent=5 // pred_fallthru
      _
    %p3271 = scmp.le.s32.totalorder 2, %s9
    // Predicated region
    $region37: #{pilotnet_forward.7} parent=5 // pred_check
      %p3272 = pneg %p3271
    $region38: #{pilotnet_forward.7} parent=5 // pred_check_branch
      %3274 = sbr.rel (%p3272) target = $region40
    $region39: #{pilotnet_forward.7} parent=5 // pred_region
      %s3275 = ssub.s32 %s9, 2
      // Predicated region
      $region41: #{pilotnet_forward.7} parent=39 // pred_check
        %p3276 = pneg %p106
      $region42: #{pilotnet_forward.7} parent=39 // pred_check_branch
        %3278 = sbr.rel (%p3276) target = $region44
      $region43: #{pilotnet_forward.7} parent=39 // pred_region
        %s3279 = smul.u32 84, %s15
        %p3280 = scmp.lt.s32.totalorder %s3279, 167
        %s3281 = scalar_select %p3280, %s3279, 167
        %s3282 = smul.addr %s3281, 4
        %s3283 = scalar_lea.vmem %s3, %s3282
      $region44: #{pilotnet_forward.7} parent=39 // pred_fallthru
        _
    $region40: #{pilotnet_forward.7} parent=5 // pred_fallthru
      _
  $region6: #{pilotnet_forward.7} parent=0 // loop_footer
    %s13 = sadd.s32 1, %s9
  $region7: #{pilotnet_forward.7} parent=0 // loop_footer_branch
    %8 = sbr.rel target = $region3
  $region8: #{pilotnet_forward.7} parent=0 // loop_exit
    _

// kernel: pilotnet_forward.8
$region0: #{pilotnet_forward.8}
  #allocation0 [shape = 'u32[]', space=smem, size = 0x4, offset = 0x4, fixed_abs, tag = 'smem constant byte address 0x4 - core index']
  #allocation1 [shape = 'u32[72,128]{1,0:T(1,128)}', space=vmem, size = 0x9000, scoped, tag = 'internal scratch']
  %s0 = inlined_call_operand.vmem [shape: bf16[224,900], index: 0, kind: input, shape index: {}]
  %s1 = inlined_call_operand.vmem [shape: bf16[900,128], index: 1, kind: input, shape index: {}]
  %s2 = inlined_call_operand.vmem [shape: f32[1,128], index: 2, kind: input, shape index: {}]
  %s3 = inlined_call_operand.vmem [shape: bf16[224,128], index: 3, kind: output, shape index: {}]
  %s4 = sld [smem:[#allocation0]]
  $region22: #{pilotnet_forward.8} parent=0
    _
  %s6 = ssub.s32 1, %s4
  %s7 = scalar_select 0, %s6, %s4
  // Predicated region
  $region2: #{pilotnet_forward.8} parent=0 // pred_check
    _
  $region3: #{pilotnet_forward.8} parent=0 // pred_check_branch
    %9 = sbr.rel (0) target = $region5
  $region4: #{pilotnet_forward.8} parent=0 // pred_region
    _
  $region5: #{pilotnet_forward.8} parent=0 // pred_fallthru
    _
  // Predicated region
  $region6: #{pilotnet_forward.8} parent=0 // pred_check
    _
  $region7: #{pilotnet_forward.8} parent=0 // pred_check_branch
    %11 = sbr.rel (0) target = $region9
  $region8: #{pilotnet_forward.8} parent=0 // pred_region
    _
  $region9: #{pilotnet_forward.8} parent=0 // pred_fallthru
    _
  // Predicated region
  $region10: #{pilotnet_forward.8} parent=0 // pred_check
    _
  $region11: #{pilotnet_forward.8} parent=0 // pred_check_branch
    %13 = sbr.rel (0) target = $region13
  $region12: #{pilotnet_forward.8} parent=0 // pred_region
    _
  $region13: #{pilotnet_forward.8} parent=0 // pred_fallthru
    _
  %v15 = vld [vmem:[%s0] sm:$0xff]
  %v16 = vld [vmem:[%s0 + $0x8] sm:$0xff]
  %v17 = vld [vmem:[%s0 + $0x10] sm:$0xff]
  %v18 = vld [vmem:[%s0 + $0x18] sm:$0xff]
  %v19 = vld [vmem:[%s0 + $0x20] sm:$0xff]
  %v20 = vld [vmem:[%s0 + $0x28] sm:$0xff]
  %v21 = vld [vmem:[%s0 + $0x30] sm:$0xff]
  %v22 = vld [vmem:[%s0 + $0x38] sm:$0xff]
  %v23 = vld [vmem:[%s0 + $0x40] sm:$0xff]
  %v24 = vld [vmem:[%s0 + $0x48] sm:$0xff]
  %v25 = vld [vmem:[%s0 + $0x50] sm:$0xff]
  %v26 = vld [vmem:[%s0 + $0x58] sm:$0xff]
  %v27 = vld [vmem:[%s0 + $0x60] sm:$0xff]
  %v28 = vld [vmem:[%s0 + $0x68] sm:$0xff]
  %v29 = vld [vmem:[%s0 + $0x70] sm:$0xff]
  %v30 = vld [vmem:[%s0 + $0x78] sm:$0xff]
  %v31 = vld [vmem:[%s0 + $0x80] sm:$0xff]
  %v32 = vld [vmem:[%s0 + $0x88] sm:$0xff]
  %v33 = vld [vmem:[%s0 + $0x90] sm:$0xff]
  %v34 = vld [vmem:[%s0 + $0x98] sm:$0xff]
  %v35 = vld [vmem:[%s0 + $0xa0] sm:$0xff]
  %v36 = vld [vmem:[%s0 + $0xa8] sm:$0xff]
  %v37 = vld [vmem:[%s0 + $0xb0] sm:$0xff]
  %v38 = vld [vmem:[%s0 + $0xb8] sm:$0xff]
  %v39 = vld [vmem:[%s0 + $0xc0] sm:$0xff]
  %v40 = vld [vmem:[%s0 + $0xc8] sm:$0xff]
  %v41 = vld [vmem:[%s0 + $0xd0] sm:$0xff]
  %v42 = vld [vmem:[%s0 + $0xd8] sm:$0xff]
  %v43 = vld [vmem:[%s0 + $0xe0] sm:$0xff]
  %v44 = vld [vmem:[%s0 + $0xe8] sm:$0xff]
  %v45 = vld [vmem:[%s0 + $0xf0] sm:$0xff]
  %v46 = vld [vmem:[%s0 + $0xf8] sm:$0xff]
  %v47 = vld [vmem:[%s0 + $0x100] sm:$0xff]
  %v48 = vld [vmem:[%s0 + $0x108] sm:$0xff]
  %v49 = vld [vmem:[%s0 + $0x110] sm:$0xff]
  %v50 = vld [vmem:[%s0 + $0x118] sm:$0xff]
  %v51 = vld [vmem:[%s0 + $0x120] sm:$0xff]
  %v52 = vld [vmem:[%s0 + $0x128] sm:$0xff]
  %v53 = vld [vmem:[%s0 + $0x130] sm:$0xff]
  %v54 = vld [vmem:[%s0 + $0x138] sm:$0xff]
  %v55 = vld [vmem:[%s0 + $0x140] sm:$0xff]
  %v56 = vld [vmem:[%s0 + $0x148] sm:$0xff]
  %v57 = vld [vmem:[%s0 + $0x150] sm:$0xff]
  %v58 = vld [vmem:[%s0 + $0x158] sm:$0xff]
  %v59 = vld [vmem:[%s0 + $0x160] sm:$0xff]
  %v60 = vld [vmem:[%s0 + $0x168] sm:$0xff]
  %v61 = vld [vmem:[%s0 + $0x170] sm:$0xff]
  %v62 = vld [vmem:[%s0 + $0x178] sm:$0xff]
  %v63 = vld [vmem:[%s0 + $0x180] sm:$0xff]
  %v64 = vld [vmem:[%s0 + $0x188] sm:$0xff]
  %v65 = vld [vmem:[%s0 + $0x190] sm:$0xff]
  %v66 = vld [vmem:[%s0 + $0x198] sm:$0xff]
  %v67 = vld [vmem:[%s0 + $0x1a0] sm:$0xff]
  %v68 = vld [vmem:[%s0 + $0x1a8] sm:$0xff]
  %v69 = vld [vmem:[%s0 + $0x1b0] sm:$0xff]
  %v70 = vld [vmem:[%s0 + $0x1b8] sm:$0xff]
  %v71 = vld [vmem:[%s0 + $0x1c0] sm:$0xff]
  %v72 = vld [vmem:[%s0 + $0x1c8] sm:$0xff]
  %v73 = vld [vmem:[%s0 + $0x1d0] sm:$0xff]
  %v74 = vld [vmem:[%s0 + $0x1d8] sm:$0xff]
  %v75 = vld [vmem:[%s0 + $0x1e0] sm:$0xff]
  %v76 = vld [vmem:[%s0 + $0x1e8] sm:$0xff]
  %v77 = vld [vmem:[%s0 + $0x1f0] sm:$0xff]
  %v78 = vld [vmem:[%s0 + $0x1f8] sm:$0xff]
  %v79 = vld [vmem:[%s0 + $0x200] sm:$0xff]
  %v80 = vld [vmem:[%s0 + $0x208] sm:$0xff]
  %v81 = vld [vmem:[%s0 + $0x210] sm:$0xff]
  %v82 = vld [vmem:[%s0 + $0x218] sm:$0xff]
  %v83 = vld [vmem:[%s0 + $0x220] sm:$0xff]
  %v84 = vld [vmem:[%s0 + $0x228] sm:$0xff]
  %v85 = vld [vmem:[%s0 + $0x230] sm:$0xff]
  %v86 = vld [vmem:[%s0 + $0x238] sm:$0xff]
  %v87 = vld [vmem:[%s0 + $0x240] sm:$0xff]
  %v88 = vld [vmem:[%s0 + $0x248] sm:$0xff]
  %v89 = vld [vmem:[%s0 + $0x250] sm:$0xff]
  %v90 = vld [vmem:[%s0 + $0x258] sm:$0xff]
  %v91 = vld [vmem:[%s0 + $0x260] sm:$0xff]
  %v92 = vld [vmem:[%s0 + $0x268] sm:$0xff]
  %v93 = vld [vmem:[%s0 + $0x270] sm:$0xff]
  %v94 = vld [vmem:[%s0 + $0x278] sm:$0xff]
  %v95 = vld [vmem:[%s0 + $0x280] sm:$0xff]
  %v96 = vld [vmem:[%s0 + $0x288] sm:$0xff]
  %v97 = vld [vmem:[%s0 + $0x290] sm:$0xff]
  %v98 = vld [vmem:[%s0 + $0x298] sm:$0xff]
  %v99 = vld [vmem:[%s0 + $0x2a0] sm:$0xff]
  %v100 = vld [vmem:[%s0 + $0x2a8] sm:$0xff]
  %v101 = vld [vmem:[%s0 + $0x2b0] sm:$0xff]
  %v102 = vld [vmem:[%s0 + $0x2b8] sm:$0xff]
  %v103 = vld [vmem:[%s0 + $0x2c0] sm:$0xff]
  %v104 = vld [vmem:[%s0 + $0x2c8] sm:$0xff]
  %v105 = vld [vmem:[%s0 + $0x2d0] sm:$0xff]
  %v106 = vld [vmem:[%s0 + $0x2d8] sm:$0xff]
  %v107 = vld [vmem:[%s0 + $0x2e0] sm:$0xff]
  %v108 = vld [vmem:[%s0 + $0x2e8] sm:$0xff]
  %v109 = vld [vmem:[%s0 + $0x2f0] sm:$0xff]
  %v110 = vld [vmem:[%s0 + $0x2f8] sm:$0xff]
  %v111 = vld [vmem:[%s0 + $0x300] sm:$0xff]
  %v112 = vld [vmem:[%s0 + $0x308] sm:$0xff]
  %v113 = vld [vmem:[%s0 + $0x310] sm:$0xff]
  %v114 = vld [vmem:[%s0 + $0x318] sm:$0xff]
  %v115 = vld [vmem:[%s0 + $0x320] sm:$0xff]
  %v116 = vld [vmem:[%s0 + $0x328] sm:$0xff]
  %v117 = vld [vmem:[%s0 + $0x330] sm:$0xff]
  %v118 = vld [vmem:[%s0 + $0x338] sm:$0xff]
  %v119 = vld [vmem:[%s0 + $0x340] sm:$0xff]
  %v120 = vld [vmem:[%s0 + $0x348] sm:$0xff]
  %v121 = vld [vmem:[%s0 + $0x350] sm:$0xff]
  %v122 = vld [vmem:[%s0 + $0x358] sm:$0xff]
  %v123 = vld [vmem:[%s0 + $0x360] sm:$0xff]
  %v124 = vld [vmem:[%s0 + $0x368] sm:$0xff]
  %v125 = vld [vmem:[%s0 + $0x370] sm:$0xff]
  %v126 = vld [vmem:[%s0 + $0x378] sm:$0xff]
  %v127 = vld [vmem:[%s1] sm:$0xf]
  %v128 = vld [vmem:[%s1 + $0x4] sm:$0xf]
  %v129 = vld [vmem:[%s1 + $0x8] sm:$0xf]
  %v130 = vld [vmem:[%s1 + $0xc] sm:$0xf]
  %v131 = vld [vmem:[%s1 + $0x10] sm:$0xf]
  %v132 = vld [vmem:[%s1 + $0x14] sm:$0xf]
  %v133 = vld [vmem:[%s1 + $0x18] sm:$0xf]
  %v134 = vld [vmem:[%s1 + $0x1c] sm:$0xf]
  %v135 = vld [vmem:[%s1 + $0x20] sm:$0xf]
  %v136 = vld [vmem:[%s1 + $0x24] sm:$0xf]
  %v137 = vld [vmem:[%s1 + $0x28] sm:$0xf]
  %v138 = vld [vmem:[%s1 + $0x2c] sm:$0xf]
  %v139 = vld [vmem:[%s1 + $0x30] sm:$0xf]
  %v140 = vld [vmem:[%s1 + $0x34] sm:$0xf]
  %v141 = vld [vmem:[%s1 + $0x38] sm:$0xf]
  %v142 = vld [vmem:[%s1 + $0x3c] sm:$0xf]
  %v143 = vld [vmem:[%s1 + $0x40] sm:$0xf]
  %v144 = vld [vmem:[%s1 + $0x44] sm:$0xf]
  %v145 = vld [vmem:[%s1 + $0x48] sm:$0xf]
  %v146 = vld [vmem:[%s1 + $0x4c] sm:$0xf]
  %v147 = vld [vmem:[%s1 + $0x50] sm:$0xf]
  %v148 = vld [vmem:[%s1 + $0x54] sm:$0xf]
  %v149 = vld [vmem:[%s1 + $0x58] sm:$0xf]
  %v150 = vld [vmem:[%s1 + $0x5c] sm:$0xf]
  %v151 = vld [vmem:[%s1 + $0x60] sm:$0xf]
  %v152 = vld [vmem:[%s1 + $0x64] sm:$0xf]
  %v153 = vld [vmem:[%s1 + $0x68] sm:$0xf]
  %v154 = vld [vmem:[%s1 + $0x6c] sm:$0xf]
  %v155 = vld [vmem:[%s1 + $0x70] sm:$0xf]
  %v156 = vld [vmem:[%s1 + $0x74] sm:$0xf]
  %v157 = vld [vmem:[%s1 + $0x78] sm:$0xf]
  %v158 = vld [vmem:[%s1 + $0x7c] sm:$0xf]
  %v159 = vld [vmem:[%s1 + $0x80] sm:$0xf]
  %v160 = vld [vmem:[%s1 + $0x84] sm:$0xf]
  %v161 = vld [vmem:[%s1 + $0x88] sm:$0xf]
  %v162 = vld [vmem:[%s1 + $0x8c] sm:$0xf]
  %v163 = vld [vmem:[%s1 + $0x90] sm:$0xf]
  %v164 = vld [vmem:[%s1 + $0x94] sm:$0xf]
  %v165 = vld [vmem:[%s1 + $0x98] sm:$0xf]
  %v166 = vld [vmem:[%s1 + $0x9c] sm:$0xf]
  %v167 = vld [vmem:[%s1 + $0xa0] sm:$0xf]
  %v168 = vld [vmem:[%s1 + $0xa4] sm:$0xf]
  %v169 = vld [vmem:[%s1 + $0xa8] sm:$0xf]
  %v170 = vld [vmem:[%s1 + $0xac] sm:$0xf]
  %v171 = vld [vmem:[%s1 + $0xb0] sm:$0xf]
  %v172 = vld [vmem:[%s1 + $0xb4] sm:$0xf]
  %v173 = vld [vmem:[%s1 + $0xb8] sm:$0xf]
  %v174 = vld [vmem:[%s1 + $0xbc] sm:$0xf]
  %v175 = vld [vmem:[%s1 + $0xc0] sm:$0xf]
  %v176 = vld [vmem:[%s1 + $0xc4] sm:$0xf]
  %v177 = vld [vmem:[%s1 + $0xc8] sm:$0xf]
  %v178 = vld [vmem:[%s1 + $0xcc] sm:$0xf]
  %v179 = vld [vmem:[%s1 + $0xd0] sm:$0xf]
  %v180 = vld [vmem:[%s1 + $0xd4] sm:$0xf]
  %v181 = vld [vmem:[%s1 + $0xd8] sm:$0xf]
  %v182 = vld [vmem:[%s1 + $0xdc] sm:$0xf]
  %v183 = vld [vmem:[%s1 + $0xe0] sm:$0xf]
  %v184 = vld [vmem:[%s1 + $0xe4] sm:$0xf]
  %v185 = vld [vmem:[%s1 + $0xe8] sm:$0xf]
  %v186 = vld [vmem:[%s1 + $0xec] sm:$0xf]
  %v187 = vld [vmem:[%s1 + $0xf0] sm:$0xf]
  %v188 = vld [vmem:[%s1 + $0xf4] sm:$0xf]
  %v189 = vld [vmem:[%s1 + $0xf8] sm:$0xf]
  %v190 = vld [vmem:[%s1 + $0xfc] sm:$0xf]
  %v191 = vld [vmem:[%s1 + $0x100] sm:$0xf]
  %v192 = vld [vmem:[%s1 + $0x104] sm:$0xf]
  %v193 = vld [vmem:[%s1 + $0x108] sm:$0xf]
  %v194 = vld [vmem:[%s1 + $0x10c] sm:$0xf]
  %v195 = vld [vmem:[%s1 + $0x110] sm:$0xf]
  %v196 = vld [vmem:[%s1 + $0x114] sm:$0xf]
  %v197 = vld [vmem:[%s1 + $0x118] sm:$0xf]
  %v198 = vld [vmem:[%s1 + $0x11c] sm:$0xf]
  %v199 = vld [vmem:[%s1 + $0x120] sm:$0xf]
  %v200 = vld [vmem:[%s1 + $0x124] sm:$0xf]
  %v201 = vld [vmem:[%s1 + $0x128] sm:$0xf]
  %v202 = vld [vmem:[%s1 + $0x12c] sm:$0xf]
  %v203 = vld [vmem:[%s1 + $0x130] sm:$0xf]
  %v204 = vld [vmem:[%s1 + $0x134] sm:$0xf]
  %v205 = vld [vmem:[%s1 + $0x138] sm:$0xf]
  %v206 = vld [vmem:[%s1 + $0x13c] sm:$0xf]
  %v207 = vld [vmem:[%s1 + $0x140] sm:$0xf]
  %v208 = vld [vmem:[%s1 + $0x144] sm:$0xf]
  %v209 = vld [vmem:[%s1 + $0x148] sm:$0xf]
  %v210 = vld [vmem:[%s1 + $0x14c] sm:$0xf]
  %v211 = vld [vmem:[%s1 + $0x150] sm:$0xf]
  %v212 = vld [vmem:[%s1 + $0x154] sm:$0xf]
  %v213 = vld [vmem:[%s1 + $0x158] sm:$0xf]
  %v214 = vld [vmem:[%s1 + $0x15c] sm:$0xf]
  %v215 = vld [vmem:[%s1 + $0x160] sm:$0xf]
  %v216 = vld [vmem:[%s1 + $0x164] sm:$0xf]
  %v217 = vld [vmem:[%s1 + $0x168] sm:$0xf]
  %v218 = vld [vmem:[%s1 + $0x16c] sm:$0xf]
  %v219 = vld [vmem:[%s1 + $0x170] sm:$0xf]
  %v220 = vld [vmem:[%s1 + $0x174] sm:$0xf]
  %v221 = vld [vmem:[%s1 + $0x178] sm:$0xf]
  %v222 = vld [vmem:[%s1 + $0x17c] sm:$0xf]
  %v223 = vld [vmem:[%s1 + $0x180] sm:$0xf]
  %v224 = vld [vmem:[%s1 + $0x184] sm:$0xf]
  %v225 = vld [vmem:[%s1 + $0x188] sm:$0xf]
  %v226 = vld [vmem:[%s1 + $0x18c] sm:$0xf]
  %v227 = vld [vmem:[%s1 + $0x190] sm:$0xf]
  %v228 = vld [vmem:[%s1 + $0x194] sm:$0xf]
  %v229 = vld [vmem:[%s1 + $0x198] sm:$0xf]
  %v230 = vld [vmem:[%s1 + $0x19c] sm:$0xf]
  %v231 = vld [vmem:[%s1 + $0x1a0] sm:$0xf]
  %v232 = vld [vmem:[%s1 + $0x1a4] sm:$0xf]
  %v233 = vld [vmem:[%s1 + $0x1a8] sm:$0xf]
  %v234 = vld [vmem:[%s1 + $0x1ac] sm:$0xf]
  %v235 = vld [vmem:[%s1 + $0x1b0] sm:$0xf]
  %v236 = vld [vmem:[%s1 + $0x1b4] sm:$0xf]
  %v237 = vld [vmem:[%s1 + $0x1b8] sm:$0xf]
  %v238 = vld [vmem:[%s1 + $0x1bc] sm:$0xf]
  %v239 = vld [vmem:[%s1 + $0x1c0] sm:$0x3]
  %v240 = vld [vmem:[%s2] sm:$0x1]
  %v242 = vperm.slane %v240, 0
  %v356 = vunpack.c.l.b16 %v15
  %v357 = vunpack.c.h.b16 %v15
  %v358 = vunpack.c.l.b16 %v16
  %v359 = vunpack.c.h.b16 %v16
  %v360 = vunpack.c.l.b16 %v17
  %v361 = vunpack.c.h.b16 %v17
  %v362 = vunpack.c.l.b16 %v18
  %v363 = vunpack.c.h.b16 %v18
  %v364 = vunpack.c.l.b16 %v19
  %v365 = vunpack.c.h.b16 %v19
  %v366 = vunpack.c.l.b16 %v20
  %v367 = vunpack.c.h.b16 %v20
  %v368 = vunpack.c.l.b16 %v21
  %v369 = vunpack.c.h.b16 %v21
  %v370 = vunpack.c.l.b16 %v22
  %v371 = vunpack.c.h.b16 %v22
  %v372 = vunpack.c.l.b16 %v23
  %v373 = vunpack.c.h.b16 %v23
  %v374 = vunpack.c.l.b16 %v24
  %v375 = vunpack.c.h.b16 %v24
  %v376 = vunpack.c.l.b16 %v25
  %v377 = vunpack.c.h.b16 %v25
  %v378 = vunpack.c.l.b16 %v26
  %v379 = vunpack.c.h.b16 %v26
  %v380 = vunpack.c.l.b16 %v27
  %v381 = vunpack.c.h.b16 %v27
  %v382 = vunpack.c.l.b16 %v28
  %v383 = vunpack.c.h.b16 %v28
  %v384 = vunpack.c.l.b16 %v29
  %v385 = vunpack.c.h.b16 %v29
  %v386 = vunpack.c.l.b16 %v30
  %v387 = vunpack.c.h.b16 %v30
  %v388 = vunpack.c.l.b16 %v31
  %v389 = vunpack.c.h.b16 %v31
  %v390 = vunpack.c.l.b16 %v32
  %v391 = vunpack.c.h.b16 %v32
  %v392 = vunpack.c.l.b16 %v33
  %v393 = vunpack.c.h.b16 %v33
  %v394 = vunpack.c.l.b16 %v34
  %v395 = vunpack.c.h.b16 %v34
  %v396 = vunpack.c.l.b16 %v35
  %v397 = vunpack.c.h.b16 %v35
  %v398 = vunpack.c.l.b16 %v36
  %v399 = vunpack.c.h.b16 %v36
  %v400 = vunpack.c.l.b16 %v37
  %v401 = vunpack.c.h.b16 %v37
  %v402 = vunpack.c.l.b16 %v38
  %v403 = vunpack.c.h.b16 %v38
  %v404 = vunpack.c.l.b16 %v39
  %v405 = vunpack.c.h.b16 %v39
  %v406 = vunpack.c.l.b16 %v40
  %v407 = vunpack.c.h.b16 %v40
  %v408 = vunpack.c.l.b16 %v41
  %v409 = vunpack.c.h.b16 %v41
  %v410 = vunpack.c.l.b16 %v42
  %v411 = vunpack.c.h.b16 %v42
  %v412 = vunpack.c.l.b16 %v43
  %v413 = vunpack.c.h.b16 %v43
  %v414 = vunpack.c.l.b16 %v44
  %v415 = vunpack.c.h.b16 %v44
  %v416 = vunpack.c.l.b16 %v45
  %v417 = vunpack.c.h.b16 %v45
  %v418 = vunpack.c.l.b16 %v46
  %v419 = vunpack.c.h.b16 %v46
  %v420 = vunpack.c.l.b16 %v47
  %v421 = vunpack.c.h.b16 %v47
  %v422 = vunpack.c.l.b16 %v48
  %v423 = vunpack.c.h.b16 %v48
  %v424 = vunpack.c.l.b16 %v49
  %v425 = vunpack.c.h.b16 %v49
  %v426 = vunpack.c.l.b16 %v50
  %v427 = vunpack.c.h.b16 %v50
  %v428 = vunpack.c.l.b16 %v51
  %v429 = vunpack.c.h.b16 %v51
  %v430 = vunpack.c.l.b16 %v52
  %v431 = vunpack.c.h.b16 %v52
  %v432 = vunpack.c.l.b16 %v53
  %v433 = vunpack.c.h.b16 %v53
  %v434 = vunpack.c.l.b16 %v54
  %v435 = vunpack.c.h.b16 %v54
  %v436 = vunpack.c.l.b16 %v55
  %v437 = vunpack.c.h.b16 %v55
  %v438 = vunpack.c.l.b16 %v56
  %v439 = vunpack.c.h.b16 %v56
  %v440 = vunpack.c.l.b16 %v57
  %v441 = vunpack.c.h.b16 %v57
  %v442 = vunpack.c.l.b16 %v58
  %v443 = vunpack.c.h.b16 %v58
  %v444 = vunpack.c.l.b16 %v59
  %v445 = vunpack.c.h.b16 %v59
  %v446 = vunpack.c.l.b16 %v60
  %v447 = vunpack.c.h.b16 %v60
  %v448 = vunpack.c.l.b16 %v61
  %v449 = vunpack.c.h.b16 %v61
  %v450 = vunpack.c.l.b16 %v62
  %v451 = vunpack.c.h.b16 %v62
  %v452 = vunpack.c.l.b16 %v63
  %v453 = vunpack.c.h.b16 %v63
  %v454 = vunpack.c.l.b16 %v64
  %v455 = vunpack.c.h.b16 %v64
  %v456 = vunpack.c.l.b16 %v65
  %v457 = vunpack.c.h.b16 %v65
  %v458 = vunpack.c.l.b16 %v66
  %v459 = vunpack.c.h.b16 %v66
  %v460 = vunpack.c.l.b16 %v67
  %v461 = vunpack.c.h.b16 %v67
  %v462 = vunpack.c.l.b16 %v68
  %v463 = vunpack.c.h.b16 %v68
  %v464 = vunpack.c.l.b16 %v69
  %v465 = vunpack.c.h.b16 %v69
  %v466 = vunpack.c.l.b16 %v70
  %v467 = vunpack.c.h.b16 %v70
  %v468 = vunpack.c.l.b16 %v71
  %v469 = vunpack.c.h.b16 %v71
  %v470 = vunpack.c.l.b16 %v72
  %v471 = vunpack.c.h.b16 %v72
  %v472 = vunpack.c.l.b16 %v73
  %v473 = vunpack.c.h.b16 %v73
  %v474 = vunpack.c.l.b16 %v74
  %v475 = vunpack.c.h.b16 %v74
  %v476 = vunpack.c.l.b16 %v75
  %v477 = vunpack.c.h.b16 %v75
  %v478 = vunpack.c.l.b16 %v76
  %v479 = vunpack.c.h.b16 %v76
  %v480 = vunpack.c.l.b16 %v77
  %v481 = vunpack.c.h.b16 %v77
  %v482 = vunpack.c.l.b16 %v78
  %v483 = vunpack.c.h.b16 %v78
  %v484 = vunpack.c.l.b16 %v79
  %v485 = vunpack.c.h.b16 %v79
  %v486 = vunpack.c.l.b16 %v80
  %v487 = vunpack.c.h.b16 %v80
  %v488 = vunpack.c.l.b16 %v81
  %v489 = vunpack.c.h.b16 %v81
  %v490 = vunpack.c.l.b16 %v82
  %v491 = vunpack.c.h.b16 %v82
  %v492 = vunpack.c.l.b16 %v83
  %v493 = vunpack.c.h.b16 %v83
  %v494 = vunpack.c.l.b16 %v84
  %v495 = vunpack.c.h.b16 %v84
  %v496 = vunpack.c.l.b16 %v85
  %v497 = vunpack.c.h.b16 %v85
  %v498 = vunpack.c.l.b16 %v86
  %v499 = vunpack.c.h.b16 %v86
  %v500 = vunpack.c.l.b16 %v87
  %v501 = vunpack.c.h.b16 %v87
  %v502 = vunpack.c.l.b16 %v88
  %v503 = vunpack.c.h.b16 %v88
  %v504 = vunpack.c.l.b16 %v89
  %v505 = vunpack.c.h.b16 %v89
  %v506 = vunpack.c.l.b16 %v90
  %v507 = vunpack.c.h.b16 %v90
  %v508 = vunpack.c.l.b16 %v91
  %v509 = vunpack.c.h.b16 %v91
  %v510 = vunpack.c.l.b16 %v92
  %v511 = vunpack.c.h.b16 %v92
  %v512 = vunpack.c.l.b16 %v93
  %v513 = vunpack.c.h.b16 %v93
  %v514 = vunpack.c.l.b16 %v94
  %v515 = vunpack.c.h.b16 %v94
  %v516 = vunpack.c.l.b16 %v95
  %v517 = vunpack.c.h.b16 %v95
  %v518 = vunpack.c.l.b16 %v96
  %v519 = vunpack.c.h.b16 %v96
  %v520 = vunpack.c.l.b16 %v97
  %v521 = vunpack.c.h.b16 %v97
  %v522 = vunpack.c.l.b16 %v98
  %v523 = vunpack.c.h.b16 %v98
  %v524 = vunpack.c.l.b16 %v99
  %v525 = vunpack.c.h.b16 %v99
  %v526 = vunpack.c.l.b16 %v100
  %v527 = vunpack.c.h.b16 %v100
  %v528 = vunpack.c.l.b16 %v101
  %v529 = vunpack.c.h.b16 %v101
  %v530 = vunpack.c.l.b16 %v102
  %v531 = vunpack.c.h.b16 %v102
  %v532 = vunpack.c.l.b16 %v103
  %v533 = vunpack.c.h.b16 %v103
  %v534 = vunpack.c.l.b16 %v104
  %v535 = vunpack.c.h.b16 %v104
  %v536 = vunpack.c.l.b16 %v105
  %v537 = vunpack.c.h.b16 %v105
  %v538 = vunpack.c.l.b16 %v106
  %v539 = vunpack.c.h.b16 %v106
  %v540 = vunpack.c.l.b16 %v107
  %v541 = vunpack.c.h.b16 %v107
  %v542 = vunpack.c.l.b16 %v108
  %v543 = vunpack.c.h.b16 %v108
  %v544 = vunpack.c.l.b16 %v109
  %v545 = vunpack.c.h.b16 %v109
  %v546 = vunpack.c.l.b16 %v110
  %v547 = vunpack.c.h.b16 %v110
  %v548 = vunpack.c.l.b16 %v111
  %v549 = vunpack.c.h.b16 %v111
  %v550 = vunpack.c.l.b16 %v112
  %v551 = vunpack.c.h.b16 %v112
  %v552 = vunpack.c.l.b16 %v113
  %v553 = vunpack.c.h.b16 %v113
  %v554 = vunpack.c.l.b16 %v114
  %v555 = vunpack.c.h.b16 %v114
  %v556 = vunpack.c.l.b16 %v115
  %v557 = vunpack.c.h.b16 %v115
  %v558 = vunpack.c.l.b16 %v116
  %v559 = vunpack.c.h.b16 %v116
  %v560 = vunpack.c.l.b16 %v117
  %v561 = vunpack.c.h.b16 %v117
  %v562 = vunpack.c.l.b16 %v118
  %v563 = vunpack.c.h.b16 %v118
  %v564 = vunpack.c.l.b16 %v119
  %v565 = vunpack.c.h.b16 %v119
  %v566 = vunpack.c.l.b16 %v120
  %v567 = vunpack.c.h.b16 %v120
  %v568 = vunpack.c.l.b16 %v121
  %v569 = vunpack.c.h.b16 %v121
  %v570 = vunpack.c.l.b16 %v122
  %v571 = vunpack.c.h.b16 %v122
  %v572 = vunpack.c.l.b16 %v123
  %v573 = vunpack.c.h.b16 %v123
  %v574 = vunpack.c.l.b16 %v124
  %v575 = vunpack.c.h.b16 %v124
  %v576 = vunpack.c.l.b16 %v125
  %v577 = vunpack.c.h.b16 %v125
  %v578 = vunpack.c.l.b16 %v126
  %v579 = vunpack.c.h.b16 %v126
  %v580 = vpack.c.b16 %v364, %v356
  %v581 = vpack.c.b16 %v365, %v357
  %v582 = vpack.c.b16 %v366, %v358
  %v583 = vpack.c.b16 %v367, %v359
  %v584 = vpack.c.b16 %v368, %v360
  %v585 = vpack.c.b16 %v369, %v361
  %v586 = vpack.c.b16 %v370, %v362
  %v587 = vpack.c.b16 %v371, %v363
  %v588 = vpack.c.b16 %v380, %v372
  %v589 = vpack.c.b16 %v381, %v373
  %v590 = vpack.c.b16 %v382, %v374
  %v591 = vpack.c.b16 %v383, %v375
  %v592 = vpack.c.b16 %v384, %v376
  %v593 = vpack.c.b16 %v385, %v377
  %v594 = vpack.c.b16 %v386, %v378
  %v595 = vpack.c.b16 %v387, %v379
  %v596 = vpack.c.b16 %v396, %v388
  %v597 = vpack.c.b16 %v397, %v389
  %v598 = vpack.c.b16 %v398, %v390
  %v599 = vpack.c.b16 %v399, %v391
  %v600 = vpack.c.b16 %v400, %v392
  %v601 = vpack.c.b16 %v401, %v393
  %v602 = vpack.c.b16 %v402, %v394
  %v603 = vpack.c.b16 %v403, %v395
  %v604 = vpack.c.b16 %v412, %v404
  %v605 = vpack.c.b16 %v413, %v405
  %v606 = vpack.c.b16 %v414, %v406
  %v607 = vpack.c.b16 %v415, %v407
  %v608 = vpack.c.b16 %v416, %v408
  %v609 = vpack.c.b16 %v417, %v409
  %v610 = vpack.c.b16 %v418, %v410
  %v611 = vpack.c.b16 %v419, %v411
  %v612 = vpack.c.b16 %v428, %v420
  %v613 = vpack.c.b16 %v429, %v421
  %v614 = vpack.c.b16 %v430, %v422
  %v615 = vpack.c.b16 %v431, %v423
  %v616 = vpack.c.b16 %v432, %v424
  %v617 = vpack.c.b16 %v433, %v425
  %v618 = vpack.c.b16 %v434, %v426
  %v619 = vpack.c.b16 %v435, %v427
  %v620 = vpack.c.b16 %v444, %v436
  %v621 = vpack.c.b16 %v445, %v437
  %v622 = vpack.c.b16 %v446, %v438
  %v623 = vpack.c.b16 %v447, %v439
  %v624 = vpack.c.b16 %v448, %v440
  %v625 = vpack.c.b16 %v449, %v441
  %v626 = vpack.c.b16 %v450, %v442
  %v627 = vpack.c.b16 %v451, %v443
  %v628 = vpack.c.b16 %v460, %v452
  %v629 = vpack.c.b16 %v461, %v453
  %v630 = vpack.c.b16 %v462, %v454
  %v631 = vpack.c.b16 %v463, %v455
  %v632 = vpack.c.b16 %v464, %v456
  %v633 = vpack.c.b16 %v465, %v457
  %v634 = vpack.c.b16 %v466, %v458
  %v635 = vpack.c.b16 %v467, %v459
  %v636 = vpack.c.b16 %v476, %v468
  %v637 = vpack.c.b16 %v477, %v469
  %v638 = vpack.c.b16 %v478, %v470
  %v639 = vpack.c.b16 %v479, %v471
  %v640 = vpack.c.b16 %v480, %v472
  %v641 = vpack.c.b16 %v481, %v473
  %v642 = vpack.c.b16 %v482, %v474
  %v643 = vpack.c.b16 %v483, %v475
  %v644 = vpack.c.b16 %v492, %v484
  %v645 = vpack.c.b16 %v493, %v485
  %v646 = vpack.c.b16 %v494, %v486
  %v647 = vpack.c.b16 %v495, %v487
  %v648 = vpack.c.b16 %v496, %v488
  %v649 = vpack.c.b16 %v497, %v489
  %v650 = vpack.c.b16 %v498, %v490
  %v651 = vpack.c.b16 %v499, %v491
  %v652 = vpack.c.b16 %v508, %v500
  %v653 = vpack.c.b16 %v509, %v501
  %v654 = vpack.c.b16 %v510, %v502
  %v655 = vpack.c.b16 %v511, %v503
  %v656 = vpack.c.b16 %v512, %v504
  %v657 = vpack.c.b16 %v513, %v505
  %v658 = vpack.c.b16 %v514, %v506
  %v659 = vpack.c.b16 %v515, %v507
  %v660 = vpack.c.b16 %v524, %v516
  %v661 = vpack.c.b16 %v525, %v517
  %v662 = vpack.c.b16 %v526, %v518
  %v663 = vpack.c.b16 %v527, %v519
  %v664 = vpack.c.b16 %v528, %v520
  %v665 = vpack.c.b16 %v529, %v521
  %v666 = vpack.c.b16 %v530, %v522
  %v667 = vpack.c.b16 %v531, %v523
  %v668 = vpack.c.b16 %v540, %v532
  %v669 = vpack.c.b16 %v541, %v533
  %v670 = vpack.c.b16 %v542, %v534
  %v671 = vpack.c.b16 %v543, %v535
  %v672 = vpack.c.b16 %v544, %v536
  %v673 = vpack.c.b16 %v545, %v537
  %v674 = vpack.c.b16 %v546, %v538
  %v675 = vpack.c.b16 %v547, %v539
  %v676 = vpack.c.b16 %v556, %v548
  %v677 = vpack.c.b16 %v557, %v549
  %v678 = vpack.c.b16 %v558, %v550
  %v679 = vpack.c.b16 %v559, %v551
  %v680 = vpack.c.b16 %v560, %v552
  %v681 = vpack.c.b16 %v561, %v553
  %v682 = vpack.c.b16 %v562, %v554
  %v683 = vpack.c.b16 %v563, %v555
  %v684 = vpack.c.b16 %v572, %v564
  %v685 = vpack.c.b16 %v573, %v565
  %v686 = vpack.c.b16 %v574, %v566
  %v687 = vpack.c.b16 %v575, %v567
  %v688 = vpack.c.b16 %v576, %v568
  %v689 = vpack.c.b16 %v577, %v569
  %v690 = vpack.c.b16 %v578, %v570
  %v691 = vpack.c.b16 %v579, %v571
  %v903 = vunpack.c.l.b16 %v127
  %v904 = vunpack.c.l.b16 %v128
  %v905 = vunpack.c.l.b16 %v129
  %v906 = vunpack.c.l.b16 %v130
  %v907 = vunpack.c.l.b16 %v131
  %v908 = vunpack.c.l.b16 %v132
  %v909 = vunpack.c.l.b16 %v133
  %v910 = vunpack.c.l.b16 %v134
  %v911 = vunpack.c.l.b16 %v135
  %v912 = vunpack.c.l.b16 %v136
  %v913 = vunpack.c.l.b16 %v137
  %v914 = vunpack.c.l.b16 %v138
  %v915 = vunpack.c.l.b16 %v139
  %v916 = vunpack.c.l.b16 %v140
  %v917 = vunpack.c.l.b16 %v141
  %v918 = vunpack.c.l.b16 %v142
  %v919 = vunpack.c.l.b16 %v143
  %v920 = vunpack.c.l.b16 %v144
  %v921 = vunpack.c.l.b16 %v145
  %v922 = vunpack.c.l.b16 %v146
  %v923 = vunpack.c.l.b16 %v147
  %v924 = vunpack.c.l.b16 %v148
  %v925 = vunpack.c.l.b16 %v149
  %v926 = vunpack.c.l.b16 %v150
  %v927 = vunpack.c.l.b16 %v151
  %v928 = vunpack.c.l.b16 %v152
  %v929 = vunpack.c.l.b16 %v153
  %v930 = vunpack.c.l.b16 %v154
  %v931 = vunpack.c.l.b16 %v155
  %v932 = vunpack.c.l.b16 %v156
  %v933 = vunpack.c.l.b16 %v157
  %v934 = vunpack.c.l.b16 %v158
  %v935 = vunpack.c.l.b16 %v159
  %v936 = vunpack.c.l.b16 %v160
  %v937 = vunpack.c.l.b16 %v161
  %v938 = vunpack.c.l.b16 %v162
  %v939 = vunpack.c.l.b16 %v163
  %v940 = vunpack.c.l.b16 %v164
  %v941 = vunpack.c.l.b16 %v165
  %v942 = vunpack.c.l.b16 %v166
  %v943 = vunpack.c.l.b16 %v167
  %v944 = vunpack.c.l.b16 %v168
  %v945 = vunpack.c.l.b16 %v169
  %v946 = vunpack.c.l.b16 %v170
  %v947 = vunpack.c.l.b16 %v171
  %v948 = vunpack.c.l.b16 %v172
  %v949 = vunpack.c.l.b16 %v173
  %v950 = vunpack.c.l.b16 %v174
  %v951 = vunpack.c.l.b16 %v175
  %v952 = vunpack.c.l.b16 %v176
  %v953 = vunpack.c.l.b16 %v177
  %v954 = vunpack.c.l.b16 %v178
  %v955 = vunpack.c.l.b16 %v179
  %v956 = vunpack.c.l.b16 %v180
  %v957 = vunpack.c.l.b16 %v181
  %v958 = vunpack.c.l.b16 %v182
  %v959 = vunpack.c.l.b16 %v183
  %v960 = vunpack.c.l.b16 %v184
  %v961 = vunpack.c.l.b16 %v185
  %v962 = vunpack.c.l.b16 %v186
  %v963 = vunpack.c.l.b16 %v187
  %v964 = vunpack.c.l.b16 %v188
  %v965 = vunpack.c.l.b16 %v189
  %v966 = vunpack.c.l.b16 %v190
  %v967 = vunpack.c.l.b16 %v191
  %v968 = vunpack.c.l.b16 %v192
  %v969 = vunpack.c.l.b16 %v193
  %v970 = vunpack.c.l.b16 %v194
  %v971 = vunpack.c.l.b16 %v195
  %v972 = vunpack.c.l.b16 %v196
  %v973 = vunpack.c.l.b16 %v197
  %v974 = vunpack.c.l.b16 %v198
  %v975 = vunpack.c.l.b16 %v199
  %v976 = vunpack.c.l.b16 %v200
  %v977 = vunpack.c.l.b16 %v201
  %v978 = vunpack.c.l.b16 %v202
  %v979 = vunpack.c.l.b16 %v203
  %v980 = vunpack.c.l.b16 %v204
  %v981 = vunpack.c.l.b16 %v205
  %v982 = vunpack.c.l.b16 %v206
  %v983 = vunpack.c.l.b16 %v207
  %v984 = vunpack.c.l.b16 %v208
  %v985 = vunpack.c.l.b16 %v209
  %v986 = vunpack.c.l.b16 %v210
  %v987 = vunpack.c.l.b16 %v211
  %v988 = vunpack.c.l.b16 %v212
  %v989 = vunpack.c.l.b16 %v213
  %v990 = vunpack.c.l.b16 %v214
  %v991 = vunpack.c.l.b16 %v215
  %v992 = vunpack.c.l.b16 %v216
  %v993 = vunpack.c.l.b16 %v217
  %v994 = vunpack.c.l.b16 %v218
  %v995 = vunpack.c.l.b16 %v219
  %v996 = vunpack.c.l.b16 %v220
  %v997 = vunpack.c.l.b16 %v221
  %v998 = vunpack.c.l.b16 %v222
  %v999 = vunpack.c.l.b16 %v223
  %v1000 = vunpack.c.l.b16 %v224
  %v1001 = vunpack.c.l.b16 %v225
  %v1002 = vunpack.c.l.b16 %v226
  %v1003 = vunpack.c.l.b16 %v227
  %v1004 = vunpack.c.l.b16 %v228
  %v1005 = vunpack.c.l.b16 %v229
  %v1006 = vunpack.c.l.b16 %v230
  %v1007 = vunpack.c.l.b16 %v231
  %v1008 = vunpack.c.l.b16 %v232
  %v1009 = vunpack.c.l.b16 %v233
  %v1010 = vunpack.c.l.b16 %v234
  %v1011 = vunpack.c.l.b16 %v235
  %v1012 = vunpack.c.l.b16 %v236
  %v1013 = vunpack.c.l.b16 %v237
  %v1014 = vunpack.c.l.b16 %v238
  %v1015 = vunpack.c.l.b16 %v239
  %v1016 = vpack.c.b16 %v904, %v903
  %v1017 = vpack.c.b16 %v906, %v905
  %v1018 = vpack.c.b16 %v908, %v907
  %v1019 = vpack.c.b16 %v910, %v909
  %v1020 = vpack.c.b16 %v912, %v911
  %v1021 = vpack.c.b16 %v914, %v913
  %v1022 = vpack.c.b16 %v916, %v915
  %v1023 = vpack.c.b16 %v918, %v917
  %v1024 = vpack.c.b16 %v920, %v919
  %v1025 = vpack.c.b16 %v922, %v921
  %v1026 = vpack.c.b16 %v924, %v923
  %v1027 = vpack.c.b16 %v926, %v925
  %v1028 = vpack.c.b16 %v928, %v927
  %v1029 = vpack.c.b16 %v930, %v929
  %v1030 = vpack.c.b16 %v932, %v931
  %v1031 = vpack.c.b16 %v934, %v933
  %v1032 = vpack.c.b16 %v936, %v935
  %v1033 = vpack.c.b16 %v938, %v937
  %v1034 = vpack.c.b16 %v940, %v939
  %v1035 = vpack.c.b16 %v942, %v941
  %v1036 = vpack.c.b16 %v944, %v943
  %v1037 = vpack.c.b16 %v946, %v945
  %v1038 = vpack.c.b16 %v948, %v947
  %v1039 = vpack.c.b16 %v950, %v949
  %v1040 = vpack.c.b16 %v952, %v951
  %v1041 = vpack.c.b16 %v954, %v953
  %v1042 = vpack.c.b16 %v956, %v955
  %v1043 = vpack.c.b16 %v958, %v957
  %v1044 = vpack.c.b16 %v960, %v959
  %v1045 = vpack.c.b16 %v962, %v961
  %v1046 = vpack.c.b16 %v964, %v963
  %v1047 = vpack.c.b16 %v966, %v965
  %v1048 = vpack.c.b16 %v968, %v967
  %v1049 = vpack.c.b16 %v970, %v969
  %v1050 = vpack.c.b16 %v972, %v971
  %v1051 = vpack.c.b16 %v974, %v973
  %v1052 = vpack.c.b16 %v976, %v975
  %v1053 = vpack.c.b16 %v978, %v977
  %v1054 = vpack.c.b16 %v980, %v979
  %v1055 = vpack.c.b16 %v982, %v981
  %v1056 = vpack.c.b16 %v984, %v983
  %v1057 = vpack.c.b16 %v986, %v985
  %v1058 = vpack.c.b16 %v988, %v987
  %v1059 = vpack.c.b16 %v990, %v989
  %v1060 = vpack.c.b16 %v992, %v991
  %v1061 = vpack.c.b16 %v994, %v993
  %v1062 = vpack.c.b16 %v996, %v995
  %v1063 = vpack.c.b16 %v998, %v997
  %v1064 = vpack.c.b16 %v1000, %v999
  %v1065 = vpack.c.b16 %v1002, %v1001
  %v1066 = vpack.c.b16 %v1004, %v1003
  %v1067 = vpack.c.b16 %v1006, %v1005
  %v1068 = vpack.c.b16 %v1008, %v1007
  %v1069 = vpack.c.b16 %v1010, %v1009
  %v1070 = vpack.c.b16 %v1012, %v1011
  %v1071 = vpack.c.b16 %v1014, %v1013
  %v1072 = vpack.c.b16 %v1015, %v1015
  %vm1129 = vcmask 31744
  %v1131 = vsel %vm1129, %v587, 0
  %v1134 = vsel %vm1129, %v595, 0
  %v1137 = vsel %vm1129, %v603, 0
  %v1140 = vsel %vm1129, %v611, 0
  %v1143 = vsel %vm1129, %v619, 0
  %v1146 = vsel %vm1129, %v627, 0
  %v1149 = vsel %vm1129, %v635, 0
  %v1152 = vsel %vm1129, %v643, 0
  %v1155 = vsel %vm1129, %v651, 0
  %v1158 = vsel %vm1129, %v659, 0
  %v1161 = vsel %vm1129, %v667, 0
  %v1164 = vsel %vm1129, %v675, 0
  %v1167 = vsel %vm1129, %v683, 0
  %v1170 = vsel %vm1129, %v691, 0
  %vm1172 = vcmask 1041408
  %v1174 = vsel %vm1172, %v1072, 0
  %1176 = vmatpush.bf16.msra.mxu0 %v1023
  %1177 = vmatpush.bf16.msra.mxu0 %v1022
  %1178 = vmatpush.bf16.msra.mxu0 %v1021
  %1179 = vmatpush.bf16.msra.mxu0 %v1020
  %1180 = vmatpush.bf16.msra.mxu0 %v1019
  %1181 = vmatpush.bf16.msra.mxu0 %v1018
  %1182 = vmatpush.bf16.msra.mxu0 %v1017
  %1183 = vmatpush.bf16.msra.mxu0 %v1016
  %1184 = vmatmul.bf16.gmra.mxu0 %v580
  %v1185 = vpop.f32.mrf.mxu0
  %v1186 = vadd.f32 %v242, %v1185
  %v1187 = vpop.f32.mrf.mxu0
  %v1188 = vadd.f32 %v242, %v1187
  %1189 = vmatmul.bf16.gmra.mxu0 %v588
  %v1190 = vpop.f32.mrf.mxu0
  %v1191 = vadd.f32 %v242, %v1190
  %v1192 = vpop.f32.mrf.mxu0
  %v1193 = vadd.f32 %v242, %v1192
  %1194 = vmatmul.bf16.gmra.mxu0 %v596
  %v1195 = vpop.f32.mrf.mxu0
  %v1196 = vadd.f32 %v242, %v1195
  %v1197 = vpop.f32.mrf.mxu0
  %v1198 = vadd.f32 %v242, %v1197
  %1199 = vmatmul.bf16.gmra.mxu0 %v604
  %v1200 = vpop.f32.mrf.mxu0
  %v1201 = vadd.f32 %v242, %v1200
  %v1202 = vpop.f32.mrf.mxu0
  %v1203 = vadd.f32 %v242, %v1202
  %1204 = vmatmul.bf16.gmra.mxu0 %v612
  %v1205 = vpop.f32.mrf.mxu0
  %v1206 = vadd.f32 %v242, %v1205
  %v1207 = vpop.f32.mrf.mxu0
  %v1208 = vadd.f32 %v242, %v1207
  %1209 = vmatmul.bf16.gmra.mxu0 %v620
  %v1210 = vpop.f32.mrf.mxu0
  %v1211 = vadd.f32 %v242, %v1210
  %v1212 = vpop.f32.mrf.mxu0
  %v1213 = vadd.f32 %v242, %v1212
  %1214 = vmatmul.bf16.gmra.mxu0 %v628
  %v1215 = vpop.f32.mrf.mxu0
  %v1216 = vadd.f32 %v242, %v1215
  %v1217 = vpop.f32.mrf.mxu0
  %v1218 = vadd.f32 %v242, %v1217
  %1219 = vmatmul.bf16.gmra.mxu0 %v636
  %v1220 = vpop.f32.mrf.mxu0
  %v1221 = vadd.f32 %v242, %v1220
  %v1222 = vpop.f32.mrf.mxu0
  %v1223 = vadd.f32 %v242, %v1222
  %1224 = vmatmul.bf16.gmra.mxu0 %v644
  %v1225 = vpop.f32.mrf.mxu0
  %v1226 = vadd.f32 %v242, %v1225
  %v1227 = vpop.f32.mrf.mxu0
  %v1228 = vadd.f32 %v242, %v1227
  %1229 = vmatmul.bf16.gmra.mxu0 %v652
  %v1230 = vpop.f32.mrf.mxu0
  %v1231 = vadd.f32 %v242, %v1230
  %v1232 = vpop.f32.mrf.mxu0
  %v1233 = vadd.f32 %v242, %v1232
  %1234 = vmatmul.bf16.gmra.mxu0 %v660
  %v1235 = vpop.f32.mrf.mxu0
  %v1236 = vadd.f32 %v242, %v1235
  %v1237 = vpop.f32.mrf.mxu0
  %v1238 = vadd.f32 %v242, %v1237
  %1239 = vmatmul.bf16.gmra.mxu0 %v668
  %v1240 = vpop.f32.mrf.mxu0
  %v1241 = vadd.f32 %v242, %v1240
  %v1242 = vpop.f32.mrf.mxu0
  %v1243 = vadd.f32 %v242, %v1242
  %1244 = vmatmul.bf16.gmra.mxu0 %v676
  %v1245 = vpop.f32.mrf.mxu0
  %v1246 = vadd.f32 %v242, %v1245
  %v1247 = vpop.f32.mrf.mxu0
  %v1248 = vadd.f32 %v242, %v1247
  %1249 = vmatmul.bf16.gmra.mxu0 %v684
  %v1250 = vpop.f32.mrf.mxu0
  %v1251 = vadd.f32 %v242, %v1250
  %v1252 = vpop.f32.mrf.mxu0
  %v1253 = vadd.f32 %v242, %v1252
  %1254 = vdwg.mxu0
  %1255 = vmatpush.bf16.msra.mxu0 %v1031
  %1256 = vmatpush.bf16.msra.mxu0 %v1030
  %1257 = vmatpush.bf16.msra.mxu0 %v1029
  %1258 = vmatpush.bf16.msra.mxu0 %v1028
  %1259 = vmatpush.bf16.msra.mxu0 %v1027
  %1260 = vmatpush.bf16.msra.mxu0 %v1026
  %1261 = vmatpush.bf16.msra.mxu0 %v1025
  %1262 = vmatpush.bf16.msra.mxu0 %v1024
  %1263 = vmatmul.bf16.gmra.mxu0 %v581
  %v1264 = vpop.f32.mrf.mxu0
  %v1265 = vadd.f32 %v1186, %v1264
  %v1266 = vpop.f32.mrf.mxu0
  %v1267 = vadd.f32 %v1188, %v1266
  %1268 = vmatmul.bf16.gmra.mxu0 %v589
  %v1269 = vpop.f32.mrf.mxu0
  %v1270 = vadd.f32 %v1191, %v1269
  %v1271 = vpop.f32.mrf.mxu0
  %v1272 = vadd.f32 %v1193, %v1271
  %1273 = vmatmul.bf16.gmra.mxu0 %v597
  %v1274 = vpop.f32.mrf.mxu0
  %v1275 = vadd.f32 %v1196, %v1274
  %v1276 = vpop.f32.mrf.mxu0
  %v1277 = vadd.f32 %v1198, %v1276
  %1278 = vmatmul.bf16.gmra.mxu0 %v605
  %v1279 = vpop.f32.mrf.mxu0
  %v1280 = vadd.f32 %v1201, %v1279
  %v1281 = vpop.f32.mrf.mxu0
  %v1282 = vadd.f32 %v1203, %v1281
  %1283 = vmatmul.bf16.gmra.mxu0 %v613
  %v1284 = vpop.f32.mrf.mxu0
  %v1285 = vadd.f32 %v1206, %v1284
  %v1286 = vpop.f32.mrf.mxu0
  %v1287 = vadd.f32 %v1208, %v1286
  %1288 = vmatmul.bf16.gmra.mxu0 %v621
  %v1289 = vpop.f32.mrf.mxu0
  %v1290 = vadd.f32 %v1211, %v1289
  %v1291 = vpop.f32.mrf.mxu0
  %v1292 = vadd.f32 %v1213, %v1291
  %1293 = vmatmul.bf16.gmra.mxu0 %v629
  %v1294 = vpop.f32.mrf.mxu0
  %v1295 = vadd.f32 %v1216, %v1294
  %v1296 = vpop.f32.mrf.mxu0
  %v1297 = vadd.f32 %v1218, %v1296
  %1298 = vmatmul.bf16.gmra.mxu0 %v637
  %v1299 = vpop.f32.mrf.mxu0
  %v1300 = vadd.f32 %v1221, %v1299
  %v1301 = vpop.f32.mrf.mxu0
  %v1302 = vadd.f32 %v1223, %v1301
  %1303 = vmatmul.bf16.gmra.mxu0 %v645
  %v1304 = vpop.f32.mrf.mxu0
  %v1305 = vadd.f32 %v1226, %v1304
  %v1306 = vpop.f32.mrf.mxu0
  %v1307 = vadd.f32 %v1228, %v1306
  %1308 = vmatmul.bf16.gmra.mxu0 %v653
  %v1309 = vpop.f32.mrf.mxu0
  %v1310 = vadd.f32 %v1231, %v1309
  %v1311 = vpop.f32.mrf.mxu0
  %v1312 = vadd.f32 %v1233, %v1311
  %1313 = vmatmul.bf16.gmra.mxu0 %v661
  %v1314 = vpop.f32.mrf.mxu0
  %v1315 = vadd.f32 %v1236, %v1314
  %v1316 = vpop.f32.mrf.mxu0
  %v1317 = vadd.f32 %v1238, %v1316
  %1318 = vmatmul.bf16.gmra.mxu0 %v669
  %v1319 = vpop.f32.mrf.mxu0
  %v1320 = vadd.f32 %v1241, %v1319
  %v1321 = vpop.f32.mrf.mxu0
  %v1322 = vadd.f32 %v1243, %v1321
  %1323 = vmatmul.bf16.gmra.mxu0 %v677
  %v1324 = vpop.f32.mrf.mxu0
  %v1325 = vadd.f32 %v1246, %v1324
  %v1326 = vpop.f32.mrf.mxu0
  %v1327 = vadd.f32 %v1248, %v1326
  %1328 = vmatmul.bf16.gmra.mxu0 %v685
  %v1329 = vpop.f32.mrf.mxu0
  %v1330 = vadd.f32 %v1251, %v1329
  %v1331 = vpop.f32.mrf.mxu0
  %v1332 = vadd.f32 %v1253, %v1331
  %1333 = vdwg.mxu0
  %1334 = vmatpush.bf16.msra.mxu0 %v1039
  %1335 = vmatpush.bf16.msra.mxu0 %v1038
  %1336 = vmatpush.bf16.msra.mxu0 %v1037
  %1337 = vmatpush.bf16.msra.mxu0 %v1036
  %1338 = vmatpush.bf16.msra.mxu0 %v1035
  %1339 = vmatpush.bf16.msra.mxu0 %v1034
  %1340 = vmatpush.bf16.msra.mxu0 %v1033
  %1341 = vmatpush.bf16.msra.mxu0 %v1032
  %1342 = vmatmul.bf16.gmra.mxu0 %v582
  %v1343 = vpop.f32.mrf.mxu0
  %v1344 = vadd.f32 %v1265, %v1343
  %v1345 = vpop.f32.mrf.mxu0
  %v1346 = vadd.f32 %v1267, %v1345
  %1347 = vmatmul.bf16.gmra.mxu0 %v590
  %v1348 = vpop.f32.mrf.mxu0
  %v1349 = vadd.f32 %v1270, %v1348
  %v1350 = vpop.f32.mrf.mxu0
  %v1351 = vadd.f32 %v1272, %v1350
  %1352 = vmatmul.bf16.gmra.mxu0 %v598
  %v1353 = vpop.f32.mrf.mxu0
  %v1354 = vadd.f32 %v1275, %v1353
  %v1355 = vpop.f32.mrf.mxu0
  %v1356 = vadd.f32 %v1277, %v1355
  %1357 = vmatmul.bf16.gmra.mxu0 %v606
  %v1358 = vpop.f32.mrf.mxu0
  %v1359 = vadd.f32 %v1280, %v1358
  %v1360 = vpop.f32.mrf.mxu0
  %v1361 = vadd.f32 %v1282, %v1360
  %1362 = vmatmul.bf16.gmra.mxu0 %v614
  %v1363 = vpop.f32.mrf.mxu0
  %v1364 = vadd.f32 %v1285, %v1363
  %v1365 = vpop.f32.mrf.mxu0
  %v1366 = vadd.f32 %v1287, %v1365
  %1367 = vmatmul.bf16.gmra.mxu0 %v622
  %v1368 = vpop.f32.mrf.mxu0
  %v1369 = vadd.f32 %v1290, %v1368
  %v1370 = vpop.f32.mrf.mxu0
  %v1371 = vadd.f32 %v1292, %v1370
  %1372 = vmatmul.bf16.gmra.mxu0 %v630
  %v1373 = vpop.f32.mrf.mxu0
  %v1374 = vadd.f32 %v1295, %v1373
  %v1375 = vpop.f32.mrf.mxu0
  %v1376 = vadd.f32 %v1297, %v1375
  %1377 = vmatmul.bf16.gmra.mxu0 %v638
  %v1378 = vpop.f32.mrf.mxu0
  %v1379 = vadd.f32 %v1300, %v1378
  %v1380 = vpop.f32.mrf.mxu0
  %v1381 = vadd.f32 %v1302, %v1380
  %1382 = vmatmul.bf16.gmra.mxu0 %v646
  %v1383 = vpop.f32.mrf.mxu0
  %v1384 = vadd.f32 %v1305, %v1383
  %v1385 = vpop.f32.mrf.mxu0
  %v1386 = vadd.f32 %v1307, %v1385
  %1387 = vmatmul.bf16.gmra.mxu0 %v654
  %v1388 = vpop.f32.mrf.mxu0
  %v1389 = vadd.f32 %v1310, %v1388
  %v1390 = vpop.f32.mrf.mxu0
  %v1391 = vadd.f32 %v1312, %v1390
  %1392 = vmatmul.bf16.gmra.mxu0 %v662
  %v1393 = vpop.f32.mrf.mxu0
  %v1394 = vadd.f32 %v1315, %v1393
  %v1395 = vpop.f32.mrf.mxu0
  %v1396 = vadd.f32 %v1317, %v1395
  %1397 = vmatmul.bf16.gmra.mxu0 %v670
  %v1398 = vpop.f32.mrf.mxu0
  %v1399 = vadd.f32 %v1320, %v1398
  %v1400 = vpop.f32.mrf.mxu0
  %v1401 = vadd.f32 %v1322, %v1400
  %1402 = vmatmul.bf16.gmra.mxu0 %v678
  %v1403 = vpop.f32.mrf.mxu0
  %v1404 = vadd.f32 %v1325, %v1403
  %v1405 = vpop.f32.mrf.mxu0
  %v1406 = vadd.f32 %v1327, %v1405
  %1407 = vmatmul.bf16.gmra.mxu0 %v686
  %v1408 = vpop.f32.mrf.mxu0
  %v1409 = vadd.f32 %v1330, %v1408
  %v1410 = vpop.f32.mrf.mxu0
  %v1411 = vadd.f32 %v1332, %v1410
  %1412 = vdwg.mxu0
  %1413 = vmatpush.bf16.msra.mxu0 %v1047
  %1414 = vmatpush.bf16.msra.mxu0 %v1046
  %1415 = vmatpush.bf16.msra.mxu0 %v1045
  %1416 = vmatpush.bf16.msra.mxu0 %v1044
  %1417 = vmatpush.bf16.msra.mxu0 %v1043
  %1418 = vmatpush.bf16.msra.mxu0 %v1042
  %1419 = vmatpush.bf16.msra.mxu0 %v1041
  %1420 = vmatpush.bf16.msra.mxu0 %v1040
  %1421 = vmatmul.bf16.gmra.mxu0 %v583
  %v1422 = vpop.f32.mrf.mxu0
  %v1423 = vadd.f32 %v1344, %v1422
  %v1424 = vpop.f32.mrf.mxu0
  %v1425 = vadd.f32 %v1346, %v1424
  %1426 = vmatmul.bf16.gmra.mxu0 %v591
  %v1427 = vpop.f32.mrf.mxu0
  %v1428 = vadd.f32 %v1349, %v1427
  %v1429 = vpop.f32.mrf.mxu0
  %v1430 = vadd.f32 %v1351, %v1429
  %1431 = vmatmul.bf16.gmra.mxu0 %v599
  %v1432 = vpop.f32.mrf.mxu0
  %v1433 = vadd.f32 %v1354, %v1432
  %v1434 = vpop.f32.mrf.mxu0
  %v1435 = vadd.f32 %v1356, %v1434
  %1436 = vmatmul.bf16.gmra.mxu0 %v607
  %v1437 = vpop.f32.mrf.mxu0
  %v1438 = vadd.f32 %v1359, %v1437
  %v1439 = vpop.f32.mrf.mxu0
  %v1440 = vadd.f32 %v1361, %v1439
  %1441 = vmatmul.bf16.gmra.mxu0 %v615
  %v1442 = vpop.f32.mrf.mxu0
  %v1443 = vadd.f32 %v1364, %v1442
  %v1444 = vpop.f32.mrf.mxu0
  %v1445 = vadd.f32 %v1366, %v1444
  %1446 = vmatmul.bf16.gmra.mxu0 %v623
  %v1447 = vpop.f32.mrf.mxu0
  %v1448 = vadd.f32 %v1369, %v1447
  %v1449 = vpop.f32.mrf.mxu0
  %v1450 = vadd.f32 %v1371, %v1449
  %1451 = vmatmul.bf16.gmra.mxu0 %v631
  %v1452 = vpop.f32.mrf.mxu0
  %v1453 = vadd.f32 %v1374, %v1452
  %v1454 = vpop.f32.mrf.mxu0
  %v1455 = vadd.f32 %v1376, %v1454
  %1456 = vmatmul.bf16.gmra.mxu0 %v639
  %v1457 = vpop.f32.mrf.mxu0
  %v1458 = vadd.f32 %v1379, %v1457
  %v1459 = vpop.f32.mrf.mxu0
  %v1460 = vadd.f32 %v1381, %v1459
  %1461 = vmatmul.bf16.gmra.mxu0 %v647
  %v1462 = vpop.f32.mrf.mxu0
  %v1463 = vadd.f32 %v1384, %v1462
  %v1464 = vpop.f32.mrf.mxu0
  %v1465 = vadd.f32 %v1386, %v1464
  %1466 = vmatmul.bf16.gmra.mxu0 %v655
  %v1467 = vpop.f32.mrf.mxu0
  %v1468 = vadd.f32 %v1389, %v1467
  %v1469 = vpop.f32.mrf.mxu0
  %v1470 = vadd.f32 %v1391, %v1469
  %1471 = vmatmul.bf16.gmra.mxu0 %v663
  %v1472 = vpop.f32.mrf.mxu0
  %v1473 = vadd.f32 %v1394, %v1472
  %v1474 = vpop.f32.mrf.mxu0
  %v1475 = vadd.f32 %v1396, %v1474
  %1476 = vmatmul.bf16.gmra.mxu0 %v671
  %v1477 = vpop.f32.mrf.mxu0
  %v1478 = vadd.f32 %v1399, %v1477
  %v1479 = vpop.f32.mrf.mxu0
  %v1480 = vadd.f32 %v1401, %v1479
  %1481 = vmatmul.bf16.gmra.mxu0 %v679
  %v1482 = vpop.f32.mrf.mxu0
  %v1483 = vadd.f32 %v1404, %v1482
  %v1484 = vpop.f32.mrf.mxu0
  %v1485 = vadd.f32 %v1406, %v1484
  %1486 = vmatmul.bf16.gmra.mxu0 %v687
  %v1487 = vpop.f32.mrf.mxu0
  %v1488 = vadd.f32 %v1409, %v1487
  %v1489 = vpop.f32.mrf.mxu0
  %v1490 = vadd.f32 %v1411, %v1489
  %1491 = vdwg.mxu0
  %1492 = vmatpush.bf16.msra.mxu0 %v1055
  %1493 = vmatpush.bf16.msra.mxu0 %v1054
  %1494 = vmatpush.bf16.msra.mxu0 %v1053
  %1495 = vmatpush.bf16.msra.mxu0 %v1052
  %1496 = vmatpush.bf16.msra.mxu0 %v1051
  %1497 = vmatpush.bf16.msra.mxu0 %v1050
  %1498 = vmatpush.bf16.msra.mxu0 %v1049
  %1499 = vmatpush.bf16.msra.mxu0 %v1048
  %1500 = vmatmul.bf16.gmra.mxu0 %v584
  %v1501 = vpop.f32.mrf.mxu0
  %v1502 = vadd.f32 %v1423, %v1501
  %v1503 = vpop.f32.mrf.mxu0
  %v1504 = vadd.f32 %v1425, %v1503
  %1505 = vmatmul.bf16.gmra.mxu0 %v592
  %v1506 = vpop.f32.mrf.mxu0
  %v1507 = vadd.f32 %v1428, %v1506
  %v1508 = vpop.f32.mrf.mxu0
  %v1509 = vadd.f32 %v1430, %v1508
  %1510 = vmatmul.bf16.gmra.mxu0 %v600
  %v1511 = vpop.f32.mrf.mxu0
  %v1512 = vadd.f32 %v1433, %v1511
  %v1513 = vpop.f32.mrf.mxu0
  %v1514 = vadd.f32 %v1435, %v1513
  %1515 = vmatmul.bf16.gmra.mxu0 %v608
  %v1516 = vpop.f32.mrf.mxu0
  %v1517 = vadd.f32 %v1438, %v1516
  %v1518 = vpop.f32.mrf.mxu0
  %v1519 = vadd.f32 %v1440, %v1518
  %1520 = vmatmul.bf16.gmra.mxu0 %v616
  %v1521 = vpop.f32.mrf.mxu0
  %v1522 = vadd.f32 %v1443, %v1521
  %v1523 = vpop.f32.mrf.mxu0
  %v1524 = vadd.f32 %v1445, %v1523
  %1525 = vmatmul.bf16.gmra.mxu0 %v624
  %v1526 = vpop.f32.mrf.mxu0
  %v1527 = vadd.f32 %v1448, %v1526
  %v1528 = vpop.f32.mrf.mxu0
  %v1529 = vadd.f32 %v1450, %v1528
  %1530 = vmatmul.bf16.gmra.mxu0 %v632
  %v1531 = vpop.f32.mrf.mxu0
  %v1532 = vadd.f32 %v1453, %v1531
  %v1533 = vpop.f32.mrf.mxu0
  %v1534 = vadd.f32 %v1455, %v1533
  %1535 = vmatmul.bf16.gmra.mxu0 %v640
  %v1536 = vpop.f32.mrf.mxu0
  %v1537 = vadd.f32 %v1458, %v1536
  %v1538 = vpop.f32.mrf.mxu0
  %v1539 = vadd.f32 %v1460, %v1538
  %1540 = vmatmul.bf16.gmra.mxu0 %v648
  %v1541 = vpop.f32.mrf.mxu0
  %v1542 = vadd.f32 %v1463, %v1541
  %v1543 = vpop.f32.mrf.mxu0
  %v1544 = vadd.f32 %v1465, %v1543
  %1545 = vmatmul.bf16.gmra.mxu0 %v656
  %v1546 = vpop.f32.mrf.mxu0
  %v1547 = vadd.f32 %v1468, %v1546
  %v1548 = vpop.f32.mrf.mxu0
  %v1549 = vadd.f32 %v1470, %v1548
  %1550 = vmatmul.bf16.gmra.mxu0 %v664
  %v1551 = vpop.f32.mrf.mxu0
  %v1552 = vadd.f32 %v1473, %v1551
  %v1553 = vpop.f32.mrf.mxu0
  %v1554 = vadd.f32 %v1475, %v1553
  %1555 = vmatmul.bf16.gmra.mxu0 %v672
  %v1556 = vpop.f32.mrf.mxu0
  %v1557 = vadd.f32 %v1478, %v1556
  %v1558 = vpop.f32.mrf.mxu0
  %v1559 = vadd.f32 %v1480, %v1558
  %1560 = vmatmul.bf16.gmra.mxu0 %v680
  %v1561 = vpop.f32.mrf.mxu0
  %v1562 = vadd.f32 %v1483, %v1561
  %v1563 = vpop.f32.mrf.mxu0
  %v1564 = vadd.f32 %v1485, %v1563
  %1565 = vmatmul.bf16.gmra.mxu0 %v688
  %v1566 = vpop.f32.mrf.mxu0
  %v1567 = vadd.f32 %v1488, %v1566
  %v1568 = vpop.f32.mrf.mxu0
  %v1569 = vadd.f32 %v1490, %v1568
  %1570 = vdwg.mxu0
  %1571 = vmatpush.bf16.msra.mxu0 %v1063
  %1572 = vmatpush.bf16.msra.mxu0 %v1062
  %1573 = vmatpush.bf16.msra.mxu0 %v1061
  %1574 = vmatpush.bf16.msra.mxu0 %v1060
  %1575 = vmatpush.bf16.msra.mxu0 %v1059
  %1576 = vmatpush.bf16.msra.mxu0 %v1058
  %1577 = vmatpush.bf16.msra.mxu0 %v1057
  %1578 = vmatpush.bf16.msra.mxu0 %v1056
  %1579 = vmatmul.bf16.gmra.mxu0 %v585
  %v1580 = vpop.f32.mrf.mxu0
  %v1581 = vadd.f32 %v1502, %v1580
  %v1582 = vpop.f32.mrf.mxu0
  %v1583 = vadd.f32 %v1504, %v1582
  %1584 = vmatmul.bf16.gmra.mxu0 %v593
  %v1585 = vpop.f32.mrf.mxu0
  %v1586 = vadd.f32 %v1507, %v1585
  %v1587 = vpop.f32.mrf.mxu0
  %v1588 = vadd.f32 %v1509, %v1587
  %1589 = vmatmul.bf16.gmra.mxu0 %v601
  %v1590 = vpop.f32.mrf.mxu0
  %v1591 = vadd.f32 %v1512, %v1590
  %v1592 = vpop.f32.mrf.mxu0
  %v1593 = vadd.f32 %v1514, %v1592
  %1594 = vmatmul.bf16.gmra.mxu0 %v609
  %v1595 = vpop.f32.mrf.mxu0
  %v1596 = vadd.f32 %v1517, %v1595
  %v1597 = vpop.f32.mrf.mxu0
  %v1598 = vadd.f32 %v1519, %v1597
  %1599 = vmatmul.bf16.gmra.mxu0 %v617
  %v1600 = vpop.f32.mrf.mxu0
  %v1601 = vadd.f32 %v1522, %v1600
  %v1602 = vpop.f32.mrf.mxu0
  %v1603 = vadd.f32 %v1524, %v1602
  %1604 = vmatmul.bf16.gmra.mxu0 %v625
  %v1605 = vpop.f32.mrf.mxu0
  %v1606 = vadd.f32 %v1527, %v1605
  %v1607 = vpop.f32.mrf.mxu0
  %v1608 = vadd.f32 %v1529, %v1607
  %1609 = vmatmul.bf16.gmra.mxu0 %v633
  %v1610 = vpop.f32.mrf.mxu0
  %v1611 = vadd.f32 %v1532, %v1610
  %v1612 = vpop.f32.mrf.mxu0
  %v1613 = vadd.f32 %v1534, %v1612
  %1614 = vmatmul.bf16.gmra.mxu0 %v641
  %v1615 = vpop.f32.mrf.mxu0
  %v1616 = vadd.f32 %v1537, %v1615
  %v1617 = vpop.f32.mrf.mxu0
  %v1618 = vadd.f32 %v1539, %v1617
  %1619 = vmatmul.bf16.gmra.mxu0 %v649
  %v1620 = vpop.f32.mrf.mxu0
  %v1621 = vadd.f32 %v1542, %v1620
  %v1622 = vpop.f32.mrf.mxu0
  %v1623 = vadd.f32 %v1544, %v1622
  %1624 = vmatmul.bf16.gmra.mxu0 %v657
  %v1625 = vpop.f32.mrf.mxu0
  %v1626 = vadd.f32 %v1547, %v1625
  %v1627 = vpop.f32.mrf.mxu0
  %v1628 = vadd.f32 %v1549, %v1627
  %1629 = vmatmul.bf16.gmra.mxu0 %v665
  %v1630 = vpop.f32.mrf.mxu0
  %v1631 = vadd.f32 %v1552, %v1630
  %v1632 = vpop.f32.mrf.mxu0
  %v1633 = vadd.f32 %v1554, %v1632
  %1634 = vmatmul.bf16.gmra.mxu0 %v673
  %v1635 = vpop.f32.mrf.mxu0
  %v1636 = vadd.f32 %v1557, %v1635
  %v1637 = vpop.f32.mrf.mxu0
  %v1638 = vadd.f32 %v1559, %v1637
  %1639 = vmatmul.bf16.gmra.mxu0 %v681
  %v1640 = vpop.f32.mrf.mxu0
  %v1641 = vadd.f32 %v1562, %v1640
  %v1642 = vpop.f32.mrf.mxu0
  %v1643 = vadd.f32 %v1564, %v1642
  %1644 = vmatmul.bf16.gmra.mxu0 %v689
  %v1645 = vpop.f32.mrf.mxu0
  %v1646 = vadd.f32 %v1567, %v1645
  %v1647 = vpop.f32.mrf.mxu0
  %v1648 = vadd.f32 %v1569, %v1647
  %1649 = vdwg.mxu0
  %1650 = vmatpush.bf16.msra.mxu0 %v1071
  %1651 = vmatpush.bf16.msra.mxu0 %v1070
  %1652 = vmatpush.bf16.msra.mxu0 %v1069
  %1653 = vmatpush.bf16.msra.mxu0 %v1068
  %1654 = vmatpush.bf16.msra.mxu0 %v1067
  %1655 = vmatpush.bf16.msra.mxu0 %v1066
  %1656 = vmatpush.bf16.msra.mxu0 %v1065
  %1657 = vmatpush.bf16.msra.mxu0 %v1064
  %1658 = vmatmul.bf16.gmra.mxu0 %v586
  %v1659 = vpop.f32.mrf.mxu0
  %v1660 = vadd.f32 %v1581, %v1659
  %v1661 = vpop.f32.mrf.mxu0
  %v1662 = vadd.f32 %v1583, %v1661
  %1663 = vmatmul.bf16.gmra.mxu0 %v594
  %v1664 = vpop.f32.mrf.mxu0
  %v1665 = vadd.f32 %v1586, %v1664
  %v1666 = vpop.f32.mrf.mxu0
  %v1667 = vadd.f32 %v1588, %v1666
  %1668 = vmatmul.bf16.gmra.mxu0 %v602
  %v1669 = vpop.f32.mrf.mxu0
  %v1670 = vadd.f32 %v1591, %v1669
  %v1671 = vpop.f32.mrf.mxu0
  %v1672 = vadd.f32 %v1593, %v1671
  %1673 = vmatmul.bf16.gmra.mxu0 %v610
  %v1674 = vpop.f32.mrf.mxu0
  %v1675 = vadd.f32 %v1596, %v1674
  %v1676 = vpop.f32.mrf.mxu0
  %v1677 = vadd.f32 %v1598, %v1676
  %1678 = vmatmul.bf16.gmra.mxu0 %v618
  %v1679 = vpop.f32.mrf.mxu0
  %v1680 = vadd.f32 %v1601, %v1679
  %v1681 = vpop.f32.mrf.mxu0
  %v1682 = vadd.f32 %v1603, %v1681
  %1683 = vmatmul.bf16.gmra.mxu0 %v626
  %v1684 = vpop.f32.mrf.mxu0
  %v1685 = vadd.f32 %v1606, %v1684
  %v1686 = vpop.f32.mrf.mxu0
  %v1687 = vadd.f32 %v1608, %v1686
  %1688 = vmatmul.bf16.gmra.mxu0 %v634
  %v1689 = vpop.f32.mrf.mxu0
  %v1690 = vadd.f32 %v1611, %v1689
  %v1691 = vpop.f32.mrf.mxu0
  %v1692 = vadd.f32 %v1613, %v1691
  %1693 = vmatmul.bf16.gmra.mxu0 %v642
  %v1694 = vpop.f32.mrf.mxu0
  %v1695 = vadd.f32 %v1616, %v1694
  %v1696 = vpop.f32.mrf.mxu0
  %v1697 = vadd.f32 %v1618, %v1696
  %1698 = vmatmul.bf16.gmra.mxu0 %v650
  %v1699 = vpop.f32.mrf.mxu0
  %v1700 = vadd.f32 %v1621, %v1699
  %v1701 = vpop.f32.mrf.mxu0
  %v1702 = vadd.f32 %v1623, %v1701
  %1703 = vmatmul.bf16.gmra.mxu0 %v658
  %v1704 = vpop.f32.mrf.mxu0
  %v1705 = vadd.f32 %v1626, %v1704
  %v1706 = vpop.f32.mrf.mxu0
  %v1707 = vadd.f32 %v1628, %v1706
  %1708 = vmatmul.bf16.gmra.mxu0 %v666
  %v1709 = vpop.f32.mrf.mxu0
  %v1710 = vadd.f32 %v1631, %v1709
  %v1711 = vpop.f32.mrf.mxu0
  %v1712 = vadd.f32 %v1633, %v1711
  %1713 = vmatmul.bf16.gmra.mxu0 %v674
  %v1714 = vpop.f32.mrf.mxu0
  %v1715 = vadd.f32 %v1636, %v1714
  %v1716 = vpop.f32.mrf.mxu0
  %v1717 = vadd.f32 %v1638, %v1716
  %1718 = vmatmul.bf16.gmra.mxu0 %v682
  %v1719 = vpop.f32.mrf.mxu0
  %v1720 = vadd.f32 %v1641, %v1719
  %v1721 = vpop.f32.mrf.mxu0
  %v1722 = vadd.f32 %v1643, %v1721
  %1723 = vmatmul.bf16.gmra.mxu0 %v690
  %v1724 = vpop.f32.mrf.mxu0
  %v1725 = vadd.f32 %v1646, %v1724
  %v1726 = vpop.f32.mrf.mxu0
  %v1727 = vadd.f32 %v1648, %v1726
  %1728 = vdwg.mxu0
  %1729 = vmatpush.bf16.msra.mxu0 0
  %1730 = vmatpush.bf16.msra.mxu0 0
  %1731 = vmatpush.bf16.msra.mxu0 0
  %1732 = vmatpush.bf16.msra.mxu0 0
  %1733 = vmatpush.bf16.msra.mxu0 0
  %1734 = vmatpush.bf16.msra.mxu0 0
  %1735 = vmatpush.bf16.msra.mxu0 0
  %1736 = vmatpush.bf16.msra.mxu0 %v1174
  %1737 = vmatmul.bf16.gmra.mxu0 %v1131
  %v1738 = vpop.f32.mrf.mxu0
  %v1739 = vadd.f32 %v1660, %v1738
  %v1740 = vpop.f32.mrf.mxu0
  %v1741 = vadd.f32 %v1662, %v1740
  %1742 = vmatmul.bf16.gmra.mxu0 %v1134
  %v1743 = vpop.f32.mrf.mxu0
  %v1744 = vadd.f32 %v1665, %v1743
  %v1745 = vpop.f32.mrf.mxu0
  %v1746 = vadd.f32 %v1667, %v1745
  %1747 = vmatmul.bf16.gmra.mxu0 %v1137
  %v1748 = vpop.f32.mrf.mxu0
  %v1749 = vadd.f32 %v1670, %v1748
  %v1750 = vpop.f32.mrf.mxu0
  %v1751 = vadd.f32 %v1672, %v1750
  %1752 = vmatmul.bf16.gmra.mxu0 %v1140
  %v1753 = vpop.f32.mrf.mxu0
  %v1754 = vadd.f32 %v1675, %v1753
  %v1755 = vpop.f32.mrf.mxu0
  %v1756 = vadd.f32 %v1677, %v1755
  %1757 = vmatmul.bf16.gmra.mxu0 %v1143
  %v1758 = vpop.f32.mrf.mxu0
  %v1759 = vadd.f32 %v1680, %v1758
  %v1760 = vpop.f32.mrf.mxu0
  %v1761 = vadd.f32 %v1682, %v1760
  %1762 = vmatmul.bf16.gmra.mxu0 %v1146
  %v1763 = vpop.f32.mrf.mxu0
  %v1764 = vadd.f32 %v1685, %v1763
  %v1765 = vpop.f32.mrf.mxu0
  %v1766 = vadd.f32 %v1687, %v1765
  %1767 = vmatmul.bf16.gmra.mxu0 %v1149
  %v1768 = vpop.f32.mrf.mxu0
  %v1769 = vadd.f32 %v1690, %v1768
  %v1770 = vpop.f32.mrf.mxu0
  %v1771 = vadd.f32 %v1692, %v1770
  %1772 = vmatmul.bf16.gmra.mxu0 %v1152
  %v1773 = vpop.f32.mrf.mxu0
  %v1774 = vadd.f32 %v1695, %v1773
  %v1775 = vpop.f32.mrf.mxu0
  %v1776 = vadd.f32 %v1697, %v1775
  %1777 = vmatmul.bf16.gmra.mxu0 %v1155
  %v1778 = vpop.f32.mrf.mxu0
  %v1779 = vadd.f32 %v1700, %v1778
  %v1780 = vpop.f32.mrf.mxu0
  %v1781 = vadd.f32 %v1702, %v1780
  %1782 = vmatmul.bf16.gmra.mxu0 %v1158
  %v1783 = vpop.f32.mrf.mxu0
  %v1784 = vadd.f32 %v1705, %v1783
  %v1785 = vpop.f32.mrf.mxu0
  %v1786 = vadd.f32 %v1707, %v1785
  %1787 = vmatmul.bf16.gmra.mxu0 %v1161
  %v1788 = vpop.f32.mrf.mxu0
  %v1789 = vadd.f32 %v1710, %v1788
  %v1790 = vpop.f32.mrf.mxu0
  %v1791 = vadd.f32 %v1712, %v1790
  %1792 = vmatmul.bf16.gmra.mxu0 %v1164
  %v1793 = vpop.f32.mrf.mxu0
  %v1794 = vadd.f32 %v1715, %v1793
  %v1795 = vpop.f32.mrf.mxu0
  %v1796 = vadd.f32 %v1717, %v1795
  %1797 = vmatmul.bf16.gmra.mxu0 %v1167
  %v1798 = vpop.f32.mrf.mxu0
  %v1799 = vadd.f32 %v1720, %v1798
  %v1800 = vpop.f32.mrf.mxu0
  %v1801 = vadd.f32 %v1722, %v1800
  %1802 = vmatmul.bf16.gmra.mxu0 %v1170
  %v1803 = vpop.f32.mrf.mxu0
  %v1804 = vadd.f32 %v1725, %v1803
  %v1805 = vpop.f32.mrf.mxu0
  %v1806 = vadd.f32 %v1727, %v1805
  %1807 = vdwg.mxu0
  %v1808 = vmax.f32 %v1739, 0.0
  %v1809 = vmax.f32 %v1741, 0.0
  %v1810 = vmax.f32 %v1744, 0.0
  %v1811 = vmax.f32 %v1746, 0.0
  %v1812 = vmax.f32 %v1749, 0.0
  %v1813 = vmax.f32 %v1751, 0.0
  %v1814 = vmax.f32 %v1754, 0.0
  %v1815 = vmax.f32 %v1756, 0.0
  %v1816 = vmax.f32 %v1759, 0.0
  %v1817 = vmax.f32 %v1761, 0.0
  %v1818 = vmax.f32 %v1764, 0.0
  %v1819 = vmax.f32 %v1766, 0.0
  %v1820 = vmax.f32 %v1769, 0.0
  %v1821 = vmax.f32 %v1771, 0.0
  %v1822 = vmax.f32 %v1774, 0.0
  %v1823 = vmax.f32 %v1776, 0.0
  %v1824 = vmax.f32 %v1779, 0.0
  %v1825 = vmax.f32 %v1781, 0.0
  %v1826 = vmax.f32 %v1784, 0.0
  %v1827 = vmax.f32 %v1786, 0.0
  %v1828 = vmax.f32 %v1789, 0.0
  %v1829 = vmax.f32 %v1791, 0.0
  %v1830 = vmax.f32 %v1794, 0.0
  %v1831 = vmax.f32 %v1796, 0.0
  %v1832 = vmax.f32 %v1799, 0.0
  %v1833 = vmax.f32 %v1801, 0.0
  %v1834 = vmax.f32 %v1804, 0.0
  %v1835 = vmax.f32 %v1806, 0.0
  %v1836 = vpack.c.bf16 %v1808, %v1808
  %v1837 = vpack.c.bf16 %v1809, %v1809
  %v1838 = vpack.c.bf16 %v1810, %v1810
  %v1839 = vpack.c.bf16 %v1811, %v1811
  %v1840 = vpack.c.bf16 %v1812, %v1812
  %v1841 = vpack.c.bf16 %v1813, %v1813
  %v1842 = vpack.c.bf16 %v1814, %v1814
  %v1843 = vpack.c.bf16 %v1815, %v1815
  %v1844 = vpack.c.bf16 %v1816, %v1816
  %v1845 = vpack.c.bf16 %v1817, %v1817
  %v1846 = vpack.c.bf16 %v1818, %v1818
  %v1847 = vpack.c.bf16 %v1819, %v1819
  %v1848 = vpack.c.bf16 %v1820, %v1820
  %v1849 = vpack.c.bf16 %v1821, %v1821
  %v1850 = vpack.c.bf16 %v1822, %v1822
  %v1851 = vpack.c.bf16 %v1823, %v1823
  %v1852 = vpack.c.bf16 %v1824, %v1824
  %v1853 = vpack.c.bf16 %v1825, %v1825
  %v1854 = vpack.c.bf16 %v1826, %v1826
  %v1855 = vpack.c.bf16 %v1827, %v1827
  %v1856 = vpack.c.bf16 %v1828, %v1828
  %v1857 = vpack.c.bf16 %v1829, %v1829
  %v1858 = vpack.c.bf16 %v1830, %v1830
  %v1859 = vpack.c.bf16 %v1831, %v1831
  %v1860 = vpack.c.bf16 %v1832, %v1832
  %v1861 = vpack.c.bf16 %v1833, %v1833
  %v1862 = vpack.c.bf16 %v1834, %v1834
  %v1863 = vpack.c.bf16 %v1835, %v1835
  %1864 = vst [vmem:[%s3] sm:$0xf] %v1836
  %1865 = vst [vmem:[%s3 + $0x4] sm:$0xf] %v1837
  %1866 = vst [vmem:[%s3 + $0x8] sm:$0xf] %v1838
  %1867 = vst [vmem:[%s3 + $0xc] sm:$0xf] %v1839
  %1868 = vst [vmem:[%s3 + $0x10] sm:$0xf] %v1840
  %1869 = vst [vmem:[%s3 + $0x14] sm:$0xf] %v1841
  %1870 = vst [vmem:[%s3 + $0x18] sm:$0xf] %v1842
  %1871 = vst [vmem:[%s3 + $0x1c] sm:$0xf] %v1843
  %1872 = vst [vmem:[%s3 + $0x20] sm:$0xf] %v1844
  %1873 = vst [vmem:[%s3 + $0x24] sm:$0xf] %v1845
  %1874 = vst [vmem:[%s3 + $0x28] sm:$0xf] %v1846
  %1875 = vst [vmem:[%s3 + $0x2c] sm:$0xf] %v1847
  %1876 = vst [vmem:[%s3 + $0x30] sm:$0xf] %v1848
  %1877 = vst [vmem:[%s3 + $0x34] sm:$0xf] %v1849
  %1878 = vst [vmem:[%s3 + $0x38] sm:$0xf] %v1850
  %1879 = vst [vmem:[%s3 + $0x3c] sm:$0xf] %v1851
  %1880 = vst [vmem:[%s3 + $0x40] sm:$0xf] %v1852
  %1881 = vst [vmem:[%s3 + $0x44] sm:$0xf] %v1853
  %1882 = vst [vmem:[%s3 + $0x48] sm:$0xf] %v1854
  %1883 = vst [vmem:[%s3 + $0x4c] sm:$0xf] %v1855
  %1884 = vst [vmem:[%s3 + $0x50] sm:$0xf] %v1856
  %1885 = vst [vmem:[%s3 + $0x54] sm:$0xf] %v1857
  %1886 = vst [vmem:[%s3 + $0x58] sm:$0xf] %v1858
  %1887 = vst [vmem:[%s3 + $0x5c] sm:$0xf] %v1859
  %1888 = vst [vmem:[%s3 + $0x60] sm:$0xf] %v1860
  %1889 = vst [vmem:[%s3 + $0x64] sm:$0xf] %v1861
  %1890 = vst [vmem:[%s3 + $0x68] sm:$0xf] %v1862
  %1891 = vst [vmem:[%s3 + $0x6c] sm:$0xf] %v1863
  // Predicated region
  $region14: #{pilotnet_forward.8} parent=0 // pred_check
    _
  $region15: #{pilotnet_forward.8} parent=0 // pred_check_branch
    %1893 = sbr.rel (0) target = $region17
  $region16: #{pilotnet_forward.8} parent=0 // pred_region
    _
  $region17: #{pilotnet_forward.8} parent=0 // pred_fallthru
    _
  // Predicated region
  $region18: #{pilotnet_forward.8} parent=0 // pred_check
    _
  $region19: #{pilotnet_forward.8} parent=0 // pred_check_branch
    %1895 = sbr.rel (0) target = $region21
  $region20: #{pilotnet_forward.8} parent=0 // pred_region
    _
  $region21: #{pilotnet_forward.8} parent=0 // pred_fallthru
    _

// kernel: pilotnet_forward.9
$region0: #{pilotnet_forward.9}
  #allocation0 [shape = 'u32[]', space=smem, size = 0x4, offset = 0x4, fixed_abs, tag = 'smem constant byte address 0x4 - core index']
  #allocation1 [shape = 'u32[72,128]{1,0:T(1,128)}', space=vmem, size = 0x9000, scoped, tag = 'internal scratch']
  %s0 = inlined_call_operand.vmem [shape: bf16[128,432], index: 0, kind: input, shape index: {}]
  %s1 = inlined_call_operand.vmem [shape: bf16[432,128], index: 1, kind: input, shape index: {}]
  %s2 = inlined_call_operand.vmem [shape: f32[1,128], index: 2, kind: input, shape index: {}]
  %s3 = inlined_call_operand.vmem [shape: bf16[128,128], index: 3, kind: output, shape index: {}]
  %s4 = sld [smem:[#allocation0]]
  $region22: #{pilotnet_forward.9} parent=0
    _
  %s6 = ssub.s32 1, %s4
  %s7 = scalar_select 0, %s6, %s4
  // Predicated region
  $region2: #{pilotnet_forward.9} parent=0 // pred_check
    _
  $region3: #{pilotnet_forward.9} parent=0 // pred_check_branch
    %9 = sbr.rel (0) target = $region5
  $region4: #{pilotnet_forward.9} parent=0 // pred_region
    _
  $region5: #{pilotnet_forward.9} parent=0 // pred_fallthru
    _
  // Predicated region
  $region6: #{pilotnet_forward.9} parent=0 // pred_check
    _
  $region7: #{pilotnet_forward.9} parent=0 // pred_check_branch
    %11 = sbr.rel (0) target = $region9
  $region8: #{pilotnet_forward.9} parent=0 // pred_region
    _
  $region9: #{pilotnet_forward.9} parent=0 // pred_fallthru
    _
  // Predicated region
  $region10: #{pilotnet_forward.9} parent=0 // pred_check
    _
  $region11: #{pilotnet_forward.9} parent=0 // pred_check_branch
    %13 = sbr.rel (0) target = $region13
  $region12: #{pilotnet_forward.9} parent=0 // pred_region
    _
  $region13: #{pilotnet_forward.9} parent=0 // pred_fallthru
    _
  %v15 = vld [vmem:[%s0] sm:$0xff]
  %v16 = vld [vmem:[%s0 + $0x8] sm:$0xff]
  %v17 = vld [vmem:[%s0 + $0x10] sm:$0xff]
  %v18 = vld [vmem:[%s0 + $0x18] sm:$0xff]
  %v19 = vld [vmem:[%s0 + $0x20] sm:$0xff]
  %v20 = vld [vmem:[%s0 + $0x28] sm:$0xff]
  %v21 = vld [vmem:[%s0 + $0x30] sm:$0xff]
  %v22 = vld [vmem:[%s0 + $0x38] sm:$0xff]
  %v23 = vld [vmem:[%s0 + $0x40] sm:$0xff]
  %v24 = vld [vmem:[%s0 + $0x48] sm:$0xff]
  %v25 = vld [vmem:[%s0 + $0x50] sm:$0xff]
  %v26 = vld [vmem:[%s0 + $0x58] sm:$0xff]
  %v27 = vld [vmem:[%s0 + $0x60] sm:$0xff]
  %v28 = vld [vmem:[%s0 + $0x68] sm:$0xff]
  %v29 = vld [vmem:[%s0 + $0x70] sm:$0xff]
  %v30 = vld [vmem:[%s0 + $0x78] sm:$0xff]
  %v31 = vld [vmem:[%s0 + $0x80] sm:$0xff]
  %v32 = vld [vmem:[%s0 + $0x88] sm:$0xff]
  %v33 = vld [vmem:[%s0 + $0x90] sm:$0xff]
  %v34 = vld [vmem:[%s0 + $0x98] sm:$0xff]
  %v35 = vld [vmem:[%s0 + $0xa0] sm:$0xff]
  %v36 = vld [vmem:[%s0 + $0xa8] sm:$0xff]
  %v37 = vld [vmem:[%s0 + $0xb0] sm:$0xff]
  %v38 = vld [vmem:[%s0 + $0xb8] sm:$0xff]
  %v39 = vld [vmem:[%s0 + $0xc0] sm:$0xff]
  %v40 = vld [vmem:[%s0 + $0xc8] sm:$0xff]
  %v41 = vld [vmem:[%s0 + $0xd0] sm:$0xff]
  %v42 = vld [vmem:[%s0 + $0xd8] sm:$0xff]
  %v43 = vld [vmem:[%s0 + $0xe0] sm:$0xff]
  %v44 = vld [vmem:[%s0 + $0xe8] sm:$0xff]
  %v45 = vld [vmem:[%s0 + $0xf0] sm:$0xff]
  %v46 = vld [vmem:[%s0 + $0xf8] sm:$0xff]
  %v47 = vld [vmem:[%s1] sm:$0xf]
  %v48 = vld [vmem:[%s1 + $0x4] sm:$0xf]
  %v49 = vld [vmem:[%s1 + $0x8] sm:$0xf]
  %v50 = vld [vmem:[%s1 + $0xc] sm:$0xf]
  %v51 = vld [vmem:[%s1 + $0x10] sm:$0xf]
  %v52 = vld [vmem:[%s1 + $0x14] sm:$0xf]
  %v53 = vld [vmem:[%s1 + $0x18] sm:$0xf]
  %v54 = vld [vmem:[%s1 + $0x1c] sm:$0xf]
  %v55 = vld [vmem:[%s1 + $0x20] sm:$0xf]
  %v56 = vld [vmem:[%s1 + $0x24] sm:$0xf]
  %v57 = vld [vmem:[%s1 + $0x28] sm:$0xf]
  %v58 = vld [vmem:[%s1 + $0x2c] sm:$0xf]
  %v59 = vld [vmem:[%s1 + $0x30] sm:$0xf]
  %v60 = vld [vmem:[%s1 + $0x34] sm:$0xf]
  %v61 = vld [vmem:[%s1 + $0x38] sm:$0xf]
  %v62 = vld [vmem:[%s1 + $0x3c] sm:$0xf]
  %v63 = vld [vmem:[%s1 + $0x40] sm:$0xf]
  %v64 = vld [vmem:[%s1 + $0x44] sm:$0xf]
  %v65 = vld [vmem:[%s1 + $0x48] sm:$0xf]
  %v66 = vld [vmem:[%s1 + $0x4c] sm:$0xf]
  %v67 = vld [vmem:[%s1 + $0x50] sm:$0xf]
  %v68 = vld [vmem:[%s1 + $0x54] sm:$0xf]
  %v69 = vld [vmem:[%s1 + $0x58] sm:$0xf]
  %v70 = vld [vmem:[%s1 + $0x5c] sm:$0xf]
  %v71 = vld [vmem:[%s1 + $0x60] sm:$0xf]
  %v72 = vld [vmem:[%s1 + $0x64] sm:$0xf]
  %v73 = vld [vmem:[%s1 + $0x68] sm:$0xf]
  %v74 = vld [vmem:[%s1 + $0x6c] sm:$0xf]
  %v75 = vld [vmem:[%s1 + $0x70] sm:$0xf]
  %v76 = vld [vmem:[%s1 + $0x74] sm:$0xf]
  %v77 = vld [vmem:[%s1 + $0x78] sm:$0xf]
  %v78 = vld [vmem:[%s1 + $0x7c] sm:$0xf]
  %v79 = vld [vmem:[%s1 + $0x80] sm:$0xf]
  %v80 = vld [vmem:[%s1 + $0x84] sm:$0xf]
  %v81 = vld [vmem:[%s1 + $0x88] sm:$0xf]
  %v82 = vld [vmem:[%s1 + $0x8c] sm:$0xf]
  %v83 = vld [vmem:[%s1 + $0x90] sm:$0xf]
  %v84 = vld [vmem:[%s1 + $0x94] sm:$0xf]
  %v85 = vld [vmem:[%s1 + $0x98] sm:$0xf]
  %v86 = vld [vmem:[%s1 + $0x9c] sm:$0xf]
  %v87 = vld [vmem:[%s1 + $0xa0] sm:$0xf]
  %v88 = vld [vmem:[%s1 + $0xa4] sm:$0xf]
  %v89 = vld [vmem:[%s1 + $0xa8] sm:$0xf]
  %v90 = vld [vmem:[%s1 + $0xac] sm:$0xf]
  %v91 = vld [vmem:[%s1 + $0xb0] sm:$0xf]
  %v92 = vld [vmem:[%s1 + $0xb4] sm:$0xf]
  %v93 = vld [vmem:[%s1 + $0xb8] sm:$0xf]
  %v94 = vld [vmem:[%s1 + $0xbc] sm:$0xf]
  %v95 = vld [vmem:[%s1 + $0xc0] sm:$0xf]
  %v96 = vld [vmem:[%s1 + $0xc4] sm:$0xf]
  %v97 = vld [vmem:[%s1 + $0xc8] sm:$0xf]
  %v98 = vld [vmem:[%s1 + $0xcc] sm:$0xf]
  %v99 = vld [vmem:[%s1 + $0xd0] sm:$0xf]
  %v100 = vld [vmem:[%s1 + $0xd4] sm:$0xf]
  %v101 = vld [vmem:[%s2] sm:$0x1]
  %v103 = vperm.slane %v101, 0
  %v137 = vunpack.c.l.b16 %v15
  %v138 = vunpack.c.h.b16 %v15
  %v139 = vunpack.c.l.b16 %v16
  %v140 = vunpack.c.h.b16 %v16
  %v141 = vunpack.c.l.b16 %v17
  %v142 = vunpack.c.h.b16 %v17
  %v143 = vunpack.c.l.b16 %v18
  %v144 = vunpack.c.h.b16 %v18
  %v145 = vunpack.c.l.b16 %v19
  %v146 = vunpack.c.h.b16 %v19
  %v147 = vunpack.c.l.b16 %v20
  %v148 = vunpack.c.h.b16 %v20
  %v149 = vunpack.c.l.b16 %v21
  %v150 = vunpack.c.h.b16 %v21
  %v151 = vunpack.c.l.b16 %v22
  %v152 = vunpack.c.h.b16 %v22
  %v153 = vunpack.c.l.b16 %v23
  %v154 = vunpack.c.h.b16 %v23
  %v155 = vunpack.c.l.b16 %v24
  %v156 = vunpack.c.h.b16 %v24
  %v157 = vunpack.c.l.b16 %v25
  %v158 = vunpack.c.h.b16 %v25
  %v159 = vunpack.c.l.b16 %v26
  %v160 = vunpack.c.h.b16 %v26
  %v161 = vunpack.c.l.b16 %v27
  %v162 = vunpack.c.h.b16 %v27
  %v163 = vunpack.c.l.b16 %v28
  %v164 = vunpack.c.h.b16 %v28
  %v165 = vunpack.c.l.b16 %v29
  %v166 = vunpack.c.h.b16 %v29
  %v167 = vunpack.c.l.b16 %v30
  %v168 = vunpack.c.h.b16 %v30
  %v169 = vunpack.c.l.b16 %v31
  %v170 = vunpack.c.h.b16 %v31
  %v171 = vunpack.c.l.b16 %v32
  %v172 = vunpack.c.h.b16 %v32
  %v173 = vunpack.c.l.b16 %v33
  %v174 = vunpack.c.h.b16 %v33
  %v175 = vunpack.c.l.b16 %v34
  %v176 = vunpack.c.h.b16 %v34
  %v177 = vunpack.c.l.b16 %v35
  %v178 = vunpack.c.h.b16 %v35
  %v179 = vunpack.c.l.b16 %v36
  %v180 = vunpack.c.h.b16 %v36
  %v181 = vunpack.c.l.b16 %v37
  %v182 = vunpack.c.h.b16 %v37
  %v183 = vunpack.c.l.b16 %v38
  %v184 = vunpack.c.h.b16 %v38
  %v185 = vunpack.c.l.b16 %v39
  %v186 = vunpack.c.h.b16 %v39
  %v187 = vunpack.c.l.b16 %v40
  %v188 = vunpack.c.h.b16 %v40
  %v189 = vunpack.c.l.b16 %v41
  %v190 = vunpack.c.h.b16 %v41
  %v191 = vunpack.c.l.b16 %v42
  %v192 = vunpack.c.h.b16 %v42
  %v193 = vunpack.c.l.b16 %v43
  %v194 = vunpack.c.h.b16 %v43
  %v195 = vunpack.c.l.b16 %v44
  %v196 = vunpack.c.h.b16 %v44
  %v197 = vunpack.c.l.b16 %v45
  %v198 = vunpack.c.h.b16 %v45
  %v199 = vunpack.c.l.b16 %v46
  %v200 = vunpack.c.h.b16 %v46
  %v201 = vpack.c.b16 %v141, %v137
  %v202 = vpack.c.b16 %v142, %v138
  %v203 = vpack.c.b16 %v143, %v139
  %v204 = vpack.c.b16 %v144, %v140
  %v205 = vpack.c.b16 %v149, %v145
  %v206 = vpack.c.b16 %v150, %v146
  %v207 = vpack.c.b16 %v151, %v147
  %v208 = vpack.c.b16 %v152, %v148
  %v209 = vpack.c.b16 %v157, %v153
  %v210 = vpack.c.b16 %v158, %v154
  %v211 = vpack.c.b16 %v159, %v155
  %v212 = vpack.c.b16 %v160, %v156
  %v213 = vpack.c.b16 %v165, %v161
  %v214 = vpack.c.b16 %v166, %v162
  %v215 = vpack.c.b16 %v167, %v163
  %v216 = vpack.c.b16 %v168, %v164
  %v217 = vpack.c.b16 %v173, %v169
  %v218 = vpack.c.b16 %v174, %v170
  %v219 = vpack.c.b16 %v175, %v171
  %v220 = vpack.c.b16 %v176, %v172
  %v221 = vpack.c.b16 %v181, %v177
  %v222 = vpack.c.b16 %v182, %v178
  %v223 = vpack.c.b16 %v183, %v179
  %v224 = vpack.c.b16 %v184, %v180
  %v225 = vpack.c.b16 %v189, %v185
  %v226 = vpack.c.b16 %v190, %v186
  %v227 = vpack.c.b16 %v191, %v187
  %v228 = vpack.c.b16 %v192, %v188
  %v229 = vpack.c.b16 %v197, %v193
  %v230 = vpack.c.b16 %v198, %v194
  %v231 = vpack.c.b16 %v199, %v195
  %v232 = vpack.c.b16 %v200, %v196
  %v311 = vunpack.c.l.b16 %v47
  %v312 = vunpack.c.l.b16 %v48
  %v313 = vunpack.c.l.b16 %v49
  %v314 = vunpack.c.l.b16 %v50
  %v315 = vunpack.c.l.b16 %v51
  %v316 = vunpack.c.l.b16 %v52
  %v317 = vunpack.c.l.b16 %v53
  %v318 = vunpack.c.l.b16 %v54
  %v319 = vunpack.c.l.b16 %v55
  %v320 = vunpack.c.l.b16 %v56
  %v321 = vunpack.c.l.b16 %v57
  %v322 = vunpack.c.l.b16 %v58
  %v323 = vunpack.c.l.b16 %v59
  %v324 = vunpack.c.l.b16 %v60
  %v325 = vunpack.c.l.b16 %v61
  %v326 = vunpack.c.l.b16 %v62
  %v327 = vunpack.c.l.b16 %v63
  %v328 = vunpack.c.l.b16 %v64
  %v329 = vunpack.c.l.b16 %v65
  %v330 = vunpack.c.l.b16 %v66
  %v331 = vunpack.c.l.b16 %v67
  %v332 = vunpack.c.l.b16 %v68
  %v333 = vunpack.c.l.b16 %v69
  %v334 = vunpack.c.l.b16 %v70
  %v335 = vunpack.c.l.b16 %v71
  %v336 = vunpack.c.l.b16 %v72
  %v337 = vunpack.c.l.b16 %v73
  %v338 = vunpack.c.l.b16 %v74
  %v339 = vunpack.c.l.b16 %v75
  %v340 = vunpack.c.l.b16 %v76
  %v341 = vunpack.c.l.b16 %v77
  %v342 = vunpack.c.l.b16 %v78
  %v343 = vunpack.c.l.b16 %v79
  %v344 = vunpack.c.l.b16 %v80
  %v345 = vunpack.c.l.b16 %v81
  %v346 = vunpack.c.l.b16 %v82
  %v347 = vunpack.c.l.b16 %v83
  %v348 = vunpack.c.l.b16 %v84
  %v349 = vunpack.c.l.b16 %v85
  %v350 = vunpack.c.l.b16 %v86
  %v351 = vunpack.c.l.b16 %v87
  %v352 = vunpack.c.l.b16 %v88
  %v353 = vunpack.c.l.b16 %v89
  %v354 = vunpack.c.l.b16 %v90
  %v355 = vunpack.c.l.b16 %v91
  %v356 = vunpack.c.l.b16 %v92
  %v357 = vunpack.c.l.b16 %v93
  %v358 = vunpack.c.l.b16 %v94
  %v359 = vunpack.c.l.b16 %v95
  %v360 = vunpack.c.l.b16 %v96
  %v361 = vunpack.c.l.b16 %v97
  %v362 = vunpack.c.l.b16 %v98
  %v363 = vunpack.c.l.b16 %v99
  %v364 = vunpack.c.l.b16 %v100
  %v365 = vpack.c.b16 %v312, %v311
  %v366 = vpack.c.b16 %v314, %v313
  %v367 = vpack.c.b16 %v316, %v315
  %v368 = vpack.c.b16 %v318, %v317
  %v369 = vpack.c.b16 %v320, %v319
  %v370 = vpack.c.b16 %v322, %v321
  %v371 = vpack.c.b16 %v324, %v323
  %v372 = vpack.c.b16 %v326, %v325
  %v373 = vpack.c.b16 %v328, %v327
  %v374 = vpack.c.b16 %v330, %v329
  %v375 = vpack.c.b16 %v332, %v331
  %v376 = vpack.c.b16 %v334, %v333
  %v377 = vpack.c.b16 %v336, %v335
  %v378 = vpack.c.b16 %v338, %v337
  %v379 = vpack.c.b16 %v340, %v339
  %v380 = vpack.c.b16 %v342, %v341
  %v381 = vpack.c.b16 %v344, %v343
  %v382 = vpack.c.b16 %v346, %v345
  %v383 = vpack.c.b16 %v348, %v347
  %v384 = vpack.c.b16 %v350, %v349
  %v385 = vpack.c.b16 %v352, %v351
  %v386 = vpack.c.b16 %v354, %v353
  %v387 = vpack.c.b16 %v356, %v355
  %v388 = vpack.c.b16 %v358, %v357
  %v389 = vpack.c.b16 %v360, %v359
  %v390 = vpack.c.b16 %v362, %v361
  %v391 = vpack.c.b16 %v364, %v363
  %vm419 = vcmask 392192
  %v421 = vsel %vm419, %v204, 0
  %v424 = vsel %vm419, %v208, 0
  %v427 = vsel %vm419, %v212, 0
  %v430 = vsel %vm419, %v216, 0
  %v433 = vsel %vm419, %v220, 0
  %v436 = vsel %vm419, %v224, 0
  %v439 = vsel %vm419, %v228, 0
  %v442 = vsel %vm419, %v232, 0
  %444 = vmatpush.bf16.msra.mxu0 %v372
  %445 = vmatpush.bf16.msra.mxu0 %v371
  %446 = vmatpush.bf16.msra.mxu0 %v370
  %447 = vmatpush.bf16.msra.mxu0 %v369
  %448 = vmatpush.bf16.msra.mxu0 %v368
  %449 = vmatpush.bf16.msra.mxu0 %v367
  %450 = vmatpush.bf16.msra.mxu0 %v366
  %451 = vmatpush.bf16.msra.mxu0 %v365
  %452 = vmatmul.bf16.gmra.mxu0 %v201
  %v453 = vpop.f32.mrf.mxu0
  %v454 = vadd.f32 %v103, %v453
  %v455 = vpop.f32.mrf.mxu0
  %v456 = vadd.f32 %v103, %v455
  %457 = vmatmul.bf16.gmra.mxu0 %v205
  %v458 = vpop.f32.mrf.mxu0
  %v459 = vadd.f32 %v103, %v458
  %v460 = vpop.f32.mrf.mxu0
  %v461 = vadd.f32 %v103, %v460
  %462 = vmatmul.bf16.gmra.mxu0 %v209
  %v463 = vpop.f32.mrf.mxu0
  %v464 = vadd.f32 %v103, %v463
  %v465 = vpop.f32.mrf.mxu0
  %v466 = vadd.f32 %v103, %v465
  %467 = vmatmul.bf16.gmra.mxu0 %v213
  %v468 = vpop.f32.mrf.mxu0
  %v469 = vadd.f32 %v103, %v468
  %v470 = vpop.f32.mrf.mxu0
  %v471 = vadd.f32 %v103, %v470
  %472 = vmatmul.bf16.gmra.mxu0 %v217
  %v473 = vpop.f32.mrf.mxu0
  %v474 = vadd.f32 %v103, %v473
  %v475 = vpop.f32.mrf.mxu0
  %v476 = vadd.f32 %v103, %v475
  %477 = vmatmul.bf16.gmra.mxu0 %v221
  %v478 = vpop.f32.mrf.mxu0
  %v479 = vadd.f32 %v103, %v478
  %v480 = vpop.f32.mrf.mxu0
  %v481 = vadd.f32 %v103, %v480
  %482 = vmatmul.bf16.gmra.mxu0 %v225
  %v483 = vpop.f32.mrf.mxu0
  %v484 = vadd.f32 %v103, %v483
  %v485 = vpop.f32.mrf.mxu0
  %v486 = vadd.f32 %v103, %v485
  %487 = vmatmul.bf16.gmra.mxu0 %v229
  %v488 = vpop.f32.mrf.mxu0
  %v489 = vadd.f32 %v103, %v488
  %v490 = vpop.f32.mrf.mxu0
  %v491 = vadd.f32 %v103, %v490
  %492 = vdwg.mxu0
  %493 = vmatpush.bf16.msra.mxu0 %v380
  %494 = vmatpush.bf16.msra.mxu0 %v379
  %495 = vmatpush.bf16.msra.mxu0 %v378
  %496 = vmatpush.bf16.msra.mxu0 %v377
  %497 = vmatpush.bf16.msra.mxu0 %v376
  %498 = vmatpush.bf16.msra.mxu0 %v375
  %499 = vmatpush.bf16.msra.mxu0 %v374
  %500 = vmatpush.bf16.msra.mxu0 %v373
  %501 = vmatmul.bf16.gmra.mxu0 %v202
  %v502 = vpop.f32.mrf.mxu0
  %v503 = vadd.f32 %v454, %v502
  %v504 = vpop.f32.mrf.mxu0
  %v505 = vadd.f32 %v456, %v504
  %506 = vmatmul.bf16.gmra.mxu0 %v206
  %v507 = vpop.f32.mrf.mxu0
  %v508 = vadd.f32 %v459, %v507
  %v509 = vpop.f32.mrf.mxu0
  %v510 = vadd.f32 %v461, %v509
  %511 = vmatmul.bf16.gmra.mxu0 %v210
  %v512 = vpop.f32.mrf.mxu0
  %v513 = vadd.f32 %v464, %v512
  %v514 = vpop.f32.mrf.mxu0
  %v515 = vadd.f32 %v466, %v514
  %516 = vmatmul.bf16.gmra.mxu0 %v214
  %v517 = vpop.f32.mrf.mxu0
  %v518 = vadd.f32 %v469, %v517
  %v519 = vpop.f32.mrf.mxu0
  %v520 = vadd.f32 %v471, %v519
  %521 = vmatmul.bf16.gmra.mxu0 %v218
  %v522 = vpop.f32.mrf.mxu0
  %v523 = vadd.f32 %v474, %v522
  %v524 = vpop.f32.mrf.mxu0
  %v525 = vadd.f32 %v476, %v524
  %526 = vmatmul.bf16.gmra.mxu0 %v222
  %v527 = vpop.f32.mrf.mxu0
  %v528 = vadd.f32 %v479, %v527
  %v529 = vpop.f32.mrf.mxu0
  %v530 = vadd.f32 %v481, %v529
  %531 = vmatmul.bf16.gmra.mxu0 %v226
  %v532 = vpop.f32.mrf.mxu0
  %v533 = vadd.f32 %v484, %v532
  %v534 = vpop.f32.mrf.mxu0
  %v535 = vadd.f32 %v486, %v534
  %536 = vmatmul.bf16.gmra.mxu0 %v230
  %v537 = vpop.f32.mrf.mxu0
  %v538 = vadd.f32 %v489, %v537
  %v539 = vpop.f32.mrf.mxu0
  %v540 = vadd.f32 %v491, %v539
  %541 = vdwg.mxu0
  %542 = vmatpush.bf16.msra.mxu0 %v388
  %543 = vmatpush.bf16.msra.mxu0 %v387
  %544 = vmatpush.bf16.msra.mxu0 %v386
  %545 = vmatpush.bf16.msra.mxu0 %v385
  %546 = vmatpush.bf16.msra.mxu0 %v384
  %547 = vmatpush.bf16.msra.mxu0 %v383
  %548 = vmatpush.bf16.msra.mxu0 %v382
  %549 = vmatpush.bf16.msra.mxu0 %v381
  %550 = vmatmul.bf16.gmra.mxu0 %v203
  %v551 = vpop.f32.mrf.mxu0
  %v552 = vadd.f32 %v503, %v551
  %v553 = vpop.f32.mrf.mxu0
  %v554 = vadd.f32 %v505, %v553
  %555 = vmatmul.bf16.gmra.mxu0 %v207
  %v556 = vpop.f32.mrf.mxu0
  %v557 = vadd.f32 %v508, %v556
  %v558 = vpop.f32.mrf.mxu0
  %v559 = vadd.f32 %v510, %v558
  %560 = vmatmul.bf16.gmra.mxu0 %v211
  %v561 = vpop.f32.mrf.mxu0
  %v562 = vadd.f32 %v513, %v561
  %v563 = vpop.f32.mrf.mxu0
  %v564 = vadd.f32 %v515, %v563
  %565 = vmatmul.bf16.gmra.mxu0 %v215
  %v566 = vpop.f32.mrf.mxu0
  %v567 = vadd.f32 %v518, %v566
  %v568 = vpop.f32.mrf.mxu0
  %v569 = vadd.f32 %v520, %v568
  %570 = vmatmul.bf16.gmra.mxu0 %v219
  %v571 = vpop.f32.mrf.mxu0
  %v572 = vadd.f32 %v523, %v571
  %v573 = vpop.f32.mrf.mxu0
  %v574 = vadd.f32 %v525, %v573
  %575 = vmatmul.bf16.gmra.mxu0 %v223
  %v576 = vpop.f32.mrf.mxu0
  %v577 = vadd.f32 %v528, %v576
  %v578 = vpop.f32.mrf.mxu0
  %v579 = vadd.f32 %v530, %v578
  %580 = vmatmul.bf16.gmra.mxu0 %v227
  %v581 = vpop.f32.mrf.mxu0
  %v582 = vadd.f32 %v533, %v581
  %v583 = vpop.f32.mrf.mxu0
  %v584 = vadd.f32 %v535, %v583
  %585 = vmatmul.bf16.gmra.mxu0 %v231
  %v586 = vpop.f32.mrf.mxu0
  %v587 = vadd.f32 %v538, %v586
  %v588 = vpop.f32.mrf.mxu0
  %v589 = vadd.f32 %v540, %v588
  %590 = vdwg.mxu0
  %591 = vmatpush.bf16.msra.mxu0 0
  %592 = vmatpush.bf16.msra.mxu0 0
  %593 = vmatpush.bf16.msra.mxu0 0
  %594 = vmatpush.bf16.msra.mxu0 0
  %595 = vmatpush.bf16.msra.mxu0 0
  %596 = vmatpush.bf16.msra.mxu0 %v391
  %597 = vmatpush.bf16.msra.mxu0 %v390
  %598 = vmatpush.bf16.msra.mxu0 %v389
  %599 = vmatmul.bf16.gmra.mxu0 %v421
  %v600 = vpop.f32.mrf.mxu0
  %v601 = vadd.f32 %v552, %v600
  %v602 = vpop.f32.mrf.mxu0
  %v603 = vadd.f32 %v554, %v602
  %604 = vmatmul.bf16.gmra.mxu0 %v424
  %v605 = vpop.f32.mrf.mxu0
  %v606 = vadd.f32 %v557, %v605
  %v607 = vpop.f32.mrf.mxu0
  %v608 = vadd.f32 %v559, %v607
  %609 = vmatmul.bf16.gmra.mxu0 %v427
  %v610 = vpop.f32.mrf.mxu0
  %v611 = vadd.f32 %v562, %v610
  %v612 = vpop.f32.mrf.mxu0
  %v613 = vadd.f32 %v564, %v612
  %614 = vmatmul.bf16.gmra.mxu0 %v430
  %v615 = vpop.f32.mrf.mxu0
  %v616 = vadd.f32 %v567, %v615
  %v617 = vpop.f32.mrf.mxu0
  %v618 = vadd.f32 %v569, %v617
  %619 = vmatmul.bf16.gmra.mxu0 %v433
  %v620 = vpop.f32.mrf.mxu0
  %v621 = vadd.f32 %v572, %v620
  %v622 = vpop.f32.mrf.mxu0
  %v623 = vadd.f32 %v574, %v622
  %624 = vmatmul.bf16.gmra.mxu0 %v436
  %v625 = vpop.f32.mrf.mxu0
  %v626 = vadd.f32 %v577, %v625
  %v627 = vpop.f32.mrf.mxu0
  %v628 = vadd.f32 %v579, %v627
  %629 = vmatmul.bf16.gmra.mxu0 %v439
  %v630 = vpop.f32.mrf.mxu0
  %v631 = vadd.f32 %v582, %v630
  %v632 = vpop.f32.mrf.mxu0
  %v633 = vadd.f32 %v584, %v632
  %634 = vmatmul.bf16.gmra.mxu0 %v442
  %v635 = vpop.f32.mrf.mxu0
  %v636 = vadd.f32 %v587, %v635
  %v637 = vpop.f32.mrf.mxu0
  %v638 = vadd.f32 %v589, %v637
  %639 = vdwg.mxu0
  %v640 = vmax.f32 %v601, 0.0
  %v641 = vmax.f32 %v603, 0.0
  %v642 = vmax.f32 %v606, 0.0
  %v643 = vmax.f32 %v608, 0.0
  %v644 = vmax.f32 %v611, 0.0
  %v645 = vmax.f32 %v613, 0.0
  %v646 = vmax.f32 %v616, 0.0
  %v647 = vmax.f32 %v618, 0.0
  %v648 = vmax.f32 %v621, 0.0
  %v649 = vmax.f32 %v623, 0.0
  %v650 = vmax.f32 %v626, 0.0
  %v651 = vmax.f32 %v628, 0.0
  %v652 = vmax.f32 %v631, 0.0
  %v653 = vmax.f32 %v633, 0.0
  %v654 = vmax.f32 %v636, 0.0
  %v655 = vmax.f32 %v638, 0.0
  %v656 = vpack.c.bf16 %v640, %v640
  %v657 = vpack.c.bf16 %v641, %v641
  %v658 = vpack.c.bf16 %v642, %v642
  %v659 = vpack.c.bf16 %v643, %v643
  %v660 = vpack.c.bf16 %v644, %v644
  %v661 = vpack.c.bf16 %v645, %v645
  %v662 = vpack.c.bf16 %v646, %v646
  %v663 = vpack.c.bf16 %v647, %v647
  %v664 = vpack.c.bf16 %v648, %v648
  %v665 = vpack.c.bf16 %v649, %v649
  %v666 = vpack.c.bf16 %v650, %v650
  %v667 = vpack.c.bf16 %v651, %v651
  %v668 = vpack.c.bf16 %v652, %v652
  %v669 = vpack.c.bf16 %v653, %v653
  %v670 = vpack.c.bf16 %v654, %v654
  %v671 = vpack.c.bf16 %v655, %v655
  %672 = vst [vmem:[%s3] sm:$0xf] %v656
  %673 = vst [vmem:[%s3 + $0x4] sm:$0xf] %v657
  %674 = vst [vmem:[%s3 + $0x8] sm:$0xf] %v658
  %675 = vst [vmem:[%s3 + $0xc] sm:$0xf] %v659
  %676 = vst [vmem:[%s3 + $0x10] sm:$0xf] %v660
  %677 = vst [vmem:[%s3 + $0x14] sm:$0xf] %v661
  %678 = vst [vmem:[%s3 + $0x18] sm:$0xf] %v662
  %679 = vst [vmem:[%s3 + $0x1c] sm:$0xf] %v663
  %680 = vst [vmem:[%s3 + $0x20] sm:$0xf] %v664
  %681 = vst [vmem:[%s3 + $0x24] sm:$0xf] %v665
  %682 = vst [vmem:[%s3 + $0x28] sm:$0xf] %v666
  %683 = vst [vmem:[%s3 + $0x2c] sm:$0xf] %v667
  %684 = vst [vmem:[%s3 + $0x30] sm:$0xf] %v668
  %685 = vst [vmem:[%s3 + $0x34] sm:$0xf] %v669
  %686 = vst [vmem:[%s3 + $0x38] sm:$0xf] %v670
  %687 = vst [vmem:[%s3 + $0x3c] sm:$0xf] %v671
  // Predicated region
  $region14: #{pilotnet_forward.9} parent=0 // pred_check
    _
  $region15: #{pilotnet_forward.9} parent=0 // pred_check_branch
    %689 = sbr.rel (0) target = $region17
  $region16: #{pilotnet_forward.9} parent=0 // pred_region
    _
  $region17: #{pilotnet_forward.9} parent=0 // pred_fallthru
    _
  // Predicated region
  $region18: #{pilotnet_forward.9} parent=0 // pred_check
    _
  $region19: #{pilotnet_forward.9} parent=0 // pred_check_branch
    %691 = sbr.rel (0) target = $region21
  $region20: #{pilotnet_forward.9} parent=0 // pred_region
    _
  $region21: #{pilotnet_forward.9} parent=0 // pred_fallthru
    _

// kernel: pilotnet_forward.10
$region0: #{pilotnet_forward.10}
  #allocation0 [shape = 'u32[]', space=smem, size = 0x4, offset = 0x4, fixed_abs, tag = 'smem constant byte address 0x4 - core index']
  #allocation1 [shape = 'u32[72,128]{1,0:T(1,128)}', space=vmem, size = 0x9000, scoped, tag = 'internal scratch']
  %s0 = inlined_call_operand.vmem [shape: bf16[48,576], index: 0, kind: input, shape index: {}]
  %s1 = inlined_call_operand.vmem [shape: bf16[576,128], index: 1, kind: input, shape index: {}]
  %s2 = inlined_call_operand.vmem [shape: f32[1,128], index: 2, kind: input, shape index: {}]
  %s3 = inlined_call_operand.vmem [shape: bf16[48,128], index: 3, kind: output, shape index: {}]
  %s4 = sld [smem:[#allocation0]]
  $region22: #{pilotnet_forward.10} parent=0
    _
  %s6 = ssub.s32 1, %s4
  %s7 = scalar_select 0, %s6, %s4
  // Predicated region
  $region2: #{pilotnet_forward.10} parent=0 // pred_check
    _
  $region3: #{pilotnet_forward.10} parent=0 // pred_check_branch
    %9 = sbr.rel (0) target = $region5
  $region4: #{pilotnet_forward.10} parent=0 // pred_region
    _
  $region5: #{pilotnet_forward.10} parent=0 // pred_fallthru
    _
  // Predicated region
  $region6: #{pilotnet_forward.10} parent=0 // pred_check
    _
  $region7: #{pilotnet_forward.10} parent=0 // pred_check_branch
    %11 = sbr.rel (0) target = $region9
  $region8: #{pilotnet_forward.10} parent=0 // pred_region
    _
  $region9: #{pilotnet_forward.10} parent=0 // pred_fallthru
    _
  // Predicated region
  $region10: #{pilotnet_forward.10} parent=0 // pred_check
    _
  $region11: #{pilotnet_forward.10} parent=0 // pred_check_branch
    %13 = sbr.rel (0) target = $region13
  $region12: #{pilotnet_forward.10} parent=0 // pred_region
    _
  $region13: #{pilotnet_forward.10} parent=0 // pred_fallthru
    _
  %v15 = vld [vmem:[%s0] sm:$0xff]
  %v16 = vld [vmem:[%s0 + $0x8] sm:$0xff]
  %v17 = vld [vmem:[%s0 + $0x10] sm:$0xf]
  %v18 = vld [vmem:[%s0 + $0x14] sm:$0xff]
  %v19 = vld [vmem:[%s0 + $0x1c] sm:$0xff]
  %v20 = vld [vmem:[%s0 + $0x24] sm:$0xf]
  %v21 = vld [vmem:[%s0 + $0x28] sm:$0xff]
  %v22 = vld [vmem:[%s0 + $0x30] sm:$0xff]
  %v23 = vld [vmem:[%s0 + $0x38] sm:$0xf]
  %v24 = vld [vmem:[%s0 + $0x3c] sm:$0xff]
  %v25 = vld [vmem:[%s0 + $0x44] sm:$0xff]
  %v26 = vld [vmem:[%s0 + $0x4c] sm:$0xf]
  %v27 = vld [vmem:[%s0 + $0x50] sm:$0xff]
  %v28 = vld [vmem:[%s0 + $0x58] sm:$0xff]
  %v29 = vld [vmem:[%s0 + $0x60] sm:$0xf]
  %v30 = vld [vmem:[%s0 + $0x64] sm:$0xff]
  %v31 = vld [vmem:[%s0 + $0x6c] sm:$0xff]
  %v32 = vld [vmem:[%s0 + $0x74] sm:$0xf]
  %v33 = vld [vmem:[%s1] sm:$0xf]
  %v34 = vld [vmem:[%s1 + $0x4] sm:$0xf]
  %v35 = vld [vmem:[%s1 + $0x8] sm:$0xf]
  %v36 = vld [vmem:[%s1 + $0xc] sm:$0xf]
  %v37 = vld [vmem:[%s1 + $0x10] sm:$0xf]
  %v38 = vld [vmem:[%s1 + $0x14] sm:$0xf]
  %v39 = vld [vmem:[%s1 + $0x18] sm:$0xf]
  %v40 = vld [vmem:[%s1 + $0x1c] sm:$0xf]
  %v41 = vld [vmem:[%s1 + $0x20] sm:$0xf]
  %v42 = vld [vmem:[%s1 + $0x24] sm:$0xf]
  %v43 = vld [vmem:[%s1 + $0x28] sm:$0xf]
  %v44 = vld [vmem:[%s1 + $0x2c] sm:$0xf]
  %v45 = vld [vmem:[%s1 + $0x30] sm:$0xf]
  %v46 = vld [vmem:[%s1 + $0x34] sm:$0xf]
  %v47 = vld [vmem:[%s1 + $0x38] sm:$0xf]
  %v48 = vld [vmem:[%s1 + $0x3c] sm:$0xf]
  %v49 = vld [vmem:[%s1 + $0x40] sm:$0xf]
  %v50 = vld [vmem:[%s1 + $0x44] sm:$0xf]
  %v51 = vld [vmem:[%s1 + $0x48] sm:$0xf]
  %v52 = vld [vmem:[%s1 + $0x4c] sm:$0xf]
  %v53 = vld [vmem:[%s1 + $0x50] sm:$0xf]
  %v54 = vld [vmem:[%s1 + $0x54] sm:$0xf]
  %v55 = vld [vmem:[%s1 + $0x58] sm:$0xf]
  %v56 = vld [vmem:[%s1 + $0x5c] sm:$0xf]
  %v57 = vld [vmem:[%s1 + $0x60] sm:$0xf]
  %v58 = vld [vmem:[%s1 + $0x64] sm:$0xf]
  %v59 = vld [vmem:[%s1 + $0x68] sm:$0xf]
  %v60 = vld [vmem:[%s1 + $0x6c] sm:$0xf]
  %v61 = vld [vmem:[%s1 + $0x70] sm:$0xf]
  %v62 = vld [vmem:[%s1 + $0x74] sm:$0xf]
  %v63 = vld [vmem:[%s1 + $0x78] sm:$0xf]
  %v64 = vld [vmem:[%s1 + $0x7c] sm:$0xf]
  %v65 = vld [vmem:[%s1 + $0x80] sm:$0xf]
  %v66 = vld [vmem:[%s1 + $0x84] sm:$0xf]
  %v67 = vld [vmem:[%s1 + $0x88] sm:$0xf]
  %v68 = vld [vmem:[%s1 + $0x8c] sm:$0xf]
  %v69 = vld [vmem:[%s1 + $0x90] sm:$0xf]
  %v70 = vld [vmem:[%s1 + $0x94] sm:$0xf]
  %v71 = vld [vmem:[%s1 + $0x98] sm:$0xf]
  %v72 = vld [vmem:[%s1 + $0x9c] sm:$0xf]
  %v73 = vld [vmem:[%s1 + $0xa0] sm:$0xf]
  %v74 = vld [vmem:[%s1 + $0xa4] sm:$0xf]
  %v75 = vld [vmem:[%s1 + $0xa8] sm:$0xf]
  %v76 = vld [vmem:[%s1 + $0xac] sm:$0xf]
  %v77 = vld [vmem:[%s1 + $0xb0] sm:$0xf]
  %v78 = vld [vmem:[%s1 + $0xb4] sm:$0xf]
  %v79 = vld [vmem:[%s1 + $0xb8] sm:$0xf]
  %v80 = vld [vmem:[%s1 + $0xbc] sm:$0xf]
  %v81 = vld [vmem:[%s1 + $0xc0] sm:$0xf]
  %v82 = vld [vmem:[%s1 + $0xc4] sm:$0xf]
  %v83 = vld [vmem:[%s1 + $0xc8] sm:$0xf]
  %v84 = vld [vmem:[%s1 + $0xcc] sm:$0xf]
  %v85 = vld [vmem:[%s1 + $0xd0] sm:$0xf]
  %v86 = vld [vmem:[%s1 + $0xd4] sm:$0xf]
  %v87 = vld [vmem:[%s1 + $0xd8] sm:$0xf]
  %v88 = vld [vmem:[%s1 + $0xdc] sm:$0xf]
  %v89 = vld [vmem:[%s1 + $0xe0] sm:$0xf]
  %v90 = vld [vmem:[%s1 + $0xe4] sm:$0xf]
  %v91 = vld [vmem:[%s1 + $0xe8] sm:$0xf]
  %v92 = vld [vmem:[%s1 + $0xec] sm:$0xf]
  %v93 = vld [vmem:[%s1 + $0xf0] sm:$0xf]
  %v94 = vld [vmem:[%s1 + $0xf4] sm:$0xf]
  %v95 = vld [vmem:[%s1 + $0xf8] sm:$0xf]
  %v96 = vld [vmem:[%s1 + $0xfc] sm:$0xf]
  %v97 = vld [vmem:[%s1 + $0x100] sm:$0xf]
  %v98 = vld [vmem:[%s1 + $0x104] sm:$0xf]
  %v99 = vld [vmem:[%s1 + $0x108] sm:$0xf]
  %v100 = vld [vmem:[%s1 + $0x10c] sm:$0xf]
  %v101 = vld [vmem:[%s1 + $0x110] sm:$0xf]
  %v102 = vld [vmem:[%s1 + $0x114] sm:$0xf]
  %v103 = vld [vmem:[%s1 + $0x118] sm:$0xf]
  %v104 = vld [vmem:[%s1 + $0x11c] sm:$0xf]
  %v105 = vld [vmem:[%s2] sm:$0x1]
  %v107 = vperm.slane %v105, 0
  %v127 = vunpack.c.l.b16 %v15
  %v128 = vunpack.c.h.b16 %v15
  %v129 = vunpack.c.l.b16 %v16
  %v130 = vunpack.c.h.b16 %v16
  %v131 = vunpack.c.l.b16 %v17
  %v132 = vunpack.c.l.b16 %v18
  %v133 = vunpack.c.h.b16 %v18
  %v134 = vunpack.c.l.b16 %v19
  %v135 = vunpack.c.h.b16 %v19
  %v136 = vunpack.c.l.b16 %v20
  %v137 = vunpack.c.l.b16 %v21
  %v138 = vunpack.c.h.b16 %v21
  %v139 = vunpack.c.l.b16 %v22
  %v140 = vunpack.c.h.b16 %v22
  %v141 = vunpack.c.l.b16 %v23
  %v142 = vunpack.c.l.b16 %v24
  %v143 = vunpack.c.h.b16 %v24
  %v144 = vunpack.c.l.b16 %v25
  %v145 = vunpack.c.h.b16 %v25
  %v146 = vunpack.c.l.b16 %v26
  %v147 = vunpack.c.l.b16 %v27
  %v148 = vunpack.c.h.b16 %v27
  %v149 = vunpack.c.l.b16 %v28
  %v150 = vunpack.c.h.b16 %v28
  %v151 = vunpack.c.l.b16 %v29
  %v152 = vunpack.c.l.b16 %v30
  %v153 = vunpack.c.h.b16 %v30
  %v154 = vunpack.c.l.b16 %v31
  %v155 = vunpack.c.h.b16 %v31
  %v156 = vunpack.c.l.b16 %v32
  %v157 = vpack.c.b16 %v132, %v127
  %v158 = vpack.c.b16 %v133, %v128
  %v159 = vpack.c.b16 %v134, %v129
  %v160 = vpack.c.b16 %v135, %v130
  %v161 = vpack.c.b16 %v136, %v131
  %v162 = vpack.c.b16 %v142, %v137
  %v163 = vpack.c.b16 %v143, %v138
  %v164 = vpack.c.b16 %v144, %v139
  %v165 = vpack.c.b16 %v145, %v140
  %v166 = vpack.c.b16 %v146, %v141
  %v167 = vpack.c.b16 %v152, %v147
  %v168 = vpack.c.b16 %v153, %v148
  %v169 = vpack.c.b16 %v154, %v149
  %v170 = vpack.c.b16 %v155, %v150
  %v171 = vpack.c.b16 %v156, %v151
  %v256 = vunpack.c.l.b16 %v33
  %v257 = vunpack.c.l.b16 %v34
  %v258 = vunpack.c.l.b16 %v35
  %v259 = vunpack.c.l.b16 %v36
  %v260 = vunpack.c.l.b16 %v37
  %v261 = vunpack.c.l.b16 %v38
  %v262 = vunpack.c.l.b16 %v39
  %v263 = vunpack.c.l.b16 %v40
  %v264 = vunpack.c.l.b16 %v41
  %v265 = vunpack.c.l.b16 %v42
  %v266 = vunpack.c.l.b16 %v43
  %v267 = vunpack.c.l.b16 %v44
  %v268 = vunpack.c.l.b16 %v45
  %v269 = vunpack.c.l.b16 %v46
  %v270 = vunpack.c.l.b16 %v47
  %v271 = vunpack.c.l.b16 %v48
  %v272 = vunpack.c.l.b16 %v49
  %v273 = vunpack.c.l.b16 %v50
  %v274 = vunpack.c.l.b16 %v51
  %v275 = vunpack.c.l.b16 %v52
  %v276 = vunpack.c.l.b16 %v53
  %v277 = vunpack.c.l.b16 %v54
  %v278 = vunpack.c.l.b16 %v55
  %v279 = vunpack.c.l.b16 %v56
  %v280 = vunpack.c.l.b16 %v57
  %v281 = vunpack.c.l.b16 %v58
  %v282 = vunpack.c.l.b16 %v59
  %v283 = vunpack.c.l.b16 %v60
  %v284 = vunpack.c.l.b16 %v61
  %v285 = vunpack.c.l.b16 %v62
  %v286 = vunpack.c.l.b16 %v63
  %v287 = vunpack.c.l.b16 %v64
  %v288 = vunpack.c.l.b16 %v65
  %v289 = vunpack.c.l.b16 %v66
  %v290 = vunpack.c.l.b16 %v67
  %v291 = vunpack.c.l.b16 %v68
  %v292 = vunpack.c.l.b16 %v69
  %v293 = vunpack.c.l.b16 %v70
  %v294 = vunpack.c.l.b16 %v71
  %v295 = vunpack.c.l.b16 %v72
  %v296 = vunpack.c.l.b16 %v73
  %v297 = vunpack.c.l.b16 %v74
  %v298 = vunpack.c.l.b16 %v75
  %v299 = vunpack.c.l.b16 %v76
  %v300 = vunpack.c.l.b16 %v77
  %v301 = vunpack.c.l.b16 %v78
  %v302 = vunpack.c.l.b16 %v79
  %v303 = vunpack.c.l.b16 %v80
  %v304 = vunpack.c.l.b16 %v81
  %v305 = vunpack.c.l.b16 %v82
  %v306 = vunpack.c.l.b16 %v83
  %v307 = vunpack.c.l.b16 %v84
  %v308 = vunpack.c.l.b16 %v85
  %v309 = vunpack.c.l.b16 %v86
  %v310 = vunpack.c.l.b16 %v87
  %v311 = vunpack.c.l.b16 %v88
  %v312 = vunpack.c.l.b16 %v89
  %v313 = vunpack.c.l.b16 %v90
  %v314 = vunpack.c.l.b16 %v91
  %v315 = vunpack.c.l.b16 %v92
  %v316 = vunpack.c.l.b16 %v93
  %v317 = vunpack.c.l.b16 %v94
  %v318 = vunpack.c.l.b16 %v95
  %v319 = vunpack.c.l.b16 %v96
  %v320 = vunpack.c.l.b16 %v97
  %v321 = vunpack.c.l.b16 %v98
  %v322 = vunpack.c.l.b16 %v99
  %v323 = vunpack.c.l.b16 %v100
  %v324 = vunpack.c.l.b16 %v101
  %v325 = vunpack.c.l.b16 %v102
  %v326 = vunpack.c.l.b16 %v103
  %v327 = vunpack.c.l.b16 %v104
  %v328 = vpack.c.b16 %v257, %v256
  %v329 = vpack.c.b16 %v259, %v258
  %v330 = vpack.c.b16 %v261, %v260
  %v331 = vpack.c.b16 %v263, %v262
  %v332 = vpack.c.b16 %v265, %v264
  %v333 = vpack.c.b16 %v267, %v266
  %v334 = vpack.c.b16 %v269, %v268
  %v335 = vpack.c.b16 %v271, %v270
  %v336 = vpack.c.b16 %v273, %v272
  %v337 = vpack.c.b16 %v275, %v274
  %v338 = vpack.c.b16 %v277, %v276
  %v339 = vpack.c.b16 %v279, %v278
  %v340 = vpack.c.b16 %v281, %v280
  %v341 = vpack.c.b16 %v283, %v282
  %v342 = vpack.c.b16 %v285, %v284
  %v343 = vpack.c.b16 %v287, %v286
  %v344 = vpack.c.b16 %v289, %v288
  %v345 = vpack.c.b16 %v291, %v290
  %v346 = vpack.c.b16 %v293, %v292
  %v347 = vpack.c.b16 %v295, %v294
  %v348 = vpack.c.b16 %v297, %v296
  %v349 = vpack.c.b16 %v299, %v298
  %v350 = vpack.c.b16 %v301, %v300
  %v351 = vpack.c.b16 %v303, %v302
  %v352 = vpack.c.b16 %v305, %v304
  %v353 = vpack.c.b16 %v307, %v306
  %v354 = vpack.c.b16 %v309, %v308
  %v355 = vpack.c.b16 %v311, %v310
  %v356 = vpack.c.b16 %v313, %v312
  %v357 = vpack.c.b16 %v315, %v314
  %v358 = vpack.c.b16 %v317, %v316
  %v359 = vpack.c.b16 %v319, %v318
  %v360 = vpack.c.b16 %v321, %v320
  %v361 = vpack.c.b16 %v323, %v322
  %v362 = vpack.c.b16 %v325, %v324
  %v363 = vpack.c.b16 %v327, %v326
  %vm400 = vcmask 523264
  %v402 = vsel %vm400, %v161, 0
  %v405 = vsel %vm400, %v166, 0
  %v408 = vsel %vm400, %v171, 0
  %410 = vmatpush.bf16.msra.mxu0 %v335
  %411 = vmatpush.bf16.msra.mxu0 %v334
  %412 = vmatpush.bf16.msra.mxu0 %v333
  %413 = vmatpush.bf16.msra.mxu0 %v332
  %414 = vmatpush.bf16.msra.mxu0 %v331
  %415 = vmatpush.bf16.msra.mxu0 %v330
  %416 = vmatpush.bf16.msra.mxu0 %v329
  %417 = vmatpush.bf16.msra.mxu0 %v328
  %418 = vmatmul.bf16.gmra.mxu0 %v157
  %v419 = vpop.f32.mrf.mxu0
  %v420 = vadd.f32 %v107, %v419
  %v421 = vpop.f32.mrf.mxu0
  %v422 = vadd.f32 %v107, %v421
  %423 = vmatmul.bf16.gmra.mxu0 %v162
  %v424 = vpop.f32.mrf.mxu0
  %v425 = vadd.f32 %v107, %v424
  %v426 = vpop.f32.mrf.mxu0
  %v427 = vadd.f32 %v107, %v426
  %428 = vmatmul.bf16.gmra.mxu0 %v167
  %v429 = vpop.f32.mrf.mxu0
  %v430 = vadd.f32 %v107, %v429
  %v431 = vpop.f32.mrf.mxu0
  %v432 = vadd.f32 %v107, %v431
  %433 = vdwg.mxu0
  %434 = vmatpush.bf16.msra.mxu0 %v343
  %435 = vmatpush.bf16.msra.mxu0 %v342
  %436 = vmatpush.bf16.msra.mxu0 %v341
  %437 = vmatpush.bf16.msra.mxu0 %v340
  %438 = vmatpush.bf16.msra.mxu0 %v339
  %439 = vmatpush.bf16.msra.mxu0 %v338
  %440 = vmatpush.bf16.msra.mxu0 %v337
  %441 = vmatpush.bf16.msra.mxu0 %v336
  %442 = vmatmul.bf16.gmra.mxu0 %v158
  %v443 = vpop.f32.mrf.mxu0
  %v444 = vadd.f32 %v420, %v443
  %v445 = vpop.f32.mrf.mxu0
  %v446 = vadd.f32 %v422, %v445
  %447 = vmatmul.bf16.gmra.mxu0 %v163
  %v448 = vpop.f32.mrf.mxu0
  %v449 = vadd.f32 %v425, %v448
  %v450 = vpop.f32.mrf.mxu0
  %v451 = vadd.f32 %v427, %v450
  %452 = vmatmul.bf16.gmra.mxu0 %v168
  %v453 = vpop.f32.mrf.mxu0
  %v454 = vadd.f32 %v430, %v453
  %v455 = vpop.f32.mrf.mxu0
  %v456 = vadd.f32 %v432, %v455
  %457 = vdwg.mxu0
  %458 = vmatpush.bf16.msra.mxu0 %v351
  %459 = vmatpush.bf16.msra.mxu0 %v350
  %460 = vmatpush.bf16.msra.mxu0 %v349
  %461 = vmatpush.bf16.msra.mxu0 %v348
  %462 = vmatpush.bf16.msra.mxu0 %v347
  %463 = vmatpush.bf16.msra.mxu0 %v346
  %464 = vmatpush.bf16.msra.mxu0 %v345
  %465 = vmatpush.bf16.msra.mxu0 %v344
  %466 = vmatmul.bf16.gmra.mxu0 %v159
  %v467 = vpop.f32.mrf.mxu0
  %v468 = vadd.f32 %v444, %v467
  %v469 = vpop.f32.mrf.mxu0
  %v470 = vadd.f32 %v446, %v469
  %471 = vmatmul.bf16.gmra.mxu0 %v164
  %v472 = vpop.f32.mrf.mxu0
  %v473 = vadd.f32 %v449, %v472
  %v474 = vpop.f32.mrf.mxu0
  %v475 = vadd.f32 %v451, %v474
  %476 = vmatmul.bf16.gmra.mxu0 %v169
  %v477 = vpop.f32.mrf.mxu0
  %v478 = vadd.f32 %v454, %v477
  %v479 = vpop.f32.mrf.mxu0
  %v480 = vadd.f32 %v456, %v479
  %481 = vdwg.mxu0
  %482 = vmatpush.bf16.msra.mxu0 %v359
  %483 = vmatpush.bf16.msra.mxu0 %v358
  %484 = vmatpush.bf16.msra.mxu0 %v357
  %485 = vmatpush.bf16.msra.mxu0 %v356
  %486 = vmatpush.bf16.msra.mxu0 %v355
  %487 = vmatpush.bf16.msra.mxu0 %v354
  %488 = vmatpush.bf16.msra.mxu0 %v353
  %489 = vmatpush.bf16.msra.mxu0 %v352
  %490 = vmatmul.bf16.gmra.mxu0 %v160
  %v491 = vpop.f32.mrf.mxu0
  %v492 = vadd.f32 %v468, %v491
  %v493 = vpop.f32.mrf.mxu0
  %v494 = vadd.f32 %v470, %v493
  %495 = vmatmul.bf16.gmra.mxu0 %v165
  %v496 = vpop.f32.mrf.mxu0
  %v497 = vadd.f32 %v473, %v496
  %v498 = vpop.f32.mrf.mxu0
  %v499 = vadd.f32 %v475, %v498
  %500 = vmatmul.bf16.gmra.mxu0 %v170
  %v501 = vpop.f32.mrf.mxu0
  %v502 = vadd.f32 %v478, %v501
  %v503 = vpop.f32.mrf.mxu0
  %v504 = vadd.f32 %v480, %v503
  %505 = vdwg.mxu0
  %506 = vmatpush.bf16.msra.mxu0 0
  %507 = vmatpush.bf16.msra.mxu0 0
  %508 = vmatpush.bf16.msra.mxu0 0
  %509 = vmatpush.bf16.msra.mxu0 0
  %510 = vmatpush.bf16.msra.mxu0 %v363
  %511 = vmatpush.bf16.msra.mxu0 %v362
  %512 = vmatpush.bf16.msra.mxu0 %v361
  %513 = vmatpush.bf16.msra.mxu0 %v360
  %514 = vmatmul.bf16.gmra.mxu0 %v402
  %v515 = vpop.f32.mrf.mxu0
  %v516 = vadd.f32 %v492, %v515
  %v517 = vpop.f32.mrf.mxu0
  %v518 = vadd.f32 %v494, %v517
  %519 = vmatmul.bf16.gmra.mxu0 %v405
  %v520 = vpop.f32.mrf.mxu0
  %v521 = vadd.f32 %v497, %v520
  %v522 = vpop.f32.mrf.mxu0
  %v523 = vadd.f32 %v499, %v522
  %524 = vmatmul.bf16.gmra.mxu0 %v408
  %v525 = vpop.f32.mrf.mxu0
  %v526 = vadd.f32 %v502, %v525
  %v527 = vpop.f32.mrf.mxu0
  %v528 = vadd.f32 %v504, %v527
  %529 = vdwg.mxu0
  %v530 = vmax.f32 %v516, 0.0
  %v531 = vmax.f32 %v518, 0.0
  %v532 = vmax.f32 %v521, 0.0
  %v533 = vmax.f32 %v523, 0.0
  %v534 = vmax.f32 %v526, 0.0
  %v535 = vmax.f32 %v528, 0.0
  %v536 = vpack.c.bf16 %v530, %v530
  %v537 = vpack.c.bf16 %v531, %v531
  %v538 = vpack.c.bf16 %v532, %v532
  %v539 = vpack.c.bf16 %v533, %v533
  %v540 = vpack.c.bf16 %v534, %v534
  %v541 = vpack.c.bf16 %v535, %v535
  %542 = vst [vmem:[%s3] sm:$0xf] %v536
  %543 = vst [vmem:[%s3 + $0x4] sm:$0xf] %v537
  %544 = vst [vmem:[%s3 + $0x8] sm:$0xf] %v538
  %545 = vst [vmem:[%s3 + $0xc] sm:$0xf] %v539
  %546 = vst [vmem:[%s3 + $0x10] sm:$0xf] %v540
  %547 = vst [vmem:[%s3 + $0x14] sm:$0xf] %v541
  // Predicated region
  $region14: #{pilotnet_forward.10} parent=0 // pred_check
    _
  $region15: #{pilotnet_forward.10} parent=0 // pred_check_branch
    %549 = sbr.rel (0) target = $region17
  $region16: #{pilotnet_forward.10} parent=0 // pred_region
    _
  $region17: #{pilotnet_forward.10} parent=0 // pred_fallthru
    _
  // Predicated region
  $region18: #{pilotnet_forward.10} parent=0 // pred_check
    _
  $region19: #{pilotnet_forward.10} parent=0 // pred_check_branch
    %551 = sbr.rel (0) target = $region21
  $region20: #{pilotnet_forward.10} parent=0 // pred_region
    _
  $region21: #{pilotnet_forward.10} parent=0 // pred_fallthru
    _

// kernel: pilotnet_forward.11
$region0: #{pilotnet_forward.11}
  #allocation0 [shape = 'u32[]', space=smem, size = 0x4, offset = 0x4, fixed_abs, tag = 'smem constant byte address 0x4 - core index']
  #allocation1 [shape = 'u32[72,128]{1,0:T(1,128)}', space=vmem, size = 0x9000, scoped, tag = 'internal scratch']
  %s0 = inlined_call_operand.vmem [shape: bf16[8,1152], index: 0, kind: input, shape index: {}]
  %s1 = inlined_call_operand.vmem [shape: bf16[1152,1280], index: 1, kind: input, shape index: {}]
  %s2 = inlined_call_operand.vmem [shape: f32[1,1280], index: 2, kind: input, shape index: {}]
  %s3 = inlined_call_operand.vmem [shape: bf16[1280,128], index: 3, kind: input, shape index: {}]
  %s4 = inlined_call_operand.vmem [shape: f32[1,128], index: 4, kind: input, shape index: {}]
  %s5 = inlined_call_operand.vmem [shape: bf16[128,128], index: 5, kind: input, shape index: {}]
  %s6 = inlined_call_operand.vmem [shape: f32[1,128], index: 6, kind: input, shape index: {}]
  %s7 = inlined_call_operand.vmem [shape: bf16[128,128], index: 7, kind: input, shape index: {}]
  %s8 = inlined_call_operand.vmem [shape: f32[1,128], index: 8, kind: input, shape index: {}]
  %s9 = inlined_call_operand.vmem [shape: bf16[128,128], index: 9, kind: input, shape index: {}]
  %s10 = inlined_call_operand.vmem [shape: f32[1,128], index: 10, kind: input, shape index: {}]
  %s11 = inlined_call_operand.vmem [shape: f32[8,128], index: 11, kind: output, shape index: {}]
  %s12 = sld [smem:[#allocation0]]
  $region54: #{pilotnet_forward.11} parent=0
    _
  %s14 = ssub.s32 1, %s12
  %s15 = scalar_select 0, %s14, %s12
  // Predicated region
  $region2: #{pilotnet_forward.11} parent=0 // pred_check
    _
  $region3: #{pilotnet_forward.11} parent=0 // pred_check_branch
    %17 = sbr.rel (0) target = $region5
  $region4: #{pilotnet_forward.11} parent=0 // pred_region
    _
  $region5: #{pilotnet_forward.11} parent=0 // pred_fallthru
    _
  // Predicated region
  $region6: #{pilotnet_forward.11} parent=0 // pred_check
    _
  $region7: #{pilotnet_forward.11} parent=0 // pred_check_branch
    %19 = sbr.rel (0) target = $region9
  $region8: #{pilotnet_forward.11} parent=0 // pred_region
    _
  $region9: #{pilotnet_forward.11} parent=0 // pred_fallthru
    _
  // Predicated region
  $region10: #{pilotnet_forward.11} parent=0 // pred_check
    _
  $region11: #{pilotnet_forward.11} parent=0 // pred_check_branch
    %21 = sbr.rel (0) target = $region13
  $region12: #{pilotnet_forward.11} parent=0 // pred_region
    _
  $region13: #{pilotnet_forward.11} parent=0 // pred_fallthru
    _
  // Predicated region
  $region14: #{pilotnet_forward.11} parent=0 // pred_check
    _
  $region15: #{pilotnet_forward.11} parent=0 // pred_check_branch
    %23 = sbr.rel (0) target = $region17
  $region16: #{pilotnet_forward.11} parent=0 // pred_region
    _
  $region17: #{pilotnet_forward.11} parent=0 // pred_fallthru
    _
  // Predicated region
  $region18: #{pilotnet_forward.11} parent=0 // pred_check
    _
  $region19: #{pilotnet_forward.11} parent=0 // pred_check_branch
    %25 = sbr.rel (0) target = $region21
  $region20: #{pilotnet_forward.11} parent=0 // pred_region
    _
  $region21: #{pilotnet_forward.11} parent=0 // pred_fallthru
    _
  // Predicated region
  $region22: #{pilotnet_forward.11} parent=0 // pred_check
    _
  $region23: #{pilotnet_forward.11} parent=0 // pred_check_branch
    %27 = sbr.rel (0) target = $region25
  $region24: #{pilotnet_forward.11} parent=0 // pred_region
    _
  $region25: #{pilotnet_forward.11} parent=0 // pred_fallthru
    _
  // Predicated region
  $region26: #{pilotnet_forward.11} parent=0 // pred_check
    _
  $region27: #{pilotnet_forward.11} parent=0 // pred_check_branch
    %29 = sbr.rel (0) target = $region29
  $region28: #{pilotnet_forward.11} parent=0 // pred_region
    _
  $region29: #{pilotnet_forward.11} parent=0 // pred_fallthru
    _
  // Predicated region
  $region30: #{pilotnet_forward.11} parent=0 // pred_check
    _
  $region31: #{pilotnet_forward.11} parent=0 // pred_check_branch
    %31 = sbr.rel (0) target = $region33
  $region32: #{pilotnet_forward.11} parent=0 // pred_region
    _
  $region33: #{pilotnet_forward.11} parent=0 // pred_fallthru
    _
  // Predicated region
  $region34: #{pilotnet_forward.11} parent=0 // pred_check
    _
  $region35: #{pilotnet_forward.11} parent=0 // pred_check_branch
    %33 = sbr.rel (0) target = $region37
  $region36: #{pilotnet_forward.11} parent=0 // pred_region
    _
  $region37: #{pilotnet_forward.11} parent=0 // pred_fallthru
    _
  // Predicated region
  $region38: #{pilotnet_forward.11} parent=0 // pred_check
    _
  $region39: #{pilotnet_forward.11} parent=0 // pred_check_branch
    %35 = sbr.rel (0) target = $region41
  $region40: #{pilotnet_forward.11} parent=0 // pred_region
    _
  $region41: #{pilotnet_forward.11} parent=0 // pred_fallthru
    _
  // Predicated region
  $region42: #{pilotnet_forward.11} parent=0 // pred_check
    _
  $region43: #{pilotnet_forward.11} parent=0 // pred_check_branch
    %37 = sbr.rel (0) target = $region45
  $region44: #{pilotnet_forward.11} parent=0 // pred_region
    _
  $region45: #{pilotnet_forward.11} parent=0 // pred_fallthru
    _
  %v38 = vld [vmem:[%s0] sm:$0xff]
  %v39 = vld [vmem:[%s0 + $0x8] sm:$0xff]
  %v40 = vld [vmem:[%s0 + $0x10] sm:$0xff]
  %v41 = vld [vmem:[%s0 + $0x18] sm:$0xff]
  %v42 = vld [vmem:[%s0 + $0x20] sm:$0xf]
  %v43 = vld [vmem:[%s1] sm:$0xff]
  %v44 = vld [vmem:[%s1 + $0x8] sm:$0xff]
  %v45 = vld [vmem:[%s1 + $0x10] sm:$0xff]
  %v46 = vld [vmem:[%s1 + $0x18] sm:$0xff]
  %v47 = vld [vmem:[%s1 + $0x20] sm:$0xff]
  %v48 = vld [vmem:[%s1 + $0x28] sm:$0xff]
  %v49 = vld [vmem:[%s1 + $0x30] sm:$0xff]
  %v50 = vld [vmem:[%s1 + $0x38] sm:$0xff]
  %v51 = vld [vmem:[%s1 + $0x40] sm:$0xff]
  %v52 = vld [vmem:[%s1 + $0x48] sm:$0xff]
  %v53 = vld [vmem:[%s1 + $0x50] sm:$0xff]
  %v54 = vld [vmem:[%s1 + $0x58] sm:$0xff]
  %v55 = vld [vmem:[%s1 + $0x60] sm:$0xff]
  %v56 = vld [vmem:[%s1 + $0x68] sm:$0xff]
  %v57 = vld [vmem:[%s1 + $0x70] sm:$0xff]
  %v58 = vld [vmem:[%s1 + $0x78] sm:$0xff]
  %v59 = vld [vmem:[%s1 + $0x80] sm:$0xff]
  %v60 = vld [vmem:[%s1 + $0x88] sm:$0xff]
  %v61 = vld [vmem:[%s1 + $0x90] sm:$0xff]
  %v62 = vld [vmem:[%s1 + $0x98] sm:$0xff]
  %v63 = vld [vmem:[%s1 + $0xa0] sm:$0xff]
  %v64 = vld [vmem:[%s1 + $0xa8] sm:$0xff]
  %v65 = vld [vmem:[%s1 + $0xb0] sm:$0xff]
  %v66 = vld [vmem:[%s1 + $0xb8] sm:$0xff]
  %v67 = vld [vmem:[%s1 + $0xc0] sm:$0xff]
  %v68 = vld [vmem:[%s1 + $0xc8] sm:$0xff]
  %v69 = vld [vmem:[%s1 + $0xd0] sm:$0xff]
  %v70 = vld [vmem:[%s1 + $0xd8] sm:$0xff]
  %v71 = vld [vmem:[%s1 + $0xe0] sm:$0xff]
  %v72 = vld [vmem:[%s1 + $0xe8] sm:$0xff]
  %v73 = vld [vmem:[%s1 + $0xf0] sm:$0xff]
  %v74 = vld [vmem:[%s1 + $0xf8] sm:$0xff]
  %v75 = vld [vmem:[%s1 + $0x100] sm:$0xff]
  %v76 = vld [vmem:[%s1 + $0x108] sm:$0xff]
  %v77 = vld [vmem:[%s1 + $0x110] sm:$0xff]
  %v78 = vld [vmem:[%s1 + $0x118] sm:$0xff]
  %v79 = vld [vmem:[%s1 + $0x120] sm:$0xff]
  %v80 = vld [vmem:[%s1 + $0x128] sm:$0xff]
  %v81 = vld [vmem:[%s1 + $0x130] sm:$0xff]
  %v82 = vld [vmem:[%s1 + $0x138] sm:$0xff]
  %v83 = vld [vmem:[%s1 + $0x140] sm:$0xff]
  %v84 = vld [vmem:[%s1 + $0x148] sm:$0xff]
  %v85 = vld [vmem:[%s1 + $0x150] sm:$0xff]
  %v86 = vld [vmem:[%s1 + $0x158] sm:$0xff]
  %v87 = vld [vmem:[%s1 + $0x160] sm:$0xff]
  %v88 = vld [vmem:[%s1 + $0x168] sm:$0xff]
  %v89 = vld [vmem:[%s1 + $0x170] sm:$0xff]
  %v90 = vld [vmem:[%s1 + $0x178] sm:$0xff]
  %v91 = vld [vmem:[%s1 + $0x180] sm:$0xff]
  %v92 = vld [vmem:[%s1 + $0x188] sm:$0xff]
  %v93 = vld [vmem:[%s1 + $0x190] sm:$0xff]
  %v94 = vld [vmem:[%s1 + $0x198] sm:$0xff]
  %v95 = vld [vmem:[%s1 + $0x1a0] sm:$0xff]
  %v96 = vld [vmem:[%s1 + $0x1a8] sm:$0xff]
  %v97 = vld [vmem:[%s1 + $0x1b0] sm:$0xff]
  %v98 = vld [vmem:[%s1 + $0x1b8] sm:$0xff]
  %v99 = vld [vmem:[%s1 + $0x1c0] sm:$0xff]
  %v100 = vld [vmem:[%s1 + $0x1c8] sm:$0xff]
  %v101 = vld [vmem:[%s1 + $0x1d0] sm:$0xff]
  %v102 = vld [vmem:[%s1 + $0x1d8] sm:$0xff]
  %v103 = vld [vmem:[%s1 + $0x1e0] sm:$0xff]
  %v104 = vld [vmem:[%s1 + $0x1e8] sm:$0xff]
  %v105 = vld [vmem:[%s1 + $0x1f0] sm:$0xff]
  %v106 = vld [vmem:[%s1 + $0x1f8] sm:$0xff]
  %v107 = vld [vmem:[%s1 + $0x200] sm:$0xff]
  %v108 = vld [vmem:[%s1 + $0x208] sm:$0xff]
  %v109 = vld [vmem:[%s1 + $0x210] sm:$0xff]
  %v110 = vld [vmem:[%s1 + $0x218] sm:$0xff]
  %v111 = vld [vmem:[%s1 + $0x220] sm:$0xff]
  %v112 = vld [vmem:[%s1 + $0x228] sm:$0xff]
  %v113 = vld [vmem:[%s1 + $0x230] sm:$0xff]
  %v114 = vld [vmem:[%s1 + $0x238] sm:$0xff]
  %v115 = vld [vmem:[%s1 + $0x240] sm:$0xff]
  %v116 = vld [vmem:[%s1 + $0x248] sm:$0xff]
  %v117 = vld [vmem:[%s1 + $0x250] sm:$0xff]
  %v118 = vld [vmem:[%s1 + $0x258] sm:$0xff]
  %v119 = vld [vmem:[%s1 + $0x260] sm:$0xff]
  %v120 = vld [vmem:[%s1 + $0x268] sm:$0xff]
  %v121 = vld [vmem:[%s1 + $0x270] sm:$0xff]
  %v122 = vld [vmem:[%s1 + $0x278] sm:$0xff]
  %v123 = vld [vmem:[%s1 + $0x280] sm:$0xff]
  %v124 = vld [vmem:[%s1 + $0x288] sm:$0xff]
  %v125 = vld [vmem:[%s1 + $0x290] sm:$0xff]
  %v126 = vld [vmem:[%s1 + $0x298] sm:$0xff]
  %v127 = vld [vmem:[%s1 + $0x2a0] sm:$0xff]
  %v128 = vld [vmem:[%s1 + $0x2a8] sm:$0xff]
  %v129 = vld [vmem:[%s1 + $0x2b0] sm:$0xff]
  %v130 = vld [vmem:[%s1 + $0x2b8] sm:$0xff]
  %v131 = vld [vmem:[%s1 + $0x2c0] sm:$0xff]
  %v132 = vld [vmem:[%s1 + $0x2c8] sm:$0xff]
  %v133 = vld [vmem:[%s1 + $0x2d0] sm:$0xff]
  %v134 = vld [vmem:[%s1 + $0x2d8] sm:$0xff]
  %v135 = vld [vmem:[%s1 + $0x2e0] sm:$0xff]
  %v136 = vld [vmem:[%s1 + $0x2e8] sm:$0xff]
  %v137 = vld [vmem:[%s1 + $0x2f0] sm:$0xff]
  %v138 = vld [vmem:[%s1 + $0x2f8] sm:$0xff]
  %v139 = vld [vmem:[%s1 + $0x300] sm:$0xff]
  %v140 = vld [vmem:[%s1 + $0x308] sm:$0xff]
  %v141 = vld [vmem:[%s1 + $0x310] sm:$0xff]
  %v142 = vld [vmem:[%s1 + $0x318] sm:$0xff]
  %v143 = vld [vmem:[%s1 + $0x320] sm:$0xff]
  %v144 = vld [vmem:[%s1 + $0x328] sm:$0xff]
  %v145 = vld [vmem:[%s1 + $0x330] sm:$0xff]
  %v146 = vld [vmem:[%s1 + $0x338] sm:$0xff]
  %v147 = vld [vmem:[%s1 + $0x340] sm:$0xff]
  %v148 = vld [vmem:[%s1 + $0x348] sm:$0xff]
  %v149 = vld [vmem:[%s1 + $0x350] sm:$0xff]
  %v150 = vld [vmem:[%s1 + $0x358] sm:$0xff]
  %v151 = vld [vmem:[%s1 + $0x360] sm:$0xff]
  %v152 = vld [vmem:[%s1 + $0x368] sm:$0xff]
  %v153 = vld [vmem:[%s1 + $0x370] sm:$0xff]
  %v154 = vld [vmem:[%s1 + $0x378] sm:$0xff]
  %v155 = vld [vmem:[%s1 + $0x380] sm:$0xff]
  %v156 = vld [vmem:[%s1 + $0x388] sm:$0xff]
  %v157 = vld [vmem:[%s1 + $0x390] sm:$0xff]
  %v158 = vld [vmem:[%s1 + $0x398] sm:$0xff]
  %v159 = vld [vmem:[%s1 + $0x3a0] sm:$0xff]
  %v160 = vld [vmem:[%s1 + $0x3a8] sm:$0xff]
  %v161 = vld [vmem:[%s1 + $0x3b0] sm:$0xff]
  %v162 = vld [vmem:[%s1 + $0x3b8] sm:$0xff]
  %v163 = vld [vmem:[%s1 + $0x3c0] sm:$0xff]
  %v164 = vld [vmem:[%s1 + $0x3c8] sm:$0xff]
  %v165 = vld [vmem:[%s1 + $0x3d0] sm:$0xff]
  %v166 = vld [vmem:[%s1 + $0x3d8] sm:$0xff]
  %v167 = vld [vmem:[%s1 + $0x3e0] sm:$0xff]
  %v168 = vld [vmem:[%s1 + $0x3e8] sm:$0xff]
  %v169 = vld [vmem:[%s1 + $0x3f0] sm:$0xff]
  %v170 = vld [vmem:[%s1 + $0x3f8] sm:$0xff]
  %v171 = vld [vmem:[%s1 + $0x400] sm:$0xff]
  %v172 = vld [vmem:[%s1 + $0x408] sm:$0xff]
  %v173 = vld [vmem:[%s1 + $0x410] sm:$0xff]
  %v174 = vld [vmem:[%s1 + $0x418] sm:$0xff]
  %v175 = vld [vmem:[%s1 + $0x420] sm:$0xff]
  %v176 = vld [vmem:[%s1 + $0x428] sm:$0xff]
  %v177 = vld [vmem:[%s1 + $0x430] sm:$0xff]
  %v178 = vld [vmem:[%s1 + $0x438] sm:$0xff]
  %v179 = vld [vmem:[%s1 + $0x440] sm:$0xff]
  %v180 = vld [vmem:[%s1 + $0x448] sm:$0xff]
  %v181 = vld [vmem:[%s1 + $0x450] sm:$0xff]
  %v182 = vld [vmem:[%s1 + $0x458] sm:$0xff]
  %v183 = vld [vmem:[%s1 + $0x460] sm:$0xff]
  %v184 = vld [vmem:[%s1 + $0x468] sm:$0xff]
  %v185 = vld [vmem:[%s1 + $0x470] sm:$0xff]
  %v186 = vld [vmem:[%s1 + $0x478] sm:$0xff]
  %v187 = vld [vmem:[%s1 + $0x480] sm:$0xff]
  %v188 = vld [vmem:[%s1 + $0x488] sm:$0xff]
  %v189 = vld [vmem:[%s1 + $0x490] sm:$0xff]
  %v190 = vld [vmem:[%s1 + $0x498] sm:$0xff]
  %v191 = vld [vmem:[%s1 + $0x4a0] sm:$0xff]
  %v192 = vld [vmem:[%s1 + $0x4a8] sm:$0xff]
  %v193 = vld [vmem:[%s1 + $0x4b0] sm:$0xff]
  %v194 = vld [vmem:[%s1 + $0x4b8] sm:$0xff]
  %v195 = vld [vmem:[%s1 + $0x4c0] sm:$0xff]
  %v196 = vld [vmem:[%s1 + $0x4c8] sm:$0xff]
  %v197 = vld [vmem:[%s1 + $0x4d0] sm:$0xff]
  %v198 = vld [vmem:[%s1 + $0x4d8] sm:$0xff]
  %v199 = vld [vmem:[%s1 + $0x4e0] sm:$0xff]
  %v200 = vld [vmem:[%s1 + $0x4e8] sm:$0xff]
  %v201 = vld [vmem:[%s1 + $0x4f0] sm:$0xff]
  %v202 = vld [vmem:[%s1 + $0x4f8] sm:$0xff]
  %v203 = vld [vmem:[%s1 + $0x500] sm:$0xff]
  %v204 = vld [vmem:[%s1 + $0x508] sm:$0xff]
  %v205 = vld [vmem:[%s1 + $0x510] sm:$0xff]
  %v206 = vld [vmem:[%s1 + $0x518] sm:$0xff]
  %v207 = vld [vmem:[%s1 + $0x520] sm:$0xff]
  %v208 = vld [vmem:[%s1 + $0x528] sm:$0xff]
  %v209 = vld [vmem:[%s1 + $0x530] sm:$0xff]
  %v210 = vld [vmem:[%s1 + $0x538] sm:$0xff]
  %v211 = vld [vmem:[%s1 + $0x540] sm:$0xff]
  %v212 = vld [vmem:[%s1 + $0x548] sm:$0xff]
  %v213 = vld [vmem:[%s1 + $0x550] sm:$0xff]
  %v214 = vld [vmem:[%s1 + $0x558] sm:$0xff]
  %v215 = vld [vmem:[%s1 + $0x560] sm:$0xff]
  %v216 = vld [vmem:[%s1 + $0x568] sm:$0xff]
  %v217 = vld [vmem:[%s1 + $0x570] sm:$0xff]
  %v218 = vld [vmem:[%s1 + $0x578] sm:$0xff]
  %v219 = vld [vmem:[%s1 + $0x580] sm:$0xff]
  %v220 = vld [vmem:[%s1 + $0x588] sm:$0xff]
  %v221 = vld [vmem:[%s1 + $0x590] sm:$0xff]
  %v222 = vld [vmem:[%s1 + $0x598] sm:$0xff]
  %v223 = vld [vmem:[%s1 + $0x5a0] sm:$0xff]
  %v224 = vld [vmem:[%s1 + $0x5a8] sm:$0xff]
  %v225 = vld [vmem:[%s1 + $0x5b0] sm:$0xff]
  %v226 = vld [vmem:[%s1 + $0x5b8] sm:$0xff]
  %v227 = vld [vmem:[%s1 + $0x5c0] sm:$0xff]
  %v228 = vld [vmem:[%s1 + $0x5c8] sm:$0xff]
  %v229 = vld [vmem:[%s1 + $0x5d0] sm:$0xff]
  %v230 = vld [vmem:[%s1 + $0x5d8] sm:$0xff]
  %v231 = vld [vmem:[%s1 + $0x5e0] sm:$0xff]
  %v232 = vld [vmem:[%s1 + $0x5e8] sm:$0xff]
  %v233 = vld [vmem:[%s1 + $0x5f0] sm:$0xff]
  %v234 = vld [vmem:[%s1 + $0x5f8] sm:$0xff]
  %v235 = vld [vmem:[%s1 + $0x600] sm:$0xff]
  %v236 = vld [vmem:[%s1 + $0x608] sm:$0xff]
  %v237 = vld [vmem:[%s1 + $0x610] sm:$0xff]
  %v238 = vld [vmem:[%s1 + $0x618] sm:$0xff]
  %v239 = vld [vmem:[%s1 + $0x620] sm:$0xff]
  %v240 = vld [vmem:[%s1 + $0x628] sm:$0xff]
  %v241 = vld [vmem:[%s1 + $0x630] sm:$0xff]
  %v242 = vld [vmem:[%s1 + $0x638] sm:$0xff]
  %v243 = vld [vmem:[%s1 + $0x640] sm:$0xff]
  %v244 = vld [vmem:[%s1 + $0x648] sm:$0xff]
  %v245 = vld [vmem:[%s1 + $0x650] sm:$0xff]
  %v246 = vld [vmem:[%s1 + $0x658] sm:$0xff]
  %v247 = vld [vmem:[%s1 + $0x660] sm:$0xff]
  %v248 = vld [vmem:[%s1 + $0x668] sm:$0xff]
  %v249 = vld [vmem:[%s1 + $0x670] sm:$0xff]
  %v250 = vld [vmem:[%s1 + $0x678] sm:$0xff]
  %v251 = vld [vmem:[%s1 + $0x680] sm:$0xff]
  %v252 = vld [vmem:[%s1 + $0x688] sm:$0xff]
  %v253 = vld [vmem:[%s1 + $0x690] sm:$0xff]
  %v254 = vld [vmem:[%s1 + $0x698] sm:$0xff]
  %v255 = vld [vmem:[%s1 + $0x6a0] sm:$0xff]
  %v256 = vld [vmem:[%s1 + $0x6a8] sm:$0xff]
  %v257 = vld [vmem:[%s1 + $0x6b0] sm:$0xff]
  %v258 = vld [vmem:[%s1 + $0x6b8] sm:$0xff]
  %v259 = vld [vmem:[%s1 + $0x6c0] sm:$0xff]
  %v260 = vld [vmem:[%s1 + $0x6c8] sm:$0xff]
  %v261 = vld [vmem:[%s1 + $0x6d0] sm:$0xff]
  %v262 = vld [vmem:[%s1 + $0x6d8] sm:$0xff]
  %v263 = vld [vmem:[%s1 + $0x6e0] sm:$0xff]
  %v264 = vld [vmem:[%s1 + $0x6e8] sm:$0xff]
  %v265 = vld [vmem:[%s1 + $0x6f0] sm:$0xff]
  %v266 = vld [vmem:[%s1 + $0x6f8] sm:$0xff]
  %v267 = vld [vmem:[%s1 + $0x700] sm:$0xff]
  %v268 = vld [vmem:[%s1 + $0x708] sm:$0xff]
  %v269 = vld [vmem:[%s1 + $0x710] sm:$0xff]
  %v270 = vld [vmem:[%s1 + $0x718] sm:$0xff]
  %v271 = vld [vmem:[%s1 + $0x720] sm:$0xff]
  %v272 = vld [vmem:[%s1 + $0x728] sm:$0xff]
  %v273 = vld [vmem:[%s1 + $0x730] sm:$0xff]
  %v274 = vld [vmem:[%s1 + $0x738] sm:$0xff]
  %v275 = vld [vmem:[%s1 + $0x740] sm:$0xff]
  %v276 = vld [vmem:[%s1 + $0x748] sm:$0xff]
  %v277 = vld [vmem:[%s1 + $0x750] sm:$0xff]
  %v278 = vld [vmem:[%s1 + $0x758] sm:$0xff]
  %v279 = vld [vmem:[%s1 + $0x760] sm:$0xff]
  %v280 = vld [vmem:[%s1 + $0x768] sm:$0xff]
  %v281 = vld [vmem:[%s1 + $0x770] sm:$0xff]
  %v282 = vld [vmem:[%s1 + $0x778] sm:$0xff]
  %v283 = vld [vmem:[%s1 + $0x780] sm:$0xff]
  %v284 = vld [vmem:[%s1 + $0x788] sm:$0xff]
  %v285 = vld [vmem:[%s1 + $0x790] sm:$0xff]
  %v286 = vld [vmem:[%s1 + $0x798] sm:$0xff]
  %v287 = vld [vmem:[%s1 + $0x7a0] sm:$0xff]
  %v288 = vld [vmem:[%s1 + $0x7a8] sm:$0xff]
  %v289 = vld [vmem:[%s1 + $0x7b0] sm:$0xff]
  %v290 = vld [vmem:[%s1 + $0x7b8] sm:$0xff]
  %v291 = vld [vmem:[%s1 + $0x7c0] sm:$0xff]
  %v292 = vld [vmem:[%s1 + $0x7c8] sm:$0xff]
  %v293 = vld [vmem:[%s1 + $0x7d0] sm:$0xff]
  %v294 = vld [vmem:[%s1 + $0x7d8] sm:$0xff]
  %v295 = vld [vmem:[%s1 + $0x7e0] sm:$0xff]
  %v296 = vld [vmem:[%s1 + $0x7e8] sm:$0xff]
  %v297 = vld [vmem:[%s1 + $0x7f0] sm:$0xff]
  %v298 = vld [vmem:[%s1 + $0x7f8] sm:$0xff]
  %v299 = vld [vmem:[%s1 + $0x800] sm:$0xff]
  %v300 = vld [vmem:[%s1 + $0x808] sm:$0xff]
  %v301 = vld [vmem:[%s1 + $0x810] sm:$0xff]
  %v302 = vld [vmem:[%s1 + $0x818] sm:$0xff]
  %v303 = vld [vmem:[%s1 + $0x820] sm:$0xff]
  %v304 = vld [vmem:[%s1 + $0x828] sm:$0xff]
  %v305 = vld [vmem:[%s1 + $0x830] sm:$0xff]
  %v306 = vld [vmem:[%s1 + $0x838] sm:$0xff]
  %v307 = vld [vmem:[%s1 + $0x840] sm:$0xff]
  %v308 = vld [vmem:[%s1 + $0x848] sm:$0xff]
  %v309 = vld [vmem:[%s1 + $0x850] sm:$0xff]
  %v310 = vld [vmem:[%s1 + $0x858] sm:$0xff]
  %v311 = vld [vmem:[%s1 + $0x860] sm:$0xff]
  %v312 = vld [vmem:[%s1 + $0x868] sm:$0xff]
  %v313 = vld [vmem:[%s1 + $0x870] sm:$0xff]
  %v314 = vld [vmem:[%s1 + $0x878] sm:$0xff]
  %v315 = vld [vmem:[%s1 + $0x880] sm:$0xff]
  %v316 = vld [vmem:[%s1 + $0x888] sm:$0xff]
  %v317 = vld [vmem:[%s1 + $0x890] sm:$0xff]
  %v318 = vld [vmem:[%s1 + $0x898] sm:$0xff]
  %v319 = vld [vmem:[%s1 + $0x8a0] sm:$0xff]
  %v320 = vld [vmem:[%s1 + $0x8a8] sm:$0xff]
  %v321 = vld [vmem:[%s1 + $0x8b0] sm:$0xff]
  %v322 = vld [vmem:[%s1 + $0x8b8] sm:$0xff]
  %v323 = vld [vmem:[%s1 + $0x8c0] sm:$0xff]
  %v324 = vld [vmem:[%s1 + $0x8c8] sm:$0xff]
  %v325 = vld [vmem:[%s1 + $0x8d0] sm:$0xff]
  %v326 = vld [vmem:[%s1 + $0x8d8] sm:$0xff]
  %v327 = vld [vmem:[%s1 + $0x8e0] sm:$0xff]
  %v328 = vld [vmem:[%s1 + $0x8e8] sm:$0xff]
  %v329 = vld [vmem:[%s1 + $0x8f0] sm:$0xff]
  %v330 = vld [vmem:[%s1 + $0x8f8] sm:$0xff]
  %v331 = vld [vmem:[%s1 + $0x900] sm:$0xff]
  %v332 = vld [vmem:[%s1 + $0x908] sm:$0xff]
  %v333 = vld [vmem:[%s1 + $0x910] sm:$0xff]
  %v334 = vld [vmem:[%s1 + $0x918] sm:$0xff]
  %v335 = vld [vmem:[%s1 + $0x920] sm:$0xff]
  %v336 = vld [vmem:[%s1 + $0x928] sm:$0xff]
  %v337 = vld [vmem:[%s1 + $0x930] sm:$0xff]
  %v338 = vld [vmem:[%s1 + $0x938] sm:$0xff]
  %v339 = vld [vmem:[%s1 + $0x940] sm:$0xff]
  %v340 = vld [vmem:[%s1 + $0x948] sm:$0xff]
  %v341 = vld [vmem:[%s1 + $0x950] sm:$0xff]
  %v342 = vld [vmem:[%s1 + $0x958] sm:$0xff]
  %v343 = vld [vmem:[%s1 + $0x960] sm:$0xff]
  %v344 = vld [vmem:[%s1 + $0x968] sm:$0xff]
  %v345 = vld [vmem:[%s1 + $0x970] sm:$0xff]
  %v346 = vld [vmem:[%s1 + $0x978] sm:$0xff]
  %v347 = vld [vmem:[%s1 + $0x980] sm:$0xff]
  %v348 = vld [vmem:[%s1 + $0x988] sm:$0xff]
  %v349 = vld [vmem:[%s1 + $0x990] sm:$0xff]
  %v350 = vld [vmem:[%s1 + $0x998] sm:$0xff]
  %v351 = vld [vmem:[%s1 + $0x9a0] sm:$0xff]
  %v352 = vld [vmem:[%s1 + $0x9a8] sm:$0xff]
  %v353 = vld [vmem:[%s1 + $0x9b0] sm:$0xff]
  %v354 = vld [vmem:[%s1 + $0x9b8] sm:$0xff]
  %v355 = vld [vmem:[%s1 + $0x9c0] sm:$0xff]
  %v356 = vld [vmem:[%s1 + $0x9c8] sm:$0xff]
  %v357 = vld [vmem:[%s1 + $0x9d0] sm:$0xff]
  %v358 = vld [vmem:[%s1 + $0x9d8] sm:$0xff]
  %v359 = vld [vmem:[%s1 + $0x9e0] sm:$0xff]
  %v360 = vld [vmem:[%s1 + $0x9e8] sm:$0xff]
  %v361 = vld [vmem:[%s1 + $0x9f0] sm:$0xff]
  %v362 = vld [vmem:[%s1 + $0x9f8] sm:$0xff]
  %v363 = vld [vmem:[%s1 + $0xa00] sm:$0xff]
  %v364 = vld [vmem:[%s1 + $0xa08] sm:$0xff]
  %v365 = vld [vmem:[%s1 + $0xa10] sm:$0xff]
  %v366 = vld [vmem:[%s1 + $0xa18] sm:$0xff]
  %v367 = vld [vmem:[%s1 + $0xa20] sm:$0xff]
  %v368 = vld [vmem:[%s1 + $0xa28] sm:$0xff]
  %v369 = vld [vmem:[%s1 + $0xa30] sm:$0xff]
  %v370 = vld [vmem:[%s1 + $0xa38] sm:$0xff]
  %v371 = vld [vmem:[%s1 + $0xa40] sm:$0xff]
  %v372 = vld [vmem:[%s1 + $0xa48] sm:$0xff]
  %v373 = vld [vmem:[%s1 + $0xa50] sm:$0xff]
  %v374 = vld [vmem:[%s1 + $0xa58] sm:$0xff]
  %v375 = vld [vmem:[%s1 + $0xa60] sm:$0xff]
  %v376 = vld [vmem:[%s1 + $0xa68] sm:$0xff]
  %v377 = vld [vmem:[%s1 + $0xa70] sm:$0xff]
  %v378 = vld [vmem:[%s1 + $0xa78] sm:$0xff]
  %v379 = vld [vmem:[%s1 + $0xa80] sm:$0xff]
  %v380 = vld [vmem:[%s1 + $0xa88] sm:$0xff]
  %v381 = vld [vmem:[%s1 + $0xa90] sm:$0xff]
  %v382 = vld [vmem:[%s1 + $0xa98] sm:$0xff]
  %v383 = vld [vmem:[%s1 + $0xaa0] sm:$0xff]
  %v384 = vld [vmem:[%s1 + $0xaa8] sm:$0xff]
  %v385 = vld [vmem:[%s1 + $0xab0] sm:$0xff]
  %v386 = vld [vmem:[%s1 + $0xab8] sm:$0xff]
  %v387 = vld [vmem:[%s1 + $0xac0] sm:$0xff]
  %v388 = vld [vmem:[%s1 + $0xac8] sm:$0xff]
  %v389 = vld [vmem:[%s1 + $0xad0] sm:$0xff]
  %v390 = vld [vmem:[%s1 + $0xad8] sm:$0xff]
  %v391 = vld [vmem:[%s1 + $0xae0] sm:$0xff]
  %v392 = vld [vmem:[%s1 + $0xae8] sm:$0xff]
  %v393 = vld [vmem:[%s1 + $0xaf0] sm:$0xff]
  %v394 = vld [vmem:[%s1 + $0xaf8] sm:$0xff]
  %v395 = vld [vmem:[%s1 + $0xb00] sm:$0xff]
  %v396 = vld [vmem:[%s1 + $0xb08] sm:$0xff]
  %v397 = vld [vmem:[%s1 + $0xb10] sm:$0xff]
  %v398 = vld [vmem:[%s1 + $0xb18] sm:$0xff]
  %v399 = vld [vmem:[%s1 + $0xb20] sm:$0xff]
  %v400 = vld [vmem:[%s1 + $0xb28] sm:$0xff]
  %v401 = vld [vmem:[%s1 + $0xb30] sm:$0xff]
  %v402 = vld [vmem:[%s1 + $0xb38] sm:$0xff]
  %v403 = vld [vmem:[%s1 + $0xb40] sm:$0xff]
  %v404 = vld [vmem:[%s1 + $0xb48] sm:$0xff]
  %v405 = vld [vmem:[%s1 + $0xb50] sm:$0xff]
  %v406 = vld [vmem:[%s1 + $0xb58] sm:$0xff]
  %v407 = vld [vmem:[%s1 + $0xb60] sm:$0xff]
  %v408 = vld [vmem:[%s1 + $0xb68] sm:$0xff]
  %v409 = vld [vmem:[%s1 + $0xb70] sm:$0xff]
  %v410 = vld [vmem:[%s1 + $0xb78] sm:$0xff]
  %v411 = vld [vmem:[%s1 + $0xb80] sm:$0xff]
  %v412 = vld [vmem:[%s1 + $0xb88] sm:$0xff]
  %v413 = vld [vmem:[%s1 + $0xb90] sm:$0xff]
  %v414 = vld [vmem:[%s1 + $0xb98] sm:$0xff]
  %v415 = vld [vmem:[%s1 + $0xba0] sm:$0xff]
  %v416 = vld [vmem:[%s1 + $0xba8] sm:$0xff]
  %v417 = vld [vmem:[%s1 + $0xbb0] sm:$0xff]
  %v418 = vld [vmem:[%s1 + $0xbb8] sm:$0xff]
  %v419 = vld [vmem:[%s1 + $0xbc0] sm:$0xff]
  %v420 = vld [vmem:[%s1 + $0xbc8] sm:$0xff]
  %v421 = vld [vmem:[%s1 + $0xbd0] sm:$0xff]
  %v422 = vld [vmem:[%s1 + $0xbd8] sm:$0xff]
  %v423 = vld [vmem:[%s1 + $0xbe0] sm:$0xff]
  %v424 = vld [vmem:[%s1 + $0xbe8] sm:$0xff]
  %v425 = vld [vmem:[%s1 + $0xbf0] sm:$0xff]
  %v426 = vld [vmem:[%s1 + $0xbf8] sm:$0xff]
  %v427 = vld [vmem:[%s1 + $0xc00] sm:$0xff]
  %v428 = vld [vmem:[%s1 + $0xc08] sm:$0xff]
  %v429 = vld [vmem:[%s1 + $0xc10] sm:$0xff]
  %v430 = vld [vmem:[%s1 + $0xc18] sm:$0xff]
  %v431 = vld [vmem:[%s1 + $0xc20] sm:$0xff]
  %v432 = vld [vmem:[%s1 + $0xc28] sm:$0xff]
  %v433 = vld [vmem:[%s1 + $0xc30] sm:$0xff]
  %v434 = vld [vmem:[%s1 + $0xc38] sm:$0xff]
  %v435 = vld [vmem:[%s1 + $0xc40] sm:$0xff]
  %v436 = vld [vmem:[%s1 + $0xc48] sm:$0xff]
  %v437 = vld [vmem:[%s1 + $0xc50] sm:$0xff]
  %v438 = vld [vmem:[%s1 + $0xc58] sm:$0xff]
  %v439 = vld [vmem:[%s1 + $0xc60] sm:$0xff]
  %v440 = vld [vmem:[%s1 + $0xc68] sm:$0xff]
  %v441 = vld [vmem:[%s1 + $0xc70] sm:$0xff]
  %v442 = vld [vmem:[%s1 + $0xc78] sm:$0xff]
  %v443 = vld [vmem:[%s1 + $0xc80] sm:$0xff]
  %v444 = vld [vmem:[%s1 + $0xc88] sm:$0xff]
  %v445 = vld [vmem:[%s1 + $0xc90] sm:$0xff]
  %v446 = vld [vmem:[%s1 + $0xc98] sm:$0xff]
  %v447 = vld [vmem:[%s1 + $0xca0] sm:$0xff]
  %v448 = vld [vmem:[%s1 + $0xca8] sm:$0xff]
  %v449 = vld [vmem:[%s1 + $0xcb0] sm:$0xff]
  %v450 = vld [vmem:[%s1 + $0xcb8] sm:$0xff]
  %v451 = vld [vmem:[%s1 + $0xcc0] sm:$0xff]
  %v452 = vld [vmem:[%s1 + $0xcc8] sm:$0xff]
  %v453 = vld [vmem:[%s1 + $0xcd0] sm:$0xff]
  %v454 = vld [vmem:[%s1 + $0xcd8] sm:$0xff]
  %v455 = vld [vmem:[%s1 + $0xce0] sm:$0xff]
  %v456 = vld [vmem:[%s1 + $0xce8] sm:$0xff]
  %v457 = vld [vmem:[%s1 + $0xcf0] sm:$0xff]
  %v458 = vld [vmem:[%s1 + $0xcf8] sm:$0xff]
  %v459 = vld [vmem:[%s1 + $0xd00] sm:$0xff]
  %v460 = vld [vmem:[%s1 + $0xd08] sm:$0xff]
  %v461 = vld [vmem:[%s1 + $0xd10] sm:$0xff]
  %v462 = vld [vmem:[%s1 + $0xd18] sm:$0xff]
  %v463 = vld [vmem:[%s1 + $0xd20] sm:$0xff]
  %v464 = vld [vmem:[%s1 + $0xd28] sm:$0xff]
  %v465 = vld [vmem:[%s1 + $0xd30] sm:$0xff]
  %v466 = vld [vmem:[%s1 + $0xd38] sm:$0xff]
  %v467 = vld [vmem:[%s1 + $0xd40] sm:$0xff]
  %v468 = vld [vmem:[%s1 + $0xd48] sm:$0xff]
  %v469 = vld [vmem:[%s1 + $0xd50] sm:$0xff]
  %v470 = vld [vmem:[%s1 + $0xd58] sm:$0xff]
  %v471 = vld [vmem:[%s1 + $0xd60] sm:$0xff]
  %v472 = vld [vmem:[%s1 + $0xd68] sm:$0xff]
  %v473 = vld [vmem:[%s1 + $0xd70] sm:$0xff]
  %v474 = vld [vmem:[%s1 + $0xd78] sm:$0xff]
  %v475 = vld [vmem:[%s1 + $0xd80] sm:$0xff]
  %v476 = vld [vmem:[%s1 + $0xd88] sm:$0xff]
  %v477 = vld [vmem:[%s1 + $0xd90] sm:$0xff]
  %v478 = vld [vmem:[%s1 + $0xd98] sm:$0xff]
  %v479 = vld [vmem:[%s1 + $0xda0] sm:$0xff]
  %v480 = vld [vmem:[%s1 + $0xda8] sm:$0xff]
  %v481 = vld [vmem:[%s1 + $0xdb0] sm:$0xff]
  %v482 = vld [vmem:[%s1 + $0xdb8] sm:$0xff]
  %v483 = vld [vmem:[%s1 + $0xdc0] sm:$0xff]
  %v484 = vld [vmem:[%s1 + $0xdc8] sm:$0xff]
  %v485 = vld [vmem:[%s1 + $0xdd0] sm:$0xff]
  %v486 = vld [vmem:[%s1 + $0xdd8] sm:$0xff]
  %v487 = vld [vmem:[%s1 + $0xde0] sm:$0xff]
  %v488 = vld [vmem:[%s1 + $0xde8] sm:$0xff]
  %v489 = vld [vmem:[%s1 + $0xdf0] sm:$0xff]
  %v490 = vld [vmem:[%s1 + $0xdf8] sm:$0xff]
  %v491 = vld [vmem:[%s1 + $0xe00] sm:$0xff]
  %v492 = vld [vmem:[%s1 + $0xe08] sm:$0xff]
  %v493 = vld [vmem:[%s1 + $0xe10] sm:$0xff]
  %v494 = vld [vmem:[%s1 + $0xe18] sm:$0xff]
  %v495 = vld [vmem:[%s1 + $0xe20] sm:$0xff]
  %v496 = vld [vmem:[%s1 + $0xe28] sm:$0xff]
  %v497 = vld [vmem:[%s1 + $0xe30] sm:$0xff]
  %v498 = vld [vmem:[%s1 + $0xe38] sm:$0xff]
  %v499 = vld [vmem:[%s1 + $0xe40] sm:$0xff]
  %v500 = vld [vmem:[%s1 + $0xe48] sm:$0xff]
  %v501 = vld [vmem:[%s1 + $0xe50] sm:$0xff]
  %v502 = vld [vmem:[%s1 + $0xe58] sm:$0xff]
  %v503 = vld [vmem:[%s1 + $0xe60] sm:$0xff]
  %v504 = vld [vmem:[%s1 + $0xe68] sm:$0xff]
  %v505 = vld [vmem:[%s1 + $0xe70] sm:$0xff]
  %v506 = vld [vmem:[%s1 + $0xe78] sm:$0xff]
  %v507 = vld [vmem:[%s1 + $0xe80] sm:$0xff]
  %v508 = vld [vmem:[%s1 + $0xe88] sm:$0xff]
  %v509 = vld [vmem:[%s1 + $0xe90] sm:$0xff]
  %v510 = vld [vmem:[%s1 + $0xe98] sm:$0xff]
  %v511 = vld [vmem:[%s1 + $0xea0] sm:$0xff]
  %v512 = vld [vmem:[%s1 + $0xea8] sm:$0xff]
  %v513 = vld [vmem:[%s1 + $0xeb0] sm:$0xff]
  %v514 = vld [vmem:[%s1 + $0xeb8] sm:$0xff]
  %v515 = vld [vmem:[%s1 + $0xec0] sm:$0xff]
  %v516 = vld [vmem:[%s1 + $0xec8] sm:$0xff]
  %v517 = vld [vmem:[%s1 + $0xed0] sm:$0xff]
  %v518 = vld [vmem:[%s1 + $0xed8] sm:$0xff]
  %v519 = vld [vmem:[%s1 + $0xee0] sm:$0xff]
  %v520 = vld [vmem:[%s1 + $0xee8] sm:$0xff]
  %v521 = vld [vmem:[%s1 + $0xef0] sm:$0xff]
  %v522 = vld [vmem:[%s1 + $0xef8] sm:$0xff]
  %v523 = vld [vmem:[%s1 + $0xf00] sm:$0xff]
  %v524 = vld [vmem:[%s1 + $0xf08] sm:$0xff]
  %v525 = vld [vmem:[%s1 + $0xf10] sm:$0xff]
  %v526 = vld [vmem:[%s1 + $0xf18] sm:$0xff]
  %v527 = vld [vmem:[%s1 + $0xf20] sm:$0xff]
  %v528 = vld [vmem:[%s1 + $0xf28] sm:$0xff]
  %v529 = vld [vmem:[%s1 + $0xf30] sm:$0xff]
  %v530 = vld [vmem:[%s1 + $0xf38] sm:$0xff]
  %v531 = vld [vmem:[%s1 + $0xf40] sm:$0xff]
  %v532 = vld [vmem:[%s1 + $0xf48] sm:$0xff]
  %v533 = vld [vmem:[%s1 + $0xf50] sm:$0xff]
  %v534 = vld [vmem:[%s1 + $0xf58] sm:$0xff]
  %v535 = vld [vmem:[%s1 + $0xf60] sm:$0xff]
  %v536 = vld [vmem:[%s1 + $0xf68] sm:$0xff]
  %v537 = vld [vmem:[%s1 + $0xf70] sm:$0xff]
  %v538 = vld [vmem:[%s1 + $0xf78] sm:$0xff]
  %v539 = vld [vmem:[%s1 + $0xf80] sm:$0xff]
  %v540 = vld [vmem:[%s1 + $0xf88] sm:$0xff]
  %v541 = vld [vmem:[%s1 + $0xf90] sm:$0xff]
  %v542 = vld [vmem:[%s1 + $0xf98] sm:$0xff]
  %v543 = vld [vmem:[%s1 + $0xfa0] sm:$0xff]
  %v544 = vld [vmem:[%s1 + $0xfa8] sm:$0xff]
  %v545 = vld [vmem:[%s1 + $0xfb0] sm:$0xff]
  %v546 = vld [vmem:[%s1 + $0xfb8] sm:$0xff]
  %v547 = vld [vmem:[%s1 + $0xfc0] sm:$0xff]
  %v548 = vld [vmem:[%s1 + $0xfc8] sm:$0xff]
  %v549 = vld [vmem:[%s1 + $0xfd0] sm:$0xff]
  %v550 = vld [vmem:[%s1 + $0xfd8] sm:$0xff]
  %v551 = vld [vmem:[%s1 + $0xfe0] sm:$0xff]
  %v552 = vld [vmem:[%s1 + $0xfe8] sm:$0xff]
  %v553 = vld [vmem:[%s1 + $0xff0] sm:$0xff]
  %v554 = vld [vmem:[%s1 + $0xff8] sm:$0xff]
  %v555 = vld [vmem:[%s1 + $0x1000] sm:$0xff]
  %v556 = vld [vmem:[%s1 + $0x1008] sm:$0xff]
  %v557 = vld [vmem:[%s1 + $0x1010] sm:$0xff]
  %v558 = vld [vmem:[%s1 + $0x1018] sm:$0xff]
  %v559 = vld [vmem:[%s1 + $0x1020] sm:$0xff]
  %v560 = vld [vmem:[%s1 + $0x1028] sm:$0xff]
  %v561 = vld [vmem:[%s1 + $0x1030] sm:$0xff]
  %v562 = vld [vmem:[%s1 + $0x1038] sm:$0xff]
  %v563 = vld [vmem:[%s1 + $0x1040] sm:$0xff]
  %v564 = vld [vmem:[%s1 + $0x1048] sm:$0xff]
  %v565 = vld [vmem:[%s1 + $0x1050] sm:$0xff]
  %v566 = vld [vmem:[%s1 + $0x1058] sm:$0xff]
  %v567 = vld [vmem:[%s1 + $0x1060] sm:$0xff]
  %v568 = vld [vmem:[%s1 + $0x1068] sm:$0xff]
  %v569 = vld [vmem:[%s1 + $0x1070] sm:$0xff]
  %v570 = vld [vmem:[%s1 + $0x1078] sm:$0xff]
  %v571 = vld [vmem:[%s1 + $0x1080] sm:$0xff]
  %v572 = vld [vmem:[%s1 + $0x1088] sm:$0xff]
  %v573 = vld [vmem:[%s1 + $0x1090] sm:$0xff]
  %v574 = vld [vmem:[%s1 + $0x1098] sm:$0xff]
  %v575 = vld [vmem:[%s1 + $0x10a0] sm:$0xff]
  %v576 = vld [vmem:[%s1 + $0x10a8] sm:$0xff]
  %v577 = vld [vmem:[%s1 + $0x10b0] sm:$0xff]
  %v578 = vld [vmem:[%s1 + $0x10b8] sm:$0xff]
  %v579 = vld [vmem:[%s1 + $0x10c0] sm:$0xff]
  %v580 = vld [vmem:[%s1 + $0x10c8] sm:$0xff]
  %v581 = vld [vmem:[%s1 + $0x10d0] sm:$0xff]
  %v582 = vld [vmem:[%s1 + $0x10d8] sm:$0xff]
  %v583 = vld [vmem:[%s1 + $0x10e0] sm:$0xff]
  %v584 = vld [vmem:[%s1 + $0x10e8] sm:$0xff]
  %v585 = vld [vmem:[%s1 + $0x10f0] sm:$0xff]
  %v586 = vld [vmem:[%s1 + $0x10f8] sm:$0xff]
  %v587 = vld [vmem:[%s1 + $0x1100] sm:$0xff]
  %v588 = vld [vmem:[%s1 + $0x1108] sm:$0xff]
  %v589 = vld [vmem:[%s1 + $0x1110] sm:$0xff]
  %v590 = vld [vmem:[%s1 + $0x1118] sm:$0xff]
  %v591 = vld [vmem:[%s1 + $0x1120] sm:$0xff]
  %v592 = vld [vmem:[%s1 + $0x1128] sm:$0xff]
  %v593 = vld [vmem:[%s1 + $0x1130] sm:$0xff]
  %v594 = vld [vmem:[%s1 + $0x1138] sm:$0xff]
  %v595 = vld [vmem:[%s1 + $0x1140] sm:$0xff]
  %v596 = vld [vmem:[%s1 + $0x1148] sm:$0xff]
  %v597 = vld [vmem:[%s1 + $0x1150] sm:$0xff]
  %v598 = vld [vmem:[%s1 + $0x1158] sm:$0xff]
  %v599 = vld [vmem:[%s1 + $0x1160] sm:$0xff]
  %v600 = vld [vmem:[%s1 + $0x1168] sm:$0xff]
  %v601 = vld [vmem:[%s1 + $0x1170] sm:$0xff]
  %v602 = vld [vmem:[%s1 + $0x1178] sm:$0xff]
  %v603 = vld [vmem:[%s1 + $0x1180] sm:$0xff]
  %v604 = vld [vmem:[%s1 + $0x1188] sm:$0xff]
  %v605 = vld [vmem:[%s1 + $0x1190] sm:$0xff]
  %v606 = vld [vmem:[%s1 + $0x1198] sm:$0xff]
  %v607 = vld [vmem:[%s1 + $0x11a0] sm:$0xff]
  %v608 = vld [vmem:[%s1 + $0x11a8] sm:$0xff]
  %v609 = vld [vmem:[%s1 + $0x11b0] sm:$0xff]
  %v610 = vld [vmem:[%s1 + $0x11b8] sm:$0xff]
  %v611 = vld [vmem:[%s1 + $0x11c0] sm:$0xff]
  %v612 = vld [vmem:[%s1 + $0x11c8] sm:$0xff]
  %v613 = vld [vmem:[%s1 + $0x11d0] sm:$0xff]
  %v614 = vld [vmem:[%s1 + $0x11d8] sm:$0xff]
  %v615 = vld [vmem:[%s1 + $0x11e0] sm:$0xff]
  %v616 = vld [vmem:[%s1 + $0x11e8] sm:$0xff]
  %v617 = vld [vmem:[%s1 + $0x11f0] sm:$0xff]
  %v618 = vld [vmem:[%s1 + $0x11f8] sm:$0xff]
  %v619 = vld [vmem:[%s1 + $0x1200] sm:$0xff]
  %v620 = vld [vmem:[%s1 + $0x1208] sm:$0xff]
  %v621 = vld [vmem:[%s1 + $0x1210] sm:$0xff]
  %v622 = vld [vmem:[%s1 + $0x1218] sm:$0xff]
  %v623 = vld [vmem:[%s1 + $0x1220] sm:$0xff]
  %v624 = vld [vmem:[%s1 + $0x1228] sm:$0xff]
  %v625 = vld [vmem:[%s1 + $0x1230] sm:$0xff]
  %v626 = vld [vmem:[%s1 + $0x1238] sm:$0xff]
  %v627 = vld [vmem:[%s1 + $0x1240] sm:$0xff]
  %v628 = vld [vmem:[%s1 + $0x1248] sm:$0xff]
  %v629 = vld [vmem:[%s1 + $0x1250] sm:$0xff]
  %v630 = vld [vmem:[%s1 + $0x1258] sm:$0xff]
  %v631 = vld [vmem:[%s1 + $0x1260] sm:$0xff]
  %v632 = vld [vmem:[%s1 + $0x1268] sm:$0xff]
  %v633 = vld [vmem:[%s1 + $0x1270] sm:$0xff]
  %v634 = vld [vmem:[%s1 + $0x1278] sm:$0xff]
  %v635 = vld [vmem:[%s1 + $0x1280] sm:$0xff]
  %v636 = vld [vmem:[%s1 + $0x1288] sm:$0xff]
  %v637 = vld [vmem:[%s1 + $0x1290] sm:$0xff]
  %v638 = vld [vmem:[%s1 + $0x1298] sm:$0xff]
  %v639 = vld [vmem:[%s1 + $0x12a0] sm:$0xff]
  %v640 = vld [vmem:[%s1 + $0x12a8] sm:$0xff]
  %v641 = vld [vmem:[%s1 + $0x12b0] sm:$0xff]
  %v642 = vld [vmem:[%s1 + $0x12b8] sm:$0xff]
  %v643 = vld [vmem:[%s1 + $0x12c0] sm:$0xff]
  %v644 = vld [vmem:[%s1 + $0x12c8] sm:$0xff]
  %v645 = vld [vmem:[%s1 + $0x12d0] sm:$0xff]
  %v646 = vld [vmem:[%s1 + $0x12d8] sm:$0xff]
  %v647 = vld [vmem:[%s1 + $0x12e0] sm:$0xff]
  %v648 = vld [vmem:[%s1 + $0x12e8] sm:$0xff]
  %v649 = vld [vmem:[%s1 + $0x12f0] sm:$0xff]
  %v650 = vld [vmem:[%s1 + $0x12f8] sm:$0xff]
  %v651 = vld [vmem:[%s1 + $0x1300] sm:$0xff]
  %v652 = vld [vmem:[%s1 + $0x1308] sm:$0xff]
  %v653 = vld [vmem:[%s1 + $0x1310] sm:$0xff]
  %v654 = vld [vmem:[%s1 + $0x1318] sm:$0xff]
  %v655 = vld [vmem:[%s1 + $0x1320] sm:$0xff]
  %v656 = vld [vmem:[%s1 + $0x1328] sm:$0xff]
  %v657 = vld [vmem:[%s1 + $0x1330] sm:$0xff]
  %v658 = vld [vmem:[%s1 + $0x1338] sm:$0xff]
  %v659 = vld [vmem:[%s1 + $0x1340] sm:$0xff]
  %v660 = vld [vmem:[%s1 + $0x1348] sm:$0xff]
  %v661 = vld [vmem:[%s1 + $0x1350] sm:$0xff]
  %v662 = vld [vmem:[%s1 + $0x1358] sm:$0xff]
  %v663 = vld [vmem:[%s1 + $0x1360] sm:$0xff]
  %v664 = vld [vmem:[%s1 + $0x1368] sm:$0xff]
  %v665 = vld [vmem:[%s1 + $0x1370] sm:$0xff]
  %v666 = vld [vmem:[%s1 + $0x1378] sm:$0xff]
  %v667 = vld [vmem:[%s1 + $0x1380] sm:$0xff]
  %v668 = vld [vmem:[%s1 + $0x1388] sm:$0xff]
  %v669 = vld [vmem:[%s1 + $0x1390] sm:$0xff]
  %v670 = vld [vmem:[%s1 + $0x1398] sm:$0xff]
  %v671 = vld [vmem:[%s1 + $0x13a0] sm:$0xff]
  %v672 = vld [vmem:[%s1 + $0x13a8] sm:$0xff]
  %v673 = vld [vmem:[%s1 + $0x13b0] sm:$0xff]
  %v674 = vld [vmem:[%s1 + $0x13b8] sm:$0xff]
  %v675 = vld [vmem:[%s1 + $0x13c0] sm:$0xff]
  %v676 = vld [vmem:[%s1 + $0x13c8] sm:$0xff]
  %v677 = vld [vmem:[%s1 + $0x13d0] sm:$0xff]
  %v678 = vld [vmem:[%s1 + $0x13d8] sm:$0xff]
  %v679 = vld [vmem:[%s1 + $0x13e0] sm:$0xff]
  %v680 = vld [vmem:[%s1 + $0x13e8] sm:$0xff]
  %v681 = vld [vmem:[%s1 + $0x13f0] sm:$0xff]
  %v682 = vld [vmem:[%s1 + $0x13f8] sm:$0xff]
  %v683 = vld [vmem:[%s1 + $0x1400] sm:$0xff]
  %v684 = vld [vmem:[%s1 + $0x1408] sm:$0xff]
  %v685 = vld [vmem:[%s1 + $0x1410] sm:$0xff]
  %v686 = vld [vmem:[%s1 + $0x1418] sm:$0xff]
  %v687 = vld [vmem:[%s1 + $0x1420] sm:$0xff]
  %v688 = vld [vmem:[%s1 + $0x1428] sm:$0xff]
  %v689 = vld [vmem:[%s1 + $0x1430] sm:$0xff]
  %v690 = vld [vmem:[%s1 + $0x1438] sm:$0xff]
  %v691 = vld [vmem:[%s1 + $0x1440] sm:$0xff]
  %v692 = vld [vmem:[%s1 + $0x1448] sm:$0xff]
  %v693 = vld [vmem:[%s1 + $0x1450] sm:$0xff]
  %v694 = vld [vmem:[%s1 + $0x1458] sm:$0xff]
  %v695 = vld [vmem:[%s1 + $0x1460] sm:$0xff]
  %v696 = vld [vmem:[%s1 + $0x1468] sm:$0xff]
  %v697 = vld [vmem:[%s1 + $0x1470] sm:$0xff]
  %v698 = vld [vmem:[%s1 + $0x1478] sm:$0xff]
  %v699 = vld [vmem:[%s1 + $0x1480] sm:$0xff]
  %v700 = vld [vmem:[%s1 + $0x1488] sm:$0xff]
  %v701 = vld [vmem:[%s1 + $0x1490] sm:$0xff]
  %v702 = vld [vmem:[%s1 + $0x1498] sm:$0xff]
  %v703 = vld [vmem:[%s1 + $0x14a0] sm:$0xff]
  %v704 = vld [vmem:[%s1 + $0x14a8] sm:$0xff]
  %v705 = vld [vmem:[%s1 + $0x14b0] sm:$0xff]
  %v706 = vld [vmem:[%s1 + $0x14b8] sm:$0xff]
  %v707 = vld [vmem:[%s1 + $0x14c0] sm:$0xff]
  %v708 = vld [vmem:[%s1 + $0x14c8] sm:$0xff]
  %v709 = vld [vmem:[%s1 + $0x14d0] sm:$0xff]
  %v710 = vld [vmem:[%s1 + $0x14d8] sm:$0xff]
  %v711 = vld [vmem:[%s1 + $0x14e0] sm:$0xff]
  %v712 = vld [vmem:[%s1 + $0x14e8] sm:$0xff]
  %v713 = vld [vmem:[%s1 + $0x14f0] sm:$0xff]
  %v714 = vld [vmem:[%s1 + $0x14f8] sm:$0xff]
  %v715 = vld [vmem:[%s1 + $0x1500] sm:$0xff]
  %v716 = vld [vmem:[%s1 + $0x1508] sm:$0xff]
  %v717 = vld [vmem:[%s1 + $0x1510] sm:$0xff]
  %v718 = vld [vmem:[%s1 + $0x1518] sm:$0xff]
  %v719 = vld [vmem:[%s1 + $0x1520] sm:$0xff]
  %v720 = vld [vmem:[%s1 + $0x1528] sm:$0xff]
  %v721 = vld [vmem:[%s1 + $0x1530] sm:$0xff]
  %v722 = vld [vmem:[%s1 + $0x1538] sm:$0xff]
  %v723 = vld [vmem:[%s1 + $0x1540] sm:$0xff]
  %v724 = vld [vmem:[%s1 + $0x1548] sm:$0xff]
  %v725 = vld [vmem:[%s1 + $0x1550] sm:$0xff]
  %v726 = vld [vmem:[%s1 + $0x1558] sm:$0xff]
  %v727 = vld [vmem:[%s1 + $0x1560] sm:$0xff]
  %v728 = vld [vmem:[%s1 + $0x1568] sm:$0xff]
  %v729 = vld [vmem:[%s1 + $0x1570] sm:$0xff]
  %v730 = vld [vmem:[%s1 + $0x1578] sm:$0xff]
  %v731 = vld [vmem:[%s1 + $0x1580] sm:$0xff]
  %v732 = vld [vmem:[%s1 + $0x1588] sm:$0xff]
  %v733 = vld [vmem:[%s1 + $0x1590] sm:$0xff]
  %v734 = vld [vmem:[%s1 + $0x1598] sm:$0xff]
  %v735 = vld [vmem:[%s1 + $0x15a0] sm:$0xff]
  %v736 = vld [vmem:[%s1 + $0x15a8] sm:$0xff]
  %v737 = vld [vmem:[%s1 + $0x15b0] sm:$0xff]
  %v738 = vld [vmem:[%s1 + $0x15b8] sm:$0xff]
  %v739 = vld [vmem:[%s1 + $0x15c0] sm:$0xff]
  %v740 = vld [vmem:[%s1 + $0x15c8] sm:$0xff]
  %v741 = vld [vmem:[%s1 + $0x15d0] sm:$0xff]
  %v742 = vld [vmem:[%s1 + $0x15d8] sm:$0xff]
  %v743 = vld [vmem:[%s1 + $0x15e0] sm:$0xff]
  %v744 = vld [vmem:[%s1 + $0x15e8] sm:$0xff]
  %v745 = vld [vmem:[%s1 + $0x15f0] sm:$0xff]
  %v746 = vld [vmem:[%s1 + $0x15f8] sm:$0xff]
  %v747 = vld [vmem:[%s1 + $0x1600] sm:$0xff]
  %v748 = vld [vmem:[%s1 + $0x1608] sm:$0xff]
  %v749 = vld [vmem:[%s1 + $0x1610] sm:$0xff]
  %v750 = vld [vmem:[%s1 + $0x1618] sm:$0xff]
  %v751 = vld [vmem:[%s1 + $0x1620] sm:$0xff]
  %v752 = vld [vmem:[%s1 + $0x1628] sm:$0xff]
  %v753 = vld [vmem:[%s1 + $0x1630] sm:$0xff]
  %v754 = vld [vmem:[%s1 + $0x1638] sm:$0xff]
  %v755 = vld [vmem:[%s1 + $0x1640] sm:$0xff]
  %v756 = vld [vmem:[%s1 + $0x1648] sm:$0xff]
  %v757 = vld [vmem:[%s1 + $0x1650] sm:$0xff]
  %v758 = vld [vmem:[%s1 + $0x1658] sm:$0xff]
  %v759 = vld [vmem:[%s1 + $0x1660] sm:$0xff]
  %v760 = vld [vmem:[%s1 + $0x1668] sm:$0xff]
  %v761 = vld [vmem:[%s1 + $0x1670] sm:$0xff]
  %v762 = vld [vmem:[%s1 + $0x1678] sm:$0xff]
  %v763 = vld [vmem:[%s2] sm:$0xff]
  %v764 = vld [vmem:[%s2 + $0x8] sm:$0x3]
  %v767 = vperm.slane %v763, 0
  %v768 = vperm.slane %v763, 1
  %v769 = vperm.slane %v763, 2
  %v770 = vperm.slane %v763, 3
  %v771 = vperm.slane %v763, 4
  %v772 = vperm.slane %v763, 5
  %v773 = vperm.slane %v763, 6
  %v774 = vperm.slane %v763, 7
  %v775 = vperm.slane %v764, 0
  %v776 = vperm.slane %v764, 1
  %v792 = vunpack.c.l.b16 %v38
  %v793 = vunpack.c.h.b16 %v38
  %v794 = vunpack.c.l.b16 %v39
  %v795 = vunpack.c.h.b16 %v39
  %v796 = vunpack.c.l.b16 %v40
  %v797 = vunpack.c.h.b16 %v40
  %v798 = vunpack.c.l.b16 %v41
  %v799 = vunpack.c.h.b16 %v41
  %v800 = vunpack.c.l.b16 %v42
  %v801 = vpack.c.b16 %v792, %v792
  %v802 = vpack.c.b16 %v793, %v793
  %v803 = vpack.c.b16 %v794, %v794
  %v804 = vpack.c.b16 %v795, %v795
  %v805 = vpack.c.b16 %v796, %v796
  %v806 = vpack.c.b16 %v797, %v797
  %v807 = vpack.c.b16 %v798, %v798
  %v808 = vpack.c.b16 %v799, %v799
  %v809 = vpack.c.b16 %v800, %v800
  %v1539 = vunpack.c.l.b16 %v43
  %v1540 = vunpack.c.h.b16 %v43
  %v1541 = vunpack.c.l.b16 %v44
  %v1542 = vunpack.c.h.b16 %v44
  %v1543 = vunpack.c.l.b16 %v45
  %v1544 = vunpack.c.h.b16 %v45
  %v1545 = vunpack.c.l.b16 %v46
  %v1546 = vunpack.c.h.b16 %v46
  %v1547 = vunpack.c.l.b16 %v47
  %v1548 = vunpack.c.h.b16 %v47
  %v1549 = vunpack.c.l.b16 %v48
  %v1550 = vunpack.c.h.b16 %v48
  %v1551 = vunpack.c.l.b16 %v49
  %v1552 = vunpack.c.h.b16 %v49
  %v1553 = vunpack.c.l.b16 %v50
  %v1554 = vunpack.c.h.b16 %v50
  %v1555 = vunpack.c.l.b16 %v51
  %v1556 = vunpack.c.h.b16 %v51
  %v1557 = vunpack.c.l.b16 %v52
  %v1558 = vunpack.c.h.b16 %v52
  %v1559 = vunpack.c.l.b16 %v53
  %v1560 = vunpack.c.h.b16 %v53
  %v1561 = vunpack.c.l.b16 %v54
  %v1562 = vunpack.c.h.b16 %v54
  %v1563 = vunpack.c.l.b16 %v55
  %v1564 = vunpack.c.h.b16 %v55
  %v1565 = vunpack.c.l.b16 %v56
  %v1566 = vunpack.c.h.b16 %v56
  %v1567 = vunpack.c.l.b16 %v57
  %v1568 = vunpack.c.h.b16 %v57
  %v1569 = vunpack.c.l.b16 %v58
  %v1570 = vunpack.c.h.b16 %v58
  %v1571 = vunpack.c.l.b16 %v59
  %v1572 = vunpack.c.h.b16 %v59
  %v1573 = vunpack.c.l.b16 %v60
  %v1574 = vunpack.c.h.b16 %v60
  %v1575 = vunpack.c.l.b16 %v61
  %v1576 = vunpack.c.h.b16 %v61
  %v1577 = vunpack.c.l.b16 %v62
  %v1578 = vunpack.c.h.b16 %v62
  %v1579 = vunpack.c.l.b16 %v63
  %v1580 = vunpack.c.h.b16 %v63
  %v1581 = vunpack.c.l.b16 %v64
  %v1582 = vunpack.c.h.b16 %v64
  %v1583 = vunpack.c.l.b16 %v65
  %v1584 = vunpack.c.h.b16 %v65
  %v1585 = vunpack.c.l.b16 %v66
  %v1586 = vunpack.c.h.b16 %v66
  %v1587 = vunpack.c.l.b16 %v67
  %v1588 = vunpack.c.h.b16 %v67
  %v1589 = vunpack.c.l.b16 %v68
  %v1590 = vunpack.c.h.b16 %v68
  %v1591 = vunpack.c.l.b16 %v69
  %v1592 = vunpack.c.h.b16 %v69
  %v1593 = vunpack.c.l.b16 %v70
  %v1594 = vunpack.c.h.b16 %v70
  %v1595 = vunpack.c.l.b16 %v71
  %v1596 = vunpack.c.h.b16 %v71
  %v1597 = vunpack.c.l.b16 %v72
  %v1598 = vunpack.c.h.b16 %v72
  %v1599 = vunpack.c.l.b16 %v73
  %v1600 = vunpack.c.h.b16 %v73
  %v1601 = vunpack.c.l.b16 %v74
  %v1602 = vunpack.c.h.b16 %v74
  %v1603 = vunpack.c.l.b16 %v75
  %v1604 = vunpack.c.h.b16 %v75
  %v1605 = vunpack.c.l.b16 %v76
  %v1606 = vunpack.c.h.b16 %v76
  %v1607 = vunpack.c.l.b16 %v77
  %v1608 = vunpack.c.h.b16 %v77
  %v1609 = vunpack.c.l.b16 %v78
  %v1610 = vunpack.c.h.b16 %v78
  %v1611 = vunpack.c.l.b16 %v79
  %v1612 = vunpack.c.h.b16 %v79
  %v1613 = vunpack.c.l.b16 %v80
  %v1614 = vunpack.c.h.b16 %v80
  %v1615 = vunpack.c.l.b16 %v81
  %v1616 = vunpack.c.h.b16 %v81
  %v1617 = vunpack.c.l.b16 %v82
  %v1618 = vunpack.c.h.b16 %v82
  %v1619 = vunpack.c.l.b16 %v83
  %v1620 = vunpack.c.h.b16 %v83
  %v1621 = vunpack.c.l.b16 %v84
  %v1622 = vunpack.c.h.b16 %v84
  %v1623 = vunpack.c.l.b16 %v85
  %v1624 = vunpack.c.h.b16 %v85
  %v1625 = vunpack.c.l.b16 %v86
  %v1626 = vunpack.c.h.b16 %v86
  %v1627 = vunpack.c.l.b16 %v87
  %v1628 = vunpack.c.h.b16 %v87
  %v1629 = vunpack.c.l.b16 %v88
  %v1630 = vunpack.c.h.b16 %v88
  %v1631 = vunpack.c.l.b16 %v89
  %v1632 = vunpack.c.h.b16 %v89
  %v1633 = vunpack.c.l.b16 %v90
  %v1634 = vunpack.c.h.b16 %v90
  %v1635 = vunpack.c.l.b16 %v91
  %v1636 = vunpack.c.h.b16 %v91
  %v1637 = vunpack.c.l.b16 %v92
  %v1638 = vunpack.c.h.b16 %v92
  %v1639 = vunpack.c.l.b16 %v93
  %v1640 = vunpack.c.h.b16 %v93
  %v1641 = vunpack.c.l.b16 %v94
  %v1642 = vunpack.c.h.b16 %v94
  %v1643 = vunpack.c.l.b16 %v95
  %v1644 = vunpack.c.h.b16 %v95
  %v1645 = vunpack.c.l.b16 %v96
  %v1646 = vunpack.c.h.b16 %v96
  %v1647 = vunpack.c.l.b16 %v97
  %v1648 = vunpack.c.h.b16 %v97
  %v1649 = vunpack.c.l.b16 %v98
  %v1650 = vunpack.c.h.b16 %v98
  %v1651 = vunpack.c.l.b16 %v99
  %v1652 = vunpack.c.h.b16 %v99
  %v1653 = vunpack.c.l.b16 %v100
  %v1654 = vunpack.c.h.b16 %v100
  %v1655 = vunpack.c.l.b16 %v101
  %v1656 = vunpack.c.h.b16 %v101
  %v1657 = vunpack.c.l.b16 %v102
  %v1658 = vunpack.c.h.b16 %v102
  %v1659 = vunpack.c.l.b16 %v103
  %v1660 = vunpack.c.h.b16 %v103
  %v1661 = vunpack.c.l.b16 %v104
  %v1662 = vunpack.c.h.b16 %v104
  %v1663 = vunpack.c.l.b16 %v105
  %v1664 = vunpack.c.h.b16 %v105
  %v1665 = vunpack.c.l.b16 %v106
  %v1666 = vunpack.c.h.b16 %v106
  %v1667 = vunpack.c.l.b16 %v107
  %v1668 = vunpack.c.h.b16 %v107
  %v1669 = vunpack.c.l.b16 %v108
  %v1670 = vunpack.c.h.b16 %v108
  %v1671 = vunpack.c.l.b16 %v109
  %v1672 = vunpack.c.h.b16 %v109
  %v1673 = vunpack.c.l.b16 %v110
  %v1674 = vunpack.c.h.b16 %v110
  %v1675 = vunpack.c.l.b16 %v111
  %v1676 = vunpack.c.h.b16 %v111
  %v1677 = vunpack.c.l.b16 %v112
  %v1678 = vunpack.c.h.b16 %v112
  %v1679 = vunpack.c.l.b16 %v113
  %v1680 = vunpack.c.h.b16 %v113
  %v1681 = vunpack.c.l.b16 %v114
  %v1682 = vunpack.c.h.b16 %v114
  %v1683 = vunpack.c.l.b16 %v115
  %v1684 = vunpack.c.h.b16 %v115
  %v1685 = vunpack.c.l.b16 %v116
  %v1686 = vunpack.c.h.b16 %v116
  %v1687 = vunpack.c.l.b16 %v117
  %v1688 = vunpack.c.h.b16 %v117
  %v1689 = vunpack.c.l.b16 %v118
  %v1690 = vunpack.c.h.b16 %v118
  %v1691 = vunpack.c.l.b16 %v119
  %v1692 = vunpack.c.h.b16 %v119
  %v1693 = vunpack.c.l.b16 %v120
  %v1694 = vunpack.c.h.b16 %v120
  %v1695 = vunpack.c.l.b16 %v121
  %v1696 = vunpack.c.h.b16 %v121
  %v1697 = vunpack.c.l.b16 %v122
  %v1698 = vunpack.c.h.b16 %v122
  %v1699 = vunpack.c.l.b16 %v123
  %v1700 = vunpack.c.h.b16 %v123
  %v1701 = vunpack.c.l.b16 %v124
  %v1702 = vunpack.c.h.b16 %v124
  %v1703 = vunpack.c.l.b16 %v125
  %v1704 = vunpack.c.h.b16 %v125
  %v1705 = vunpack.c.l.b16 %v126
  %v1706 = vunpack.c.h.b16 %v126
  %v1707 = vunpack.c.l.b16 %v127
  %v1708 = vunpack.c.h.b16 %v127
  %v1709 = vunpack.c.l.b16 %v128
  %v1710 = vunpack.c.h.b16 %v128
  %v1711 = vunpack.c.l.b16 %v129
  %v1712 = vunpack.c.h.b16 %v129
  %v1713 = vunpack.c.l.b16 %v130
  %v1714 = vunpack.c.h.b16 %v130
  %v1715 = vunpack.c.l.b16 %v131
  %v1716 = vunpack.c.h.b16 %v131
  %v1717 = vunpack.c.l.b16 %v132
  %v1718 = vunpack.c.h.b16 %v132
  %v1719 = vunpack.c.l.b16 %v133
  %v1720 = vunpack.c.h.b16 %v133
  %v1721 = vunpack.c.l.b16 %v134
  %v1722 = vunpack.c.h.b16 %v134
  %v1723 = vunpack.c.l.b16 %v135
  %v1724 = vunpack.c.h.b16 %v135
  %v1725 = vunpack.c.l.b16 %v136
  %v1726 = vunpack.c.h.b16 %v136
  %v1727 = vunpack.c.l.b16 %v137
  %v1728 = vunpack.c.h.b16 %v137
  %v1729 = vunpack.c.l.b16 %v138
  %v1730 = vunpack.c.h.b16 %v138
  %v1731 = vunpack.c.l.b16 %v139
  %v1732 = vunpack.c.h.b16 %v139
  %v1733 = vunpack.c.l.b16 %v140
  %v1734 = vunpack.c.h.b16 %v140
  %v1735 = vunpack.c.l.b16 %v141
  %v1736 = vunpack.c.h.b16 %v141
  %v1737 = vunpack.c.l.b16 %v142
  %v1738 = vunpack.c.h.b16 %v142
  %v1739 = vunpack.c.l.b16 %v143
  %v1740 = vunpack.c.h.b16 %v143
  %v1741 = vunpack.c.l.b16 %v144
  %v1742 = vunpack.c.h.b16 %v144
  %v1743 = vunpack.c.l.b16 %v145
  %v1744 = vunpack.c.h.b16 %v145
  %v1745 = vunpack.c.l.b16 %v146
  %v1746 = vunpack.c.h.b16 %v146
  %v1747 = vunpack.c.l.b16 %v147
  %v1748 = vunpack.c.h.b16 %v147
  %v1749 = vunpack.c.l.b16 %v148
  %v1750 = vunpack.c.h.b16 %v148
  %v1751 = vunpack.c.l.b16 %v149
  %v1752 = vunpack.c.h.b16 %v149
  %v1753 = vunpack.c.l.b16 %v150
  %v1754 = vunpack.c.h.b16 %v150
  %v1755 = vunpack.c.l.b16 %v151
  %v1756 = vunpack.c.h.b16 %v151
  %v1757 = vunpack.c.l.b16 %v152
  %v1758 = vunpack.c.h.b16 %v152
  %v1759 = vunpack.c.l.b16 %v153
  %v1760 = vunpack.c.h.b16 %v153
  %v1761 = vunpack.c.l.b16 %v154
  %v1762 = vunpack.c.h.b16 %v154
  %v1763 = vunpack.c.l.b16 %v155
  %v1764 = vunpack.c.h.b16 %v155
  %v1765 = vunpack.c.l.b16 %v156
  %v1766 = vunpack.c.h.b16 %v156
  %v1767 = vunpack.c.l.b16 %v157
  %v1768 = vunpack.c.h.b16 %v157
  %v1769 = vunpack.c.l.b16 %v158
  %v1770 = vunpack.c.h.b16 %v158
  %v1771 = vunpack.c.l.b16 %v159
  %v1772 = vunpack.c.h.b16 %v159
  %v1773 = vunpack.c.l.b16 %v160
  %v1774 = vunpack.c.h.b16 %v160
  %v1775 = vunpack.c.l.b16 %v161
  %v1776 = vunpack.c.h.b16 %v161
  %v1777 = vunpack.c.l.b16 %v162
  %v1778 = vunpack.c.h.b16 %v162
  %v1779 = vunpack.c.l.b16 %v163
  %v1780 = vunpack.c.h.b16 %v163
  %v1781 = vunpack.c.l.b16 %v164
  %v1782 = vunpack.c.h.b16 %v164
  %v1783 = vunpack.c.l.b16 %v165
  %v1784 = vunpack.c.h.b16 %v165
  %v1785 = vunpack.c.l.b16 %v166
  %v1786 = vunpack.c.h.b16 %v166
  %v1787 = vunpack.c.l.b16 %v167
  %v1788 = vunpack.c.h.b16 %v167
  %v1789 = vunpack.c.l.b16 %v168
  %v1790 = vunpack.c.h.b16 %v168
  %v1791 = vunpack.c.l.b16 %v169
  %v1792 = vunpack.c.h.b16 %v169
  %v1793 = vunpack.c.l.b16 %v170
  %v1794 = vunpack.c.h.b16 %v170
  %v1795 = vunpack.c.l.b16 %v171
  %v1796 = vunpack.c.h.b16 %v171
  %v1797 = vunpack.c.l.b16 %v172
  %v1798 = vunpack.c.h.b16 %v172
  %v1799 = vunpack.c.l.b16 %v173
  %v1800 = vunpack.c.h.b16 %v173
  %v1801 = vunpack.c.l.b16 %v174
  %v1802 = vunpack.c.h.b16 %v174
  %v1803 = vunpack.c.l.b16 %v175
  %v1804 = vunpack.c.h.b16 %v175
  %v1805 = vunpack.c.l.b16 %v176
  %v1806 = vunpack.c.h.b16 %v176
  %v1807 = vunpack.c.l.b16 %v177
  %v1808 = vunpack.c.h.b16 %v177
  %v1809 = vunpack.c.l.b16 %v178
  %v1810 = vunpack.c.h.b16 %v178
  %v1811 = vunpack.c.l.b16 %v179
  %v1812 = vunpack.c.h.b16 %v179
  %v1813 = vunpack.c.l.b16 %v180
  %v1814 = vunpack.c.h.b16 %v180
  %v1815 = vunpack.c.l.b16 %v181
  %v1816 = vunpack.c.h.b16 %v181
  %v1817 = vunpack.c.l.b16 %v182
  %v1818 = vunpack.c.h.b16 %v182
  %v1819 = vunpack.c.l.b16 %v183
  %v1820 = vunpack.c.h.b16 %v183
  %v1821 = vunpack.c.l.b16 %v184
  %v1822 = vunpack.c.h.b16 %v184
  %v1823 = vunpack.c.l.b16 %v185
  %v1824 = vunpack.c.h.b16 %v185
  %v1825 = vunpack.c.l.b16 %v186
  %v1826 = vunpack.c.h.b16 %v186
  %v1827 = vunpack.c.l.b16 %v187
  %v1828 = vunpack.c.h.b16 %v187
  %v1829 = vunpack.c.l.b16 %v188
  %v1830 = vunpack.c.h.b16 %v188
  %v1831 = vunpack.c.l.b16 %v189
  %v1832 = vunpack.c.h.b16 %v189
  %v1833 = vunpack.c.l.b16 %v190
  %v1834 = vunpack.c.h.b16 %v190
  %v1835 = vunpack.c.l.b16 %v191
  %v1836 = vunpack.c.h.b16 %v191
  %v1837 = vunpack.c.l.b16 %v192
  %v1838 = vunpack.c.h.b16 %v192
  %v1839 = vunpack.c.l.b16 %v193
  %v1840 = vunpack.c.h.b16 %v193
  %v1841 = vunpack.c.l.b16 %v194
  %v1842 = vunpack.c.h.b16 %v194
  %v1843 = vunpack.c.l.b16 %v195
  %v1844 = vunpack.c.h.b16 %v195
  %v1845 = vunpack.c.l.b16 %v196
  %v1846 = vunpack.c.h.b16 %v196
  %v1847 = vunpack.c.l.b16 %v197
  %v1848 = vunpack.c.h.b16 %v197
  %v1849 = vunpack.c.l.b16 %v198
  %v1850 = vunpack.c.h.b16 %v198
  %v1851 = vunpack.c.l.b16 %v199
  %v1852 = vunpack.c.h.b16 %v199
  %v1853 = vunpack.c.l.b16 %v200
  %v1854 = vunpack.c.h.b16 %v200
  %v1855 = vunpack.c.l.b16 %v201
  %v1856 = vunpack.c.h.b16 %v201
  %v1857 = vunpack.c.l.b16 %v202
  %v1858 = vunpack.c.h.b16 %v202
  %v1859 = vunpack.c.l.b16 %v203
  %v1860 = vunpack.c.h.b16 %v203
  %v1861 = vunpack.c.l.b16 %v204
  %v1862 = vunpack.c.h.b16 %v204
  %v1863 = vunpack.c.l.b16 %v205
  %v1864 = vunpack.c.h.b16 %v205
  %v1865 = vunpack.c.l.b16 %v206
  %v1866 = vunpack.c.h.b16 %v206
  %v1867 = vunpack.c.l.b16 %v207
  %v1868 = vunpack.c.h.b16 %v207
  %v1869 = vunpack.c.l.b16 %v208
  %v1870 = vunpack.c.h.b16 %v208
  %v1871 = vunpack.c.l.b16 %v209
  %v1872 = vunpack.c.h.b16 %v209
  %v1873 = vunpack.c.l.b16 %v210
  %v1874 = vunpack.c.h.b16 %v210
  %v1875 = vunpack.c.l.b16 %v211
  %v1876 = vunpack.c.h.b16 %v211
  %v1877 = vunpack.c.l.b16 %v212
  %v1878 = vunpack.c.h.b16 %v212
  %v1879 = vunpack.c.l.b16 %v213
  %v1880 = vunpack.c.h.b16 %v213
  %v1881 = vunpack.c.l.b16 %v214
  %v1882 = vunpack.c.h.b16 %v214
  %v1883 = vunpack.c.l.b16 %v215
  %v1884 = vunpack.c.h.b16 %v215
  %v1885 = vunpack.c.l.b16 %v216
  %v1886 = vunpack.c.h.b16 %v216
  %v1887 = vunpack.c.l.b16 %v217
  %v1888 = vunpack.c.h.b16 %v217
  %v1889 = vunpack.c.l.b16 %v218
  %v1890 = vunpack.c.h.b16 %v218
  %v1891 = vunpack.c.l.b16 %v219
  %v1892 = vunpack.c.h.b16 %v219
  %v1893 = vunpack.c.l.b16 %v220
  %v1894 = vunpack.c.h.b16 %v220
  %v1895 = vunpack.c.l.b16 %v221
  %v1896 = vunpack.c.h.b16 %v221
  %v1897 = vunpack.c.l.b16 %v222
  %v1898 = vunpack.c.h.b16 %v222
  %v1899 = vunpack.c.l.b16 %v223
  %v1900 = vunpack.c.h.b16 %v223
  %v1901 = vunpack.c.l.b16 %v224
  %v1902 = vunpack.c.h.b16 %v224
  %v1903 = vunpack.c.l.b16 %v225
  %v1904 = vunpack.c.h.b16 %v225
  %v1905 = vunpack.c.l.b16 %v226
  %v1906 = vunpack.c.h.b16 %v226
  %v1907 = vunpack.c.l.b16 %v227
  %v1908 = vunpack.c.h.b16 %v227
  %v1909 = vunpack.c.l.b16 %v228
  %v1910 = vunpack.c.h.b16 %v228
  %v1911 = vunpack.c.l.b16 %v229
  %v1912 = vunpack.c.h.b16 %v229
  %v1913 = vunpack.c.l.b16 %v230
  %v1914 = vunpack.c.h.b16 %v230
  %v1915 = vunpack.c.l.b16 %v231
  %v1916 = vunpack.c.h.b16 %v231
  %v1917 = vunpack.c.l.b16 %v232
  %v1918 = vunpack.c.h.b16 %v232
  %v1919 = vunpack.c.l.b16 %v233
  %v1920 = vunpack.c.h.b16 %v233
  %v1921 = vunpack.c.l.b16 %v234
  %v1922 = vunpack.c.h.b16 %v234
  %v1923 = vunpack.c.l.b16 %v235
  %v1924 = vunpack.c.h.b16 %v235
  %v1925 = vunpack.c.l.b16 %v236
  %v1926 = vunpack.c.h.b16 %v236
  %v1927 = vunpack.c.l.b16 %v237
  %v1928 = vunpack.c.h.b16 %v237
  %v1929 = vunpack.c.l.b16 %v238
  %v1930 = vunpack.c.h.b16 %v238
  %v1931 = vunpack.c.l.b16 %v239
  %v1932 = vunpack.c.h.b16 %v239
  %v1933 = vunpack.c.l.b16 %v240
  %v1934 = vunpack.c.h.b16 %v240
  %v1935 = vunpack.c.l.b16 %v241
  %v1936 = vunpack.c.h.b16 %v241
  %v1937 = vunpack.c.l.b16 %v242
  %v1938 = vunpack.c.h.b16 %v242
  %v1939 = vunpack.c.l.b16 %v243
  %v1940 = vunpack.c.h.b16 %v243
  %v1941 = vunpack.c.l.b16 %v244
  %v1942 = vunpack.c.h.b16 %v244
  %v1943 = vunpack.c.l.b16 %v245
  %v1944 = vunpack.c.h.b16 %v245
  %v1945 = vunpack.c.l.b16 %v246
  %v1946 = vunpack.c.h.b16 %v246
  %v1947 = vunpack.c.l.b16 %v247
  %v1948 = vunpack.c.h.b16 %v247
  %v1949 = vunpack.c.l.b16 %v248
  %v1950 = vunpack.c.h.b16 %v248
  %v1951 = vunpack.c.l.b16 %v249
  %v1952 = vunpack.c.h.b16 %v249
  %v1953 = vunpack.c.l.b16 %v250
  %v1954 = vunpack.c.h.b16 %v250
  %v1955 = vunpack.c.l.b16 %v251
  %v1956 = vunpack.c.h.b16 %v251
  %v1957 = vunpack.c.l.b16 %v252
  %v1958 = vunpack.c.h.b16 %v252
  %v1959 = vunpack.c.l.b16 %v253
  %v1960 = vunpack.c.h.b16 %v253
  %v1961 = vunpack.c.l.b16 %v254
  %v1962 = vunpack.c.h.b16 %v254
  %v1963 = vunpack.c.l.b16 %v255
  %v1964 = vunpack.c.h.b16 %v255
  %v1965 = vunpack.c.l.b16 %v256
  %v1966 = vunpack.c.h.b16 %v256
  %v1967 = vunpack.c.l.b16 %v257
  %v1968 = vunpack.c.h.b16 %v257
  %v1969 = vunpack.c.l.b16 %v258
  %v1970 = vunpack.c.h.b16 %v258
  %v1971 = vunpack.c.l.b16 %v259
  %v1972 = vunpack.c.h.b16 %v259
  %v1973 = vunpack.c.l.b16 %v260
  %v1974 = vunpack.c.h.b16 %v260
  %v1975 = vunpack.c.l.b16 %v261
  %v1976 = vunpack.c.h.b16 %v261
  %v1977 = vunpack.c.l.b16 %v262
  %v1978 = vunpack.c.h.b16 %v262
  %v1979 = vunpack.c.l.b16 %v263
  %v1980 = vunpack.c.h.b16 %v263
  %v1981 = vunpack.c.l.b16 %v264
  %v1982 = vunpack.c.h.b16 %v264
  %v1983 = vunpack.c.l.b16 %v265
  %v1984 = vunpack.c.h.b16 %v265
  %v1985 = vunpack.c.l.b16 %v266
  %v1986 = vunpack.c.h.b16 %v266
  %v1987 = vunpack.c.l.b16 %v267
  %v1988 = vunpack.c.h.b16 %v267
  %v1989 = vunpack.c.l.b16 %v268
  %v1990 = vunpack.c.h.b16 %v268
  %v1991 = vunpack.c.l.b16 %v269
  %v1992 = vunpack.c.h.b16 %v269
  %v1993 = vunpack.c.l.b16 %v270
  %v1994 = vunpack.c.h.b16 %v270
  %v1995 = vunpack.c.l.b16 %v271
  %v1996 = vunpack.c.h.b16 %v271
  %v1997 = vunpack.c.l.b16 %v272
  %v1998 = vunpack.c.h.b16 %v272
  %v1999 = vunpack.c.l.b16 %v273
  %v2000 = vunpack.c.h.b16 %v273
  %v2001 = vunpack.c.l.b16 %v274
  %v2002 = vunpack.c.h.b16 %v274
  %v2003 = vunpack.c.l.b16 %v275
  %v2004 = vunpack.c.h.b16 %v275
  %v2005 = vunpack.c.l.b16 %v276
  %v2006 = vunpack.c.h.b16 %v276
  %v2007 = vunpack.c.l.b16 %v277
  %v2008 = vunpack.c.h.b16 %v277
  %v2009 = vunpack.c.l.b16 %v278
  %v2010 = vunpack.c.h.b16 %v278
  %v2011 = vunpack.c.l.b16 %v279
  %v2012 = vunpack.c.h.b16 %v279
  %v2013 = vunpack.c.l.b16 %v280
  %v2014 = vunpack.c.h.b16 %v280
  %v2015 = vunpack.c.l.b16 %v281
  %v2016 = vunpack.c.h.b16 %v281
  %v2017 = vunpack.c.l.b16 %v282
  %v2018 = vunpack.c.h.b16 %v282
  %v2019 = vunpack.c.l.b16 %v283
  %v2020 = vunpack.c.h.b16 %v283
  %v2021 = vunpack.c.l.b16 %v284
  %v2022 = vunpack.c.h.b16 %v284
  %v2023 = vunpack.c.l.b16 %v285
  %v2024 = vunpack.c.h.b16 %v285
  %v2025 = vunpack.c.l.b16 %v286
  %v2026 = vunpack.c.h.b16 %v286
  %v2027 = vunpack.c.l.b16 %v287
  %v2028 = vunpack.c.h.b16 %v287
  %v2029 = vunpack.c.l.b16 %v288
  %v2030 = vunpack.c.h.b16 %v288
  %v2031 = vunpack.c.l.b16 %v289
  %v2032 = vunpack.c.h.b16 %v289
  %v2033 = vunpack.c.l.b16 %v290
  %v2034 = vunpack.c.h.b16 %v290
  %v2035 = vunpack.c.l.b16 %v291
  %v2036 = vunpack.c.h.b16 %v291
  %v2037 = vunpack.c.l.b16 %v292
  %v2038 = vunpack.c.h.b16 %v292
  %v2039 = vunpack.c.l.b16 %v293
  %v2040 = vunpack.c.h.b16 %v293
  %v2041 = vunpack.c.l.b16 %v294
  %v2042 = vunpack.c.h.b16 %v294
  %v2043 = vunpack.c.l.b16 %v295
  %v2044 = vunpack.c.h.b16 %v295
  %v2045 = vunpack.c.l.b16 %v296
  %v2046 = vunpack.c.h.b16 %v296
  %v2047 = vunpack.c.l.b16 %v297
  %v2048 = vunpack.c.h.b16 %v297
  %v2049 = vunpack.c.l.b16 %v298
  %v2050 = vunpack.c.h.b16 %v298
  %v2051 = vunpack.c.l.b16 %v299
  %v2052 = vunpack.c.h.b16 %v299
  %v2053 = vunpack.c.l.b16 %v300
  %v2054 = vunpack.c.h.b16 %v300
  %v2055 = vunpack.c.l.b16 %v301
  %v2056 = vunpack.c.h.b16 %v301
  %v2057 = vunpack.c.l.b16 %v302
  %v2058 = vunpack.c.h.b16 %v302
  %v2059 = vunpack.c.l.b16 %v303
  %v2060 = vunpack.c.h.b16 %v303
  %v2061 = vunpack.c.l.b16 %v304
  %v2062 = vunpack.c.h.b16 %v304
  %v2063 = vunpack.c.l.b16 %v305
  %v2064 = vunpack.c.h.b16 %v305
  %v2065 = vunpack.c.l.b16 %v306
  %v2066 = vunpack.c.h.b16 %v306
  %v2067 = vunpack.c.l.b16 %v307
  %v2068 = vunpack.c.h.b16 %v307
  %v2069 = vunpack.c.l.b16 %v308
  %v2070 = vunpack.c.h.b16 %v308
  %v2071 = vunpack.c.l.b16 %v309
  %v2072 = vunpack.c.h.b16 %v309
  %v2073 = vunpack.c.l.b16 %v310
  %v2074 = vunpack.c.h.b16 %v310
  %v2075 = vunpack.c.l.b16 %v311
  %v2076 = vunpack.c.h.b16 %v311
  %v2077 = vunpack.c.l.b16 %v312
  %v2078 = vunpack.c.h.b16 %v312
  %v2079 = vunpack.c.l.b16 %v313
  %v2080 = vunpack.c.h.b16 %v313
  %v2081 = vunpack.c.l.b16 %v314
  %v2082 = vunpack.c.h.b16 %v314
  %v2083 = vunpack.c.l.b16 %v315
  %v2084 = vunpack.c.h.b16 %v315
  %v2085 = vunpack.c.l.b16 %v316
  %v2086 = vunpack.c.h.b16 %v316
  %v2087 = vunpack.c.l.b16 %v317
  %v2088 = vunpack.c.h.b16 %v317
  %v2089 = vunpack.c.l.b16 %v318
  %v2090 = vunpack.c.h.b16 %v318
  %v2091 = vunpack.c.l.b16 %v319
  %v2092 = vunpack.c.h.b16 %v319
  %v2093 = vunpack.c.l.b16 %v320
  %v2094 = vunpack.c.h.b16 %v320
  %v2095 = vunpack.c.l.b16 %v321
  %v2096 = vunpack.c.h.b16 %v321
  %v2097 = vunpack.c.l.b16 %v322
  %v2098 = vunpack.c.h.b16 %v322
  %v2099 = vunpack.c.l.b16 %v323
  %v2100 = vunpack.c.h.b16 %v323
  %v2101 = vunpack.c.l.b16 %v324
  %v2102 = vunpack.c.h.b16 %v324
  %v2103 = vunpack.c.l.b16 %v325
  %v2104 = vunpack.c.h.b16 %v325
  %v2105 = vunpack.c.l.b16 %v326
  %v2106 = vunpack.c.h.b16 %v326
  %v2107 = vunpack.c.l.b16 %v327
  %v2108 = vunpack.c.h.b16 %v327
  %v2109 = vunpack.c.l.b16 %v328
  %v2110 = vunpack.c.h.b16 %v328
  %v2111 = vunpack.c.l.b16 %v329
  %v2112 = vunpack.c.h.b16 %v329
  %v2113 = vunpack.c.l.b16 %v330
  %v2114 = vunpack.c.h.b16 %v330
  %v2115 = vunpack.c.l.b16 %v331
  %v2116 = vunpack.c.h.b16 %v331
  %v2117 = vunpack.c.l.b16 %v332
  %v2118 = vunpack.c.h.b16 %v332
  %v2119 = vunpack.c.l.b16 %v333
  %v2120 = vunpack.c.h.b16 %v333
  %v2121 = vunpack.c.l.b16 %v334
  %v2122 = vunpack.c.h.b16 %v334
  %v2123 = vunpack.c.l.b16 %v335
  %v2124 = vunpack.c.h.b16 %v335
  %v2125 = vunpack.c.l.b16 %v336
  %v2126 = vunpack.c.h.b16 %v336
  %v2127 = vunpack.c.l.b16 %v337
  %v2128 = vunpack.c.h.b16 %v337
  %v2129 = vunpack.c.l.b16 %v338
  %v2130 = vunpack.c.h.b16 %v338
  %v2131 = vunpack.c.l.b16 %v339
  %v2132 = vunpack.c.h.b16 %v339
  %v2133 = vunpack.c.l.b16 %v340
  %v2134 = vunpack.c.h.b16 %v340
  %v2135 = vunpack.c.l.b16 %v341
  %v2136 = vunpack.c.h.b16 %v341
  %v2137 = vunpack.c.l.b16 %v342
  %v2138 = vunpack.c.h.b16 %v342
  %v2139 = vunpack.c.l.b16 %v343
  %v2140 = vunpack.c.h.b16 %v343
  %v2141 = vunpack.c.l.b16 %v344
  %v2142 = vunpack.c.h.b16 %v344
  %v2143 = vunpack.c.l.b16 %v345
  %v2144 = vunpack.c.h.b16 %v345
  %v2145 = vunpack.c.l.b16 %v346
  %v2146 = vunpack.c.h.b16 %v346
  %v2147 = vunpack.c.l.b16 %v347
  %v2148 = vunpack.c.h.b16 %v347
  %v2149 = vunpack.c.l.b16 %v348
  %v2150 = vunpack.c.h.b16 %v348
  %v2151 = vunpack.c.l.b16 %v349
  %v2152 = vunpack.c.h.b16 %v349
  %v2153 = vunpack.c.l.b16 %v350
  %v2154 = vunpack.c.h.b16 %v350
  %v2155 = vunpack.c.l.b16 %v351
  %v2156 = vunpack.c.h.b16 %v351
  %v2157 = vunpack.c.l.b16 %v352
  %v2158 = vunpack.c.h.b16 %v352
  %v2159 = vunpack.c.l.b16 %v353
  %v2160 = vunpack.c.h.b16 %v353
  %v2161 = vunpack.c.l.b16 %v354
  %v2162 = vunpack.c.h.b16 %v354
  %v2163 = vunpack.c.l.b16 %v355
  %v2164 = vunpack.c.h.b16 %v355
  %v2165 = vunpack.c.l.b16 %v356
  %v2166 = vunpack.c.h.b16 %v356
  %v2167 = vunpack.c.l.b16 %v357
  %v2168 = vunpack.c.h.b16 %v357
  %v2169 = vunpack.c.l.b16 %v358
  %v2170 = vunpack.c.h.b16 %v358
  %v2171 = vunpack.c.l.b16 %v359
  %v2172 = vunpack.c.h.b16 %v359
  %v2173 = vunpack.c.l.b16 %v360
  %v2174 = vunpack.c.h.b16 %v360
  %v2175 = vunpack.c.l.b16 %v361
  %v2176 = vunpack.c.h.b16 %v361
  %v2177 = vunpack.c.l.b16 %v362
  %v2178 = vunpack.c.h.b16 %v362
  %v2179 = vunpack.c.l.b16 %v363
  %v2180 = vunpack.c.h.b16 %v363
  %v2181 = vunpack.c.l.b16 %v364
  %v2182 = vunpack.c.h.b16 %v364
  %v2183 = vunpack.c.l.b16 %v365
  %v2184 = vunpack.c.h.b16 %v365
  %v2185 = vunpack.c.l.b16 %v366
  %v2186 = vunpack.c.h.b16 %v366
  %v2187 = vunpack.c.l.b16 %v367
  %v2188 = vunpack.c.h.b16 %v367
  %v2189 = vunpack.c.l.b16 %v368
  %v2190 = vunpack.c.h.b16 %v368
  %v2191 = vunpack.c.l.b16 %v369
  %v2192 = vunpack.c.h.b16 %v369
  %v2193 = vunpack.c.l.b16 %v370
  %v2194 = vunpack.c.h.b16 %v370
  %v2195 = vunpack.c.l.b16 %v371
  %v2196 = vunpack.c.h.b16 %v371
  %v2197 = vunpack.c.l.b16 %v372
  %v2198 = vunpack.c.h.b16 %v372
  %v2199 = vunpack.c.l.b16 %v373
  %v2200 = vunpack.c.h.b16 %v373
  %v2201 = vunpack.c.l.b16 %v374
  %v2202 = vunpack.c.h.b16 %v374
  %v2203 = vunpack.c.l.b16 %v375
  %v2204 = vunpack.c.h.b16 %v375
  %v2205 = vunpack.c.l.b16 %v376
  %v2206 = vunpack.c.h.b16 %v376
  %v2207 = vunpack.c.l.b16 %v377
  %v2208 = vunpack.c.h.b16 %v377
  %v2209 = vunpack.c.l.b16 %v378
  %v2210 = vunpack.c.h.b16 %v378
  %v2211 = vunpack.c.l.b16 %v379
  %v2212 = vunpack.c.h.b16 %v379
  %v2213 = vunpack.c.l.b16 %v380
  %v2214 = vunpack.c.h.b16 %v380
  %v2215 = vunpack.c.l.b16 %v381
  %v2216 = vunpack.c.h.b16 %v381
  %v2217 = vunpack.c.l.b16 %v382
  %v2218 = vunpack.c.h.b16 %v382
  %v2219 = vunpack.c.l.b16 %v383
  %v2220 = vunpack.c.h.b16 %v383
  %v2221 = vunpack.c.l.b16 %v384
  %v2222 = vunpack.c.h.b16 %v384
  %v2223 = vunpack.c.l.b16 %v385
  %v2224 = vunpack.c.h.b16 %v385
  %v2225 = vunpack.c.l.b16 %v386
  %v2226 = vunpack.c.h.b16 %v386
  %v2227 = vunpack.c.l.b16 %v387
  %v2228 = vunpack.c.h.b16 %v387
  %v2229 = vunpack.c.l.b16 %v388
  %v2230 = vunpack.c.h.b16 %v388
  %v2231 = vunpack.c.l.b16 %v389
  %v2232 = vunpack.c.h.b16 %v389
  %v2233 = vunpack.c.l.b16 %v390
  %v2234 = vunpack.c.h.b16 %v390
  %v2235 = vunpack.c.l.b16 %v391
  %v2236 = vunpack.c.h.b16 %v391
  %v2237 = vunpack.c.l.b16 %v392
  %v2238 = vunpack.c.h.b16 %v392
  %v2239 = vunpack.c.l.b16 %v393
  %v2240 = vunpack.c.h.b16 %v393
  %v2241 = vunpack.c.l.b16 %v394
  %v2242 = vunpack.c.h.b16 %v394
  %v2243 = vunpack.c.l.b16 %v395
  %v2244 = vunpack.c.h.b16 %v395
  %v2245 = vunpack.c.l.b16 %v396
  %v2246 = vunpack.c.h.b16 %v396
  %v2247 = vunpack.c.l.b16 %v397
  %v2248 = vunpack.c.h.b16 %v397
  %v2249 = vunpack.c.l.b16 %v398
  %v2250 = vunpack.c.h.b16 %v398
  %v2251 = vunpack.c.l.b16 %v399
  %v2252 = vunpack.c.h.b16 %v399
  %v2253 = vunpack.c.l.b16 %v400
  %v2254 = vunpack.c.h.b16 %v400
  %v2255 = vunpack.c.l.b16 %v401
  %v2256 = vunpack.c.h.b16 %v401
  %v2257 = vunpack.c.l.b16 %v402
  %v2258 = vunpack.c.h.b16 %v402
  %v2259 = vunpack.c.l.b16 %v403
  %v2260 = vunpack.c.h.b16 %v403
  %v2261 = vunpack.c.l.b16 %v404
  %v2262 = vunpack.c.h.b16 %v404
  %v2263 = vunpack.c.l.b16 %v405
  %v2264 = vunpack.c.h.b16 %v405
  %v2265 = vunpack.c.l.b16 %v406
  %v2266 = vunpack.c.h.b16 %v406
  %v2267 = vunpack.c.l.b16 %v407
  %v2268 = vunpack.c.h.b16 %v407
  %v2269 = vunpack.c.l.b16 %v408
  %v2270 = vunpack.c.h.b16 %v408
  %v2271 = vunpack.c.l.b16 %v409
  %v2272 = vunpack.c.h.b16 %v409
  %v2273 = vunpack.c.l.b16 %v410
  %v2274 = vunpack.c.h.b16 %v410
  %v2275 = vunpack.c.l.b16 %v411
  %v2276 = vunpack.c.h.b16 %v411
  %v2277 = vunpack.c.l.b16 %v412
  %v2278 = vunpack.c.h.b16 %v412
  %v2279 = vunpack.c.l.b16 %v413
  %v2280 = vunpack.c.h.b16 %v413
  %v2281 = vunpack.c.l.b16 %v414
  %v2282 = vunpack.c.h.b16 %v414
  %v2283 = vunpack.c.l.b16 %v415
  %v2284 = vunpack.c.h.b16 %v415
  %v2285 = vunpack.c.l.b16 %v416
  %v2286 = vunpack.c.h.b16 %v416
  %v2287 = vunpack.c.l.b16 %v417
  %v2288 = vunpack.c.h.b16 %v417
  %v2289 = vunpack.c.l.b16 %v418
  %v2290 = vunpack.c.h.b16 %v418
  %v2291 = vunpack.c.l.b16 %v419
  %v2292 = vunpack.c.h.b16 %v419
  %v2293 = vunpack.c.l.b16 %v420
  %v2294 = vunpack.c.h.b16 %v420
  %v2295 = vunpack.c.l.b16 %v421
  %v2296 = vunpack.c.h.b16 %v421
  %v2297 = vunpack.c.l.b16 %v422
  %v2298 = vunpack.c.h.b16 %v422
  %v2299 = vunpack.c.l.b16 %v423
  %v2300 = vunpack.c.h.b16 %v423
  %v2301 = vunpack.c.l.b16 %v424
  %v2302 = vunpack.c.h.b16 %v424
  %v2303 = vunpack.c.l.b16 %v425
  %v2304 = vunpack.c.h.b16 %v425
  %v2305 = vunpack.c.l.b16 %v426
  %v2306 = vunpack.c.h.b16 %v426
  %v2307 = vunpack.c.l.b16 %v427
  %v2308 = vunpack.c.h.b16 %v427
  %v2309 = vunpack.c.l.b16 %v428
  %v2310 = vunpack.c.h.b16 %v428
  %v2311 = vunpack.c.l.b16 %v429
  %v2312 = vunpack.c.h.b16 %v429
  %v2313 = vunpack.c.l.b16 %v430
  %v2314 = vunpack.c.h.b16 %v430
  %v2315 = vunpack.c.l.b16 %v431
  %v2316 = vunpack.c.h.b16 %v431
  %v2317 = vunpack.c.l.b16 %v432
  %v2318 = vunpack.c.h.b16 %v432
  %v2319 = vunpack.c.l.b16 %v433
  %v2320 = vunpack.c.h.b16 %v433
  %v2321 = vunpack.c.l.b16 %v434
  %v2322 = vunpack.c.h.b16 %v434
  %v2323 = vunpack.c.l.b16 %v435
  %v2324 = vunpack.c.h.b16 %v435
  %v2325 = vunpack.c.l.b16 %v436
  %v2326 = vunpack.c.h.b16 %v436
  %v2327 = vunpack.c.l.b16 %v437
  %v2328 = vunpack.c.h.b16 %v437
  %v2329 = vunpack.c.l.b16 %v438
  %v2330 = vunpack.c.h.b16 %v438
  %v2331 = vunpack.c.l.b16 %v439
  %v2332 = vunpack.c.h.b16 %v439
  %v2333 = vunpack.c.l.b16 %v440
  %v2334 = vunpack.c.h.b16 %v440
  %v2335 = vunpack.c.l.b16 %v441
  %v2336 = vunpack.c.h.b16 %v441
  %v2337 = vunpack.c.l.b16 %v442
  %v2338 = vunpack.c.h.b16 %v442
  %v2339 = vunpack.c.l.b16 %v443
  %v2340 = vunpack.c.h.b16 %v443
  %v2341 = vunpack.c.l.b16 %v444
  %v2342 = vunpack.c.h.b16 %v444
  %v2343 = vunpack.c.l.b16 %v445
  %v2344 = vunpack.c.h.b16 %v445
  %v2345 = vunpack.c.l.b16 %v446
  %v2346 = vunpack.c.h.b16 %v446
  %v2347 = vunpack.c.l.b16 %v447
  %v2348 = vunpack.c.h.b16 %v447
  %v2349 = vunpack.c.l.b16 %v448
  %v2350 = vunpack.c.h.b16 %v448
  %v2351 = vunpack.c.l.b16 %v449
  %v2352 = vunpack.c.h.b16 %v449
  %v2353 = vunpack.c.l.b16 %v450
  %v2354 = vunpack.c.h.b16 %v450
  %v2355 = vunpack.c.l.b16 %v451
  %v2356 = vunpack.c.h.b16 %v451
  %v2357 = vunpack.c.l.b16 %v452
  %v2358 = vunpack.c.h.b16 %v452
  %v2359 = vunpack.c.l.b16 %v453
  %v2360 = vunpack.c.h.b16 %v453
  %v2361 = vunpack.c.l.b16 %v454
  %v2362 = vunpack.c.h.b16 %v454
  %v2363 = vunpack.c.l.b16 %v455
  %v2364 = vunpack.c.h.b16 %v455
  %v2365 = vunpack.c.l.b16 %v456
  %v2366 = vunpack.c.h.b16 %v456
  %v2367 = vunpack.c.l.b16 %v457
  %v2368 = vunpack.c.h.b16 %v457
  %v2369 = vunpack.c.l.b16 %v458
  %v2370 = vunpack.c.h.b16 %v458
  %v2371 = vunpack.c.l.b16 %v459
  %v2372 = vunpack.c.h.b16 %v459
  %v2373 = vunpack.c.l.b16 %v460
  %v2374 = vunpack.c.h.b16 %v460
  %v2375 = vunpack.c.l.b16 %v461
  %v2376 = vunpack.c.h.b16 %v461
  %v2377 = vunpack.c.l.b16 %v462
  %v2378 = vunpack.c.h.b16 %v462
  %v2379 = vunpack.c.l.b16 %v463
  %v2380 = vunpack.c.h.b16 %v463
  %v2381 = vunpack.c.l.b16 %v464
  %v2382 = vunpack.c.h.b16 %v464
  %v2383 = vunpack.c.l.b16 %v465
  %v2384 = vunpack.c.h.b16 %v465
  %v2385 = vunpack.c.l.b16 %v466
  %v2386 = vunpack.c.h.b16 %v466
  %v2387 = vunpack.c.l.b16 %v467
  %v2388 = vunpack.c.h.b16 %v467
  %v2389 = vunpack.c.l.b16 %v468
  %v2390 = vunpack.c.h.b16 %v468
  %v2391 = vunpack.c.l.b16 %v469
  %v2392 = vunpack.c.h.b16 %v469
  %v2393 = vunpack.c.l.b16 %v470
  %v2394 = vunpack.c.h.b16 %v470
  %v2395 = vunpack.c.l.b16 %v471
  %v2396 = vunpack.c.h.b16 %v471
  %v2397 = vunpack.c.l.b16 %v472
  %v2398 = vunpack.c.h.b16 %v472
  %v2399 = vunpack.c.l.b16 %v473
  %v2400 = vunpack.c.h.b16 %v473
  %v2401 = vunpack.c.l.b16 %v474
  %v2402 = vunpack.c.h.b16 %v474
  %v2403 = vunpack.c.l.b16 %v475
  %v2404 = vunpack.c.h.b16 %v475
  %v2405 = vunpack.c.l.b16 %v476
  %v2406 = vunpack.c.h.b16 %v476
  %v2407 = vunpack.c.l.b16 %v477
  %v2408 = vunpack.c.h.b16 %v477
  %v2409 = vunpack.c.l.b16 %v478
  %v2410 = vunpack.c.h.b16 %v478
  %v2411 = vunpack.c.l.b16 %v479
  %v2412 = vunpack.c.h.b16 %v479
  %v2413 = vunpack.c.l.b16 %v480
  %v2414 = vunpack.c.h.b16 %v480
  %v2415 = vunpack.c.l.b16 %v481
  %v2416 = vunpack.c.h.b16 %v481
  %v2417 = vunpack.c.l.b16 %v482
  %v2418 = vunpack.c.h.b16 %v482
  %v2419 = vunpack.c.l.b16 %v483
  %v2420 = vunpack.c.h.b16 %v483
  %v2421 = vunpack.c.l.b16 %v484
  %v2422 = vunpack.c.h.b16 %v484
  %v2423 = vunpack.c.l.b16 %v485
  %v2424 = vunpack.c.h.b16 %v485
  %v2425 = vunpack.c.l.b16 %v486
  %v2426 = vunpack.c.h.b16 %v486
  %v2427 = vunpack.c.l.b16 %v487
  %v2428 = vunpack.c.h.b16 %v487
  %v2429 = vunpack.c.l.b16 %v488
  %v2430 = vunpack.c.h.b16 %v488
  %v2431 = vunpack.c.l.b16 %v489
  %v2432 = vunpack.c.h.b16 %v489
  %v2433 = vunpack.c.l.b16 %v490
  %v2434 = vunpack.c.h.b16 %v490
  %v2435 = vunpack.c.l.b16 %v491
  %v2436 = vunpack.c.h.b16 %v491
  %v2437 = vunpack.c.l.b16 %v492
  %v2438 = vunpack.c.h.b16 %v492
  %v2439 = vunpack.c.l.b16 %v493
  %v2440 = vunpack.c.h.b16 %v493
  %v2441 = vunpack.c.l.b16 %v494
  %v2442 = vunpack.c.h.b16 %v494
  %v2443 = vunpack.c.l.b16 %v495
  %v2444 = vunpack.c.h.b16 %v495
  %v2445 = vunpack.c.l.b16 %v496
  %v2446 = vunpack.c.h.b16 %v496
  %v2447 = vunpack.c.l.b16 %v497
  %v2448 = vunpack.c.h.b16 %v497
  %v2449 = vunpack.c.l.b16 %v498
  %v2450 = vunpack.c.h.b16 %v498
  %v2451 = vunpack.c.l.b16 %v499
  %v2452 = vunpack.c.h.b16 %v499
  %v2453 = vunpack.c.l.b16 %v500
  %v2454 = vunpack.c.h.b16 %v500
  %v2455 = vunpack.c.l.b16 %v501
  %v2456 = vunpack.c.h.b16 %v501
  %v2457 = vunpack.c.l.b16 %v502
  %v2458 = vunpack.c.h.b16 %v502
  %v2459 = vunpack.c.l.b16 %v503
  %v2460 = vunpack.c.h.b16 %v503
  %v2461 = vunpack.c.l.b16 %v504
  %v2462 = vunpack.c.h.b16 %v504
  %v2463 = vunpack.c.l.b16 %v505
  %v2464 = vunpack.c.h.b16 %v505
  %v2465 = vunpack.c.l.b16 %v506
  %v2466 = vunpack.c.h.b16 %v506
  %v2467 = vunpack.c.l.b16 %v507
  %v2468 = vunpack.c.h.b16 %v507
  %v2469 = vunpack.c.l.b16 %v508
  %v2470 = vunpack.c.h.b16 %v508
  %v2471 = vunpack.c.l.b16 %v509
  %v2472 = vunpack.c.h.b16 %v509
  %v2473 = vunpack.c.l.b16 %v510
  %v2474 = vunpack.c.h.b16 %v510
  %v2475 = vunpack.c.l.b16 %v511
  %v2476 = vunpack.c.h.b16 %v511
  %v2477 = vunpack.c.l.b16 %v512
  %v2478 = vunpack.c.h.b16 %v512
  %v2479 = vunpack.c.l.b16 %v513
  %v2480 = vunpack.c.h.b16 %v513
  %v2481 = vunpack.c.l.b16 %v514
  %v2482 = vunpack.c.h.b16 %v514
  %v2483 = vunpack.c.l.b16 %v515
  %v2484 = vunpack.c.h.b16 %v515
  %v2485 = vunpack.c.l.b16 %v516
  %v2486 = vunpack.c.h.b16 %v516
  %v2487 = vunpack.c.l.b16 %v517
  %v2488 = vunpack.c.h.b16 %v517
  %v2489 = vunpack.c.l.b16 %v518
  %v2490 = vunpack.c.h.b16 %v518
  %v2491 = vunpack.c.l.b16 %v519
  %v2492 = vunpack.c.h.b16 %v519
  %v2493 = vunpack.c.l.b16 %v520
  %v2494 = vunpack.c.h.b16 %v520
  %v2495 = vunpack.c.l.b16 %v521
  %v2496 = vunpack.c.h.b16 %v521
  %v2497 = vunpack.c.l.b16 %v522
  %v2498 = vunpack.c.h.b16 %v522
  %v2499 = vunpack.c.l.b16 %v523
  %v2500 = vunpack.c.h.b16 %v523
  %v2501 = vunpack.c.l.b16 %v524
  %v2502 = vunpack.c.h.b16 %v524
  %v2503 = vunpack.c.l.b16 %v525
  %v2504 = vunpack.c.h.b16 %v525
  %v2505 = vunpack.c.l.b16 %v526
  %v2506 = vunpack.c.h.b16 %v526
  %v2507 = vunpack.c.l.b16 %v527
  %v2508 = vunpack.c.h.b16 %v527
  %v2509 = vunpack.c.l.b16 %v528
  %v2510 = vunpack.c.h.b16 %v528
  %v2511 = vunpack.c.l.b16 %v529
  %v2512 = vunpack.c.h.b16 %v529
  %v2513 = vunpack.c.l.b16 %v530
  %v2514 = vunpack.c.h.b16 %v530
  %v2515 = vunpack.c.l.b16 %v531
  %v2516 = vunpack.c.h.b16 %v531
  %v2517 = vunpack.c.l.b16 %v532
  %v2518 = vunpack.c.h.b16 %v532
  %v2519 = vunpack.c.l.b16 %v533
  %v2520 = vunpack.c.h.b16 %v533
  %v2521 = vunpack.c.l.b16 %v534
  %v2522 = vunpack.c.h.b16 %v534
  %v2523 = vunpack.c.l.b16 %v535
  %v2524 = vunpack.c.h.b16 %v535
  %v2525 = vunpack.c.l.b16 %v536
  %v2526 = vunpack.c.h.b16 %v536
  %v2527 = vunpack.c.l.b16 %v537
  %v2528 = vunpack.c.h.b16 %v537
  %v2529 = vunpack.c.l.b16 %v538
  %v2530 = vunpack.c.h.b16 %v538
  %v2531 = vunpack.c.l.b16 %v539
  %v2532 = vunpack.c.h.b16 %v539
  %v2533 = vunpack.c.l.b16 %v540
  %v2534 = vunpack.c.h.b16 %v540
  %v2535 = vunpack.c.l.b16 %v541
  %v2536 = vunpack.c.h.b16 %v541
  %v2537 = vunpack.c.l.b16 %v542
  %v2538 = vunpack.c.h.b16 %v542
  %v2539 = vunpack.c.l.b16 %v543
  %v2540 = vunpack.c.h.b16 %v543
  %v2541 = vunpack.c.l.b16 %v544
  %v2542 = vunpack.c.h.b16 %v544
  %v2543 = vunpack.c.l.b16 %v545
  %v2544 = vunpack.c.h.b16 %v545
  %v2545 = vunpack.c.l.b16 %v546
  %v2546 = vunpack.c.h.b16 %v546
  %v2547 = vunpack.c.l.b16 %v547
  %v2548 = vunpack.c.h.b16 %v547
  %v2549 = vunpack.c.l.b16 %v548
  %v2550 = vunpack.c.h.b16 %v548
  %v2551 = vunpack.c.l.b16 %v549
  %v2552 = vunpack.c.h.b16 %v549
  %v2553 = vunpack.c.l.b16 %v550
  %v2554 = vunpack.c.h.b16 %v550
  %v2555 = vunpack.c.l.b16 %v551
  %v2556 = vunpack.c.h.b16 %v551
  %v2557 = vunpack.c.l.b16 %v552
  %v2558 = vunpack.c.h.b16 %v552
  %v2559 = vunpack.c.l.b16 %v553
  %v2560 = vunpack.c.h.b16 %v553
  %v2561 = vunpack.c.l.b16 %v554
  %v2562 = vunpack.c.h.b16 %v554
  %v2563 = vunpack.c.l.b16 %v555
  %v2564 = vunpack.c.h.b16 %v555
  %v2565 = vunpack.c.l.b16 %v556
  %v2566 = vunpack.c.h.b16 %v556
  %v2567 = vunpack.c.l.b16 %v557
  %v2568 = vunpack.c.h.b16 %v557
  %v2569 = vunpack.c.l.b16 %v558
  %v2570 = vunpack.c.h.b16 %v558
  %v2571 = vunpack.c.l.b16 %v559
  %v2572 = vunpack.c.h.b16 %v559
  %v2573 = vunpack.c.l.b16 %v560
  %v2574 = vunpack.c.h.b16 %v560
  %v2575 = vunpack.c.l.b16 %v561
  %v2576 = vunpack.c.h.b16 %v561
  %v2577 = vunpack.c.l.b16 %v562
  %v2578 = vunpack.c.h.b16 %v562
  %v2579 = vunpack.c.l.b16 %v563
  %v2580 = vunpack.c.h.b16 %v563
  %v2581 = vunpack.c.l.b16 %v564
  %v2582 = vunpack.c.h.b16 %v564
  %v2583 = vunpack.c.l.b16 %v565
  %v2584 = vunpack.c.h.b16 %v565
  %v2585 = vunpack.c.l.b16 %v566
  %v2586 = vunpack.c.h.b16 %v566
  %v2587 = vunpack.c.l.b16 %v567
  %v2588 = vunpack.c.h.b16 %v567
  %v2589 = vunpack.c.l.b16 %v568
  %v2590 = vunpack.c.h.b16 %v568
  %v2591 = vunpack.c.l.b16 %v569
  %v2592 = vunpack.c.h.b16 %v569
  %v2593 = vunpack.c.l.b16 %v570
  %v2594 = vunpack.c.h.b16 %v570
  %v2595 = vunpack.c.l.b16 %v571
  %v2596 = vunpack.c.h.b16 %v571
  %v2597 = vunpack.c.l.b16 %v572
  %v2598 = vunpack.c.h.b16 %v572
  %v2599 = vunpack.c.l.b16 %v573
  %v2600 = vunpack.c.h.b16 %v573
  %v2601 = vunpack.c.l.b16 %v574
  %v2602 = vunpack.c.h.b16 %v574
  %v2603 = vunpack.c.l.b16 %v575
  %v2604 = vunpack.c.h.b16 %v575
  %v2605 = vunpack.c.l.b16 %v576
  %v2606 = vunpack.c.h.b16 %v576
  %v2607 = vunpack.c.l.b16 %v577
  %v2608 = vunpack.c.h.b16 %v577
  %v2609 = vunpack.c.l.b16 %v578
  %v2610 = vunpack.c.h.b16 %v578
  %v2611 = vunpack.c.l.b16 %v579
  %v2612 = vunpack.c.h.b16 %v579
  %v2613 = vunpack.c.l.b16 %v580
  %v2614 = vunpack.c.h.b16 %v580
  %v2615 = vunpack.c.l.b16 %v581
  %v2616 = vunpack.c.h.b16 %v581
  %v2617 = vunpack.c.l.b16 %v582
  %v2618 = vunpack.c.h.b16 %v582
  %v2619 = vunpack.c.l.b16 %v583
  %v2620 = vunpack.c.h.b16 %v583
  %v2621 = vunpack.c.l.b16 %v584
  %v2622 = vunpack.c.h.b16 %v584
  %v2623 = vunpack.c.l.b16 %v585
  %v2624 = vunpack.c.h.b16 %v585
  %v2625 = vunpack.c.l.b16 %v586
  %v2626 = vunpack.c.h.b16 %v586
  %v2627 = vunpack.c.l.b16 %v587
  %v2628 = vunpack.c.h.b16 %v587
  %v2629 = vunpack.c.l.b16 %v588
  %v2630 = vunpack.c.h.b16 %v588
  %v2631 = vunpack.c.l.b16 %v589
  %v2632 = vunpack.c.h.b16 %v589
  %v2633 = vunpack.c.l.b16 %v590
  %v2634 = vunpack.c.h.b16 %v590
  %v2635 = vunpack.c.l.b16 %v591
  %v2636 = vunpack.c.h.b16 %v591
  %v2637 = vunpack.c.l.b16 %v592
  %v2638 = vunpack.c.h.b16 %v592
  %v2639 = vunpack.c.l.b16 %v593
  %v2640 = vunpack.c.h.b16 %v593
  %v2641 = vunpack.c.l.b16 %v594
  %v2642 = vunpack.c.h.b16 %v594
  %v2643 = vunpack.c.l.b16 %v595
  %v2644 = vunpack.c.h.b16 %v595
  %v2645 = vunpack.c.l.b16 %v596
  %v2646 = vunpack.c.h.b16 %v596
  %v2647 = vunpack.c.l.b16 %v597
  %v2648 = vunpack.c.h.b16 %v597
  %v2649 = vunpack.c.l.b16 %v598
  %v2650 = vunpack.c.h.b16 %v598
  %v2651 = vunpack.c.l.b16 %v599
  %v2652 = vunpack.c.h.b16 %v599
  %v2653 = vunpack.c.l.b16 %v600
  %v2654 = vunpack.c.h.b16 %v600
  %v2655 = vunpack.c.l.b16 %v601
  %v2656 = vunpack.c.h.b16 %v601
  %v2657 = vunpack.c.l.b16 %v602
  %v2658 = vunpack.c.h.b16 %v602
  %v2659 = vunpack.c.l.b16 %v603
  %v2660 = vunpack.c.h.b16 %v603
  %v2661 = vunpack.c.l.b16 %v604
  %v2662 = vunpack.c.h.b16 %v604
  %v2663 = vunpack.c.l.b16 %v605
  %v2664 = vunpack.c.h.b16 %v605
  %v2665 = vunpack.c.l.b16 %v606
  %v2666 = vunpack.c.h.b16 %v606
  %v2667 = vunpack.c.l.b16 %v607
  %v2668 = vunpack.c.h.b16 %v607
  %v2669 = vunpack.c.l.b16 %v608
  %v2670 = vunpack.c.h.b16 %v608
  %v2671 = vunpack.c.l.b16 %v609
  %v2672 = vunpack.c.h.b16 %v609
  %v2673 = vunpack.c.l.b16 %v610
  %v2674 = vunpack.c.h.b16 %v610
  %v2675 = vunpack.c.l.b16 %v611
  %v2676 = vunpack.c.h.b16 %v611
  %v2677 = vunpack.c.l.b16 %v612
  %v2678 = vunpack.c.h.b16 %v612
  %v2679 = vunpack.c.l.b16 %v613
  %v2680 = vunpack.c.h.b16 %v613
  %v2681 = vunpack.c.l.b16 %v614
  %v2682 = vunpack.c.h.b16 %v614
  %v2683 = vunpack.c.l.b16 %v615
  %v2684 = vunpack.c.h.b16 %v615
  %v2685 = vunpack.c.l.b16 %v616
  %v2686 = vunpack.c.h.b16 %v616
  %v2687 = vunpack.c.l.b16 %v617
  %v2688 = vunpack.c.h.b16 %v617
  %v2689 = vunpack.c.l.b16 %v618
  %v2690 = vunpack.c.h.b16 %v618
  %v2691 = vunpack.c.l.b16 %v619
  %v2692 = vunpack.c.h.b16 %v619
  %v2693 = vunpack.c.l.b16 %v620
  %v2694 = vunpack.c.h.b16 %v620
  %v2695 = vunpack.c.l.b16 %v621
  %v2696 = vunpack.c.h.b16 %v621
  %v2697 = vunpack.c.l.b16 %v622
  %v2698 = vunpack.c.h.b16 %v622
  %v2699 = vunpack.c.l.b16 %v623
  %v2700 = vunpack.c.h.b16 %v623
  %v2701 = vunpack.c.l.b16 %v624
  %v2702 = vunpack.c.h.b16 %v624
  %v2703 = vunpack.c.l.b16 %v625
  %v2704 = vunpack.c.h.b16 %v625
  %v2705 = vunpack.c.l.b16 %v626
  %v2706 = vunpack.c.h.b16 %v626
  %v2707 = vunpack.c.l.b16 %v627
  %v2708 = vunpack.c.h.b16 %v627
  %v2709 = vunpack.c.l.b16 %v628
  %v2710 = vunpack.c.h.b16 %v628
  %v2711 = vunpack.c.l.b16 %v629
  %v2712 = vunpack.c.h.b16 %v629
  %v2713 = vunpack.c.l.b16 %v630
  %v2714 = vunpack.c.h.b16 %v630
  %v2715 = vunpack.c.l.b16 %v631
  %v2716 = vunpack.c.h.b16 %v631
  %v2717 = vunpack.c.l.b16 %v632
  %v2718 = vunpack.c.h.b16 %v632
  %v2719 = vunpack.c.l.b16 %v633
  %v2720 = vunpack.c.h.b16 %v633
  %v2721 = vunpack.c.l.b16 %v634
  %v2722 = vunpack.c.h.b16 %v634
  %v2723 = vunpack.c.l.b16 %v635
  %v2724 = vunpack.c.h.b16 %v635
  %v2725 = vunpack.c.l.b16 %v636
  %v2726 = vunpack.c.h.b16 %v636
  %v2727 = vunpack.c.l.b16 %v637
  %v2728 = vunpack.c.h.b16 %v637
  %v2729 = vunpack.c.l.b16 %v638
  %v2730 = vunpack.c.h.b16 %v638
  %v2731 = vunpack.c.l.b16 %v639
  %v2732 = vunpack.c.h.b16 %v639
  %v2733 = vunpack.c.l.b16 %v640
  %v2734 = vunpack.c.h.b16 %v640
  %v2735 = vunpack.c.l.b16 %v641
  %v2736 = vunpack.c.h.b16 %v641
  %v2737 = vunpack.c.l.b16 %v642
  %v2738 = vunpack.c.h.b16 %v642
  %v2739 = vunpack.c.l.b16 %v643
  %v2740 = vunpack.c.h.b16 %v643
  %v2741 = vunpack.c.l.b16 %v644
  %v2742 = vunpack.c.h.b16 %v644
  %v2743 = vunpack.c.l.b16 %v645
  %v2744 = vunpack.c.h.b16 %v645
  %v2745 = vunpack.c.l.b16 %v646
  %v2746 = vunpack.c.h.b16 %v646
  %v2747 = vunpack.c.l.b16 %v647
  %v2748 = vunpack.c.h.b16 %v647
  %v2749 = vunpack.c.l.b16 %v648
  %v2750 = vunpack.c.h.b16 %v648
  %v2751 = vunpack.c.l.b16 %v649
  %v2752 = vunpack.c.h.b16 %v649
  %v2753 = vunpack.c.l.b16 %v650
  %v2754 = vunpack.c.h.b16 %v650
  %v2755 = vunpack.c.l.b16 %v651
  %v2756 = vunpack.c.h.b16 %v651
  %v2757 = vunpack.c.l.b16 %v652
  %v2758 = vunpack.c.h.b16 %v652
  %v2759 = vunpack.c.l.b16 %v653
  %v2760 = vunpack.c.h.b16 %v653
  %v2761 = vunpack.c.l.b16 %v654
  %v2762 = vunpack.c.h.b16 %v654
  %v2763 = vunpack.c.l.b16 %v655
  %v2764 = vunpack.c.h.b16 %v655
  %v2765 = vunpack.c.l.b16 %v656
  %v2766 = vunpack.c.h.b16 %v656
  %v2767 = vunpack.c.l.b16 %v657
  %v2768 = vunpack.c.h.b16 %v657
  %v2769 = vunpack.c.l.b16 %v658
  %v2770 = vunpack.c.h.b16 %v658
  %v2771 = vunpack.c.l.b16 %v659
  %v2772 = vunpack.c.h.b16 %v659
  %v2773 = vunpack.c.l.b16 %v660
  %v2774 = vunpack.c.h.b16 %v660
  %v2775 = vunpack.c.l.b16 %v661
  %v2776 = vunpack.c.h.b16 %v661
  %v2777 = vunpack.c.l.b16 %v662
  %v2778 = vunpack.c.h.b16 %v662
  %v2779 = vunpack.c.l.b16 %v663
  %v2780 = vunpack.c.h.b16 %v663
  %v2781 = vunpack.c.l.b16 %v664
  %v2782 = vunpack.c.h.b16 %v664
  %v2783 = vunpack.c.l.b16 %v665
  %v2784 = vunpack.c.h.b16 %v665
  %v2785 = vunpack.c.l.b16 %v666
  %v2786 = vunpack.c.h.b16 %v666
  %v2787 = vunpack.c.l.b16 %v667
  %v2788 = vunpack.c.h.b16 %v667
  %v2789 = vunpack.c.l.b16 %v668
  %v2790 = vunpack.c.h.b16 %v668
  %v2791 = vunpack.c.l.b16 %v669
  %v2792 = vunpack.c.h.b16 %v669
  %v2793 = vunpack.c.l.b16 %v670
  %v2794 = vunpack.c.h.b16 %v670
  %v2795 = vunpack.c.l.b16 %v671
  %v2796 = vunpack.c.h.b16 %v671
  %v2797 = vunpack.c.l.b16 %v672
  %v2798 = vunpack.c.h.b16 %v672
  %v2799 = vunpack.c.l.b16 %v673
  %v2800 = vunpack.c.h.b16 %v673
  %v2801 = vunpack.c.l.b16 %v674
  %v2802 = vunpack.c.h.b16 %v674
  %v2803 = vunpack.c.l.b16 %v675
  %v2804 = vunpack.c.h.b16 %v675
  %v2805 = vunpack.c.l.b16 %v676
  %v2806 = vunpack.c.h.b16 %v676
  %v2807 = vunpack.c.l.b16 %v677
  %v2808 = vunpack.c.h.b16 %v677
  %v2809 = vunpack.c.l.b16 %v678
  %v2810 = vunpack.c.h.b16 %v678
  %v2811 = vunpack.c.l.b16 %v679
  %v2812 = vunpack.c.h.b16 %v679
  %v2813 = vunpack.c.l.b16 %v680
  %v2814 = vunpack.c.h.b16 %v680
  %v2815 = vunpack.c.l.b16 %v681
  %v2816 = vunpack.c.h.b16 %v681
  %v2817 = vunpack.c.l.b16 %v682
  %v2818 = vunpack.c.h.b16 %v682
  %v2819 = vunpack.c.l.b16 %v683
  %v2820 = vunpack.c.h.b16 %v683
  %v2821 = vunpack.c.l.b16 %v684
  %v2822 = vunpack.c.h.b16 %v684
  %v2823 = vunpack.c.l.b16 %v685
  %v2824 = vunpack.c.h.b16 %v685
  %v2825 = vunpack.c.l.b16 %v686
  %v2826 = vunpack.c.h.b16 %v686
  %v2827 = vunpack.c.l.b16 %v687
  %v2828 = vunpack.c.h.b16 %v687
  %v2829 = vunpack.c.l.b16 %v688
  %v2830 = vunpack.c.h.b16 %v688
  %v2831 = vunpack.c.l.b16 %v689
  %v2832 = vunpack.c.h.b16 %v689
  %v2833 = vunpack.c.l.b16 %v690
  %v2834 = vunpack.c.h.b16 %v690
  %v2835 = vunpack.c.l.b16 %v691
  %v2836 = vunpack.c.h.b16 %v691
  %v2837 = vunpack.c.l.b16 %v692
  %v2838 = vunpack.c.h.b16 %v692
  %v2839 = vunpack.c.l.b16 %v693
  %v2840 = vunpack.c.h.b16 %v693
  %v2841 = vunpack.c.l.b16 %v694
  %v2842 = vunpack.c.h.b16 %v694
  %v2843 = vunpack.c.l.b16 %v695
  %v2844 = vunpack.c.h.b16 %v695
  %v2845 = vunpack.c.l.b16 %v696
  %v2846 = vunpack.c.h.b16 %v696
  %v2847 = vunpack.c.l.b16 %v697
  %v2848 = vunpack.c.h.b16 %v697
  %v2849 = vunpack.c.l.b16 %v698
  %v2850 = vunpack.c.h.b16 %v698
  %v2851 = vunpack.c.l.b16 %v699
  %v2852 = vunpack.c.h.b16 %v699
  %v2853 = vunpack.c.l.b16 %v700
  %v2854 = vunpack.c.h.b16 %v700
  %v2855 = vunpack.c.l.b16 %v701
  %v2856 = vunpack.c.h.b16 %v701
  %v2857 = vunpack.c.l.b16 %v702
  %v2858 = vunpack.c.h.b16 %v702
  %v2859 = vunpack.c.l.b16 %v703
  %v2860 = vunpack.c.h.b16 %v703
  %v2861 = vunpack.c.l.b16 %v704
  %v2862 = vunpack.c.h.b16 %v704
  %v2863 = vunpack.c.l.b16 %v705
  %v2864 = vunpack.c.h.b16 %v705
  %v2865 = vunpack.c.l.b16 %v706
  %v2866 = vunpack.c.h.b16 %v706
  %v2867 = vunpack.c.l.b16 %v707
  %v2868 = vunpack.c.h.b16 %v707
  %v2869 = vunpack.c.l.b16 %v708
  %v2870 = vunpack.c.h.b16 %v708
  %v2871 = vunpack.c.l.b16 %v709
  %v2872 = vunpack.c.h.b16 %v709
  %v2873 = vunpack.c.l.b16 %v710
  %v2874 = vunpack.c.h.b16 %v710
  %v2875 = vunpack.c.l.b16 %v711
  %v2876 = vunpack.c.h.b16 %v711
  %v2877 = vunpack.c.l.b16 %v712
  %v2878 = vunpack.c.h.b16 %v712
  %v2879 = vunpack.c.l.b16 %v713
  %v2880 = vunpack.c.h.b16 %v713
  %v2881 = vunpack.c.l.b16 %v714
  %v2882 = vunpack.c.h.b16 %v714
  %v2883 = vunpack.c.l.b16 %v715
  %v2884 = vunpack.c.h.b16 %v715
  %v2885 = vunpack.c.l.b16 %v716
  %v2886 = vunpack.c.h.b16 %v716
  %v2887 = vunpack.c.l.b16 %v717
  %v2888 = vunpack.c.h.b16 %v717
  %v2889 = vunpack.c.l.b16 %v718
  %v2890 = vunpack.c.h.b16 %v718
  %v2891 = vunpack.c.l.b16 %v719
  %v2892 = vunpack.c.h.b16 %v719
  %v2893 = vunpack.c.l.b16 %v720
  %v2894 = vunpack.c.h.b16 %v720
  %v2895 = vunpack.c.l.b16 %v721
  %v2896 = vunpack.c.h.b16 %v721
  %v2897 = vunpack.c.l.b16 %v722
  %v2898 = vunpack.c.h.b16 %v722
  %v2899 = vunpack.c.l.b16 %v723
  %v2900 = vunpack.c.h.b16 %v723
  %v2901 = vunpack.c.l.b16 %v724
  %v2902 = vunpack.c.h.b16 %v724
  %v2903 = vunpack.c.l.b16 %v725
  %v2904 = vunpack.c.h.b16 %v725
  %v2905 = vunpack.c.l.b16 %v726
  %v2906 = vunpack.c.h.b16 %v726
  %v2907 = vunpack.c.l.b16 %v727
  %v2908 = vunpack.c.h.b16 %v727
  %v2909 = vunpack.c.l.b16 %v728
  %v2910 = vunpack.c.h.b16 %v728
  %v2911 = vunpack.c.l.b16 %v729
  %v2912 = vunpack.c.h.b16 %v729
  %v2913 = vunpack.c.l.b16 %v730
  %v2914 = vunpack.c.h.b16 %v730
  %v2915 = vunpack.c.l.b16 %v731
  %v2916 = vunpack.c.h.b16 %v731
  %v2917 = vunpack.c.l.b16 %v732
  %v2918 = vunpack.c.h.b16 %v732
  %v2919 = vunpack.c.l.b16 %v733
  %v2920 = vunpack.c.h.b16 %v733
  %v2921 = vunpack.c.l.b16 %v734
  %v2922 = vunpack.c.h.b16 %v734
  %v2923 = vunpack.c.l.b16 %v735
  %v2924 = vunpack.c.h.b16 %v735
  %v2925 = vunpack.c.l.b16 %v736
  %v2926 = vunpack.c.h.b16 %v736
  %v2927 = vunpack.c.l.b16 %v737
  %v2928 = vunpack.c.h.b16 %v737
  %v2929 = vunpack.c.l.b16 %v738
  %v2930 = vunpack.c.h.b16 %v738
  %v2931 = vunpack.c.l.b16 %v739
  %v2932 = vunpack.c.h.b16 %v739
  %v2933 = vunpack.c.l.b16 %v740
  %v2934 = vunpack.c.h.b16 %v740
  %v2935 = vunpack.c.l.b16 %v741
  %v2936 = vunpack.c.h.b16 %v741
  %v2937 = vunpack.c.l.b16 %v742
  %v2938 = vunpack.c.h.b16 %v742
  %v2939 = vunpack.c.l.b16 %v743
  %v2940 = vunpack.c.h.b16 %v743
  %v2941 = vunpack.c.l.b16 %v744
  %v2942 = vunpack.c.h.b16 %v744
  %v2943 = vunpack.c.l.b16 %v745
  %v2944 = vunpack.c.h.b16 %v745
  %v2945 = vunpack.c.l.b16 %v746
  %v2946 = vunpack.c.h.b16 %v746
  %v2947 = vunpack.c.l.b16 %v747
  %v2948 = vunpack.c.h.b16 %v747
  %v2949 = vunpack.c.l.b16 %v748
  %v2950 = vunpack.c.h.b16 %v748
  %v2951 = vunpack.c.l.b16 %v749
  %v2952 = vunpack.c.h.b16 %v749
  %v2953 = vunpack.c.l.b16 %v750
  %v2954 = vunpack.c.h.b16 %v750
  %v2955 = vunpack.c.l.b16 %v751
  %v2956 = vunpack.c.h.b16 %v751
  %v2957 = vunpack.c.l.b16 %v752
  %v2958 = vunpack.c.h.b16 %v752
  %v2959 = vunpack.c.l.b16 %v753
  %v2960 = vunpack.c.h.b16 %v753
  %v2961 = vunpack.c.l.b16 %v754
  %v2962 = vunpack.c.h.b16 %v754
  %v2963 = vunpack.c.l.b16 %v755
  %v2964 = vunpack.c.h.b16 %v755
  %v2965 = vunpack.c.l.b16 %v756
  %v2966 = vunpack.c.h.b16 %v756
  %v2967 = vunpack.c.l.b16 %v757
  %v2968 = vunpack.c.h.b16 %v757
  %v2969 = vunpack.c.l.b16 %v758
  %v2970 = vunpack.c.h.b16 %v758
  %v2971 = vunpack.c.l.b16 %v759
  %v2972 = vunpack.c.h.b16 %v759
  %v2973 = vunpack.c.l.b16 %v760
  %v2974 = vunpack.c.h.b16 %v760
  %v2975 = vunpack.c.l.b16 %v761
  %v2976 = vunpack.c.h.b16 %v761
  %v2977 = vunpack.c.l.b16 %v762
  %v2978 = vunpack.c.h.b16 %v762
  %v2979 = vpack.c.b16 %v1549, %v1539
  %v2980 = vpack.c.b16 %v1550, %v1540
  %v2981 = vpack.c.b16 %v1551, %v1541
  %v2982 = vpack.c.b16 %v1552, %v1542
  %v2983 = vpack.c.b16 %v1553, %v1543
  %v2984 = vpack.c.b16 %v1554, %v1544
  %v2985 = vpack.c.b16 %v1555, %v1545
  %v2986 = vpack.c.b16 %v1556, %v1546
  %v2987 = vpack.c.b16 %v1557, %v1547
  %v2988 = vpack.c.b16 %v1558, %v1548
  %v2989 = vpack.c.b16 %v1569, %v1559
  %v2990 = vpack.c.b16 %v1570, %v1560
  %v2991 = vpack.c.b16 %v1571, %v1561
  %v2992 = vpack.c.b16 %v1572, %v1562
  %v2993 = vpack.c.b16 %v1573, %v1563
  %v2994 = vpack.c.b16 %v1574, %v1564
  %v2995 = vpack.c.b16 %v1575, %v1565
  %v2996 = vpack.c.b16 %v1576, %v1566
  %v2997 = vpack.c.b16 %v1577, %v1567
  %v2998 = vpack.c.b16 %v1578, %v1568
  %v2999 = vpack.c.b16 %v1589, %v1579
  %v3000 = vpack.c.b16 %v1590, %v1580
  %v3001 = vpack.c.b16 %v1591, %v1581
  %v3002 = vpack.c.b16 %v1592, %v1582
  %v3003 = vpack.c.b16 %v1593, %v1583
  %v3004 = vpack.c.b16 %v1594, %v1584
  %v3005 = vpack.c.b16 %v1595, %v1585
  %v3006 = vpack.c.b16 %v1596, %v1586
  %v3007 = vpack.c.b16 %v1597, %v1587
  %v3008 = vpack.c.b16 %v1598, %v1588
  %v3009 = vpack.c.b16 %v1609, %v1599
  %v3010 = vpack.c.b16 %v1610, %v1600
  %v3011 = vpack.c.b16 %v1611, %v1601
  %v3012 = vpack.c.b16 %v1612, %v1602
  %v3013 = vpack.c.b16 %v1613, %v1603
  %v3014 = vpack.c.b16 %v1614, %v1604
  %v3015 = vpack.c.b16 %v1615, %v1605
  %v3016 = vpack.c.b16 %v1616, %v1606
  %v3017 = vpack.c.b16 %v1617, %v1607
  %v3018 = vpack.c.b16 %v1618, %v1608
  %v3019 = vpack.c.b16 %v1629, %v1619
  %v3020 = vpack.c.b16 %v1630, %v1620
  %v3021 = vpack.c.b16 %v1631, %v1621
  %v3022 = vpack.c.b16 %v1632, %v1622
  %v3023 = vpack.c.b16 %v1633, %v1623
  %v3024 = vpack.c.b16 %v1634, %v1624
  %v3025 = vpack.c.b16 %v1635, %v1625
  %v3026 = vpack.c.b16 %v1636, %v1626
  %v3027 = vpack.c.b16 %v1637, %v1627
  %v3028 = vpack.c.b16 %v1638, %v1628
  %v3029 = vpack.c.b16 %v1649, %v1639
  %v3030 = vpack.c.b16 %v1650, %v1640
  %v3031 = vpack.c.b16 %v1651, %v1641
  %v3032 = vpack.c.b16 %v1652, %v1642
  %v3033 = vpack.c.b16 %v1653, %v1643
  %v3034 = vpack.c.b16 %v1654, %v1644
  %v3035 = vpack.c.b16 %v1655, %v1645
  %v3036 = vpack.c.b16 %v1656, %v1646
  %v3037 = vpack.c.b16 %v1657, %v1647
  %v3038 = vpack.c.b16 %v1658, %v1648
  %v3039 = vpack.c.b16 %v1669, %v1659
  %v3040 = vpack.c.b16 %v1670, %v1660
  %v3041 = vpack.c.b16 %v1671, %v1661
  %v3042 = vpack.c.b16 %v1672, %v1662
  %v3043 = vpack.c.b16 %v1673, %v1663
  %v3044 = vpack.c.b16 %v1674, %v1664
  %v3045 = vpack.c.b16 %v1675, %v1665
  %v3046 = vpack.c.b16 %v1676, %v1666
  %v3047 = vpack.c.b16 %v1677, %v1667
  %v3048 = vpack.c.b16 %v1678, %v1668
  %v3049 = vpack.c.b16 %v1689, %v1679
  %v3050 = vpack.c.b16 %v1690, %v1680
  %v3051 = vpack.c.b16 %v1691, %v1681
  %v3052 = vpack.c.b16 %v1692, %v1682
  %v3053 = vpack.c.b16 %v1693, %v1683
  %v3054 = vpack.c.b16 %v1694, %v1684
  %v3055 = vpack.c.b16 %v1695, %v1685
  %v3056 = vpack.c.b16 %v1696, %v1686
  %v3057 = vpack.c.b16 %v1697, %v1687
  %v3058 = vpack.c.b16 %v1698, %v1688
  %v3059 = vpack.c.b16 %v1709, %v1699
  %v3060 = vpack.c.b16 %v1710, %v1700
  %v3061 = vpack.c.b16 %v1711, %v1701
  %v3062 = vpack.c.b16 %v1712, %v1702
  %v3063 = vpack.c.b16 %v1713, %v1703
  %v3064 = vpack.c.b16 %v1714, %v1704
  %v3065 = vpack.c.b16 %v1715, %v1705
  %v3066 = vpack.c.b16 %v1716, %v1706
  %v3067 = vpack.c.b16 %v1717, %v1707
  %v3068 = vpack.c.b16 %v1718, %v1708
  %v3069 = vpack.c.b16 %v1729, %v1719
  %v3070 = vpack.c.b16 %v1730, %v1720
  %v3071 = vpack.c.b16 %v1731, %v1721
  %v3072 = vpack.c.b16 %v1732, %v1722
  %v3073 = vpack.c.b16 %v1733, %v1723
  %v3074 = vpack.c.b16 %v1734, %v1724
  %v3075 = vpack.c.b16 %v1735, %v1725
  %v3076 = vpack.c.b16 %v1736, %v1726
  %v3077 = vpack.c.b16 %v1737, %v1727
  %v3078 = vpack.c.b16 %v1738, %v1728
  %v3079 = vpack.c.b16 %v1749, %v1739
  %v3080 = vpack.c.b16 %v1750, %v1740
  %v3081 = vpack.c.b16 %v1751, %v1741
  %v3082 = vpack.c.b16 %v1752, %v1742
  %v3083 = vpack.c.b16 %v1753, %v1743
  %v3084 = vpack.c.b16 %v1754, %v1744
  %v3085 = vpack.c.b16 %v1755, %v1745
  %v3086 = vpack.c.b16 %v1756, %v1746
  %v3087 = vpack.c.b16 %v1757, %v1747
  %v3088 = vpack.c.b16 %v1758, %v1748
  %v3089 = vpack.c.b16 %v1769, %v1759
  %v3090 = vpack.c.b16 %v1770, %v1760
  %v3091 = vpack.c.b16 %v1771, %v1761
  %v3092 = vpack.c.b16 %v1772, %v1762
  %v3093 = vpack.c.b16 %v1773, %v1763
  %v3094 = vpack.c.b16 %v1774, %v1764
  %v3095 = vpack.c.b16 %v1775, %v1765
  %v3096 = vpack.c.b16 %v1776, %v1766
  %v3097 = vpack.c.b16 %v1777, %v1767
  %v3098 = vpack.c.b16 %v1778, %v1768
  %v3099 = vpack.c.b16 %v1789, %v1779
  %v3100 = vpack.c.b16 %v1790, %v1780
  %v3101 = vpack.c.b16 %v1791, %v1781
  %v3102 = vpack.c.b16 %v1792, %v1782
  %v3103 = vpack.c.b16 %v1793, %v1783
  %v3104 = vpack.c.b16 %v1794, %v1784
  %v3105 = vpack.c.b16 %v1795, %v1785
  %v3106 = vpack.c.b16 %v1796, %v1786
  %v3107 = vpack.c.b16 %v1797, %v1787
  %v3108 = vpack.c.b16 %v1798, %v1788
  %v3109 = vpack.c.b16 %v1809, %v1799
  %v3110 = vpack.c.b16 %v1810, %v1800
  %v3111 = vpack.c.b16 %v1811, %v1801
  %v3112 = vpack.c.b16 %v1812, %v1802
  %v3113 = vpack.c.b16 %v1813, %v1803
  %v3114 = vpack.c.b16 %v1814, %v1804
  %v3115 = vpack.c.b16 %v1815, %v1805
  %v3116 = vpack.c.b16 %v1816, %v1806
  %v3117 = vpack.c.b16 %v1817, %v1807
  %v3118 = vpack.c.b16 %v1818, %v1808
  %v3119 = vpack.c.b16 %v1829, %v1819
  %v3120 = vpack.c.b16 %v1830, %v1820
  %v3121 = vpack.c.b16 %v1831, %v1821
  %v3122 = vpack.c.b16 %v1832, %v1822
  %v3123 = vpack.c.b16 %v1833, %v1823
  %v3124 = vpack.c.b16 %v1834, %v1824
  %v3125 = vpack.c.b16 %v1835, %v1825
  %v3126 = vpack.c.b16 %v1836, %v1826
  %v3127 = vpack.c.b16 %v1837, %v1827
  %v3128 = vpack.c.b16 %v1838, %v1828
  %v3129 = vpack.c.b16 %v1849, %v1839
  %v3130 = vpack.c.b16 %v1850, %v1840
  %v3131 = vpack.c.b16 %v1851, %v1841
  %v3132 = vpack.c.b16 %v1852, %v1842
  %v3133 = vpack.c.b16 %v1853, %v1843
  %v3134 = vpack.c.b16 %v1854, %v1844
  %v3135 = vpack.c.b16 %v1855, %v1845
  %v3136 = vpack.c.b16 %v1856, %v1846
  %v3137 = vpack.c.b16 %v1857, %v1847
  %v3138 = vpack.c.b16 %v1858, %v1848
  %v3139 = vpack.c.b16 %v1869, %v1859
  %v3140 = vpack.c.b16 %v1870, %v1860
  %v3141 = vpack.c.b16 %v1871, %v1861
  %v3142 = vpack.c.b16 %v1872, %v1862
  %v3143 = vpack.c.b16 %v1873, %v1863
  %v3144 = vpack.c.b16 %v1874, %v1864
  %v3145 = vpack.c.b16 %v1875, %v1865
  %v3146 = vpack.c.b16 %v1876, %v1866
  %v3147 = vpack.c.b16 %v1877, %v1867
  %v3148 = vpack.c.b16 %v1878, %v1868
  %v3149 = vpack.c.b16 %v1889, %v1879
  %v3150 = vpack.c.b16 %v1890, %v1880
  %v3151 = vpack.c.b16 %v1891, %v1881
  %v3152 = vpack.c.b16 %v1892, %v1882
  %v3153 = vpack.c.b16 %v1893, %v1883
  %v3154 = vpack.c.b16 %v1894, %v1884
  %v3155 = vpack.c.b16 %v1895, %v1885
  %v3156 = vpack.c.b16 %v1896, %v1886
  %v3157 = vpack.c.b16 %v1897, %v1887
  %v3158 = vpack.c.b16 %v1898, %v1888
  %v3159 = vpack.c.b16 %v1909, %v1899
  %v3160 = vpack.c.b16 %v1910, %v1900
  %v3161 = vpack.c.b16 %v1911, %v1901
  %v3162 = vpack.c.b16 %v1912, %v1902
  %v3163 = vpack.c.b16 %v1913, %v1903
  %v3164 = vpack.c.b16 %v1914, %v1904
  %v3165 = vpack.c.b16 %v1915, %v1905
  %v3166 = vpack.c.b16 %v1916, %v1906
  %v3167 = vpack.c.b16 %v1917, %v1907
  %v3168 = vpack.c.b16 %v1918, %v1908
  %v3169 = vpack.c.b16 %v1929, %v1919
  %v3170 = vpack.c.b16 %v1930, %v1920
  %v3171 = vpack.c.b16 %v1931, %v1921
  %v3172 = vpack.c.b16 %v1932, %v1922
  %v3173 = vpack.c.b16 %v1933, %v1923
  %v3174 = vpack.c.b16 %v1934, %v1924
  %v3175 = vpack.c.b16 %v1935, %v1925
  %v3176 = vpack.c.b16 %v1936, %v1926
  %v3177 = vpack.c.b16 %v1937, %v1927
  %v3178 = vpack.c.b16 %v1938, %v1928
  %v3179 = vpack.c.b16 %v1949, %v1939
  %v3180 = vpack.c.b16 %v1950, %v1940
  %v3181 = vpack.c.b16 %v1951, %v1941
  %v3182 = vpack.c.b16 %v1952, %v1942
  %v3183 = vpack.c.b16 %v1953, %v1943
  %v3184 = vpack.c.b16 %v1954, %v1944
  %v3185 = vpack.c.b16 %v1955, %v1945
  %v3186 = vpack.c.b16 %v1956, %v1946
  %v3187 = vpack.c.b16 %v1957, %v1947
  %v3188 = vpack.c.b16 %v1958, %v1948
  %v3189 = vpack.c.b16 %v1969, %v1959
  %v3190 = vpack.c.b16 %v1970, %v1960
  %v3191 = vpack.c.b16 %v1971, %v1961
  %v3192 = vpack.c.b16 %v1972, %v1962
  %v3193 = vpack.c.b16 %v1973, %v1963
  %v3194 = vpack.c.b16 %v1974, %v1964
  %v3195 = vpack.c.b16 %v1975, %v1965
  %v3196 = vpack.c.b16 %v1976, %v1966
  %v3197 = vpack.c.b16 %v1977, %v1967
  %v3198 = vpack.c.b16 %v1978, %v1968
  %v3199 = vpack.c.b16 %v1989, %v1979
  %v3200 = vpack.c.b16 %v1990, %v1980
  %v3201 = vpack.c.b16 %v1991, %v1981
  %v3202 = vpack.c.b16 %v1992, %v1982
  %v3203 = vpack.c.b16 %v1993, %v1983
  %v3204 = vpack.c.b16 %v1994, %v1984
  %v3205 = vpack.c.b16 %v1995, %v1985
  %v3206 = vpack.c.b16 %v1996, %v1986
  %v3207 = vpack.c.b16 %v1997, %v1987
  %v3208 = vpack.c.b16 %v1998, %v1988
  %v3209 = vpack.c.b16 %v2009, %v1999
  %v3210 = vpack.c.b16 %v2010, %v2000
  %v3211 = vpack.c.b16 %v2011, %v2001
  %v3212 = vpack.c.b16 %v2012, %v2002
  %v3213 = vpack.c.b16 %v2013, %v2003
  %v3214 = vpack.c.b16 %v2014, %v2004
  %v3215 = vpack.c.b16 %v2015, %v2005
  %v3216 = vpack.c.b16 %v2016, %v2006
  %v3217 = vpack.c.b16 %v2017, %v2007
  %v3218 = vpack.c.b16 %v2018, %v2008
  %v3219 = vpack.c.b16 %v2029, %v2019
  %v3220 = vpack.c.b16 %v2030, %v2020
  %v3221 = vpack.c.b16 %v2031, %v2021
  %v3222 = vpack.c.b16 %v2032, %v2022
  %v3223 = vpack.c.b16 %v2033, %v2023
  %v3224 = vpack.c.b16 %v2034, %v2024
  %v3225 = vpack.c.b16 %v2035, %v2025
  %v3226 = vpack.c.b16 %v2036, %v2026
  %v3227 = vpack.c.b16 %v2037, %v2027
  %v3228 = vpack.c.b16 %v2038, %v2028
  %v3229 = vpack.c.b16 %v2049, %v2039
  %v3230 = vpack.c.b16 %v2050, %v2040
  %v3231 = vpack.c.b16 %v2051, %v2041
  %v3232 = vpack.c.b16 %v2052, %v2042
  %v3233 = vpack.c.b16 %v2053, %v2043
  %v3234 = vpack.c.b16 %v2054, %v2044
  %v3235 = vpack.c.b16 %v2055, %v2045
  %v3236 = vpack.c.b16 %v2056, %v2046
  %v3237 = vpack.c.b16 %v2057, %v2047
  %v3238 = vpack.c.b16 %v2058, %v2048
  %v3239 = vpack.c.b16 %v2069, %v2059
  %v3240 = vpack.c.b16 %v2070, %v2060
  %v3241 = vpack.c.b16 %v2071, %v2061
  %v3242 = vpack.c.b16 %v2072, %v2062
  %v3243 = vpack.c.b16 %v2073, %v2063
  %v3244 = vpack.c.b16 %v2074, %v2064
  %v3245 = vpack.c.b16 %v2075, %v2065
  %v3246 = vpack.c.b16 %v2076, %v2066
  %v3247 = vpack.c.b16 %v2077, %v2067
  %v3248 = vpack.c.b16 %v2078, %v2068
  %v3249 = vpack.c.b16 %v2089, %v2079
  %v3250 = vpack.c.b16 %v2090, %v2080
  %v3251 = vpack.c.b16 %v2091, %v2081
  %v3252 = vpack.c.b16 %v2092, %v2082
  %v3253 = vpack.c.b16 %v2093, %v2083
  %v3254 = vpack.c.b16 %v2094, %v2084
  %v3255 = vpack.c.b16 %v2095, %v2085
  %v3256 = vpack.c.b16 %v2096, %v2086
  %v3257 = vpack.c.b16 %v2097, %v2087
  %v3258 = vpack.c.b16 %v2098, %v2088
  %v3259 = vpack.c.b16 %v2109, %v2099
  %v3260 = vpack.c.b16 %v2110, %v2100
  %v3261 = vpack.c.b16 %v2111, %v2101
  %v3262 = vpack.c.b16 %v2112, %v2102
  %v3263 = vpack.c.b16 %v2113, %v2103
  %v3264 = vpack.c.b16 %v2114, %v2104
  %v3265 = vpack.c.b16 %v2115, %v2105
  %v3266 = vpack.c.b16 %v2116, %v2106
  %v3267 = vpack.c.b16 %v2117, %v2107
  %v3268 = vpack.c.b16 %v2118, %v2108
  %v3269 = vpack.c.b16 %v2129, %v2119
  %v3270 = vpack.c.b16 %v2130, %v2120
  %v3271 = vpack.c.b16 %v2131, %v2121
  %v3272 = vpack.c.b16 %v2132, %v2122
  %v3273 = vpack.c.b16 %v2133, %v2123
  %v3274 = vpack.c.b16 %v2134, %v2124
  %v3275 = vpack.c.b16 %v2135, %v2125
  %v3276 = vpack.c.b16 %v2136, %v2126
  %v3277 = vpack.c.b16 %v2137, %v2127
  %v3278 = vpack.c.b16 %v2138, %v2128
  %v3279 = vpack.c.b16 %v2149, %v2139
  %v3280 = vpack.c.b16 %v2150, %v2140
  %v3281 = vpack.c.b16 %v2151, %v2141
  %v3282 = vpack.c.b16 %v2152, %v2142
  %v3283 = vpack.c.b16 %v2153, %v2143
  %v3284 = vpack.c.b16 %v2154, %v2144
  %v3285 = vpack.c.b16 %v2155, %v2145
  %v3286 = vpack.c.b16 %v2156, %v2146
  %v3287 = vpack.c.b16 %v2157, %v2147
  %v3288 = vpack.c.b16 %v2158, %v2148
  %v3289 = vpack.c.b16 %v2169, %v2159
  %v3290 = vpack.c.b16 %v2170, %v2160
  %v3291 = vpack.c.b16 %v2171, %v2161
  %v3292 = vpack.c.b16 %v2172, %v2162
  %v3293 = vpack.c.b16 %v2173, %v2163
  %v3294 = vpack.c.b16 %v2174, %v2164
  %v3295 = vpack.c.b16 %v2175, %v2165
  %v3296 = vpack.c.b16 %v2176, %v2166
  %v3297 = vpack.c.b16 %v2177, %v2167
  %v3298 = vpack.c.b16 %v2178, %v2168
  %v3299 = vpack.c.b16 %v2189, %v2179
  %v3300 = vpack.c.b16 %v2190, %v2180
  %v3301 = vpack.c.b16 %v2191, %v2181
  %v3302 = vpack.c.b16 %v2192, %v2182
  %v3303 = vpack.c.b16 %v2193, %v2183
  %v3304 = vpack.c.b16 %v2194, %v2184
  %v3305 = vpack.c.b16 %v2195, %v2185
  %v3306 = vpack.c.b16 %v2196, %v2186
  %v3307 = vpack.c.b16 %v2197, %v2187
  %v3308 = vpack.c.b16 %v2198, %v2188
  %v3309 = vpack.c.b16 %v2209, %v2199
  %v3310 = vpack.c.b16 %v2210, %v2200
  %v3311 = vpack.c.b16 %v2211, %v2201
  %v3312 = vpack.c.b16 %v2212, %v2202
  %v3313 = vpack.c.b16 %v2213, %v2203
  %v3314 = vpack.c.b16 %v2214, %v2204
  %v3315 = vpack.c.b16 %v2215, %v2205
  %v3316 = vpack.c.b16 %v2216, %v2206
  %v3317 = vpack.c.b16 %v2217, %v2207
  %v3318 = vpack.c.b16 %v2218, %v2208
  %v3319 = vpack.c.b16 %v2229, %v2219
  %v3320 = vpack.c.b16 %v2230, %v2220
  %v3321 = vpack.c.b16 %v2231, %v2221
  %v3322 = vpack.c.b16 %v2232, %v2222
  %v3323 = vpack.c.b16 %v2233, %v2223
  %v3324 = vpack.c.b16 %v2234, %v2224
  %v3325 = vpack.c.b16 %v2235, %v2225
  %v3326 = vpack.c.b16 %v2236, %v2226
  %v3327 = vpack.c.b16 %v2237, %v2227
  %v3328 = vpack.c.b16 %v2238, %v2228
  %v3329 = vpack.c.b16 %v2249, %v2239
  %v3330 = vpack.c.b16 %v2250, %v2240
  %v3331 = vpack.c.b16 %v2251, %v2241
  %v3332 = vpack.c.b16 %v2252, %v2242
  %v3333 = vpack.c.b16 %v2253, %v2243
  %v3334 = vpack.c.b16 %v2254, %v2244
  %v3335 = vpack.c.b16 %v2255, %v2245
  %v3336 = vpack.c.b16 %v2256, %v2246
  %v3337 = vpack.c.b16 %v2257, %v2247
  %v3338 = vpack.c.b16 %v2258, %v2248
  %v3339 = vpack.c.b16 %v2269, %v2259
  %v3340 = vpack.c.b16 %v2270, %v2260
  %v3341 = vpack.c.b16 %v2271, %v2261
  %v3342 = vpack.c.b16 %v2272, %v2262
  %v3343 = vpack.c.b16 %v2273, %v2263
  %v3344 = vpack.c.b16 %v2274, %v2264
  %v3345 = vpack.c.b16 %v2275, %v2265
  %v3346 = vpack.c.b16 %v2276, %v2266
  %v3347 = vpack.c.b16 %v2277, %v2267
  %v3348 = vpack.c.b16 %v2278, %v2268
  %v3349 = vpack.c.b16 %v2289, %v2279
  %v3350 = vpack.c.b16 %v2290, %v2280
  %v3351 = vpack.c.b16 %v2291, %v2281
  %v3352 = vpack.c.b16 %v2292, %v2282
  %v3353 = vpack.c.b16 %v2293, %v2283
  %v3354 = vpack.c.b16 %v2294, %v2284
  %v3355 = vpack.c.b16 %v2295, %v2285
  %v3356 = vpack.c.b16 %v2296, %v2286
  %v3357 = vpack.c.b16 %v2297, %v2287
  %v3358 = vpack.c.b16 %v2298, %v2288
  %v3359 = vpack.c.b16 %v2309, %v2299
  %v3360 = vpack.c.b16 %v2310, %v2300
  %v3361 = vpack.c.b16 %v2311, %v2301
  %v3362 = vpack.c.b16 %v2312, %v2302
  %v3363 = vpack.c.b16 %v2313, %v2303
  %v3364 = vpack.c.b16 %v2314, %v2304
  %v3365 = vpack.c.b16 %v2315, %v2305
  %v3366 = vpack.c.b16 %v2316, %v2306
  %v3367 = vpack.c.b16 %v2317, %v2307
  %v3368 = vpack.c.b16 %v2318, %v2308
  %v3369 = vpack.c.b16 %v2329, %v2319
  %v3370 = vpack.c.b16 %v2330, %v2320
  %v3371 = vpack.c.b16 %v2331, %v2321
  %v3372 = vpack.c.b16 %v2332, %v2322
  %v3373 = vpack.c.b16 %v2333, %v2323
  %v3374 = vpack.c.b16 %v2334, %v2324
  %v3375 = vpack.c.b16 %v2335, %v2325
  %v3376 = vpack.c.b16 %v2336, %v2326
  %v3377 = vpack.c.b16 %v2337, %v2327
  %v3378 = vpack.c.b16 %v2338, %v2328
  %v3379 = vpack.c.b16 %v2349, %v2339
  %v3380 = vpack.c.b16 %v2350, %v2340
  %v3381 = vpack.c.b16 %v2351, %v2341
  %v3382 = vpack.c.b16 %v2352, %v2342
  %v3383 = vpack.c.b16 %v2353, %v2343
  %v3384 = vpack.c.b16 %v2354, %v2344
  %v3385 = vpack.c.b16 %v2355, %v2345
  %v3386 = vpack.c.b16 %v2356, %v2346
  %v3387 = vpack.c.b16 %v2357, %v2347
  %v3388 = vpack.c.b16 %v2358, %v2348
  %v3389 = vpack.c.b16 %v2369, %v2359
  %v3390 = vpack.c.b16 %v2370, %v2360
  %v3391 = vpack.c.b16 %v2371, %v2361
  %v3392 = vpack.c.b16 %v2372, %v2362
  %v3393 = vpack.c.b16 %v2373, %v2363
  %v3394 = vpack.c.b16 %v2374, %v2364
  %v3395 = vpack.c.b16 %v2375, %v2365
  %v3396 = vpack.c.b16 %v2376, %v2366
  %v3397 = vpack.c.b16 %v2377, %v2367
  %v3398 = vpack.c.b16 %v2378, %v2368
  %v3399 = vpack.c.b16 %v2389, %v2379
  %v3400 = vpack.c.b16 %v2390, %v2380
  %v3401 = vpack.c.b16 %v2391, %v2381
  %v3402 = vpack.c.b16 %v2392, %v2382
  %v3403 = vpack.c.b16 %v2393, %v2383
  %v3404 = vpack.c.b16 %v2394, %v2384
  %v3405 = vpack.c.b16 %v2395, %v2385
  %v3406 = vpack.c.b16 %v2396, %v2386
  %v3407 = vpack.c.b16 %v2397, %v2387
  %v3408 = vpack.c.b16 %v2398, %v2388
  %v3409 = vpack.c.b16 %v2409, %v2399
  %v3410 = vpack.c.b16 %v2410, %v2400
  %v3411 = vpack.c.b16 %v2411, %v2401
  %v3412 = vpack.c.b16 %v2412, %v2402
  %v3413 = vpack.c.b16 %v2413, %v2403
  %v3414 = vpack.c.b16 %v2414, %v2404
  %v3415 = vpack.c.b16 %v2415, %v2405
  %v3416 = vpack.c.b16 %v2416, %v2406
  %v3417 = vpack.c.b16 %v2417, %v2407
  %v3418 = vpack.c.b16 %v2418, %v2408
  %v3419 = vpack.c.b16 %v2429, %v2419
  %v3420 = vpack.c.b16 %v2430, %v2420
  %v3421 = vpack.c.b16 %v2431, %v2421
  %v3422 = vpack.c.b16 %v2432, %v2422
  %v3423 = vpack.c.b16 %v2433, %v2423
  %v3424 = vpack.c.b16 %v2434, %v2424
  %v3425 = vpack.c.b16 %v2435, %v2425
  %v3426 = vpack.c.b16 %v2436, %v2426
  %v3427 = vpack.c.b16 %v2437, %v2427
  %v3428 = vpack.c.b16 %v2438, %v2428
  %v3429 = vpack.c.b16 %v2449, %v2439
  %v3430 = vpack.c.b16 %v2450, %v2440
  %v3431 = vpack.c.b16 %v2451, %v2441
  %v3432 = vpack.c.b16 %v2452, %v2442
  %v3433 = vpack.c.b16 %v2453, %v2443
  %v3434 = vpack.c.b16 %v2454, %v2444
  %v3435 = vpack.c.b16 %v2455, %v2445
  %v3436 = vpack.c.b16 %v2456, %v2446
  %v3437 = vpack.c.b16 %v2457, %v2447
  %v3438 = vpack.c.b16 %v2458, %v2448
  %v3439 = vpack.c.b16 %v2469, %v2459
  %v3440 = vpack.c.b16 %v2470, %v2460
  %v3441 = vpack.c.b16 %v2471, %v2461
  %v3442 = vpack.c.b16 %v2472, %v2462
  %v3443 = vpack.c.b16 %v2473, %v2463
  %v3444 = vpack.c.b16 %v2474, %v2464
  %v3445 = vpack.c.b16 %v2475, %v2465
  %v3446 = vpack.c.b16 %v2476, %v2466
  %v3447 = vpack.c.b16 %v2477, %v2467
  %v3448 = vpack.c.b16 %v2478, %v2468
  %v3449 = vpack.c.b16 %v2489, %v2479
  %v3450 = vpack.c.b16 %v2490, %v2480
  %v3451 = vpack.c.b16 %v2491, %v2481
  %v3452 = vpack.c.b16 %v2492, %v2482
  %v3453 = vpack.c.b16 %v2493, %v2483
  %v3454 = vpack.c.b16 %v2494, %v2484
  %v3455 = vpack.c.b16 %v2495, %v2485
  %v3456 = vpack.c.b16 %v2496, %v2486
  %v3457 = vpack.c.b16 %v2497, %v2487
  %v3458 = vpack.c.b16 %v2498, %v2488
  %v3459 = vpack.c.b16 %v2509, %v2499
  %v3460 = vpack.c.b16 %v2510, %v2500
  %v3461 = vpack.c.b16 %v2511, %v2501
  %v3462 = vpack.c.b16 %v2512, %v2502
  %v3463 = vpack.c.b16 %v2513, %v2503
  %v3464 = vpack.c.b16 %v2514, %v2504
  %v3465 = vpack.c.b16 %v2515, %v2505
  %v3466 = vpack.c.b16 %v2516, %v2506
  %v3467 = vpack.c.b16 %v2517, %v2507
  %v3468 = vpack.c.b16 %v2518, %v2508
  %v3469 = vpack.c.b16 %v2529, %v2519
  %v3470 = vpack.c.b16 %v2530, %v2520
  %v3471 = vpack.c.b16 %v2531, %v2521
  %v3472 = vpack.c.b16 %v2532, %v2522
  %v3473 = vpack.c.b16 %v2533, %v2523
  %v3474 = vpack.c.b16 %v2534, %v2524
  %v3475 = vpack.c.b16 %v2535, %v2525
  %v3476 = vpack.c.b16 %v2536, %v2526
  %v3477 = vpack.c.b16 %v2537, %v2527
  %v3478 = vpack.c.b16 %v2538, %v2528
  %v3479 = vpack.c.b16 %v2549, %v2539
  %v3480 = vpack.c.b16 %v2550, %v2540
  %v3481 = vpack.c.b16 %v2551, %v2541
  %v3482 = vpack.c.b16 %v2552, %v2542
  %v3483 = vpack.c.b16 %v2553, %v2543
  %v3484 = vpack.c.b16 %v2554, %v2544
  %v3485 = vpack.c.b16 %v2555, %v2545
  %v3486 = vpack.c.b16 %v2556, %v2546
  %v3487 = vpack.c.b16 %v2557, %v2547
  %v3488 = vpack.c.b16 %v2558, %v2548
  %v3489 = vpack.c.b16 %v2569, %v2559
  %v3490 = vpack.c.b16 %v2570, %v2560
  %v3491 = vpack.c.b16 %v2571, %v2561
  %v3492 = vpack.c.b16 %v2572, %v2562
  %v3493 = vpack.c.b16 %v2573, %v2563
  %v3494 = vpack.c.b16 %v2574, %v2564
  %v3495 = vpack.c.b16 %v2575, %v2565
  %v3496 = vpack.c.b16 %v2576, %v2566
  %v3497 = vpack.c.b16 %v2577, %v2567
  %v3498 = vpack.c.b16 %v2578, %v2568
  %v3499 = vpack.c.b16 %v2589, %v2579
  %v3500 = vpack.c.b16 %v2590, %v2580
  %v3501 = vpack.c.b16 %v2591, %v2581
  %v3502 = vpack.c.b16 %v2592, %v2582
  %v3503 = vpack.c.b16 %v2593, %v2583
  %v3504 = vpack.c.b16 %v2594, %v2584
  %v3505 = vpack.c.b16 %v2595, %v2585
  %v3506 = vpack.c.b16 %v2596, %v2586
  %v3507 = vpack.c.b16 %v2597, %v2587
  %v3508 = vpack.c.b16 %v2598, %v2588
  %v3509 = vpack.c.b16 %v2609, %v2599
  %v3510 = vpack.c.b16 %v2610, %v2600
  %v3511 = vpack.c.b16 %v2611, %v2601
  %v3512 = vpack.c.b16 %v2612, %v2602
  %v3513 = vpack.c.b16 %v2613, %v2603
  %v3514 = vpack.c.b16 %v2614, %v2604
  %v3515 = vpack.c.b16 %v2615, %v2605
  %v3516 = vpack.c.b16 %v2616, %v2606
  %v3517 = vpack.c.b16 %v2617, %v2607
  %v3518 = vpack.c.b16 %v2618, %v2608
  %v3519 = vpack.c.b16 %v2629, %v2619
  %v3520 = vpack.c.b16 %v2630, %v2620
  %v3521 = vpack.c.b16 %v2631, %v2621
  %v3522 = vpack.c.b16 %v2632, %v2622
  %v3523 = vpack.c.b16 %v2633, %v2623
  %v3524 = vpack.c.b16 %v2634, %v2624
  %v3525 = vpack.c.b16 %v2635, %v2625
  %v3526 = vpack.c.b16 %v2636, %v2626
  %v3527 = vpack.c.b16 %v2637, %v2627
  %v3528 = vpack.c.b16 %v2638, %v2628
  %v3529 = vpack.c.b16 %v2649, %v2639
  %v3530 = vpack.c.b16 %v2650, %v2640
  %v3531 = vpack.c.b16 %v2651, %v2641
  %v3532 = vpack.c.b16 %v2652, %v2642
  %v3533 = vpack.c.b16 %v2653, %v2643
  %v3534 = vpack.c.b16 %v2654, %v2644
  %v3535 = vpack.c.b16 %v2655, %v2645
  %v3536 = vpack.c.b16 %v2656, %v2646
  %v3537 = vpack.c.b16 %v2657, %v2647
  %v3538 = vpack.c.b16 %v2658, %v2648
  %v3539 = vpack.c.b16 %v2669, %v2659
  %v3540 = vpack.c.b16 %v2670, %v2660
  %v3541 = vpack.c.b16 %v2671, %v2661
  %v3542 = vpack.c.b16 %v2672, %v2662
  %v3543 = vpack.c.b16 %v2673, %v2663
  %v3544 = vpack.c.b16 %v2674, %v2664
  %v3545 = vpack.c.b16 %v2675, %v2665
  %v3546 = vpack.c.b16 %v2676, %v2666
  %v3547 = vpack.c.b16 %v2677, %v2667
  %v3548 = vpack.c.b16 %v2678, %v2668
  %v3549 = vpack.c.b16 %v2689, %v2679
  %v3550 = vpack.c.b16 %v2690, %v2680
  %v3551 = vpack.c.b16 %v2691, %v2681
  %v3552 = vpack.c.b16 %v2692, %v2682
  %v3553 = vpack.c.b16 %v2693, %v2683
  %v3554 = vpack.c.b16 %v2694, %v2684
  %v3555 = vpack.c.b16 %v2695, %v2685
  %v3556 = vpack.c.b16 %v2696, %v2686
  %v3557 = vpack.c.b16 %v2697, %v2687
  %v3558 = vpack.c.b16 %v2698, %v2688
  %v3559 = vpack.c.b16 %v2709, %v2699
  %v3560 = vpack.c.b16 %v2710, %v2700
  %v3561 = vpack.c.b16 %v2711, %v2701
  %v3562 = vpack.c.b16 %v2712, %v2702
  %v3563 = vpack.c.b16 %v2713, %v2703
  %v3564 = vpack.c.b16 %v2714, %v2704
  %v3565 = vpack.c.b16 %v2715, %v2705
  %v3566 = vpack.c.b16 %v2716, %v2706
  %v3567 = vpack.c.b16 %v2717, %v2707
  %v3568 = vpack.c.b16 %v2718, %v2708
  %v3569 = vpack.c.b16 %v2729, %v2719
  %v3570 = vpack.c.b16 %v2730, %v2720
  %v3571 = vpack.c.b16 %v2731, %v2721
  %v3572 = vpack.c.b16 %v2732, %v2722
  %v3573 = vpack.c.b16 %v2733, %v2723
  %v3574 = vpack.c.b16 %v2734, %v2724
  %v3575 = vpack.c.b16 %v2735, %v2725
  %v3576 = vpack.c.b16 %v2736, %v2726
  %v3577 = vpack.c.b16 %v2737, %v2727
  %v3578 = vpack.c.b16 %v2738, %v2728
  %v3579 = vpack.c.b16 %v2749, %v2739
  %v3580 = vpack.c.b16 %v2750, %v2740
  %v3581 = vpack.c.b16 %v2751, %v2741
  %v3582 = vpack.c.b16 %v2752, %v2742
  %v3583 = vpack.c.b16 %v2753, %v2743
  %v3584 = vpack.c.b16 %v2754, %v2744
  %v3585 = vpack.c.b16 %v2755, %v2745
  %v3586 = vpack.c.b16 %v2756, %v2746
  %v3587 = vpack.c.b16 %v2757, %v2747
  %v3588 = vpack.c.b16 %v2758, %v2748
  %v3589 = vpack.c.b16 %v2769, %v2759
  %v3590 = vpack.c.b16 %v2770, %v2760
  %v3591 = vpack.c.b16 %v2771, %v2761
  %v3592 = vpack.c.b16 %v2772, %v2762
  %v3593 = vpack.c.b16 %v2773, %v2763
  %v3594 = vpack.c.b16 %v2774, %v2764
  %v3595 = vpack.c.b16 %v2775, %v2765
  %v3596 = vpack.c.b16 %v2776, %v2766
  %v3597 = vpack.c.b16 %v2777, %v2767
  %v3598 = vpack.c.b16 %v2778, %v2768
  %v3599 = vpack.c.b16 %v2789, %v2779
  %v3600 = vpack.c.b16 %v2790, %v2780
  %v3601 = vpack.c.b16 %v2791, %v2781
  %v3602 = vpack.c.b16 %v2792, %v2782
  %v3603 = vpack.c.b16 %v2793, %v2783
  %v3604 = vpack.c.b16 %v2794, %v2784
  %v3605 = vpack.c.b16 %v2795, %v2785
  %v3606 = vpack.c.b16 %v2796, %v2786
  %v3607 = vpack.c.b16 %v2797, %v2787
  %v3608 = vpack.c.b16 %v2798, %v2788
  %v3609 = vpack.c.b16 %v2809, %v2799
  %v3610 = vpack.c.b16 %v2810, %v2800
  %v3611 = vpack.c.b16 %v2811, %v2801
  %v3612 = vpack.c.b16 %v2812, %v2802
  %v3613 = vpack.c.b16 %v2813, %v2803
  %v3614 = vpack.c.b16 %v2814, %v2804
  %v3615 = vpack.c.b16 %v2815, %v2805
  %v3616 = vpack.c.b16 %v2816, %v2806
  %v3617 = vpack.c.b16 %v2817, %v2807
  %v3618 = vpack.c.b16 %v2818, %v2808
  %v3619 = vpack.c.b16 %v2829, %v2819
  %v3620 = vpack.c.b16 %v2830, %v2820
  %v3621 = vpack.c.b16 %v2831, %v2821
  %v3622 = vpack.c.b16 %v2832, %v2822
  %v3623 = vpack.c.b16 %v2833, %v2823
  %v3624 = vpack.c.b16 %v2834, %v2824
  %v3625 = vpack.c.b16 %v2835, %v2825
  %v3626 = vpack.c.b16 %v2836, %v2826
  %v3627 = vpack.c.b16 %v2837, %v2827
  %v3628 = vpack.c.b16 %v2838, %v2828
  %v3629 = vpack.c.b16 %v2849, %v2839
  %v3630 = vpack.c.b16 %v2850, %v2840
  %v3631 = vpack.c.b16 %v2851, %v2841
  %v3632 = vpack.c.b16 %v2852, %v2842
  %v3633 = vpack.c.b16 %v2853, %v2843
  %v3634 = vpack.c.b16 %v2854, %v2844
  %v3635 = vpack.c.b16 %v2855, %v2845
  %v3636 = vpack.c.b16 %v2856, %v2846
  %v3637 = vpack.c.b16 %v2857, %v2847
  %v3638 = vpack.c.b16 %v2858, %v2848
  %v3639 = vpack.c.b16 %v2869, %v2859
  %v3640 = vpack.c.b16 %v2870, %v2860
  %v3641 = vpack.c.b16 %v2871, %v2861
  %v3642 = vpack.c.b16 %v2872, %v2862
  %v3643 = vpack.c.b16 %v2873, %v2863
  %v3644 = vpack.c.b16 %v2874, %v2864
  %v3645 = vpack.c.b16 %v2875, %v2865
  %v3646 = vpack.c.b16 %v2876, %v2866
  %v3647 = vpack.c.b16 %v2877, %v2867
  %v3648 = vpack.c.b16 %v2878, %v2868
  %v3649 = vpack.c.b16 %v2889, %v2879
  %v3650 = vpack.c.b16 %v2890, %v2880
  %v3651 = vpack.c.b16 %v2891, %v2881
  %v3652 = vpack.c.b16 %v2892, %v2882
  %v3653 = vpack.c.b16 %v2893, %v2883
  %v3654 = vpack.c.b16 %v2894, %v2884
  %v3655 = vpack.c.b16 %v2895, %v2885
  %v3656 = vpack.c.b16 %v2896, %v2886
  %v3657 = vpack.c.b16 %v2897, %v2887
  %v3658 = vpack.c.b16 %v2898, %v2888
  %v3659 = vpack.c.b16 %v2909, %v2899
  %v3660 = vpack.c.b16 %v2910, %v2900
  %v3661 = vpack.c.b16 %v2911, %v2901
  %v3662 = vpack.c.b16 %v2912, %v2902
  %v3663 = vpack.c.b16 %v2913, %v2903
  %v3664 = vpack.c.b16 %v2914, %v2904
  %v3665 = vpack.c.b16 %v2915, %v2905
  %v3666 = vpack.c.b16 %v2916, %v2906
  %v3667 = vpack.c.b16 %v2917, %v2907
  %v3668 = vpack.c.b16 %v2918, %v2908
  %v3669 = vpack.c.b16 %v2929, %v2919
  %v3670 = vpack.c.b16 %v2930, %v2920
  %v3671 = vpack.c.b16 %v2931, %v2921
  %v3672 = vpack.c.b16 %v2932, %v2922
  %v3673 = vpack.c.b16 %v2933, %v2923
  %v3674 = vpack.c.b16 %v2934, %v2924
  %v3675 = vpack.c.b16 %v2935, %v2925
  %v3676 = vpack.c.b16 %v2936, %v2926
  %v3677 = vpack.c.b16 %v2937, %v2927
  %v3678 = vpack.c.b16 %v2938, %v2928
  %v3679 = vpack.c.b16 %v2949, %v2939
  %v3680 = vpack.c.b16 %v2950, %v2940
  %v3681 = vpack.c.b16 %v2951, %v2941
  %v3682 = vpack.c.b16 %v2952, %v2942
  %v3683 = vpack.c.b16 %v2953, %v2943
  %v3684 = vpack.c.b16 %v2954, %v2944
  %v3685 = vpack.c.b16 %v2955, %v2945
  %v3686 = vpack.c.b16 %v2956, %v2946
  %v3687 = vpack.c.b16 %v2957, %v2947
  %v3688 = vpack.c.b16 %v2958, %v2948
  %v3689 = vpack.c.b16 %v2969, %v2959
  %v3690 = vpack.c.b16 %v2970, %v2960
  %v3691 = vpack.c.b16 %v2971, %v2961
  %v3692 = vpack.c.b16 %v2972, %v2962
  %v3693 = vpack.c.b16 %v2973, %v2963
  %v3694 = vpack.c.b16 %v2974, %v2964
  %v3695 = vpack.c.b16 %v2975, %v2965
  %v3696 = vpack.c.b16 %v2976, %v2966
  %v3697 = vpack.c.b16 %v2977, %v2967
  %v3698 = vpack.c.b16 %v2978, %v2968
  %4419 = vmatpush.bf16.msra.mxu0 %v3049
  %4420 = vmatpush.bf16.msra.mxu0 %v3039
  %4421 = vmatpush.bf16.msra.mxu0 %v3029
  %4422 = vmatpush.bf16.msra.mxu0 %v3019
  %4423 = vmatpush.bf16.msra.mxu0 %v3009
  %4424 = vmatpush.bf16.msra.mxu0 %v2999
  %4425 = vmatpush.bf16.msra.mxu0 %v2989
  %4426 = vmatpush.bf16.msra.mxu0 %v2979
  %4427 = vmatmul.bf16.gmra.mxu0 %v801
  %v4428 = vpop.f32.mrf.mxu0
  %v4429 = vadd.f32 %v767, %v4428
  %v4430 = vpop.f32.mrf.mxu0
  %4431 = vdwg.mxu0
  %4432 = vmatpush.bf16.msra.mxu0 %v3129
  %4433 = vmatpush.bf16.msra.mxu0 %v3119
  %4434 = vmatpush.bf16.msra.mxu0 %v3109
  %4435 = vmatpush.bf16.msra.mxu0 %v3099
  %4436 = vmatpush.bf16.msra.mxu0 %v3089
  %4437 = vmatpush.bf16.msra.mxu0 %v3079
  %4438 = vmatpush.bf16.msra.mxu0 %v3069
  %4439 = vmatpush.bf16.msra.mxu0 %v3059
  %4440 = vmatmul.bf16.gmra.mxu0 %v802
  %v4441 = vpop.f32.mrf.mxu0
  %v4442 = vadd.f32 %v4429, %v4441
  %v4443 = vpop.f32.mrf.mxu0
  %4444 = vdwg.mxu0
  %4445 = vmatpush.bf16.msra.mxu0 %v3209
  %4446 = vmatpush.bf16.msra.mxu0 %v3199
  %4447 = vmatpush.bf16.msra.mxu0 %v3189
  %4448 = vmatpush.bf16.msra.mxu0 %v3179
  %4449 = vmatpush.bf16.msra.mxu0 %v3169
  %4450 = vmatpush.bf16.msra.mxu0 %v3159
  %4451 = vmatpush.bf16.msra.mxu0 %v3149
  %4452 = vmatpush.bf16.msra.mxu0 %v3139
  %4453 = vmatmul.bf16.gmra.mxu0 %v803
  %v4454 = vpop.f32.mrf.mxu0
  %v4455 = vadd.f32 %v4442, %v4454
  %v4456 = vpop.f32.mrf.mxu0
  %4457 = vdwg.mxu0
  %4458 = vmatpush.bf16.msra.mxu0 %v3289
  %4459 = vmatpush.bf16.msra.mxu0 %v3279
  %4460 = vmatpush.bf16.msra.mxu0 %v3269
  %4461 = vmatpush.bf16.msra.mxu0 %v3259
  %4462 = vmatpush.bf16.msra.mxu0 %v3249
  %4463 = vmatpush.bf16.msra.mxu0 %v3239
  %4464 = vmatpush.bf16.msra.mxu0 %v3229
  %4465 = vmatpush.bf16.msra.mxu0 %v3219
  %4466 = vmatmul.bf16.gmra.mxu0 %v804
  %v4467 = vpop.f32.mrf.mxu0
  %v4468 = vadd.f32 %v4455, %v4467
  %v4469 = vpop.f32.mrf.mxu0
  %4470 = vdwg.mxu0
  %4471 = vmatpush.bf16.msra.mxu0 %v3369
  %4472 = vmatpush.bf16.msra.mxu0 %v3359
  %4473 = vmatpush.bf16.msra.mxu0 %v3349
  %4474 = vmatpush.bf16.msra.mxu0 %v3339
  %4475 = vmatpush.bf16.msra.mxu0 %v3329
  %4476 = vmatpush.bf16.msra.mxu0 %v3319
  %4477 = vmatpush.bf16.msra.mxu0 %v3309
  %4478 = vmatpush.bf16.msra.mxu0 %v3299
  %4479 = vmatmul.bf16.gmra.mxu0 %v805
  %v4480 = vpop.f32.mrf.mxu0
  %v4481 = vadd.f32 %v4468, %v4480
  %v4482 = vpop.f32.mrf.mxu0
  %4483 = vdwg.mxu0
  %4484 = vmatpush.bf16.msra.mxu0 %v3449
  %4485 = vmatpush.bf16.msra.mxu0 %v3439
  %4486 = vmatpush.bf16.msra.mxu0 %v3429
  %4487 = vmatpush.bf16.msra.mxu0 %v3419
  %4488 = vmatpush.bf16.msra.mxu0 %v3409
  %4489 = vmatpush.bf16.msra.mxu0 %v3399
  %4490 = vmatpush.bf16.msra.mxu0 %v3389
  %4491 = vmatpush.bf16.msra.mxu0 %v3379
  %4492 = vmatmul.bf16.gmra.mxu0 %v806
  %v4493 = vpop.f32.mrf.mxu0
  %v4494 = vadd.f32 %v4481, %v4493
  %v4495 = vpop.f32.mrf.mxu0
  %4496 = vdwg.mxu0
  %4497 = vmatpush.bf16.msra.mxu0 %v3529
  %4498 = vmatpush.bf16.msra.mxu0 %v3519
  %4499 = vmatpush.bf16.msra.mxu0 %v3509
  %4500 = vmatpush.bf16.msra.mxu0 %v3499
  %4501 = vmatpush.bf16.msra.mxu0 %v3489
  %4502 = vmatpush.bf16.msra.mxu0 %v3479
  %4503 = vmatpush.bf16.msra.mxu0 %v3469
  %4504 = vmatpush.bf16.msra.mxu0 %v3459
  %4505 = vmatmul.bf16.gmra.mxu0 %v807
  %v4506 = vpop.f32.mrf.mxu0
  %v4507 = vadd.f32 %v4494, %v4506
  %v4508 = vpop.f32.mrf.mxu0
  %4509 = vdwg.mxu0
  %4510 = vmatpush.bf16.msra.mxu0 %v3609
  %4511 = vmatpush.bf16.msra.mxu0 %v3599
  %4512 = vmatpush.bf16.msra.mxu0 %v3589
  %4513 = vmatpush.bf16.msra.mxu0 %v3579
  %4514 = vmatpush.bf16.msra.mxu0 %v3569
  %4515 = vmatpush.bf16.msra.mxu0 %v3559
  %4516 = vmatpush.bf16.msra.mxu0 %v3549
  %4517 = vmatpush.bf16.msra.mxu0 %v3539
  %4518 = vmatmul.bf16.gmra.mxu0 %v808
  %v4519 = vpop.f32.mrf.mxu0
  %v4520 = vadd.f32 %v4507, %v4519
  %v4521 = vpop.f32.mrf.mxu0
  %4522 = vdwg.mxu0
  %4523 = vmatpush.bf16.msra.mxu0 %v3689
  %4524 = vmatpush.bf16.msra.mxu0 %v3679
  %4525 = vmatpush.bf16.msra.mxu0 %v3669
  %4526 = vmatpush.bf16.msra.mxu0 %v3659
  %4527 = vmatpush.bf16.msra.mxu0 %v3649
  %4528 = vmatpush.bf16.msra.mxu0 %v3639
  %4529 = vmatpush.bf16.msra.mxu0 %v3629
  %4530 = vmatpush.bf16.msra.mxu0 %v3619
  %4531 = vmatmul.bf16.gmra.mxu0 %v809
  %v4532 = vpop.f32.mrf.mxu0
  %v4533 = vadd.f32 %v4520, %v4532
  %v4534 = vpop.f32.mrf.mxu0
  %4535 = vdwg.mxu0
  %4536 = vmatpush.bf16.msra.mxu0 %v3050
  %4537 = vmatpush.bf16.msra.mxu0 %v3040
  %4538 = vmatpush.bf16.msra.mxu0 %v3030
  %4539 = vmatpush.bf16.msra.mxu0 %v3020
  %4540 = vmatpush.bf16.msra.mxu0 %v3010
  %4541 = vmatpush.bf16.msra.mxu0 %v3000
  %4542 = vmatpush.bf16.msra.mxu0 %v2990
  %4543 = vmatpush.bf16.msra.mxu0 %v2980
  %4544 = vmatmul.bf16.gmra.mxu0 %v801
  %v4545 = vpop.f32.mrf.mxu0
  %v4546 = vadd.f32 %v768, %v4545
  %v4547 = vpop.f32.mrf.mxu0
  %4548 = vdwg.mxu0
  %4549 = vmatpush.bf16.msra.mxu0 %v3130
  %4550 = vmatpush.bf16.msra.mxu0 %v3120
  %4551 = vmatpush.bf16.msra.mxu0 %v3110
  %4552 = vmatpush.bf16.msra.mxu0 %v3100
  %4553 = vmatpush.bf16.msra.mxu0 %v3090
  %4554 = vmatpush.bf16.msra.mxu0 %v3080
  %4555 = vmatpush.bf16.msra.mxu0 %v3070
  %4556 = vmatpush.bf16.msra.mxu0 %v3060
  %4557 = vmatmul.bf16.gmra.mxu0 %v802
  %v4558 = vpop.f32.mrf.mxu0
  %v4559 = vadd.f32 %v4546, %v4558
  %v4560 = vpop.f32.mrf.mxu0
  %4561 = vdwg.mxu0
  %4562 = vmatpush.bf16.msra.mxu0 %v3210
  %4563 = vmatpush.bf16.msra.mxu0 %v3200
  %4564 = vmatpush.bf16.msra.mxu0 %v3190
  %4565 = vmatpush.bf16.msra.mxu0 %v3180
  %4566 = vmatpush.bf16.msra.mxu0 %v3170
  %4567 = vmatpush.bf16.msra.mxu0 %v3160
  %4568 = vmatpush.bf16.msra.mxu0 %v3150
  %4569 = vmatpush.bf16.msra.mxu0 %v3140
  %4570 = vmatmul.bf16.gmra.mxu0 %v803
  %v4571 = vpop.f32.mrf.mxu0
  %v4572 = vadd.f32 %v4559, %v4571
  %v4573 = vpop.f32.mrf.mxu0
  %4574 = vdwg.mxu0
  %4575 = vmatpush.bf16.msra.mxu0 %v3290
  %4576 = vmatpush.bf16.msra.mxu0 %v3280
  %4577 = vmatpush.bf16.msra.mxu0 %v3270
  %4578 = vmatpush.bf16.msra.mxu0 %v3260
  %4579 = vmatpush.bf16.msra.mxu0 %v3250
  %4580 = vmatpush.bf16.msra.mxu0 %v3240
  %4581 = vmatpush.bf16.msra.mxu0 %v3230
  %4582 = vmatpush.bf16.msra.mxu0 %v3220
  %4583 = vmatmul.bf16.gmra.mxu0 %v804
  %v4584 = vpop.f32.mrf.mxu0
  %v4585 = vadd.f32 %v4572, %v4584
  %v4586 = vpop.f32.mrf.mxu0
  %4587 = vdwg.mxu0
  %4588 = vmatpush.bf16.msra.mxu0 %v3370
  %4589 = vmatpush.bf16.msra.mxu0 %v3360
  %4590 = vmatpush.bf16.msra.mxu0 %v3350
  %4591 = vmatpush.bf16.msra.mxu0 %v3340
  %4592 = vmatpush.bf16.msra.mxu0 %v3330
  %4593 = vmatpush.bf16.msra.mxu0 %v3320
  %4594 = vmatpush.bf16.msra.mxu0 %v3310
  %4595 = vmatpush.bf16.msra.mxu0 %v3300
  %4596 = vmatmul.bf16.gmra.mxu0 %v805
  %v4597 = vpop.f32.mrf.mxu0
  %v4598 = vadd.f32 %v4585, %v4597
  %v4599 = vpop.f32.mrf.mxu0
  %4600 = vdwg.mxu0
  %4601 = vmatpush.bf16.msra.mxu0 %v3450
  %4602 = vmatpush.bf16.msra.mxu0 %v3440
  %4603 = vmatpush.bf16.msra.mxu0 %v3430
  %4604 = vmatpush.bf16.msra.mxu0 %v3420
  %4605 = vmatpush.bf16.msra.mxu0 %v3410
  %4606 = vmatpush.bf16.msra.mxu0 %v3400
  %4607 = vmatpush.bf16.msra.mxu0 %v3390
  %4608 = vmatpush.bf16.msra.mxu0 %v3380
  %4609 = vmatmul.bf16.gmra.mxu0 %v806
  %v4610 = vpop.f32.mrf.mxu0
  %v4611 = vadd.f32 %v4598, %v4610
  %v4612 = vpop.f32.mrf.mxu0
  %4613 = vdwg.mxu0
  %4614 = vmatpush.bf16.msra.mxu0 %v3530
  %4615 = vmatpush.bf16.msra.mxu0 %v3520
  %4616 = vmatpush.bf16.msra.mxu0 %v3510
  %4617 = vmatpush.bf16.msra.mxu0 %v3500
  %4618 = vmatpush.bf16.msra.mxu0 %v3490
  %4619 = vmatpush.bf16.msra.mxu0 %v3480
  %4620 = vmatpush.bf16.msra.mxu0 %v3470
  %4621 = vmatpush.bf16.msra.mxu0 %v3460
  %4622 = vmatmul.bf16.gmra.mxu0 %v807
  %v4623 = vpop.f32.mrf.mxu0
  %v4624 = vadd.f32 %v4611, %v4623
  %v4625 = vpop.f32.mrf.mxu0
  %4626 = vdwg.mxu0
  %4627 = vmatpush.bf16.msra.mxu0 %v3610
  %4628 = vmatpush.bf16.msra.mxu0 %v3600
  %4629 = vmatpush.bf16.msra.mxu0 %v3590
  %4630 = vmatpush.bf16.msra.mxu0 %v3580
  %4631 = vmatpush.bf16.msra.mxu0 %v3570
  %4632 = vmatpush.bf16.msra.mxu0 %v3560
  %4633 = vmatpush.bf16.msra.mxu0 %v3550
  %4634 = vmatpush.bf16.msra.mxu0 %v3540
  %4635 = vmatmul.bf16.gmra.mxu0 %v808
  %v4636 = vpop.f32.mrf.mxu0
  %v4637 = vadd.f32 %v4624, %v4636
  %v4638 = vpop.f32.mrf.mxu0
  %4639 = vdwg.mxu0
  %4640 = vmatpush.bf16.msra.mxu0 %v3690
  %4641 = vmatpush.bf16.msra.mxu0 %v3680
  %4642 = vmatpush.bf16.msra.mxu0 %v3670
  %4643 = vmatpush.bf16.msra.mxu0 %v3660
  %4644 = vmatpush.bf16.msra.mxu0 %v3650
  %4645 = vmatpush.bf16.msra.mxu0 %v3640
  %4646 = vmatpush.bf16.msra.mxu0 %v3630
  %4647 = vmatpush.bf16.msra.mxu0 %v3620
  %4648 = vmatmul.bf16.gmra.mxu0 %v809
  %v4649 = vpop.f32.mrf.mxu0
  %v4650 = vadd.f32 %v4637, %v4649
  %v4651 = vpop.f32.mrf.mxu0
  %4652 = vdwg.mxu0
  %4653 = vmatpush.bf16.msra.mxu0 %v3051
  %4654 = vmatpush.bf16.msra.mxu0 %v3041
  %4655 = vmatpush.bf16.msra.mxu0 %v3031
  %4656 = vmatpush.bf16.msra.mxu0 %v3021
  %4657 = vmatpush.bf16.msra.mxu0 %v3011
  %4658 = vmatpush.bf16.msra.mxu0 %v3001
  %4659 = vmatpush.bf16.msra.mxu0 %v2991
  %4660 = vmatpush.bf16.msra.mxu0 %v2981
  %4661 = vmatmul.bf16.gmra.mxu0 %v801
  %v4662 = vpop.f32.mrf.mxu0
  %v4663 = vadd.f32 %v769, %v4662
  %v4664 = vpop.f32.mrf.mxu0
  %4665 = vdwg.mxu0
  %4666 = vmatpush.bf16.msra.mxu0 %v3131
  %4667 = vmatpush.bf16.msra.mxu0 %v3121
  %4668 = vmatpush.bf16.msra.mxu0 %v3111
  %4669 = vmatpush.bf16.msra.mxu0 %v3101
  %4670 = vmatpush.bf16.msra.mxu0 %v3091
  %4671 = vmatpush.bf16.msra.mxu0 %v3081
  %4672 = vmatpush.bf16.msra.mxu0 %v3071
  %4673 = vmatpush.bf16.msra.mxu0 %v3061
  %4674 = vmatmul.bf16.gmra.mxu0 %v802
  %v4675 = vpop.f32.mrf.mxu0
  %v4676 = vadd.f32 %v4663, %v4675
  %v4677 = vpop.f32.mrf.mxu0
  %4678 = vdwg.mxu0
  %4679 = vmatpush.bf16.msra.mxu0 %v3211
  %4680 = vmatpush.bf16.msra.mxu0 %v3201
  %4681 = vmatpush.bf16.msra.mxu0 %v3191
  %4682 = vmatpush.bf16.msra.mxu0 %v3181
  %4683 = vmatpush.bf16.msra.mxu0 %v3171
  %4684 = vmatpush.bf16.msra.mxu0 %v3161
  %4685 = vmatpush.bf16.msra.mxu0 %v3151
  %4686 = vmatpush.bf16.msra.mxu0 %v3141
  %4687 = vmatmul.bf16.gmra.mxu0 %v803
  %v4688 = vpop.f32.mrf.mxu0
  %v4689 = vadd.f32 %v4676, %v4688
  %v4690 = vpop.f32.mrf.mxu0
  %4691 = vdwg.mxu0
  %4692 = vmatpush.bf16.msra.mxu0 %v3291
  %4693 = vmatpush.bf16.msra.mxu0 %v3281
  %4694 = vmatpush.bf16.msra.mxu0 %v3271
  %4695 = vmatpush.bf16.msra.mxu0 %v3261
  %4696 = vmatpush.bf16.msra.mxu0 %v3251
  %4697 = vmatpush.bf16.msra.mxu0 %v3241
  %4698 = vmatpush.bf16.msra.mxu0 %v3231
  %4699 = vmatpush.bf16.msra.mxu0 %v3221
  %4700 = vmatmul.bf16.gmra.mxu0 %v804
  %v4701 = vpop.f32.mrf.mxu0
  %v4702 = vadd.f32 %v4689, %v4701
  %v4703 = vpop.f32.mrf.mxu0
  %4704 = vdwg.mxu0
  %4705 = vmatpush.bf16.msra.mxu0 %v3371
  %4706 = vmatpush.bf16.msra.mxu0 %v3361
  %4707 = vmatpush.bf16.msra.mxu0 %v3351
  %4708 = vmatpush.bf16.msra.mxu0 %v3341
  %4709 = vmatpush.bf16.msra.mxu0 %v3331
  %4710 = vmatpush.bf16.msra.mxu0 %v3321
  %4711 = vmatpush.bf16.msra.mxu0 %v3311
  %4712 = vmatpush.bf16.msra.mxu0 %v3301
  %4713 = vmatmul.bf16.gmra.mxu0 %v805
  %v4714 = vpop.f32.mrf.mxu0
  %v4715 = vadd.f32 %v4702, %v4714
  %v4716 = vpop.f32.mrf.mxu0
  %4717 = vdwg.mxu0
  %4718 = vmatpush.bf16.msra.mxu0 %v3451
  %4719 = vmatpush.bf16.msra.mxu0 %v3441
  %4720 = vmatpush.bf16.msra.mxu0 %v3431
  %4721 = vmatpush.bf16.msra.mxu0 %v3421
  %4722 = vmatpush.bf16.msra.mxu0 %v3411
  %4723 = vmatpush.bf16.msra.mxu0 %v3401
  %4724 = vmatpush.bf16.msra.mxu0 %v3391
  %4725 = vmatpush.bf16.msra.mxu0 %v3381
  %4726 = vmatmul.bf16.gmra.mxu0 %v806
  %v4727 = vpop.f32.mrf.mxu0
  %v4728 = vadd.f32 %v4715, %v4727
  %v4729 = vpop.f32.mrf.mxu0
  %4730 = vdwg.mxu0
  %4731 = vmatpush.bf16.msra.mxu0 %v3531
  %4732 = vmatpush.bf16.msra.mxu0 %v3521
  %4733 = vmatpush.bf16.msra.mxu0 %v3511
  %4734 = vmatpush.bf16.msra.mxu0 %v3501
  %4735 = vmatpush.bf16.msra.mxu0 %v3491
  %4736 = vmatpush.bf16.msra.mxu0 %v3481
  %4737 = vmatpush.bf16.msra.mxu0 %v3471
  %4738 = vmatpush.bf16.msra.mxu0 %v3461
  %4739 = vmatmul.bf16.gmra.mxu0 %v807
  %v4740 = vpop.f32.mrf.mxu0
  %v4741 = vadd.f32 %v4728, %v4740
  %v4742 = vpop.f32.mrf.mxu0
  %4743 = vdwg.mxu0
  %4744 = vmatpush.bf16.msra.mxu0 %v3611
  %4745 = vmatpush.bf16.msra.mxu0 %v3601
  %4746 = vmatpush.bf16.msra.mxu0 %v3591
  %4747 = vmatpush.bf16.msra.mxu0 %v3581
  %4748 = vmatpush.bf16.msra.mxu0 %v3571
  %4749 = vmatpush.bf16.msra.mxu0 %v3561
  %4750 = vmatpush.bf16.msra.mxu0 %v3551
  %4751 = vmatpush.bf16.msra.mxu0 %v3541
  %4752 = vmatmul.bf16.gmra.mxu0 %v808
  %v4753 = vpop.f32.mrf.mxu0
  %v4754 = vadd.f32 %v4741, %v4753
  %v4755 = vpop.f32.mrf.mxu0
  %4756 = vdwg.mxu0
  %4757 = vmatpush.bf16.msra.mxu0 %v3691
  %4758 = vmatpush.bf16.msra.mxu0 %v3681
  %4759 = vmatpush.bf16.msra.mxu0 %v3671
  %4760 = vmatpush.bf16.msra.mxu0 %v3661
  %4761 = vmatpush.bf16.msra.mxu0 %v3651
  %4762 = vmatpush.bf16.msra.mxu0 %v3641
  %4763 = vmatpush.bf16.msra.mxu0 %v3631
  %4764 = vmatpush.bf16.msra.mxu0 %v3621
  %4765 = vmatmul.bf16.gmra.mxu0 %v809
  %v4766 = vpop.f32.mrf.mxu0
  %v4767 = vadd.f32 %v4754, %v4766
  %v4768 = vpop.f32.mrf.mxu0
  %4769 = vdwg.mxu0
  %4770 = vmatpush.bf16.msra.mxu0 %v3052
  %4771 = vmatpush.bf16.msra.mxu0 %v3042
  %4772 = vmatpush.bf16.msra.mxu0 %v3032
  %4773 = vmatpush.bf16.msra.mxu0 %v3022
  %4774 = vmatpush.bf16.msra.mxu0 %v3012
  %4775 = vmatpush.bf16.msra.mxu0 %v3002
  %4776 = vmatpush.bf16.msra.mxu0 %v2992
  %4777 = vmatpush.bf16.msra.mxu0 %v2982
  %4778 = vmatmul.bf16.gmra.mxu0 %v801
  %v4779 = vpop.f32.mrf.mxu0
  %v4780 = vadd.f32 %v770, %v4779
  %v4781 = vpop.f32.mrf.mxu0
  %4782 = vdwg.mxu0
  %4783 = vmatpush.bf16.msra.mxu0 %v3132
  %4784 = vmatpush.bf16.msra.mxu0 %v3122
  %4785 = vmatpush.bf16.msra.mxu0 %v3112
  %4786 = vmatpush.bf16.msra.mxu0 %v3102
  %4787 = vmatpush.bf16.msra.mxu0 %v3092
  %4788 = vmatpush.bf16.msra.mxu0 %v3082
  %4789 = vmatpush.bf16.msra.mxu0 %v3072
  %4790 = vmatpush.bf16.msra.mxu0 %v3062
  %4791 = vmatmul.bf16.gmra.mxu0 %v802
  %v4792 = vpop.f32.mrf.mxu0
  %v4793 = vadd.f32 %v4780, %v4792
  %v4794 = vpop.f32.mrf.mxu0
  %4795 = vdwg.mxu0
  %4796 = vmatpush.bf16.msra.mxu0 %v3212
  %4797 = vmatpush.bf16.msra.mxu0 %v3202
  %4798 = vmatpush.bf16.msra.mxu0 %v3192
  %4799 = vmatpush.bf16.msra.mxu0 %v3182
  %4800 = vmatpush.bf16.msra.mxu0 %v3172
  %4801 = vmatpush.bf16.msra.mxu0 %v3162
  %4802 = vmatpush.bf16.msra.mxu0 %v3152
  %4803 = vmatpush.bf16.msra.mxu0 %v3142
  %4804 = vmatmul.bf16.gmra.mxu0 %v803
  %v4805 = vpop.f32.mrf.mxu0
  %v4806 = vadd.f32 %v4793, %v4805
  %v4807 = vpop.f32.mrf.mxu0
  %4808 = vdwg.mxu0
  %4809 = vmatpush.bf16.msra.mxu0 %v3292
  %4810 = vmatpush.bf16.msra.mxu0 %v3282
  %4811 = vmatpush.bf16.msra.mxu0 %v3272
  %4812 = vmatpush.bf16.msra.mxu0 %v3262
  %4813 = vmatpush.bf16.msra.mxu0 %v3252
  %4814 = vmatpush.bf16.msra.mxu0 %v3242
  %4815 = vmatpush.bf16.msra.mxu0 %v3232
  %4816 = vmatpush.bf16.msra.mxu0 %v3222
  %4817 = vmatmul.bf16.gmra.mxu0 %v804
  %v4818 = vpop.f32.mrf.mxu0
  %v4819 = vadd.f32 %v4806, %v4818
  %v4820 = vpop.f32.mrf.mxu0
  %4821 = vdwg.mxu0
  %4822 = vmatpush.bf16.msra.mxu0 %v3372
  %4823 = vmatpush.bf16.msra.mxu0 %v3362
  %4824 = vmatpush.bf16.msra.mxu0 %v3352
  %4825 = vmatpush.bf16.msra.mxu0 %v3342
  %4826 = vmatpush.bf16.msra.mxu0 %v3332
  %4827 = vmatpush.bf16.msra.mxu0 %v3322
  %4828 = vmatpush.bf16.msra.mxu0 %v3312
  %4829 = vmatpush.bf16.msra.mxu0 %v3302
  %4830 = vmatmul.bf16.gmra.mxu0 %v805
  %v4831 = vpop.f32.mrf.mxu0
  %v4832 = vadd.f32 %v4819, %v4831
  %v4833 = vpop.f32.mrf.mxu0
  %4834 = vdwg.mxu0
  %4835 = vmatpush.bf16.msra.mxu0 %v3452
  %4836 = vmatpush.bf16.msra.mxu0 %v3442
  %4837 = vmatpush.bf16.msra.mxu0 %v3432
  %4838 = vmatpush.bf16.msra.mxu0 %v3422
  %4839 = vmatpush.bf16.msra.mxu0 %v3412
  %4840 = vmatpush.bf16.msra.mxu0 %v3402
  %4841 = vmatpush.bf16.msra.mxu0 %v3392
  %4842 = vmatpush.bf16.msra.mxu0 %v3382
  %4843 = vmatmul.bf16.gmra.mxu0 %v806
  %v4844 = vpop.f32.mrf.mxu0
  %v4845 = vadd.f32 %v4832, %v4844
  %v4846 = vpop.f32.mrf.mxu0
  %4847 = vdwg.mxu0
  %4848 = vmatpush.bf16.msra.mxu0 %v3532
  %4849 = vmatpush.bf16.msra.mxu0 %v3522
  %4850 = vmatpush.bf16.msra.mxu0 %v3512
  %4851 = vmatpush.bf16.msra.mxu0 %v3502
  %4852 = vmatpush.bf16.msra.mxu0 %v3492
  %4853 = vmatpush.bf16.msra.mxu0 %v3482
  %4854 = vmatpush.bf16.msra.mxu0 %v3472
  %4855 = vmatpush.bf16.msra.mxu0 %v3462
  %4856 = vmatmul.bf16.gmra.mxu0 %v807
  %v4857 = vpop.f32.mrf.mxu0
  %v4858 = vadd.f32 %v4845, %v4857
  %v4859 = vpop.f32.mrf.mxu0
  %4860 = vdwg.mxu0
  %4861 = vmatpush.bf16.msra.mxu0 %v3612
  %4862 = vmatpush.bf16.msra.mxu0 %v3602
  %4863 = vmatpush.bf16.msra.mxu0 %v3592
  %4864 = vmatpush.bf16.msra.mxu0 %v3582
  %4865 = vmatpush.bf16.msra.mxu0 %v3572
  %4866 = vmatpush.bf16.msra.mxu0 %v3562
  %4867 = vmatpush.bf16.msra.mxu0 %v3552
  %4868 = vmatpush.bf16.msra.mxu0 %v3542
  %4869 = vmatmul.bf16.gmra.mxu0 %v808
  %v4870 = vpop.f32.mrf.mxu0
  %v4871 = vadd.f32 %v4858, %v4870
  %v4872 = vpop.f32.mrf.mxu0
  %4873 = vdwg.mxu0
  %4874 = vmatpush.bf16.msra.mxu0 %v3692
  %4875 = vmatpush.bf16.msra.mxu0 %v3682
  %4876 = vmatpush.bf16.msra.mxu0 %v3672
  %4877 = vmatpush.bf16.msra.mxu0 %v3662
  %4878 = vmatpush.bf16.msra.mxu0 %v3652
  %4879 = vmatpush.bf16.msra.mxu0 %v3642
  %4880 = vmatpush.bf16.msra.mxu0 %v3632
  %4881 = vmatpush.bf16.msra.mxu0 %v3622
  %4882 = vmatmul.bf16.gmra.mxu0 %v809
  %v4883 = vpop.f32.mrf.mxu0
  %v4884 = vadd.f32 %v4871, %v4883
  %v4885 = vpop.f32.mrf.mxu0
  %4886 = vdwg.mxu0
  %4887 = vmatpush.bf16.msra.mxu0 %v3053
  %4888 = vmatpush.bf16.msra.mxu0 %v3043
  %4889 = vmatpush.bf16.msra.mxu0 %v3033
  %4890 = vmatpush.bf16.msra.mxu0 %v3023
  %4891 = vmatpush.bf16.msra.mxu0 %v3013
  %4892 = vmatpush.bf16.msra.mxu0 %v3003
  %4893 = vmatpush.bf16.msra.mxu0 %v2993
  %4894 = vmatpush.bf16.msra.mxu0 %v2983
  %4895 = vmatmul.bf16.gmra.mxu0 %v801
  %v4896 = vpop.f32.mrf.mxu0
  %v4897 = vadd.f32 %v771, %v4896
  %v4898 = vpop.f32.mrf.mxu0
  %4899 = vdwg.mxu0
  %4900 = vmatpush.bf16.msra.mxu0 %v3133
  %4901 = vmatpush.bf16.msra.mxu0 %v3123
  %4902 = vmatpush.bf16.msra.mxu0 %v3113
  %4903 = vmatpush.bf16.msra.mxu0 %v3103
  %4904 = vmatpush.bf16.msra.mxu0 %v3093
  %4905 = vmatpush.bf16.msra.mxu0 %v3083
  %4906 = vmatpush.bf16.msra.mxu0 %v3073
  %4907 = vmatpush.bf16.msra.mxu0 %v3063
  %4908 = vmatmul.bf16.gmra.mxu0 %v802
  %v4909 = vpop.f32.mrf.mxu0
  %v4910 = vadd.f32 %v4897, %v4909
  %v4911 = vpop.f32.mrf.mxu0
  %4912 = vdwg.mxu0
  %4913 = vmatpush.bf16.msra.mxu0 %v3213
  %4914 = vmatpush.bf16.msra.mxu0 %v3203
  %4915 = vmatpush.bf16.msra.mxu0 %v3193
  %4916 = vmatpush.bf16.msra.mxu0 %v3183
  %4917 = vmatpush.bf16.msra.mxu0 %v3173
  %4918 = vmatpush.bf16.msra.mxu0 %v3163
  %4919 = vmatpush.bf16.msra.mxu0 %v3153
  %4920 = vmatpush.bf16.msra.mxu0 %v3143
  %4921 = vmatmul.bf16.gmra.mxu0 %v803
  %v4922 = vpop.f32.mrf.mxu0
  %v4923 = vadd.f32 %v4910, %v4922
  %v4924 = vpop.f32.mrf.mxu0
  %4925 = vdwg.mxu0
  %4926 = vmatpush.bf16.msra.mxu0 %v3293
  %4927 = vmatpush.bf16.msra.mxu0 %v3283
  %4928 = vmatpush.bf16.msra.mxu0 %v3273
  %4929 = vmatpush.bf16.msra.mxu0 %v3263
  %4930 = vmatpush.bf16.msra.mxu0 %v3253
  %4931 = vmatpush.bf16.msra.mxu0 %v3243
  %4932 = vmatpush.bf16.msra.mxu0 %v3233
  %4933 = vmatpush.bf16.msra.mxu0 %v3223
  %4934 = vmatmul.bf16.gmra.mxu0 %v804
  %v4935 = vpop.f32.mrf.mxu0
  %v4936 = vadd.f32 %v4923, %v4935
  %v4937 = vpop.f32.mrf.mxu0
  %4938 = vdwg.mxu0
  %4939 = vmatpush.bf16.msra.mxu0 %v3373
  %4940 = vmatpush.bf16.msra.mxu0 %v3363
  %4941 = vmatpush.bf16.msra.mxu0 %v3353
  %4942 = vmatpush.bf16.msra.mxu0 %v3343
  %4943 = vmatpush.bf16.msra.mxu0 %v3333
  %4944 = vmatpush.bf16.msra.mxu0 %v3323
  %4945 = vmatpush.bf16.msra.mxu0 %v3313
  %4946 = vmatpush.bf16.msra.mxu0 %v3303
  %4947 = vmatmul.bf16.gmra.mxu0 %v805
  %v4948 = vpop.f32.mrf.mxu0
  %v4949 = vadd.f32 %v4936, %v4948
  %v4950 = vpop.f32.mrf.mxu0
  %4951 = vdwg.mxu0
  %4952 = vmatpush.bf16.msra.mxu0 %v3453
  %4953 = vmatpush.bf16.msra.mxu0 %v3443
  %4954 = vmatpush.bf16.msra.mxu0 %v3433
  %4955 = vmatpush.bf16.msra.mxu0 %v3423
  %4956 = vmatpush.bf16.msra.mxu0 %v3413
  %4957 = vmatpush.bf16.msra.mxu0 %v3403
  %4958 = vmatpush.bf16.msra.mxu0 %v3393
  %4959 = vmatpush.bf16.msra.mxu0 %v3383
  %4960 = vmatmul.bf16.gmra.mxu0 %v806
  %v4961 = vpop.f32.mrf.mxu0
  %v4962 = vadd.f32 %v4949, %v4961
  %v4963 = vpop.f32.mrf.mxu0
  %4964 = vdwg.mxu0
  %4965 = vmatpush.bf16.msra.mxu0 %v3533
  %4966 = vmatpush.bf16.msra.mxu0 %v3523
  %4967 = vmatpush.bf16.msra.mxu0 %v3513
  %4968 = vmatpush.bf16.msra.mxu0 %v3503
  %4969 = vmatpush.bf16.msra.mxu0 %v3493
  %4970 = vmatpush.bf16.msra.mxu0 %v3483
  %4971 = vmatpush.bf16.msra.mxu0 %v3473
  %4972 = vmatpush.bf16.msra.mxu0 %v3463
  %4973 = vmatmul.bf16.gmra.mxu0 %v807
  %v4974 = vpop.f32.mrf.mxu0
  %v4975 = vadd.f32 %v4962, %v4974
  %v4976 = vpop.f32.mrf.mxu0
  %4977 = vdwg.mxu0
  %4978 = vmatpush.bf16.msra.mxu0 %v3613
  %4979 = vmatpush.bf16.msra.mxu0 %v3603
  %4980 = vmatpush.bf16.msra.mxu0 %v3593
  %4981 = vmatpush.bf16.msra.mxu0 %v3583
  %4982 = vmatpush.bf16.msra.mxu0 %v3573
  %4983 = vmatpush.bf16.msra.mxu0 %v3563
  %4984 = vmatpush.bf16.msra.mxu0 %v3553
  %4985 = vmatpush.bf16.msra.mxu0 %v3543
  %4986 = vmatmul.bf16.gmra.mxu0 %v808
  %v4987 = vpop.f32.mrf.mxu0
  %v4988 = vadd.f32 %v4975, %v4987
  %v4989 = vpop.f32.mrf.mxu0
  %4990 = vdwg.mxu0
  %4991 = vmatpush.bf16.msra.mxu0 %v3693
  %4992 = vmatpush.bf16.msra.mxu0 %v3683
  %4993 = vmatpush.bf16.msra.mxu0 %v3673
  %4994 = vmatpush.bf16.msra.mxu0 %v3663
  %4995 = vmatpush.bf16.msra.mxu0 %v3653
  %4996 = vmatpush.bf16.msra.mxu0 %v3643
  %4997 = vmatpush.bf16.msra.mxu0 %v3633
  %4998 = vmatpush.bf16.msra.mxu0 %v3623
  %4999 = vmatmul.bf16.gmra.mxu0 %v809
  %v5000 = vpop.f32.mrf.mxu0
  %v5001 = vadd.f32 %v4988, %v5000
  %v5002 = vpop.f32.mrf.mxu0
  %5003 = vdwg.mxu0
  %5004 = vmatpush.bf16.msra.mxu0 %v3054
  %5005 = vmatpush.bf16.msra.mxu0 %v3044
  %5006 = vmatpush.bf16.msra.mxu0 %v3034
  %5007 = vmatpush.bf16.msra.mxu0 %v3024
  %5008 = vmatpush.bf16.msra.mxu0 %v3014
  %5009 = vmatpush.bf16.msra.mxu0 %v3004
  %5010 = vmatpush.bf16.msra.mxu0 %v2994
  %5011 = vmatpush.bf16.msra.mxu0 %v2984
  %5012 = vmatmul.bf16.gmra.mxu0 %v801
  %v5013 = vpop.f32.mrf.mxu0
  %v5014 = vadd.f32 %v772, %v5013
  %v5015 = vpop.f32.mrf.mxu0
  %5016 = vdwg.mxu0
  %5017 = vmatpush.bf16.msra.mxu0 %v3134
  %5018 = vmatpush.bf16.msra.mxu0 %v3124
  %5019 = vmatpush.bf16.msra.mxu0 %v3114
  %5020 = vmatpush.bf16.msra.mxu0 %v3104
  %5021 = vmatpush.bf16.msra.mxu0 %v3094
  %5022 = vmatpush.bf16.msra.mxu0 %v3084
  %5023 = vmatpush.bf16.msra.mxu0 %v3074
  %5024 = vmatpush.bf16.msra.mxu0 %v3064
  %5025 = vmatmul.bf16.gmra.mxu0 %v802
  %v5026 = vpop.f32.mrf.mxu0
  %v5027 = vadd.f32 %v5014, %v5026
  %v5028 = vpop.f32.mrf.mxu0
  %5029 = vdwg.mxu0
  %5030 = vmatpush.bf16.msra.mxu0 %v3214
  %5031 = vmatpush.bf16.msra.mxu0 %v3204
  %5032 = vmatpush.bf16.msra.mxu0 %v3194
  %5033 = vmatpush.bf16.msra.mxu0 %v3184
  %5034 = vmatpush.bf16.msra.mxu0 %v3174
  %5035 = vmatpush.bf16.msra.mxu0 %v3164
  %5036 = vmatpush.bf16.msra.mxu0 %v3154
  %5037 = vmatpush.bf16.msra.mxu0 %v3144
  %5038 = vmatmul.bf16.gmra.mxu0 %v803
  %v5039 = vpop.f32.mrf.mxu0
  %v5040 = vadd.f32 %v5027, %v5039
  %v5041 = vpop.f32.mrf.mxu0
  %5042 = vdwg.mxu0
  %5043 = vmatpush.bf16.msra.mxu0 %v3294
  %5044 = vmatpush.bf16.msra.mxu0 %v3284
  %5045 = vmatpush.bf16.msra.mxu0 %v3274
  %5046 = vmatpush.bf16.msra.mxu0 %v3264
  %5047 = vmatpush.bf16.msra.mxu0 %v3254
  %5048 = vmatpush.bf16.msra.mxu0 %v3244
  %5049 = vmatpush.bf16.msra.mxu0 %v3234
  %5050 = vmatpush.bf16.msra.mxu0 %v3224
  %5051 = vmatmul.bf16.gmra.mxu0 %v804
  %v5052 = vpop.f32.mrf.mxu0
  %v5053 = vadd.f32 %v5040, %v5052
  %v5054 = vpop.f32.mrf.mxu0
  %5055 = vdwg.mxu0
  %5056 = vmatpush.bf16.msra.mxu0 %v3374
  %5057 = vmatpush.bf16.msra.mxu0 %v3364
  %5058 = vmatpush.bf16.msra.mxu0 %v3354
  %5059 = vmatpush.bf16.msra.mxu0 %v3344
  %5060 = vmatpush.bf16.msra.mxu0 %v3334
  %5061 = vmatpush.bf16.msra.mxu0 %v3324
  %5062 = vmatpush.bf16.msra.mxu0 %v3314
  %5063 = vmatpush.bf16.msra.mxu0 %v3304
  %5064 = vmatmul.bf16.gmra.mxu0 %v805
  %v5065 = vpop.f32.mrf.mxu0
  %v5066 = vadd.f32 %v5053, %v5065
  %v5067 = vpop.f32.mrf.mxu0
  %5068 = vdwg.mxu0
  %5069 = vmatpush.bf16.msra.mxu0 %v3454
  %5070 = vmatpush.bf16.msra.mxu0 %v3444
  %5071 = vmatpush.bf16.msra.mxu0 %v3434
  %5072 = vmatpush.bf16.msra.mxu0 %v3424
  %5073 = vmatpush.bf16.msra.mxu0 %v3414
  %5074 = vmatpush.bf16.msra.mxu0 %v3404
  %5075 = vmatpush.bf16.msra.mxu0 %v3394
  %5076 = vmatpush.bf16.msra.mxu0 %v3384
  %5077 = vmatmul.bf16.gmra.mxu0 %v806
  %v5078 = vpop.f32.mrf.mxu0
  %v5079 = vadd.f32 %v5066, %v5078
  %v5080 = vpop.f32.mrf.mxu0
  %5081 = vdwg.mxu0
  %5082 = vmatpush.bf16.msra.mxu0 %v3534
  %5083 = vmatpush.bf16.msra.mxu0 %v3524
  %5084 = vmatpush.bf16.msra.mxu0 %v3514
  %5085 = vmatpush.bf16.msra.mxu0 %v3504
  %5086 = vmatpush.bf16.msra.mxu0 %v3494
  %5087 = vmatpush.bf16.msra.mxu0 %v3484
  %5088 = vmatpush.bf16.msra.mxu0 %v3474
  %5089 = vmatpush.bf16.msra.mxu0 %v3464
  %5090 = vmatmul.bf16.gmra.mxu0 %v807
  %v5091 = vpop.f32.mrf.mxu0
  %v5092 = vadd.f32 %v5079, %v5091
  %v5093 = vpop.f32.mrf.mxu0
  %5094 = vdwg.mxu0
  %5095 = vmatpush.bf16.msra.mxu0 %v3614
  %5096 = vmatpush.bf16.msra.mxu0 %v3604
  %5097 = vmatpush.bf16.msra.mxu0 %v3594
  %5098 = vmatpush.bf16.msra.mxu0 %v3584
  %5099 = vmatpush.bf16.msra.mxu0 %v3574
  %5100 = vmatpush.bf16.msra.mxu0 %v3564
  %5101 = vmatpush.bf16.msra.mxu0 %v3554
  %5102 = vmatpush.bf16.msra.mxu0 %v3544
  %5103 = vmatmul.bf16.gmra.mxu0 %v808
  %v5104 = vpop.f32.mrf.mxu0
  %v5105 = vadd.f32 %v5092, %v5104
  %v5106 = vpop.f32.mrf.mxu0
  %5107 = vdwg.mxu0
  %5108 = vmatpush.bf16.msra.mxu0 %v3694
  %5109 = vmatpush.bf16.msra.mxu0 %v3684
  %5110 = vmatpush.bf16.msra.mxu0 %v3674
  %5111 = vmatpush.bf16.msra.mxu0 %v3664
  %5112 = vmatpush.bf16.msra.mxu0 %v3654
  %5113 = vmatpush.bf16.msra.mxu0 %v3644
  %5114 = vmatpush.bf16.msra.mxu0 %v3634
  %5115 = vmatpush.bf16.msra.mxu0 %v3624
  %5116 = vmatmul.bf16.gmra.mxu0 %v809
  %v5117 = vpop.f32.mrf.mxu0
  %v5118 = vadd.f32 %v5105, %v5117
  %v5119 = vpop.f32.mrf.mxu0
  %5120 = vdwg.mxu0
  %5121 = vmatpush.bf16.msra.mxu0 %v3055
  %5122 = vmatpush.bf16.msra.mxu0 %v3045
  %5123 = vmatpush.bf16.msra.mxu0 %v3035
  %5124 = vmatpush.bf16.msra.mxu0 %v3025
  %5125 = vmatpush.bf16.msra.mxu0 %v3015
  %5126 = vmatpush.bf16.msra.mxu0 %v3005
  %5127 = vmatpush.bf16.msra.mxu0 %v2995
  %5128 = vmatpush.bf16.msra.mxu0 %v2985
  %5129 = vmatmul.bf16.gmra.mxu0 %v801
  %v5130 = vpop.f32.mrf.mxu0
  %v5131 = vadd.f32 %v773, %v5130
  %v5132 = vpop.f32.mrf.mxu0
  %5133 = vdwg.mxu0
  %5134 = vmatpush.bf16.msra.mxu0 %v3135
  %5135 = vmatpush.bf16.msra.mxu0 %v3125
  %5136 = vmatpush.bf16.msra.mxu0 %v3115
  %5137 = vmatpush.bf16.msra.mxu0 %v3105
  %5138 = vmatpush.bf16.msra.mxu0 %v3095
  %5139 = vmatpush.bf16.msra.mxu0 %v3085
  %5140 = vmatpush.bf16.msra.mxu0 %v3075
  %5141 = vmatpush.bf16.msra.mxu0 %v3065
  %5142 = vmatmul.bf16.gmra.mxu0 %v802
  %v5143 = vpop.f32.mrf.mxu0
  %v5144 = vadd.f32 %v5131, %v5143
  %v5145 = vpop.f32.mrf.mxu0
  %5146 = vdwg.mxu0
  %5147 = vmatpush.bf16.msra.mxu0 %v3215
  %5148 = vmatpush.bf16.msra.mxu0 %v3205
  %5149 = vmatpush.bf16.msra.mxu0 %v3195
  %5150 = vmatpush.bf16.msra.mxu0 %v3185
  %5151 = vmatpush.bf16.msra.mxu0 %v3175
  %5152 = vmatpush.bf16.msra.mxu0 %v3165
  %5153 = vmatpush.bf16.msra.mxu0 %v3155
  %5154 = vmatpush.bf16.msra.mxu0 %v3145
  %5155 = vmatmul.bf16.gmra.mxu0 %v803
  %v5156 = vpop.f32.mrf.mxu0
  %v5157 = vadd.f32 %v5144, %v5156
  %v5158 = vpop.f32.mrf.mxu0
  %5159 = vdwg.mxu0
  %5160 = vmatpush.bf16.msra.mxu0 %v3295
  %5161 = vmatpush.bf16.msra.mxu0 %v3285
  %5162 = vmatpush.bf16.msra.mxu0 %v3275
  %5163 = vmatpush.bf16.msra.mxu0 %v3265
  %5164 = vmatpush.bf16.msra.mxu0 %v3255
  %5165 = vmatpush.bf16.msra.mxu0 %v3245
  %5166 = vmatpush.bf16.msra.mxu0 %v3235
  %5167 = vmatpush.bf16.msra.mxu0 %v3225
  %5168 = vmatmul.bf16.gmra.mxu0 %v804
  %v5169 = vpop.f32.mrf.mxu0
  %v5170 = vadd.f32 %v5157, %v5169
  %v5171 = vpop.f32.mrf.mxu0
  %5172 = vdwg.mxu0
  %5173 = vmatpush.bf16.msra.mxu0 %v3375
  %5174 = vmatpush.bf16.msra.mxu0 %v3365
  %5175 = vmatpush.bf16.msra.mxu0 %v3355
  %5176 = vmatpush.bf16.msra.mxu0 %v3345
  %5177 = vmatpush.bf16.msra.mxu0 %v3335
  %5178 = vmatpush.bf16.msra.mxu0 %v3325
  %5179 = vmatpush.bf16.msra.mxu0 %v3315
  %5180 = vmatpush.bf16.msra.mxu0 %v3305
  %5181 = vmatmul.bf16.gmra.mxu0 %v805
  %v5182 = vpop.f32.mrf.mxu0
  %v5183 = vadd.f32 %v5170, %v5182
  %v5184 = vpop.f32.mrf.mxu0
  %5185 = vdwg.mxu0
  %5186 = vmatpush.bf16.msra.mxu0 %v3455
  %5187 = vmatpush.bf16.msra.mxu0 %v3445
  %5188 = vmatpush.bf16.msra.mxu0 %v3435
  %5189 = vmatpush.bf16.msra.mxu0 %v3425
  %5190 = vmatpush.bf16.msra.mxu0 %v3415
  %5191 = vmatpush.bf16.msra.mxu0 %v3405
  %5192 = vmatpush.bf16.msra.mxu0 %v3395
  %5193 = vmatpush.bf16.msra.mxu0 %v3385
  %5194 = vmatmul.bf16.gmra.mxu0 %v806
  %v5195 = vpop.f32.mrf.mxu0
  %v5196 = vadd.f32 %v5183, %v5195
  %v5197 = vpop.f32.mrf.mxu0
  %5198 = vdwg.mxu0
  %5199 = vmatpush.bf16.msra.mxu0 %v3535
  %5200 = vmatpush.bf16.msra.mxu0 %v3525
  %5201 = vmatpush.bf16.msra.mxu0 %v3515
  %5202 = vmatpush.bf16.msra.mxu0 %v3505
  %5203 = vmatpush.bf16.msra.mxu0 %v3495
  %5204 = vmatpush.bf16.msra.mxu0 %v3485
  %5205 = vmatpush.bf16.msra.mxu0 %v3475
  %5206 = vmatpush.bf16.msra.mxu0 %v3465
  %5207 = vmatmul.bf16.gmra.mxu0 %v807
  %v5208 = vpop.f32.mrf.mxu0
  %v5209 = vadd.f32 %v5196, %v5208
  %v5210 = vpop.f32.mrf.mxu0
  %5211 = vdwg.mxu0
  %5212 = vmatpush.bf16.msra.mxu0 %v3615
  %5213 = vmatpush.bf16.msra.mxu0 %v3605
  %5214 = vmatpush.bf16.msra.mxu0 %v3595
  %5215 = vmatpush.bf16.msra.mxu0 %v3585
  %5216 = vmatpush.bf16.msra.mxu0 %v3575
  %5217 = vmatpush.bf16.msra.mxu0 %v3565
  %5218 = vmatpush.bf16.msra.mxu0 %v3555
  %5219 = vmatpush.bf16.msra.mxu0 %v3545
  %5220 = vmatmul.bf16.gmra.mxu0 %v808
  %v5221 = vpop.f32.mrf.mxu0
  %v5222 = vadd.f32 %v5209, %v5221
  %v5223 = vpop.f32.mrf.mxu0
  %5224 = vdwg.mxu0
  %5225 = vmatpush.bf16.msra.mxu0 %v3695
  %5226 = vmatpush.bf16.msra.mxu0 %v3685
  %5227 = vmatpush.bf16.msra.mxu0 %v3675
  %5228 = vmatpush.bf16.msra.mxu0 %v3665
  %5229 = vmatpush.bf16.msra.mxu0 %v3655
  %5230 = vmatpush.bf16.msra.mxu0 %v3645
  %5231 = vmatpush.bf16.msra.mxu0 %v3635
  %5232 = vmatpush.bf16.msra.mxu0 %v3625
  %5233 = vmatmul.bf16.gmra.mxu0 %v809
  %v5234 = vpop.f32.mrf.mxu0
  %v5235 = vadd.f32 %v5222, %v5234
  %v5236 = vpop.f32.mrf.mxu0
  %5237 = vdwg.mxu0
  %5238 = vmatpush.bf16.msra.mxu0 %v3056
  %5239 = vmatpush.bf16.msra.mxu0 %v3046
  %5240 = vmatpush.bf16.msra.mxu0 %v3036
  %5241 = vmatpush.bf16.msra.mxu0 %v3026
  %5242 = vmatpush.bf16.msra.mxu0 %v3016
  %5243 = vmatpush.bf16.msra.mxu0 %v3006
  %5244 = vmatpush.bf16.msra.mxu0 %v2996
  %5245 = vmatpush.bf16.msra.mxu0 %v2986
  %5246 = vmatmul.bf16.gmra.mxu0 %v801
  %v5247 = vpop.f32.mrf.mxu0
  %v5248 = vadd.f32 %v774, %v5247
  %v5249 = vpop.f32.mrf.mxu0
  %5250 = vdwg.mxu0
  %5251 = vmatpush.bf16.msra.mxu0 %v3136
  %5252 = vmatpush.bf16.msra.mxu0 %v3126
  %5253 = vmatpush.bf16.msra.mxu0 %v3116
  %5254 = vmatpush.bf16.msra.mxu0 %v3106
  %5255 = vmatpush.bf16.msra.mxu0 %v3096
  %5256 = vmatpush.bf16.msra.mxu0 %v3086
  %5257 = vmatpush.bf16.msra.mxu0 %v3076
  %5258 = vmatpush.bf16.msra.mxu0 %v3066
  %5259 = vmatmul.bf16.gmra.mxu0 %v802
  %v5260 = vpop.f32.mrf.mxu0
  %v5261 = vadd.f32 %v5248, %v5260
  %v5262 = vpop.f32.mrf.mxu0
  %5263 = vdwg.mxu0
  %5264 = vmatpush.bf16.msra.mxu0 %v3216
  %5265 = vmatpush.bf16.msra.mxu0 %v3206
  %5266 = vmatpush.bf16.msra.mxu0 %v3196
  %5267 = vmatpush.bf16.msra.mxu0 %v3186
  %5268 = vmatpush.bf16.msra.mxu0 %v3176
  %5269 = vmatpush.bf16.msra.mxu0 %v3166
  %5270 = vmatpush.bf16.msra.mxu0 %v3156
  %5271 = vmatpush.bf16.msra.mxu0 %v3146
  %5272 = vmatmul.bf16.gmra.mxu0 %v803
  %v5273 = vpop.f32.mrf.mxu0
  %v5274 = vadd.f32 %v5261, %v5273
  %v5275 = vpop.f32.mrf.mxu0
  %5276 = vdwg.mxu0
  %5277 = vmatpush.bf16.msra.mxu0 %v3296
  %5278 = vmatpush.bf16.msra.mxu0 %v3286
  %5279 = vmatpush.bf16.msra.mxu0 %v3276
  %5280 = vmatpush.bf16.msra.mxu0 %v3266
  %5281 = vmatpush.bf16.msra.mxu0 %v3256
  %5282 = vmatpush.bf16.msra.mxu0 %v3246
  %5283 = vmatpush.bf16.msra.mxu0 %v3236
  %5284 = vmatpush.bf16.msra.mxu0 %v3226
  %5285 = vmatmul.bf16.gmra.mxu0 %v804
  %v5286 = vpop.f32.mrf.mxu0
  %v5287 = vadd.f32 %v5274, %v5286
  %v5288 = vpop.f32.mrf.mxu0
  %5289 = vdwg.mxu0
  %5290 = vmatpush.bf16.msra.mxu0 %v3376
  %5291 = vmatpush.bf16.msra.mxu0 %v3366
  %5292 = vmatpush.bf16.msra.mxu0 %v3356
  %5293 = vmatpush.bf16.msra.mxu0 %v3346
  %5294 = vmatpush.bf16.msra.mxu0 %v3336
  %5295 = vmatpush.bf16.msra.mxu0 %v3326
  %5296 = vmatpush.bf16.msra.mxu0 %v3316
  %5297 = vmatpush.bf16.msra.mxu0 %v3306
  %5298 = vmatmul.bf16.gmra.mxu0 %v805
  %v5299 = vpop.f32.mrf.mxu0
  %v5300 = vadd.f32 %v5287, %v5299
  %v5301 = vpop.f32.mrf.mxu0
  %5302 = vdwg.mxu0
  %5303 = vmatpush.bf16.msra.mxu0 %v3456
  %5304 = vmatpush.bf16.msra.mxu0 %v3446
  %5305 = vmatpush.bf16.msra.mxu0 %v3436
  %5306 = vmatpush.bf16.msra.mxu0 %v3426
  %5307 = vmatpush.bf16.msra.mxu0 %v3416
  %5308 = vmatpush.bf16.msra.mxu0 %v3406
  %5309 = vmatpush.bf16.msra.mxu0 %v3396
  %5310 = vmatpush.bf16.msra.mxu0 %v3386
  %5311 = vmatmul.bf16.gmra.mxu0 %v806
  %v5312 = vpop.f32.mrf.mxu0
  %v5313 = vadd.f32 %v5300, %v5312
  %v5314 = vpop.f32.mrf.mxu0
  %5315 = vdwg.mxu0
  %5316 = vmatpush.bf16.msra.mxu0 %v3536
  %5317 = vmatpush.bf16.msra.mxu0 %v3526
  %5318 = vmatpush.bf16.msra.mxu0 %v3516
  %5319 = vmatpush.bf16.msra.mxu0 %v3506
  %5320 = vmatpush.bf16.msra.mxu0 %v3496
  %5321 = vmatpush.bf16.msra.mxu0 %v3486
  %5322 = vmatpush.bf16.msra.mxu0 %v3476
  %5323 = vmatpush.bf16.msra.mxu0 %v3466
  %5324 = vmatmul.bf16.gmra.mxu0 %v807
  %v5325 = vpop.f32.mrf.mxu0
  %v5326 = vadd.f32 %v5313, %v5325
  %v5327 = vpop.f32.mrf.mxu0
  %5328 = vdwg.mxu0
  %5329 = vmatpush.bf16.msra.mxu0 %v3616
  %5330 = vmatpush.bf16.msra.mxu0 %v3606
  %5331 = vmatpush.bf16.msra.mxu0 %v3596
  %5332 = vmatpush.bf16.msra.mxu0 %v3586
  %5333 = vmatpush.bf16.msra.mxu0 %v3576
  %5334 = vmatpush.bf16.msra.mxu0 %v3566
  %5335 = vmatpush.bf16.msra.mxu0 %v3556
  %5336 = vmatpush.bf16.msra.mxu0 %v3546
  %5337 = vmatmul.bf16.gmra.mxu0 %v808
  %v5338 = vpop.f32.mrf.mxu0
  %v5339 = vadd.f32 %v5326, %v5338
  %v5340 = vpop.f32.mrf.mxu0
  %5341 = vdwg.mxu0
  %5342 = vmatpush.bf16.msra.mxu0 %v3696
  %5343 = vmatpush.bf16.msra.mxu0 %v3686
  %5344 = vmatpush.bf16.msra.mxu0 %v3676
  %5345 = vmatpush.bf16.msra.mxu0 %v3666
  %5346 = vmatpush.bf16.msra.mxu0 %v3656
  %5347 = vmatpush.bf16.msra.mxu0 %v3646
  %5348 = vmatpush.bf16.msra.mxu0 %v3636
  %5349 = vmatpush.bf16.msra.mxu0 %v3626
  %5350 = vmatmul.bf16.gmra.mxu0 %v809
  %v5351 = vpop.f32.mrf.mxu0
  %v5352 = vadd.f32 %v5339, %v5351
  %v5353 = vpop.f32.mrf.mxu0
  %5354 = vdwg.mxu0
  %5355 = vmatpush.bf16.msra.mxu0 %v3057
  %5356 = vmatpush.bf16.msra.mxu0 %v3047
  %5357 = vmatpush.bf16.msra.mxu0 %v3037
  %5358 = vmatpush.bf16.msra.mxu0 %v3027
  %5359 = vmatpush.bf16.msra.mxu0 %v3017
  %5360 = vmatpush.bf16.msra.mxu0 %v3007
  %5361 = vmatpush.bf16.msra.mxu0 %v2997
  %5362 = vmatpush.bf16.msra.mxu0 %v2987
  %5363 = vmatmul.bf16.gmra.mxu0 %v801
  %v5364 = vpop.f32.mrf.mxu0
  %v5365 = vadd.f32 %v775, %v5364
  %v5366 = vpop.f32.mrf.mxu0
  %5367 = vdwg.mxu0
  %5368 = vmatpush.bf16.msra.mxu0 %v3137
  %5369 = vmatpush.bf16.msra.mxu0 %v3127
  %5370 = vmatpush.bf16.msra.mxu0 %v3117
  %5371 = vmatpush.bf16.msra.mxu0 %v3107
  %5372 = vmatpush.bf16.msra.mxu0 %v3097
  %5373 = vmatpush.bf16.msra.mxu0 %v3087
  %5374 = vmatpush.bf16.msra.mxu0 %v3077
  %5375 = vmatpush.bf16.msra.mxu0 %v3067
  %5376 = vmatmul.bf16.gmra.mxu0 %v802
  %v5377 = vpop.f32.mrf.mxu0
  %v5378 = vadd.f32 %v5365, %v5377
  %v5379 = vpop.f32.mrf.mxu0
  %5380 = vdwg.mxu0
  %5381 = vmatpush.bf16.msra.mxu0 %v3217
  %5382 = vmatpush.bf16.msra.mxu0 %v3207
  %5383 = vmatpush.bf16.msra.mxu0 %v3197
  %5384 = vmatpush.bf16.msra.mxu0 %v3187
  %5385 = vmatpush.bf16.msra.mxu0 %v3177
  %5386 = vmatpush.bf16.msra.mxu0 %v3167
  %5387 = vmatpush.bf16.msra.mxu0 %v3157
  %5388 = vmatpush.bf16.msra.mxu0 %v3147
  %5389 = vmatmul.bf16.gmra.mxu0 %v803
  %v5390 = vpop.f32.mrf.mxu0
  %v5391 = vadd.f32 %v5378, %v5390
  %v5392 = vpop.f32.mrf.mxu0
  %5393 = vdwg.mxu0
  %5394 = vmatpush.bf16.msra.mxu0 %v3297
  %5395 = vmatpush.bf16.msra.mxu0 %v3287
  %5396 = vmatpush.bf16.msra.mxu0 %v3277
  %5397 = vmatpush.bf16.msra.mxu0 %v3267
  %5398 = vmatpush.bf16.msra.mxu0 %v3257
  %5399 = vmatpush.bf16.msra.mxu0 %v3247
  %5400 = vmatpush.bf16.msra.mxu0 %v3237
  %5401 = vmatpush.bf16.msra.mxu0 %v3227
  %5402 = vmatmul.bf16.gmra.mxu0 %v804
  %v5403 = vpop.f32.mrf.mxu0
  %v5404 = vadd.f32 %v5391, %v5403
  %v5405 = vpop.f32.mrf.mxu0
  %5406 = vdwg.mxu0
  %5407 = vmatpush.bf16.msra.mxu0 %v3377
  %5408 = vmatpush.bf16.msra.mxu0 %v3367
  %5409 = vmatpush.bf16.msra.mxu0 %v3357
  %5410 = vmatpush.bf16.msra.mxu0 %v3347
  %5411 = vmatpush.bf16.msra.mxu0 %v3337
  %5412 = vmatpush.bf16.msra.mxu0 %v3327
  %5413 = vmatpush.bf16.msra.mxu0 %v3317
  %5414 = vmatpush.bf16.msra.mxu0 %v3307
  %5415 = vmatmul.bf16.gmra.mxu0 %v805
  %v5416 = vpop.f32.mrf.mxu0
  %v5417 = vadd.f32 %v5404, %v5416
  %v5418 = vpop.f32.mrf.mxu0
  %5419 = vdwg.mxu0
  %5420 = vmatpush.bf16.msra.mxu0 %v3457
  %5421 = vmatpush.bf16.msra.mxu0 %v3447
  %5422 = vmatpush.bf16.msra.mxu0 %v3437
  %5423 = vmatpush.bf16.msra.mxu0 %v3427
  %5424 = vmatpush.bf16.msra.mxu0 %v3417
  %5425 = vmatpush.bf16.msra.mxu0 %v3407
  %5426 = vmatpush.bf16.msra.mxu0 %v3397
  %5427 = vmatpush.bf16.msra.mxu0 %v3387
  %5428 = vmatmul.bf16.gmra.mxu0 %v806
  %v5429 = vpop.f32.mrf.mxu0
  %v5430 = vadd.f32 %v5417, %v5429
  %v5431 = vpop.f32.mrf.mxu0
  %5432 = vdwg.mxu0
  %5433 = vmatpush.bf16.msra.mxu0 %v3537
  %5434 = vmatpush.bf16.msra.mxu0 %v3527
  %5435 = vmatpush.bf16.msra.mxu0 %v3517
  %5436 = vmatpush.bf16.msra.mxu0 %v3507
  %5437 = vmatpush.bf16.msra.mxu0 %v3497
  %5438 = vmatpush.bf16.msra.mxu0 %v3487
  %5439 = vmatpush.bf16.msra.mxu0 %v3477
  %5440 = vmatpush.bf16.msra.mxu0 %v3467
  %5441 = vmatmul.bf16.gmra.mxu0 %v807
  %v5442 = vpop.f32.mrf.mxu0
  %v5443 = vadd.f32 %v5430, %v5442
  %v5444 = vpop.f32.mrf.mxu0
  %5445 = vdwg.mxu0
  %5446 = vmatpush.bf16.msra.mxu0 %v3617
  %5447 = vmatpush.bf16.msra.mxu0 %v3607
  %5448 = vmatpush.bf16.msra.mxu0 %v3597
  %5449 = vmatpush.bf16.msra.mxu0 %v3587
  %5450 = vmatpush.bf16.msra.mxu0 %v3577
  %5451 = vmatpush.bf16.msra.mxu0 %v3567
  %5452 = vmatpush.bf16.msra.mxu0 %v3557
  %5453 = vmatpush.bf16.msra.mxu0 %v3547
  %5454 = vmatmul.bf16.gmra.mxu0 %v808
  %v5455 = vpop.f32.mrf.mxu0
  %v5456 = vadd.f32 %v5443, %v5455
  %v5457 = vpop.f32.mrf.mxu0
  %5458 = vdwg.mxu0
  %5459 = vmatpush.bf16.msra.mxu0 %v3697
  %5460 = vmatpush.bf16.msra.mxu0 %v3687
  %5461 = vmatpush.bf16.msra.mxu0 %v3677
  %5462 = vmatpush.bf16.msra.mxu0 %v3667
  %5463 = vmatpush.bf16.msra.mxu0 %v3657
  %5464 = vmatpush.bf16.msra.mxu0 %v3647
  %5465 = vmatpush.bf16.msra.mxu0 %v3637
  %5466 = vmatpush.bf16.msra.mxu0 %v3627
  %5467 = vmatmul.bf16.gmra.mxu0 %v809
  %v5468 = vpop.f32.mrf.mxu0
  %v5469 = vadd.f32 %v5456, %v5468
  %v5470 = vpop.f32.mrf.mxu0
  %5471 = vdwg.mxu0
  %5472 = vmatpush.bf16.msra.mxu0 %v3058
  %5473 = vmatpush.bf16.msra.mxu0 %v3048
  %5474 = vmatpush.bf16.msra.mxu0 %v3038
  %5475 = vmatpush.bf16.msra.mxu0 %v3028
  %5476 = vmatpush.bf16.msra.mxu0 %v3018
  %5477 = vmatpush.bf16.msra.mxu0 %v3008
  %5478 = vmatpush.bf16.msra.mxu0 %v2998
  %5479 = vmatpush.bf16.msra.mxu0 %v2988
  %5480 = vmatmul.bf16.gmra.mxu0 %v801
  %v5481 = vpop.f32.mrf.mxu0
  %v5482 = vadd.f32 %v776, %v5481
  %v5483 = vpop.f32.mrf.mxu0
  %5484 = vdwg.mxu0
  %5485 = vmatpush.bf16.msra.mxu0 %v3138
  %5486 = vmatpush.bf16.msra.mxu0 %v3128
  %5487 = vmatpush.bf16.msra.mxu0 %v3118
  %5488 = vmatpush.bf16.msra.mxu0 %v3108
  %5489 = vmatpush.bf16.msra.mxu0 %v3098
  %5490 = vmatpush.bf16.msra.mxu0 %v3088
  %5491 = vmatpush.bf16.msra.mxu0 %v3078
  %5492 = vmatpush.bf16.msra.mxu0 %v3068
  %5493 = vmatmul.bf16.gmra.mxu0 %v802
  %v5494 = vpop.f32.mrf.mxu0
  %v5495 = vadd.f32 %v5482, %v5494
  %v5496 = vpop.f32.mrf.mxu0
  %5497 = vdwg.mxu0
  %5498 = vmatpush.bf16.msra.mxu0 %v3218
  %5499 = vmatpush.bf16.msra.mxu0 %v3208
  %5500 = vmatpush.bf16.msra.mxu0 %v3198
  %5501 = vmatpush.bf16.msra.mxu0 %v3188
  %5502 = vmatpush.bf16.msra.mxu0 %v3178
  %5503 = vmatpush.bf16.msra.mxu0 %v3168
  %5504 = vmatpush.bf16.msra.mxu0 %v3158
  %5505 = vmatpush.bf16.msra.mxu0 %v3148
  %5506 = vmatmul.bf16.gmra.mxu0 %v803
  %v5507 = vpop.f32.mrf.mxu0
  %v5508 = vadd.f32 %v5495, %v5507
  %v5509 = vpop.f32.mrf.mxu0
  %5510 = vdwg.mxu0
  %5511 = vmatpush.bf16.msra.mxu0 %v3298
  %5512 = vmatpush.bf16.msra.mxu0 %v3288
  %5513 = vmatpush.bf16.msra.mxu0 %v3278
  %5514 = vmatpush.bf16.msra.mxu0 %v3268
  %5515 = vmatpush.bf16.msra.mxu0 %v3258
  %5516 = vmatpush.bf16.msra.mxu0 %v3248
  %5517 = vmatpush.bf16.msra.mxu0 %v3238
  %5518 = vmatpush.bf16.msra.mxu0 %v3228
  %5519 = vmatmul.bf16.gmra.mxu0 %v804
  %v5520 = vpop.f32.mrf.mxu0
  %v5521 = vadd.f32 %v5508, %v5520
  %v5522 = vpop.f32.mrf.mxu0
  %5523 = vdwg.mxu0
  %5524 = vmatpush.bf16.msra.mxu0 %v3378
  %5525 = vmatpush.bf16.msra.mxu0 %v3368
  %5526 = vmatpush.bf16.msra.mxu0 %v3358
  %5527 = vmatpush.bf16.msra.mxu0 %v3348
  %5528 = vmatpush.bf16.msra.mxu0 %v3338
  %5529 = vmatpush.bf16.msra.mxu0 %v3328
  %5530 = vmatpush.bf16.msra.mxu0 %v3318
  %5531 = vmatpush.bf16.msra.mxu0 %v3308
  %5532 = vmatmul.bf16.gmra.mxu0 %v805
  %v5533 = vpop.f32.mrf.mxu0
  %v5534 = vadd.f32 %v5521, %v5533
  %v5535 = vpop.f32.mrf.mxu0
  %5536 = vdwg.mxu0
  %5537 = vmatpush.bf16.msra.mxu0 %v3458
  %5538 = vmatpush.bf16.msra.mxu0 %v3448
  %5539 = vmatpush.bf16.msra.mxu0 %v3438
  %5540 = vmatpush.bf16.msra.mxu0 %v3428
  %5541 = vmatpush.bf16.msra.mxu0 %v3418
  %5542 = vmatpush.bf16.msra.mxu0 %v3408
  %5543 = vmatpush.bf16.msra.mxu0 %v3398
  %5544 = vmatpush.bf16.msra.mxu0 %v3388
  %5545 = vmatmul.bf16.gmra.mxu0 %v806
  %v5546 = vpop.f32.mrf.mxu0
  %v5547 = vadd.f32 %v5534, %v5546
  %v5548 = vpop.f32.mrf.mxu0
  %5549 = vdwg.mxu0
  %5550 = vmatpush.bf16.msra.mxu0 %v3538
  %5551 = vmatpush.bf16.msra.mxu0 %v3528
  %5552 = vmatpush.bf16.msra.mxu0 %v3518
  %5553 = vmatpush.bf16.msra.mxu0 %v3508
  %5554 = vmatpush.bf16.msra.mxu0 %v3498
  %5555 = vmatpush.bf16.msra.mxu0 %v3488
  %5556 = vmatpush.bf16.msra.mxu0 %v3478
  %5557 = vmatpush.bf16.msra.mxu0 %v3468
  %5558 = vmatmul.bf16.gmra.mxu0 %v807
  %v5559 = vpop.f32.mrf.mxu0
  %v5560 = vadd.f32 %v5547, %v5559
  %v5561 = vpop.f32.mrf.mxu0
  %5562 = vdwg.mxu0
  %5563 = vmatpush.bf16.msra.mxu0 %v3618
  %5564 = vmatpush.bf16.msra.mxu0 %v3608
  %5565 = vmatpush.bf16.msra.mxu0 %v3598
  %5566 = vmatpush.bf16.msra.mxu0 %v3588
  %5567 = vmatpush.bf16.msra.mxu0 %v3578
  %5568 = vmatpush.bf16.msra.mxu0 %v3568
  %5569 = vmatpush.bf16.msra.mxu0 %v3558
  %5570 = vmatpush.bf16.msra.mxu0 %v3548
  %5571 = vmatmul.bf16.gmra.mxu0 %v808
  %v5572 = vpop.f32.mrf.mxu0
  %v5573 = vadd.f32 %v5560, %v5572
  %v5574 = vpop.f32.mrf.mxu0
  %5575 = vdwg.mxu0
  %5576 = vmatpush.bf16.msra.mxu0 %v3698
  %5577 = vmatpush.bf16.msra.mxu0 %v3688
  %5578 = vmatpush.bf16.msra.mxu0 %v3678
  %5579 = vmatpush.bf16.msra.mxu0 %v3668
  %5580 = vmatpush.bf16.msra.mxu0 %v3658
  %5581 = vmatpush.bf16.msra.mxu0 %v3648
  %5582 = vmatpush.bf16.msra.mxu0 %v3638
  %5583 = vmatpush.bf16.msra.mxu0 %v3628
  %5584 = vmatmul.bf16.gmra.mxu0 %v809
  %v5585 = vpop.f32.mrf.mxu0
  %v5586 = vadd.f32 %v5573, %v5585
  %v5587 = vpop.f32.mrf.mxu0
  %5588 = vdwg.mxu0
  %v5589 = vmax.f32 %v4533, 0.0
  %v5590 = vmax.f32 %v4650, 0.0
  %v5591 = vmax.f32 %v4767, 0.0
  %v5592 = vmax.f32 %v4884, 0.0
  %v5593 = vmax.f32 %v5001, 0.0
  %v5594 = vmax.f32 %v5118, 0.0
  %v5595 = vmax.f32 %v5235, 0.0
  %v5596 = vmax.f32 %v5352, 0.0
  %v5597 = vmax.f32 %v5469, 0.0
  %v5598 = vmax.f32 %v5586, 0.0
  %v5599 = vpack.c.bf16 %v5589, %v5589
  %v5600 = vpack.c.bf16 %v5590, %v5590
  %v5601 = vpack.c.bf16 %v5591, %v5591
  %v5602 = vpack.c.bf16 %v5592, %v5592
  %v5603 = vpack.c.bf16 %v5593, %v5593
  %v5604 = vpack.c.bf16 %v5594, %v5594
  %v5605 = vpack.c.bf16 %v5595, %v5595
  %v5606 = vpack.c.bf16 %v5596, %v5596
  %v5607 = vpack.c.bf16 %v5597, %v5597
  %v5608 = vpack.c.bf16 %v5598, %v5598
  %v5609 = vld [vmem:[%s3] sm:$0xf]
  %v5610 = vld [vmem:[%s3 + $0x4] sm:$0xf]
  %v5611 = vld [vmem:[%s3 + $0x8] sm:$0xf]
  %v5612 = vld [vmem:[%s3 + $0xc] sm:$0xf]
  %v5613 = vld [vmem:[%s3 + $0x10] sm:$0xf]
  %v5614 = vld [vmem:[%s3 + $0x14] sm:$0xf]
  %v5615 = vld [vmem:[%s3 + $0x18] sm:$0xf]
  %v5616 = vld [vmem:[%s3 + $0x1c] sm:$0xf]
  %v5617 = vld [vmem:[%s3 + $0x20] sm:$0xf]
  %v5618 = vld [vmem:[%s3 + $0x24] sm:$0xf]
  %v5619 = vld [vmem:[%s3 + $0x28] sm:$0xf]
  %v5620 = vld [vmem:[%s3 + $0x2c] sm:$0xf]
  %v5621 = vld [vmem:[%s3 + $0x30] sm:$0xf]
  %v5622 = vld [vmem:[%s3 + $0x34] sm:$0xf]
  %v5623 = vld [vmem:[%s3 + $0x38] sm:$0xf]
  %v5624 = vld [vmem:[%s3 + $0x3c] sm:$0xf]
  %v5625 = vld [vmem:[%s3 + $0x40] sm:$0xf]
  %v5626 = vld [vmem:[%s3 + $0x44] sm:$0xf]
  %v5627 = vld [vmem:[%s3 + $0x48] sm:$0xf]
  %v5628 = vld [vmem:[%s3 + $0x4c] sm:$0xf]
  %v5629 = vld [vmem:[%s3 + $0x50] sm:$0xf]
  %v5630 = vld [vmem:[%s3 + $0x54] sm:$0xf]
  %v5631 = vld [vmem:[%s3 + $0x58] sm:$0xf]
  %v5632 = vld [vmem:[%s3 + $0x5c] sm:$0xf]
  %v5633 = vld [vmem:[%s3 + $0x60] sm:$0xf]
  %v5634 = vld [vmem:[%s3 + $0x64] sm:$0xf]
  %v5635 = vld [vmem:[%s3 + $0x68] sm:$0xf]
  %v5636 = vld [vmem:[%s3 + $0x6c] sm:$0xf]
  %v5637 = vld [vmem:[%s3 + $0x70] sm:$0xf]
  %v5638 = vld [vmem:[%s3 + $0x74] sm:$0xf]
  %v5639 = vld [vmem:[%s3 + $0x78] sm:$0xf]
  %v5640 = vld [vmem:[%s3 + $0x7c] sm:$0xf]
  %v5641 = vld [vmem:[%s3 + $0x80] sm:$0xf]
  %v5642 = vld [vmem:[%s3 + $0x84] sm:$0xf]
  %v5643 = vld [vmem:[%s3 + $0x88] sm:$0xf]
  %v5644 = vld [vmem:[%s3 + $0x8c] sm:$0xf]
  %v5645 = vld [vmem:[%s3 + $0x90] sm:$0xf]
  %v5646 = vld [vmem:[%s3 + $0x94] sm:$0xf]
  %v5647 = vld [vmem:[%s3 + $0x98] sm:$0xf]
  %v5648 = vld [vmem:[%s3 + $0x9c] sm:$0xf]
  %v5649 = vld [vmem:[%s3 + $0xa0] sm:$0xf]
  %v5650 = vld [vmem:[%s3 + $0xa4] sm:$0xf]
  %v5651 = vld [vmem:[%s3 + $0xa8] sm:$0xf]
  %v5652 = vld [vmem:[%s3 + $0xac] sm:$0xf]
  %v5653 = vld [vmem:[%s3 + $0xb0] sm:$0xf]
  %v5654 = vld [vmem:[%s3 + $0xb4] sm:$0xf]
  %v5655 = vld [vmem:[%s3 + $0xb8] sm:$0xf]
  %v5656 = vld [vmem:[%s3 + $0xbc] sm:$0xf]
  %v5657 = vld [vmem:[%s3 + $0xc0] sm:$0xf]
  %v5658 = vld [vmem:[%s3 + $0xc4] sm:$0xf]
  %v5659 = vld [vmem:[%s3 + $0xc8] sm:$0xf]
  %v5660 = vld [vmem:[%s3 + $0xcc] sm:$0xf]
  %v5661 = vld [vmem:[%s3 + $0xd0] sm:$0xf]
  %v5662 = vld [vmem:[%s3 + $0xd4] sm:$0xf]
  %v5663 = vld [vmem:[%s3 + $0xd8] sm:$0xf]
  %v5664 = vld [vmem:[%s3 + $0xdc] sm:$0xf]
  %v5665 = vld [vmem:[%s3 + $0xe0] sm:$0xf]
  %v5666 = vld [vmem:[%s3 + $0xe4] sm:$0xf]
  %v5667 = vld [vmem:[%s3 + $0xe8] sm:$0xf]
  %v5668 = vld [vmem:[%s3 + $0xec] sm:$0xf]
  %v5669 = vld [vmem:[%s3 + $0xf0] sm:$0xf]
  %v5670 = vld [vmem:[%s3 + $0xf4] sm:$0xf]
  %v5671 = vld [vmem:[%s3 + $0xf8] sm:$0xf]
  %v5672 = vld [vmem:[%s3 + $0xfc] sm:$0xf]
  %v5673 = vld [vmem:[%s3 + $0x100] sm:$0xf]
  %v5674 = vld [vmem:[%s3 + $0x104] sm:$0xf]
  %v5675 = vld [vmem:[%s3 + $0x108] sm:$0xf]
  %v5676 = vld [vmem:[%s3 + $0x10c] sm:$0xf]
  %v5677 = vld [vmem:[%s3 + $0x110] sm:$0xf]
  %v5678 = vld [vmem:[%s3 + $0x114] sm:$0xf]
  %v5679 = vld [vmem:[%s3 + $0x118] sm:$0xf]
  %v5680 = vld [vmem:[%s3 + $0x11c] sm:$0xf]
  %v5681 = vld [vmem:[%s3 + $0x120] sm:$0xf]
  %v5682 = vld [vmem:[%s3 + $0x124] sm:$0xf]
  %v5683 = vld [vmem:[%s3 + $0x128] sm:$0xf]
  %v5684 = vld [vmem:[%s3 + $0x12c] sm:$0xf]
  %v5685 = vld [vmem:[%s3 + $0x130] sm:$0xf]
  %v5686 = vld [vmem:[%s3 + $0x134] sm:$0xf]
  %v5687 = vld [vmem:[%s3 + $0x138] sm:$0xf]
  %v5688 = vld [vmem:[%s3 + $0x13c] sm:$0xf]
  %v5689 = vld [vmem:[%s3 + $0x140] sm:$0xf]
  %v5690 = vld [vmem:[%s3 + $0x144] sm:$0xf]
  %v5691 = vld [vmem:[%s3 + $0x148] sm:$0xf]
  %v5692 = vld [vmem:[%s3 + $0x14c] sm:$0xf]
  %v5693 = vld [vmem:[%s3 + $0x150] sm:$0xf]
  %v5694 = vld [vmem:[%s3 + $0x154] sm:$0xf]
  %v5695 = vld [vmem:[%s3 + $0x158] sm:$0xf]
  %v5696 = vld [vmem:[%s3 + $0x15c] sm:$0xf]
  %v5697 = vld [vmem:[%s3 + $0x160] sm:$0xf]
  %v5698 = vld [vmem:[%s3 + $0x164] sm:$0xf]
  %v5699 = vld [vmem:[%s3 + $0x168] sm:$0xf]
  %v5700 = vld [vmem:[%s3 + $0x16c] sm:$0xf]
  %v5701 = vld [vmem:[%s3 + $0x170] sm:$0xf]
  %v5702 = vld [vmem:[%s3 + $0x174] sm:$0xf]
  %v5703 = vld [vmem:[%s3 + $0x178] sm:$0xf]
  %v5704 = vld [vmem:[%s3 + $0x17c] sm:$0xf]
  %v5705 = vld [vmem:[%s3 + $0x180] sm:$0xf]
  %v5706 = vld [vmem:[%s3 + $0x184] sm:$0xf]
  %v5707 = vld [vmem:[%s3 + $0x188] sm:$0xf]
  %v5708 = vld [vmem:[%s3 + $0x18c] sm:$0xf]
  %v5709 = vld [vmem:[%s3 + $0x190] sm:$0xf]
  %v5710 = vld [vmem:[%s3 + $0x194] sm:$0xf]
  %v5711 = vld [vmem:[%s3 + $0x198] sm:$0xf]
  %v5712 = vld [vmem:[%s3 + $0x19c] sm:$0xf]
  %v5713 = vld [vmem:[%s3 + $0x1a0] sm:$0xf]
  %v5714 = vld [vmem:[%s3 + $0x1a4] sm:$0xf]
  %v5715 = vld [vmem:[%s3 + $0x1a8] sm:$0xf]
  %v5716 = vld [vmem:[%s3 + $0x1ac] sm:$0xf]
  %v5717 = vld [vmem:[%s3 + $0x1b0] sm:$0xf]
  %v5718 = vld [vmem:[%s3 + $0x1b4] sm:$0xf]
  %v5719 = vld [vmem:[%s3 + $0x1b8] sm:$0xf]
  %v5720 = vld [vmem:[%s3 + $0x1bc] sm:$0xf]
  %v5721 = vld [vmem:[%s3 + $0x1c0] sm:$0xf]
  %v5722 = vld [vmem:[%s3 + $0x1c4] sm:$0xf]
  %v5723 = vld [vmem:[%s3 + $0x1c8] sm:$0xf]
  %v5724 = vld [vmem:[%s3 + $0x1cc] sm:$0xf]
  %v5725 = vld [vmem:[%s3 + $0x1d0] sm:$0xf]
  %v5726 = vld [vmem:[%s3 + $0x1d4] sm:$0xf]
  %v5727 = vld [vmem:[%s3 + $0x1d8] sm:$0xf]
  %v5728 = vld [vmem:[%s3 + $0x1dc] sm:$0xf]
  %v5729 = vld [vmem:[%s3 + $0x1e0] sm:$0xf]
  %v5730 = vld [vmem:[%s3 + $0x1e4] sm:$0xf]
  %v5731 = vld [vmem:[%s3 + $0x1e8] sm:$0xf]
  %v5732 = vld [vmem:[%s3 + $0x1ec] sm:$0xf]
  %v5733 = vld [vmem:[%s3 + $0x1f0] sm:$0xf]
  %v5734 = vld [vmem:[%s3 + $0x1f4] sm:$0xf]
  %v5735 = vld [vmem:[%s3 + $0x1f8] sm:$0xf]
  %v5736 = vld [vmem:[%s3 + $0x1fc] sm:$0xf]
  %v5737 = vld [vmem:[%s3 + $0x200] sm:$0xf]
  %v5738 = vld [vmem:[%s3 + $0x204] sm:$0xf]
  %v5739 = vld [vmem:[%s3 + $0x208] sm:$0xf]
  %v5740 = vld [vmem:[%s3 + $0x20c] sm:$0xf]
  %v5741 = vld [vmem:[%s3 + $0x210] sm:$0xf]
  %v5742 = vld [vmem:[%s3 + $0x214] sm:$0xf]
  %v5743 = vld [vmem:[%s3 + $0x218] sm:$0xf]
  %v5744 = vld [vmem:[%s3 + $0x21c] sm:$0xf]
  %v5745 = vld [vmem:[%s3 + $0x220] sm:$0xf]
  %v5746 = vld [vmem:[%s3 + $0x224] sm:$0xf]
  %v5747 = vld [vmem:[%s3 + $0x228] sm:$0xf]
  %v5748 = vld [vmem:[%s3 + $0x22c] sm:$0xf]
  %v5749 = vld [vmem:[%s3 + $0x230] sm:$0xf]
  %v5750 = vld [vmem:[%s3 + $0x234] sm:$0xf]
  %v5751 = vld [vmem:[%s3 + $0x238] sm:$0xf]
  %v5752 = vld [vmem:[%s3 + $0x23c] sm:$0xf]
  %v5753 = vld [vmem:[%s3 + $0x240] sm:$0xf]
  %v5754 = vld [vmem:[%s3 + $0x244] sm:$0xf]
  %v5755 = vld [vmem:[%s3 + $0x248] sm:$0xf]
  %v5756 = vld [vmem:[%s3 + $0x24c] sm:$0xf]
  %v5757 = vld [vmem:[%s3 + $0x250] sm:$0xf]
  %v5758 = vld [vmem:[%s3 + $0x254] sm:$0xf]
  %v5759 = vld [vmem:[%s3 + $0x258] sm:$0xf]
  %v5760 = vld [vmem:[%s3 + $0x25c] sm:$0xf]
  %v5761 = vld [vmem:[%s3 + $0x260] sm:$0xf]
  %v5762 = vld [vmem:[%s3 + $0x264] sm:$0xf]
  %v5763 = vld [vmem:[%s3 + $0x268] sm:$0xf]
  %v5764 = vld [vmem:[%s3 + $0x26c] sm:$0xf]
  %v5765 = vld [vmem:[%s3 + $0x270] sm:$0xf]
  %v5766 = vld [vmem:[%s3 + $0x274] sm:$0xf]
  %v5767 = vld [vmem:[%s3 + $0x278] sm:$0xf]
  %v5768 = vld [vmem:[%s3 + $0x27c] sm:$0xf]
  %v5769 = vld [vmem:[%s4] sm:$0x1]
  %v5771 = vperm.slane %v5769, 0
  %v5933 = vunpack.c.l.b16 %v5609
  %v5934 = vunpack.c.l.b16 %v5610
  %v5935 = vunpack.c.l.b16 %v5611
  %v5936 = vunpack.c.l.b16 %v5612
  %v5937 = vunpack.c.l.b16 %v5613
  %v5938 = vunpack.c.l.b16 %v5614
  %v5939 = vunpack.c.l.b16 %v5615
  %v5940 = vunpack.c.l.b16 %v5616
  %v5941 = vunpack.c.l.b16 %v5617
  %v5942 = vunpack.c.l.b16 %v5618
  %v5943 = vunpack.c.l.b16 %v5619
  %v5944 = vunpack.c.l.b16 %v5620
  %v5945 = vunpack.c.l.b16 %v5621
  %v5946 = vunpack.c.l.b16 %v5622
  %v5947 = vunpack.c.l.b16 %v5623
  %v5948 = vunpack.c.l.b16 %v5624
  %v5949 = vunpack.c.l.b16 %v5625
  %v5950 = vunpack.c.l.b16 %v5626
  %v5951 = vunpack.c.l.b16 %v5627
  %v5952 = vunpack.c.l.b16 %v5628
  %v5953 = vunpack.c.l.b16 %v5629
  %v5954 = vunpack.c.l.b16 %v5630
  %v5955 = vunpack.c.l.b16 %v5631
  %v5956 = vunpack.c.l.b16 %v5632
  %v5957 = vunpack.c.l.b16 %v5633
  %v5958 = vunpack.c.l.b16 %v5634
  %v5959 = vunpack.c.l.b16 %v5635
  %v5960 = vunpack.c.l.b16 %v5636
  %v5961 = vunpack.c.l.b16 %v5637
  %v5962 = vunpack.c.l.b16 %v5638
  %v5963 = vunpack.c.l.b16 %v5639
  %v5964 = vunpack.c.l.b16 %v5640
  %v5965 = vunpack.c.l.b16 %v5641
  %v5966 = vunpack.c.l.b16 %v5642
  %v5967 = vunpack.c.l.b16 %v5643
  %v5968 = vunpack.c.l.b16 %v5644
  %v5969 = vunpack.c.l.b16 %v5645
  %v5970 = vunpack.c.l.b16 %v5646
  %v5971 = vunpack.c.l.b16 %v5647
  %v5972 = vunpack.c.l.b16 %v5648
  %v5973 = vunpack.c.l.b16 %v5649
  %v5974 = vunpack.c.l.b16 %v5650
  %v5975 = vunpack.c.l.b16 %v5651
  %v5976 = vunpack.c.l.b16 %v5652
  %v5977 = vunpack.c.l.b16 %v5653
  %v5978 = vunpack.c.l.b16 %v5654
  %v5979 = vunpack.c.l.b16 %v5655
  %v5980 = vunpack.c.l.b16 %v5656
  %v5981 = vunpack.c.l.b16 %v5657
  %v5982 = vunpack.c.l.b16 %v5658
  %v5983 = vunpack.c.l.b16 %v5659
  %v5984 = vunpack.c.l.b16 %v5660
  %v5985 = vunpack.c.l.b16 %v5661
  %v5986 = vunpack.c.l.b16 %v5662
  %v5987 = vunpack.c.l.b16 %v5663
  %v5988 = vunpack.c.l.b16 %v5664
  %v5989 = vunpack.c.l.b16 %v5665
  %v5990 = vunpack.c.l.b16 %v5666
  %v5991 = vunpack.c.l.b16 %v5667
  %v5992 = vunpack.c.l.b16 %v5668
  %v5993 = vunpack.c.l.b16 %v5669
  %v5994 = vunpack.c.l.b16 %v5670
  %v5995 = vunpack.c.l.b16 %v5671
  %v5996 = vunpack.c.l.b16 %v5672
  %v5997 = vunpack.c.l.b16 %v5673
  %v5998 = vunpack.c.l.b16 %v5674
  %v5999 = vunpack.c.l.b16 %v5675
  %v6000 = vunpack.c.l.b16 %v5676
  %v6001 = vunpack.c.l.b16 %v5677
  %v6002 = vunpack.c.l.b16 %v5678
  %v6003 = vunpack.c.l.b16 %v5679
  %v6004 = vunpack.c.l.b16 %v5680
  %v6005 = vunpack.c.l.b16 %v5681
  %v6006 = vunpack.c.l.b16 %v5682
  %v6007 = vunpack.c.l.b16 %v5683
  %v6008 = vunpack.c.l.b16 %v5684
  %v6009 = vunpack.c.l.b16 %v5685
  %v6010 = vunpack.c.l.b16 %v5686
  %v6011 = vunpack.c.l.b16 %v5687
  %v6012 = vunpack.c.l.b16 %v5688
  %v6013 = vunpack.c.l.b16 %v5689
  %v6014 = vunpack.c.l.b16 %v5690
  %v6015 = vunpack.c.l.b16 %v5691
  %v6016 = vunpack.c.l.b16 %v5692
  %v6017 = vunpack.c.l.b16 %v5693
  %v6018 = vunpack.c.l.b16 %v5694
  %v6019 = vunpack.c.l.b16 %v5695
  %v6020 = vunpack.c.l.b16 %v5696
  %v6021 = vunpack.c.l.b16 %v5697
  %v6022 = vunpack.c.l.b16 %v5698
  %v6023 = vunpack.c.l.b16 %v5699
  %v6024 = vunpack.c.l.b16 %v5700
  %v6025 = vunpack.c.l.b16 %v5701
  %v6026 = vunpack.c.l.b16 %v5702
  %v6027 = vunpack.c.l.b16 %v5703
  %v6028 = vunpack.c.l.b16 %v5704
  %v6029 = vunpack.c.l.b16 %v5705
  %v6030 = vunpack.c.l.b16 %v5706
  %v6031 = vunpack.c.l.b16 %v5707
  %v6032 = vunpack.c.l.b16 %v5708
  %v6033 = vunpack.c.l.b16 %v5709
  %v6034 = vunpack.c.l.b16 %v5710
  %v6035 = vunpack.c.l.b16 %v5711
  %v6036 = vunpack.c.l.b16 %v5712
  %v6037 = vunpack.c.l.b16 %v5713
  %v6038 = vunpack.c.l.b16 %v5714
  %v6039 = vunpack.c.l.b16 %v5715
  %v6040 = vunpack.c.l.b16 %v5716
  %v6041 = vunpack.c.l.b16 %v5717
  %v6042 = vunpack.c.l.b16 %v5718
  %v6043 = vunpack.c.l.b16 %v5719
  %v6044 = vunpack.c.l.b16 %v5720
  %v6045 = vunpack.c.l.b16 %v5721
  %v6046 = vunpack.c.l.b16 %v5722
  %v6047 = vunpack.c.l.b16 %v5723
  %v6048 = vunpack.c.l.b16 %v5724
  %v6049 = vunpack.c.l.b16 %v5725
  %v6050 = vunpack.c.l.b16 %v5726
  %v6051 = vunpack.c.l.b16 %v5727
  %v6052 = vunpack.c.l.b16 %v5728
  %v6053 = vunpack.c.l.b16 %v5729
  %v6054 = vunpack.c.l.b16 %v5730
  %v6055 = vunpack.c.l.b16 %v5731
  %v6056 = vunpack.c.l.b16 %v5732
  %v6057 = vunpack.c.l.b16 %v5733
  %v6058 = vunpack.c.l.b16 %v5734
  %v6059 = vunpack.c.l.b16 %v5735
  %v6060 = vunpack.c.l.b16 %v5736
  %v6061 = vunpack.c.l.b16 %v5737
  %v6062 = vunpack.c.l.b16 %v5738
  %v6063 = vunpack.c.l.b16 %v5739
  %v6064 = vunpack.c.l.b16 %v5740
  %v6065 = vunpack.c.l.b16 %v5741
  %v6066 = vunpack.c.l.b16 %v5742
  %v6067 = vunpack.c.l.b16 %v5743
  %v6068 = vunpack.c.l.b16 %v5744
  %v6069 = vunpack.c.l.b16 %v5745
  %v6070 = vunpack.c.l.b16 %v5746
  %v6071 = vunpack.c.l.b16 %v5747
  %v6072 = vunpack.c.l.b16 %v5748
  %v6073 = vunpack.c.l.b16 %v5749
  %v6074 = vunpack.c.l.b16 %v5750
  %v6075 = vunpack.c.l.b16 %v5751
  %v6076 = vunpack.c.l.b16 %v5752
  %v6077 = vunpack.c.l.b16 %v5753
  %v6078 = vunpack.c.l.b16 %v5754
  %v6079 = vunpack.c.l.b16 %v5755
  %v6080 = vunpack.c.l.b16 %v5756
  %v6081 = vunpack.c.l.b16 %v5757
  %v6082 = vunpack.c.l.b16 %v5758
  %v6083 = vunpack.c.l.b16 %v5759
  %v6084 = vunpack.c.l.b16 %v5760
  %v6085 = vunpack.c.l.b16 %v5761
  %v6086 = vunpack.c.l.b16 %v5762
  %v6087 = vunpack.c.l.b16 %v5763
  %v6088 = vunpack.c.l.b16 %v5764
  %v6089 = vunpack.c.l.b16 %v5765
  %v6090 = vunpack.c.l.b16 %v5766
  %v6091 = vunpack.c.l.b16 %v5767
  %v6092 = vunpack.c.l.b16 %v5768
  %v6093 = vpack.c.b16 %v5934, %v5933
  %v6094 = vpack.c.b16 %v5936, %v5935
  %v6095 = vpack.c.b16 %v5938, %v5937
  %v6096 = vpack.c.b16 %v5940, %v5939
  %v6097 = vpack.c.b16 %v5942, %v5941
  %v6098 = vpack.c.b16 %v5944, %v5943
  %v6099 = vpack.c.b16 %v5946, %v5945
  %v6100 = vpack.c.b16 %v5948, %v5947
  %v6101 = vpack.c.b16 %v5950, %v5949
  %v6102 = vpack.c.b16 %v5952, %v5951
  %v6103 = vpack.c.b16 %v5954, %v5953
  %v6104 = vpack.c.b16 %v5956, %v5955
  %v6105 = vpack.c.b16 %v5958, %v5957
  %v6106 = vpack.c.b16 %v5960, %v5959
  %v6107 = vpack.c.b16 %v5962, %v5961
  %v6108 = vpack.c.b16 %v5964, %v5963
  %v6109 = vpack.c.b16 %v5966, %v5965
  %v6110 = vpack.c.b16 %v5968, %v5967
  %v6111 = vpack.c.b16 %v5970, %v5969
  %v6112 = vpack.c.b16 %v5972, %v5971
  %v6113 = vpack.c.b16 %v5974, %v5973
  %v6114 = vpack.c.b16 %v5976, %v5975
  %v6115 = vpack.c.b16 %v5978, %v5977
  %v6116 = vpack.c.b16 %v5980, %v5979
  %v6117 = vpack.c.b16 %v5982, %v5981
  %v6118 = vpack.c.b16 %v5984, %v5983
  %v6119 = vpack.c.b16 %v5986, %v5985
  %v6120 = vpack.c.b16 %v5988, %v5987
  %v6121 = vpack.c.b16 %v5990, %v5989
  %v6122 = vpack.c.b16 %v5992, %v5991
  %v6123 = vpack.c.b16 %v5994, %v5993
  %v6124 = vpack.c.b16 %v5996, %v5995
  %v6125 = vpack.c.b16 %v5998, %v5997
  %v6126 = vpack.c.b16 %v6000, %v5999
  %v6127 = vpack.c.b16 %v6002, %v6001
  %v6128 = vpack.c.b16 %v6004, %v6003
  %v6129 = vpack.c.b16 %v6006, %v6005
  %v6130 = vpack.c.b16 %v6008, %v6007
  %v6131 = vpack.c.b16 %v6010, %v6009
  %v6132 = vpack.c.b16 %v6012, %v6011
  %v6133 = vpack.c.b16 %v6014, %v6013
  %v6134 = vpack.c.b16 %v6016, %v6015
  %v6135 = vpack.c.b16 %v6018, %v6017
  %v6136 = vpack.c.b16 %v6020, %v6019
  %v6137 = vpack.c.b16 %v6022, %v6021
  %v6138 = vpack.c.b16 %v6024, %v6023
  %v6139 = vpack.c.b16 %v6026, %v6025
  %v6140 = vpack.c.b16 %v6028, %v6027
  %v6141 = vpack.c.b16 %v6030, %v6029
  %v6142 = vpack.c.b16 %v6032, %v6031
  %v6143 = vpack.c.b16 %v6034, %v6033
  %v6144 = vpack.c.b16 %v6036, %v6035
  %v6145 = vpack.c.b16 %v6038, %v6037
  %v6146 = vpack.c.b16 %v6040, %v6039
  %v6147 = vpack.c.b16 %v6042, %v6041
  %v6148 = vpack.c.b16 %v6044, %v6043
  %v6149 = vpack.c.b16 %v6046, %v6045
  %v6150 = vpack.c.b16 %v6048, %v6047
  %v6151 = vpack.c.b16 %v6050, %v6049
  %v6152 = vpack.c.b16 %v6052, %v6051
  %v6153 = vpack.c.b16 %v6054, %v6053
  %v6154 = vpack.c.b16 %v6056, %v6055
  %v6155 = vpack.c.b16 %v6058, %v6057
  %v6156 = vpack.c.b16 %v6060, %v6059
  %v6157 = vpack.c.b16 %v6062, %v6061
  %v6158 = vpack.c.b16 %v6064, %v6063
  %v6159 = vpack.c.b16 %v6066, %v6065
  %v6160 = vpack.c.b16 %v6068, %v6067
  %v6161 = vpack.c.b16 %v6070, %v6069
  %v6162 = vpack.c.b16 %v6072, %v6071
  %v6163 = vpack.c.b16 %v6074, %v6073
  %v6164 = vpack.c.b16 %v6076, %v6075
  %v6165 = vpack.c.b16 %v6078, %v6077
  %v6166 = vpack.c.b16 %v6080, %v6079
  %v6167 = vpack.c.b16 %v6082, %v6081
  %v6168 = vpack.c.b16 %v6084, %v6083
  %v6169 = vpack.c.b16 %v6086, %v6085
  %v6170 = vpack.c.b16 %v6088, %v6087
  %v6171 = vpack.c.b16 %v6090, %v6089
  %v6172 = vpack.c.b16 %v6092, %v6091
  %6253 = vmatpush.bf16.msra.mxu0 %v6100
  %6254 = vmatpush.bf16.msra.mxu0 %v6099
  %6255 = vmatpush.bf16.msra.mxu0 %v6098
  %6256 = vmatpush.bf16.msra.mxu0 %v6097
  %6257 = vmatpush.bf16.msra.mxu0 %v6096
  %6258 = vmatpush.bf16.msra.mxu0 %v6095
  %6259 = vmatpush.bf16.msra.mxu0 %v6094
  %6260 = vmatpush.bf16.msra.mxu0 %v6093
  %6261 = vmatmul.bf16.gmra.mxu0 %v5599
  %v6262 = vpop.f32.mrf.mxu0
  %v6263 = vadd.f32 %v5771, %v6262
  %v6264 = vpop.f32.mrf.mxu0
  %6265 = vdwg.mxu0
  %6266 = vmatpush.bf16.msra.mxu0 %v6108
  %6267 = vmatpush.bf16.msra.mxu0 %v6107
  %6268 = vmatpush.bf16.msra.mxu0 %v6106
  %6269 = vmatpush.bf16.msra.mxu0 %v6105
  %6270 = vmatpush.bf16.msra.mxu0 %v6104
  %6271 = vmatpush.bf16.msra.mxu0 %v6103
  %6272 = vmatpush.bf16.msra.mxu0 %v6102
  %6273 = vmatpush.bf16.msra.mxu0 %v6101
  %6274 = vmatmul.bf16.gmra.mxu0 %v5600
  %v6275 = vpop.f32.mrf.mxu0
  %v6276 = vadd.f32 %v6263, %v6275
  %v6277 = vpop.f32.mrf.mxu0
  %6278 = vdwg.mxu0
  %6279 = vmatpush.bf16.msra.mxu0 %v6116
  %6280 = vmatpush.bf16.msra.mxu0 %v6115
  %6281 = vmatpush.bf16.msra.mxu0 %v6114
  %6282 = vmatpush.bf16.msra.mxu0 %v6113
  %6283 = vmatpush.bf16.msra.mxu0 %v6112
  %6284 = vmatpush.bf16.msra.mxu0 %v6111
  %6285 = vmatpush.bf16.msra.mxu0 %v6110
  %6286 = vmatpush.bf16.msra.mxu0 %v6109
  %6287 = vmatmul.bf16.gmra.mxu0 %v5601
  %v6288 = vpop.f32.mrf.mxu0
  %v6289 = vadd.f32 %v6276, %v6288
  %v6290 = vpop.f32.mrf.mxu0
  %6291 = vdwg.mxu0
  %6292 = vmatpush.bf16.msra.mxu0 %v6124
  %6293 = vmatpush.bf16.msra.mxu0 %v6123
  %6294 = vmatpush.bf16.msra.mxu0 %v6122
  %6295 = vmatpush.bf16.msra.mxu0 %v6121
  %6296 = vmatpush.bf16.msra.mxu0 %v6120
  %6297 = vmatpush.bf16.msra.mxu0 %v6119
  %6298 = vmatpush.bf16.msra.mxu0 %v6118
  %6299 = vmatpush.bf16.msra.mxu0 %v6117
  %6300 = vmatmul.bf16.gmra.mxu0 %v5602
  %v6301 = vpop.f32.mrf.mxu0
  %v6302 = vadd.f32 %v6289, %v6301
  %v6303 = vpop.f32.mrf.mxu0
  %6304 = vdwg.mxu0
  %6305 = vmatpush.bf16.msra.mxu0 %v6132
  %6306 = vmatpush.bf16.msra.mxu0 %v6131
  %6307 = vmatpush.bf16.msra.mxu0 %v6130
  %6308 = vmatpush.bf16.msra.mxu0 %v6129
  %6309 = vmatpush.bf16.msra.mxu0 %v6128
  %6310 = vmatpush.bf16.msra.mxu0 %v6127
  %6311 = vmatpush.bf16.msra.mxu0 %v6126
  %6312 = vmatpush.bf16.msra.mxu0 %v6125
  %6313 = vmatmul.bf16.gmra.mxu0 %v5603
  %v6314 = vpop.f32.mrf.mxu0
  %v6315 = vadd.f32 %v6302, %v6314
  %v6316 = vpop.f32.mrf.mxu0
  %6317 = vdwg.mxu0
  %6318 = vmatpush.bf16.msra.mxu0 %v6140
  %6319 = vmatpush.bf16.msra.mxu0 %v6139
  %6320 = vmatpush.bf16.msra.mxu0 %v6138
  %6321 = vmatpush.bf16.msra.mxu0 %v6137
  %6322 = vmatpush.bf16.msra.mxu0 %v6136
  %6323 = vmatpush.bf16.msra.mxu0 %v6135
  %6324 = vmatpush.bf16.msra.mxu0 %v6134
  %6325 = vmatpush.bf16.msra.mxu0 %v6133
  %6326 = vmatmul.bf16.gmra.mxu0 %v5604
  %v6327 = vpop.f32.mrf.mxu0
  %v6328 = vadd.f32 %v6315, %v6327
  %v6329 = vpop.f32.mrf.mxu0
  %6330 = vdwg.mxu0
  %6331 = vmatpush.bf16.msra.mxu0 %v6148
  %6332 = vmatpush.bf16.msra.mxu0 %v6147
  %6333 = vmatpush.bf16.msra.mxu0 %v6146
  %6334 = vmatpush.bf16.msra.mxu0 %v6145
  %6335 = vmatpush.bf16.msra.mxu0 %v6144
  %6336 = vmatpush.bf16.msra.mxu0 %v6143
  %6337 = vmatpush.bf16.msra.mxu0 %v6142
  %6338 = vmatpush.bf16.msra.mxu0 %v6141
  %6339 = vmatmul.bf16.gmra.mxu0 %v5605
  %v6340 = vpop.f32.mrf.mxu0
  %v6341 = vadd.f32 %v6328, %v6340
  %v6342 = vpop.f32.mrf.mxu0
  %6343 = vdwg.mxu0
  %6344 = vmatpush.bf16.msra.mxu0 %v6156
  %6345 = vmatpush.bf16.msra.mxu0 %v6155
  %6346 = vmatpush.bf16.msra.mxu0 %v6154
  %6347 = vmatpush.bf16.msra.mxu0 %v6153
  %6348 = vmatpush.bf16.msra.mxu0 %v6152
  %6349 = vmatpush.bf16.msra.mxu0 %v6151
  %6350 = vmatpush.bf16.msra.mxu0 %v6150
  %6351 = vmatpush.bf16.msra.mxu0 %v6149
  %6352 = vmatmul.bf16.gmra.mxu0 %v5606
  %v6353 = vpop.f32.mrf.mxu0
  %v6354 = vadd.f32 %v6341, %v6353
  %v6355 = vpop.f32.mrf.mxu0
  %6356 = vdwg.mxu0
  %6357 = vmatpush.bf16.msra.mxu0 %v6164
  %6358 = vmatpush.bf16.msra.mxu0 %v6163
  %6359 = vmatpush.bf16.msra.mxu0 %v6162
  %6360 = vmatpush.bf16.msra.mxu0 %v6161
  %6361 = vmatpush.bf16.msra.mxu0 %v6160
  %6362 = vmatpush.bf16.msra.mxu0 %v6159
  %6363 = vmatpush.bf16.msra.mxu0 %v6158
  %6364 = vmatpush.bf16.msra.mxu0 %v6157
  %6365 = vmatmul.bf16.gmra.mxu0 %v5607
  %v6366 = vpop.f32.mrf.mxu0
  %v6367 = vadd.f32 %v6354, %v6366
  %v6368 = vpop.f32.mrf.mxu0
  %6369 = vdwg.mxu0
  %6370 = vmatpush.bf16.msra.mxu0 %v6172
  %6371 = vmatpush.bf16.msra.mxu0 %v6171
  %6372 = vmatpush.bf16.msra.mxu0 %v6170
  %6373 = vmatpush.bf16.msra.mxu0 %v6169
  %6374 = vmatpush.bf16.msra.mxu0 %v6168
  %6375 = vmatpush.bf16.msra.mxu0 %v6167
  %6376 = vmatpush.bf16.msra.mxu0 %v6166
  %6377 = vmatpush.bf16.msra.mxu0 %v6165
  %6378 = vmatmul.bf16.gmra.mxu0 %v5608
  %v6379 = vpop.f32.mrf.mxu0
  %v6380 = vadd.f32 %v6367, %v6379
  %v6381 = vpop.f32.mrf.mxu0
  %6382 = vdwg.mxu0
  %v6383 = vmax.f32 %v6380, 0.0
  %v6384 = vpack.c.bf16 %v6383, %v6383
  %v6385 = vld [vmem:[%s5] sm:$0xf]
  %v6386 = vld [vmem:[%s5 + $0x4] sm:$0xf]
  %v6387 = vld [vmem:[%s5 + $0x8] sm:$0xf]
  %v6388 = vld [vmem:[%s5 + $0xc] sm:$0xf]
  %v6389 = vld [vmem:[%s5 + $0x10] sm:$0xf]
  %v6390 = vld [vmem:[%s5 + $0x14] sm:$0xf]
  %v6391 = vld [vmem:[%s5 + $0x18] sm:$0xf]
  %v6392 = vld [vmem:[%s5 + $0x1c] sm:$0xf]
  %v6393 = vld [vmem:[%s5 + $0x20] sm:$0xf]
  %v6394 = vld [vmem:[%s5 + $0x24] sm:$0xf]
  %v6395 = vld [vmem:[%s5 + $0x28] sm:$0xf]
  %v6396 = vld [vmem:[%s5 + $0x2c] sm:$0xf]
  %v6397 = vld [vmem:[%s5 + $0x30] sm:$0xf]
  %v6398 = vld [vmem:[%s5 + $0x34] sm:$0xf]
  %v6399 = vld [vmem:[%s5 + $0x38] sm:$0xf]
  %v6400 = vld [vmem:[%s5 + $0x3c] sm:$0xf]
  %v6401 = vld [vmem:[%s6] sm:$0x1]
  %v6403 = vperm.slane %v6401, 0
  %v6421 = vunpack.c.l.b16 %v6385
  %v6422 = vunpack.c.l.b16 %v6386
  %v6423 = vunpack.c.l.b16 %v6387
  %v6424 = vunpack.c.l.b16 %v6388
  %v6425 = vunpack.c.l.b16 %v6389
  %v6426 = vunpack.c.l.b16 %v6390
  %v6427 = vunpack.c.l.b16 %v6391
  %v6428 = vunpack.c.l.b16 %v6392
  %v6429 = vunpack.c.l.b16 %v6393
  %v6430 = vunpack.c.l.b16 %v6394
  %v6431 = vunpack.c.l.b16 %v6395
  %v6432 = vunpack.c.l.b16 %v6396
  %v6433 = vunpack.c.l.b16 %v6397
  %v6434 = vunpack.c.l.b16 %v6398
  %v6435 = vunpack.c.l.b16 %v6399
  %v6436 = vunpack.c.l.b16 %v6400
  %v6437 = vpack.c.b16 %v6422, %v6421
  %v6438 = vpack.c.b16 %v6424, %v6423
  %v6439 = vpack.c.b16 %v6426, %v6425
  %v6440 = vpack.c.b16 %v6428, %v6427
  %v6441 = vpack.c.b16 %v6430, %v6429
  %v6442 = vpack.c.b16 %v6432, %v6431
  %v6443 = vpack.c.b16 %v6434, %v6433
  %v6444 = vpack.c.b16 %v6436, %v6435
  %6453 = vmatpush.bf16.msra.mxu0 %v6444
  %6454 = vmatpush.bf16.msra.mxu0 %v6443
  %6455 = vmatpush.bf16.msra.mxu0 %v6442
  %6456 = vmatpush.bf16.msra.mxu0 %v6441
  %6457 = vmatpush.bf16.msra.mxu0 %v6440
  %6458 = vmatpush.bf16.msra.mxu0 %v6439
  %6459 = vmatpush.bf16.msra.mxu0 %v6438
  %6460 = vmatpush.bf16.msra.mxu0 %v6437
  %6461 = vmatmul.bf16.gmra.mxu0 %v6384
  %v6462 = vpop.f32.mrf.mxu0
  %v6463 = vadd.f32 %v6403, %v6462
  %v6464 = vpop.f32.mrf.mxu0
  %6465 = vdwg.mxu0
  %v6466 = vmax.f32 %v6463, 0.0
  %v6467 = vpack.c.bf16 %v6466, %v6466
  %v6468 = vld [vmem:[%s7] sm:$0xf]
  %v6469 = vld [vmem:[%s7 + $0x4] sm:$0xf]
  %v6470 = vld [vmem:[%s7 + $0x8] sm:$0xf]
  %v6471 = vld [vmem:[%s7 + $0xc] sm:$0xf]
  %v6472 = vld [vmem:[%s7 + $0x10] sm:$0xf]
  %v6473 = vld [vmem:[%s7 + $0x14] sm:$0xf]
  %v6474 = vld [vmem:[%s7 + $0x18] sm:$0xf]
  %v6475 = vld [vmem:[%s7 + $0x1c] sm:$0xf]
  %v6476 = vld [vmem:[%s7 + $0x20] sm:$0xf]
  %v6477 = vld [vmem:[%s7 + $0x24] sm:$0xf]
  %v6478 = vld [vmem:[%s7 + $0x28] sm:$0xf]
  %v6479 = vld [vmem:[%s7 + $0x2c] sm:$0xf]
  %v6480 = vld [vmem:[%s7 + $0x30] sm:$0xf]
  %v6481 = vld [vmem:[%s7 + $0x34] sm:$0xf]
  %v6482 = vld [vmem:[%s7 + $0x38] sm:$0xf]
  %v6483 = vld [vmem:[%s7 + $0x3c] sm:$0xf]
  %v6484 = vld [vmem:[%s8] sm:$0x1]
  %v6486 = vperm.slane %v6484, 0
  %v6504 = vunpack.c.l.b16 %v6468
  %v6505 = vunpack.c.l.b16 %v6469
  %v6506 = vunpack.c.l.b16 %v6470
  %v6507 = vunpack.c.l.b16 %v6471
  %v6508 = vunpack.c.l.b16 %v6472
  %v6509 = vunpack.c.l.b16 %v6473
  %v6510 = vunpack.c.l.b16 %v6474
  %v6511 = vunpack.c.l.b16 %v6475
  %v6512 = vunpack.c.l.b16 %v6476
  %v6513 = vunpack.c.l.b16 %v6477
  %v6514 = vunpack.c.l.b16 %v6478
  %v6515 = vunpack.c.l.b16 %v6479
  %v6516 = vunpack.c.l.b16 %v6480
  %v6517 = vunpack.c.l.b16 %v6481
  %v6518 = vunpack.c.l.b16 %v6482
  %v6519 = vunpack.c.l.b16 %v6483
  %v6520 = vpack.c.b16 %v6505, %v6504
  %v6521 = vpack.c.b16 %v6507, %v6506
  %v6522 = vpack.c.b16 %v6509, %v6508
  %v6523 = vpack.c.b16 %v6511, %v6510
  %v6524 = vpack.c.b16 %v6513, %v6512
  %v6525 = vpack.c.b16 %v6515, %v6514
  %v6526 = vpack.c.b16 %v6517, %v6516
  %v6527 = vpack.c.b16 %v6519, %v6518
  %6536 = vmatpush.bf16.msra.mxu0 %v6527
  %6537 = vmatpush.bf16.msra.mxu0 %v6526
  %6538 = vmatpush.bf16.msra.mxu0 %v6525
  %6539 = vmatpush.bf16.msra.mxu0 %v6524
  %6540 = vmatpush.bf16.msra.mxu0 %v6523
  %6541 = vmatpush.bf16.msra.mxu0 %v6522
  %6542 = vmatpush.bf16.msra.mxu0 %v6521
  %6543 = vmatpush.bf16.msra.mxu0 %v6520
  %6544 = vmatmul.bf16.gmra.mxu0 %v6467
  %v6545 = vpop.f32.mrf.mxu0
  %v6546 = vadd.f32 %v6486, %v6545
  %v6547 = vpop.f32.mrf.mxu0
  %6548 = vdwg.mxu0
  %v6549 = vmax.f32 %v6546, 0.0
  %v6550 = vpack.c.bf16 %v6549, %v6549
  %v6551 = vld [vmem:[%s9] sm:$0xf]
  %v6552 = vld [vmem:[%s9 + $0x4] sm:$0xf]
  %v6553 = vld [vmem:[%s9 + $0x8] sm:$0xf]
  %v6554 = vld [vmem:[%s9 + $0xc] sm:$0xf]
  %v6555 = vld [vmem:[%s9 + $0x10] sm:$0xf]
  %v6556 = vld [vmem:[%s9 + $0x14] sm:$0xf]
  %v6557 = vld [vmem:[%s9 + $0x18] sm:$0xf]
  %v6558 = vld [vmem:[%s9 + $0x1c] sm:$0xf]
  %v6559 = vld [vmem:[%s9 + $0x20] sm:$0xf]
  %v6560 = vld [vmem:[%s9 + $0x24] sm:$0xf]
  %v6561 = vld [vmem:[%s9 + $0x28] sm:$0xf]
  %v6562 = vld [vmem:[%s9 + $0x2c] sm:$0xf]
  %v6563 = vld [vmem:[%s9 + $0x30] sm:$0xf]
  %v6564 = vld [vmem:[%s9 + $0x34] sm:$0xf]
  %v6565 = vld [vmem:[%s9 + $0x38] sm:$0xf]
  %v6566 = vld [vmem:[%s9 + $0x3c] sm:$0xf]
  %v6567 = vld [vmem:[%s10] sm:$0x1]
  %v6569 = vperm.slane %v6567, 0
  %v6587 = vunpack.c.l.b16 %v6551
  %v6588 = vunpack.c.l.b16 %v6552
  %v6589 = vunpack.c.l.b16 %v6553
  %v6590 = vunpack.c.l.b16 %v6554
  %v6591 = vunpack.c.l.b16 %v6555
  %v6592 = vunpack.c.l.b16 %v6556
  %v6593 = vunpack.c.l.b16 %v6557
  %v6594 = vunpack.c.l.b16 %v6558
  %v6595 = vunpack.c.l.b16 %v6559
  %v6596 = vunpack.c.l.b16 %v6560
  %v6597 = vunpack.c.l.b16 %v6561
  %v6598 = vunpack.c.l.b16 %v6562
  %v6599 = vunpack.c.l.b16 %v6563
  %v6600 = vunpack.c.l.b16 %v6564
  %v6601 = vunpack.c.l.b16 %v6565
  %v6602 = vunpack.c.l.b16 %v6566
  %v6603 = vpack.c.b16 %v6588, %v6587
  %v6604 = vpack.c.b16 %v6590, %v6589
  %v6605 = vpack.c.b16 %v6592, %v6591
  %v6606 = vpack.c.b16 %v6594, %v6593
  %v6607 = vpack.c.b16 %v6596, %v6595
  %v6608 = vpack.c.b16 %v6598, %v6597
  %v6609 = vpack.c.b16 %v6600, %v6599
  %v6610 = vpack.c.b16 %v6602, %v6601
  %6619 = vmatpush.bf16.msra.mxu0 %v6610
  %6620 = vmatpush.bf16.msra.mxu0 %v6609
  %6621 = vmatpush.bf16.msra.mxu0 %v6608
  %6622 = vmatpush.bf16.msra.mxu0 %v6607
  %6623 = vmatpush.bf16.msra.mxu0 %v6606
  %6624 = vmatpush.bf16.msra.mxu0 %v6605
  %6625 = vmatpush.bf16.msra.mxu0 %v6604
  %6626 = vmatpush.bf16.msra.mxu0 %v6603
  %6627 = vmatmul.bf16.gmra.mxu0 %v6550
  %v6628 = vpop.f32.mrf.mxu0
  %v6629 = vadd.f32 %v6569, %v6628
  %v6630 = vpop.f32.mrf.mxu0
  %6631 = vdwg.mxu0
  %6632 = vst [vmem:[%s11] sm:$0xff] %v6629
  // Predicated region
  $region46: #{pilotnet_forward.11} parent=0 // pred_check
    _
  $region47: #{pilotnet_forward.11} parent=0 // pred_check_branch
    %6634 = sbr.rel (0) target = $region49
  $region48: #{pilotnet_forward.11} parent=0 // pred_region
    _
  $region49: #{pilotnet_forward.11} parent=0 // pred_fallthru
    _
  // Predicated region
  $region50: #{pilotnet_forward.11} parent=0 // pred_check
    _
  $region51: #{pilotnet_forward.11} parent=0 // pred_check_branch
    %6636 = sbr.rel (0) target = $region53
  $region52: #{pilotnet_forward.11} parent=0 // pred_region
    _
  $region53: #{pilotnet_forward.11} parent=0 // pred_fallthru
    _

</llo_original>
